<compile_context>
chip_gen: v7x
topology: tpu7x:2x2x1
jax: 0.10.0
libtpu: 0.0.40
codegen_flags: <defaults>
</compile_context>

<pallas_src>
import functools
import math

import jax
import jax.numpy as jnp
from jax.experimental import pallas as pl
from jax.experimental.pallas import tpu as pltpu  # noqa: F401  (kept for TPU-specific tuning hooks)


# ------------------------- config (small synthetic BERT) -------------------------
B = 2           # batch
S = 8           # sequence length
H = 32          # hidden_dim
NH = 4          # attention heads
HD = H // NH    # head dim
I = 64          # FFN intermediate
L = 2           # encoder layers
V = 100         # vocab size
P = 16          # max position embeddings
T = 2           # token type vocab
NSLOT = 5       # num_slot_labels
NINT = 3        # num_intent_labels
EPS = 1e-12     # BERT layernorm eps
OUT_PAD = 128   # lane-dense padded width for classifier-head outputs / misc slab
VPAD = 128      # padded vocab rows for the in-kernel one-hot gather
LVEC_W = 64     # per-layer vector slab width (>= max(HD, H, I))
LVEC_ROWS = 24  # per-layer vector slab rows (3*NH head biases + 7 scalars, padded to 8k)
NEG = -1e9      # additive mask value


# ---------------------------------- helpers ----------------------------------
def _layer_norm(x, gamma, beta):
    # single-pass mean / mean-of-squares (two independent lane reductions)
    m1 = jnp.mean(x, axis=-1, keepdims=True)
    m2 = jnp.mean(x * x, axis=-1, keepdims=True)
    var = jnp.maximum(m2 - m1 * m1, 0.0)
    return (x - m1) * jax.lax.rsqrt(var + EPS) * gamma + beta


def _gelu(x):
    # exact (erf) GELU, as used by bert-base
    return 0.5 * x * (1.0 + jax.lax.erf(x * (1.0 / math.sqrt(2.0))))


# ------------------------------- fused kernel -------------------------------
def fused_bert_kernel(tok_ref, mask_ref, wemb_ref, misc_ref,
                      wqkv_ref, wo_ref, wi_ref, wf_ref, lvec_ref, headw_ref,
                      out_ref, *, num_layers, num_heads, batch, seq):
    bs = batch * seq
    hidden = wi_ref.shape[1]
    inter = wi_ref.shape[2]
    head_dim = hidden // num_heads
    scale = 1.0 / math.sqrt(head_dim)

    # ---- unpack small packed slabs (all static slices, hoisted) ----
    tok = tok_ref[...]                                   # (BS, 2) int32: [word_id, type_id]
    ids = tok[:, 0:1]                                    # (BS, 1)
    ttf = tok[:, 1:2].astype(jnp.float32)                # (BS, 1)

    misc = misc_ref[...]                                 # (2*BS + 8, 128)
    pos = misc[0:bs, 0:hidden]                           # (BS, H) tiled position embeddings
    typ0 = misc[bs + 0:bs + 1, 0:hidden]
    typ1 = misc[bs + 1:bs + 2, 0:hidden]
    emb_g = misc[bs + 2:bs + 3, 0:hidden]
    emb_b = misc[bs + 3:bs + 4, 0:hidden]
    pool_b = misc[bs + 4:bs + 5, 0:hidden]
    slot_b = misc[bs + 5:bs + 6, :]
    int_b = misc[bs + 6:bs + 7, :]
    blk = misc[bs + 8:bs + 8 + bs, 0:bs]                 # (BS, BS) same-batch additive mask

    # ---- embeddings, built in-kernel (one-hot MXU gather; no XLA glue round-trip) ----
    one_hot = (jax.lax.broadcasted_iota(jnp.int32, (bs, wemb_ref.shape[0]), 1)
               == ids).astype(jnp.float32)               # (BS, VPAD)
    word = jnp.dot(one_hot, wemb_ref[...], preferred_element_type=jnp.float32)
    typ = typ0 + ttf * (typ1 - typ0)                     # 2-way token-type select
    x = _layer_norm(word + pos + typ, emb_g, emb_b)      # dropout == identity (eval mode)

    # additive attention mask over key columns, combined with the same-batch block
    # mask and hoisted ONCE out of the layer loop (no per-layer re-broadcast).
    col_keep = mask_ref[...]                             # (1, BS) 1=keep, 0=pad
    big_mask = blk + (1.0 - col_keep) * NEG              # (BS, BS)

    # ---- transformer encoder layers (static unroll; all weights VMEM-resident) ----
    for l in range(num_layers):
        lv = lvec_ref[l]                                 # (24, 64) packed per-layer vectors
        r0 = 3 * num_heads
        b_o = lv[r0 + 0:r0 + 1, 0:hidden]
        ln1_g = lv[r0 + 1:r0 + 2, 0:hidden]
        ln1_b = lv[r0 + 2:r0 + 3, 0:hidden]
        b_i = lv[r0 + 3:r0 + 4, 0:inter]
        b_f = lv[r0 + 4:r0 + 5, 0:hidden]
        ln2_g = lv[r0 + 5:r0 + 6, 0:hidden]
        ln2_b = lv[r0 + 6:r0 + 7, 0:hidden]

        # Per-head attention with weights pre-split per head at init time:
        # every operand is a plain 2-D matmul; head merge folded into Wo_h sum.
        attn = None
        for h in range(num_heads):
            wq = wqkv_ref[(l * 3 + 0) * num_heads + h]   # (H, HD)
            wk = wqkv_ref[(l * 3 + 1) * num_heads + h]
            wv = wqkv_ref[(l * 3 + 2) * num_heads + h]
            bq = lv[0 * num_heads + h:0 * num_heads + h + 1, 0:head_dim]
            bk = lv[1 * num_heads + h:1 * num_heads + h + 1, 0:head_dim]
            bv = lv[2 * num_heads + h:2 * num_heads + h + 1, 0:head_dim]

            q_h = jnp.dot(x, wq, preferred_element_type=jnp.float32) + bq   # (BS, HD)
            k_h = jnp.dot(x, wk, preferred_element_type=jnp.float32) + bk
            v_h = jnp.dot(x, wv, preferred_element_type=jnp.float32) + bv

            # block-diagonal scores over all B*S tokens; cross-sample / padded
            # columns are killed by the precomputed additive mask.
            s_h = jax.lax.dot_general(
                q_h, k_h, (((1,), (1,)), ((), ())),
                preferred_element_type=jnp.float32) * scale + big_mask      # (BS, BS)
            m_h = jnp.max(s_h, axis=-1, keepdims=True)
            p_h = jnp.exp(s_h - m_h)
            p_h = p_h * pl.reciprocal(jnp.sum(p_h, axis=-1, keepdims=True),
                                      approx=True)                          # EUP reciprocal
            ctx_h = jnp.dot(p_h, v_h, preferred_element_type=jnp.float32)   # (BS, HD)

            part = jnp.dot(ctx_h, wo_ref[l * num_heads + h],
                           preferred_element_type=jnp.float32)              # (BS, H)
            attn = part if attn is None else attn + part

        x1 = _layer_norm(x + attn + b_o, ln1_g, ln1_b)

        hmid = _gelu(jnp.dot(x1, wi_ref[l], preferred_element_type=jnp.float32) + b_i)
        ffn = jnp.dot(hmid, wf_ref[l], preferred_element_type=jnp.float32) + b_f
        x = _layer_norm(x1 + ffn, ln2_g, ln2_b)

    # ---- heads: slot logits (all tokens) + pooler/intent, one lane-dense output slab ----
    slot = jnp.dot(x, headw_ref[1], preferred_element_type=jnp.float32) + slot_b
    pooled = jnp.tanh(jnp.dot(x, headw_ref[0][:, 0:hidden],
                              preferred_element_type=jnp.float32) + pool_b)
    intent = jnp.dot(pooled, headw_ref[2], preferred_element_type=jnp.float32) + int_b

    out_ref[0:bs, :] = slot                  # rows 0..BS-1   : slot logits (padded to 128)
    out_ref[bs:2 * bs, :] = intent           # rows BS..2BS-1 : per-token intent logits


def run_fused_bert(p, tok, keep_mask):
    kernel = functools.partial(fused_bert_kernel,
                               num_layers=L, num_heads=NH, batch=B, seq=S)
    return pl.pallas_call(
        kernel,
        out_shape=jax.ShapeDtypeStruct((2 * B * S, OUT_PAD), jnp.float32),
        cost_estimate=pl.CostEstimate(flops=1_050_000, transcendentals=8_192,
                                      bytes_accessed=200_000),
    )(tok, keep_mask, p["wemb"], p["misc"], p["wqkv"], p["wo"],
      p["wi"], p["wf"], p["lvec"], p["headw"])


# ------------------------------ parameter creation ------------------------------
def init_params(key):
    f32 = jnp.float32

    def normal(k, shape, scale=0.02):
        return (scale * jax.random.normal(k, shape)).astype(f32)

    keys = jax.random.split(key, 12)

    word_emb = normal(keys[0], (V, H))
    pos_emb = normal(keys[1], (P, H))
    type_emb = normal(keys[2], (T, H))

    wq = normal(keys[3], (L, H, H))
    wk = normal(keys[4], (L, H, H))
    wv = normal(keys[5], (L, H, H))
    wo = normal(keys[6], (L, H, H))
    wi = normal(keys[7], (L, H, I))
    wf = normal(keys[8], (L, I, H))
    pooler_w = normal(keys[9], (H, H))
    slot_w = normal(keys[10], (H, NSLOT))
    intent_w = normal(keys[11], (H, NINT))

    zeros_h = jnp.zeros((H,), f32)
    ones_h = jnp.ones((H,), f32)

    params = {}

    # word-embedding table padded to lane-friendly 128 rows (in-kernel one-hot gather)
    params["wemb"] = jnp.pad(word_emb, ((0, VPAD - V), (0, 0)))

    # per-head pre-split projection weights: (L*3*NH, H, HD), idx = (l*3 + qi)*NH + h
    def split_heads_cols(w):                     # (L,H,H) -> (L,NH,H,HD)
        return jnp.transpose(w.reshape(L, H, NH, HD), (0, 2, 1, 3))
    wqkv = jnp.stack([split_heads_cols(wq), split_heads_cols(wk),
                      split_heads_cols(wv)], axis=1)          # (L,3,NH,H,HD)
    params["wqkv"] = wqkv.reshape(L * 3 * NH, H, HD)
    # per-head output-projection rows: (L*NH, HD, H), idx = l*NH + h
    params["wo"] = wo.reshape(L * NH, HD, H)

    params["wi"] = wi
    params["wf"] = wf

    # per-layer small vectors packed into one (L, 24, 64) slab
    def pad_to(vec, width):
        return jnp.pad(vec, (0, width - vec.shape[0]))

    lvec_layers = []
    for _l in range(L):
        rows = []
        for _qi in range(3):                     # bq / bk / bv : one row per head
            for _h in range(NH):
                rows.append(pad_to(jnp.zeros((HD,), f32), LVEC_W))
        rows += [pad_to(zeros_h, LVEC_W),        # attention output bias
                 pad_to(ones_h, LVEC_W),         # LN1 gamma
                 pad_to(zeros_h, LVEC_W),        # LN1 beta
                 pad_to(jnp.zeros((I,), f32), LVEC_W),  # FFN intermediate bias
                 pad_to(zeros_h, LVEC_W),        # FFN output bias
                 pad_to(ones_h, LVEC_W),         # LN2 gamma
                 pad_to(zeros_h, LVEC_W)]        # LN2 beta
        while len(rows) < LVEC_ROWS:
            rows.append(jnp.zeros((LVEC_W,), f32))
        lvec_layers.append(jnp.stack(rows))
    params["lvec"] = jnp.stack(lvec_layers)      # (L, 24, 64)

    # misc slab: static position rows, type embeddings, embedding-LN, head biases,
    # and the same-batch block-diagonal additive mask.
    def pad128(vec):
        return jnp.pad(vec, (0, OUT_PAD - vec.shape[0]))

    pos_const = jnp.tile(pos_emb[:S], (B, 1))    # (B*S, H): position ids are arange(S)
    rows = [pad128(pos_const[i]) for i in range(B * S)]
    rows += [pad128(type_emb[0]), pad128(type_emb[1]),
             pad128(ones_h), pad128(zeros_h),    # embedding LN gamma / beta
             pad128(zeros_h),                    # pooler bias
             jnp.zeros((OUT_PAD,), f32),         # slot-classifier bias (padded)
             jnp.zeros((OUT_PAD,), f32)]         # intent-classifier bias (padded)
    while len(rows) < B * S + 8:
        rows.append(jnp.zeros((OUT_PAD,), f32))
    bid = jnp.arange(B * S) // S
    blk = jnp.where(bid[:, None] == bid[None, :], 0.0, NEG).astype(f32)  # (BS,BS)
    rows += [pad128(blk[i]) for i in range(B * S)]
    params["misc"] = jnp.stack(rows)             # (2*B*S + 8, 128) = (40, 128)

    # pooler / slot / intent weights packed into one lane-dense (3, H, 128) slab
    params["headw"] = jnp.stack([
        jnp.pad(pooler_w, ((0, 0), (0, OUT_PAD - H))),
        jnp.pad(slot_w, ((0, 0), (0, OUT_PAD - NSLOT))),
        jnp.pad(intent_w, ((0, 0), (0, OUT_PAD - NINT)))])
    return params


# --------------------------------- full forward ---------------------------------
def model_bert_forward(params, input_ids, attention_mask=None, token_type_ids=None):
    if attention_mask is None:
        attention_mask = jnp.ones_like(input_ids)
    if token_type_ids is None:
        token_type_ids = jnp.zeros_like(input_ids)

    tok = jnp.stack([input_ids.reshape(-1), token_type_ids.reshape(-1)],
                    axis=1).astype(jnp.int32)                       # (B*S, 2)
    keep = attention_mask.astype(jnp.float32).reshape(1, B * S)     # (1, B*S)

    out = run_fused_bert(params, tok, keep)                         # (2*B*S, 128)

    slots = out[:B * S].reshape(B, S, OUT_PAD)[:, :, :NSLOT]        # (B, S, NSLOT)
    slots = jnp.transpose(slots, (0, 2, 1))                         # (B, NSLOT, S)
    intent = out[B * S:].reshape(B, S, OUT_PAD)[:, 0, :NINT]        # CLS rows -> (B, NINT)
    return slots, intent


# ------------------------------------ main ------------------------------------
if __name__ == "__main__":
    key = jax.random.PRNGKey(0)
    k_params, k_ids = jax.random.split(key)

    params = init_params(k_params)

    input_ids = jax.random.randint(k_ids, (B, S), 0, V, dtype=jnp.int32)
    attention_mask = jnp.ones((B, S), jnp.int32).at[1, S - 2:].set(0)  # pad last 2 tokens of sample 1
    token_type_ids = jnp.zeros((B, S), jnp.int32)

    slots, intent = jax.jit(model_bert_forward)(
        params, input_ids, attention_mask, token_type_ids)
    jax.block_until_ready((slots, intent))

    assert slots.shape == (B, NSLOT, S), slots.shape
    assert intent.shape == (B, NINT), intent.shape
    assert jnp.all(jnp.isfinite(slots)) and jnp.all(jnp.isfinite(intent))
    print("KERNEL_OK")
</pallas_src>

<mosaic_0001>
module attributes {stable_mosaic.version = 11 : i64} {
  func.func @fused_bert_kernel(%arg0: memref<16x2xi32, #tpu.memory_space<vmem>>, %arg1: memref<1x16xf32, #tpu.memory_space<vmem>>, %arg2: memref<128x32xf32, #tpu.memory_space<vmem>>, %arg3: memref<40x128xf32, #tpu.memory_space<vmem>>, %arg4: memref<24x32x8xf32, #tpu.memory_space<vmem>>, %arg5: memref<8x8x32xf32, #tpu.memory_space<vmem>>, %arg6: memref<2x32x64xf32, #tpu.memory_space<vmem>>, %arg7: memref<2x64x32xf32, #tpu.memory_space<vmem>>, %arg8: memref<2x24x64xf32, #tpu.memory_space<vmem>>, %arg9: memref<3x32x128xf32, #tpu.memory_space<vmem>>, %arg10: memref<32x128xf32, #tpu.memory_space<vmem>>) attributes {dimension_semantics = [], scalar_prefetch = 0 : i64, scratch_operands = 0 : i64, tpu.core_type = #tpu.core_type<tc>} {
    %c0 = arith.constant 0 : index
    %c0_0 = arith.constant 0 : index
    %0 = vector.load %arg0[%c0, %c0_0] : memref<16x2xi32, #tpu.memory_space<vmem>>, vector<16x2xi32>
    %1 = vector.extract_strided_slice %0 {offsets = [0, 0], sizes = [16, 1], strides = [1, 1]} : vector<16x2xi32> to vector<16x1xi32>
    %2 = vector.extract_strided_slice %0 {offsets = [0, 1], sizes = [16, 1], strides = [1, 1]} : vector<16x2xi32> to vector<16x1xi32>
    %3 = arith.sitofp %2 : vector<16x1xi32> to vector<16x1xf32>
    %c0_1 = arith.constant 0 : index
    %c0_2 = arith.constant 0 : index
    %4 = vector.load %arg3[%c0_1, %c0_2] : memref<40x128xf32, #tpu.memory_space<vmem>>, vector<40x128xf32>
    %5 = vector.extract_strided_slice %4 {offsets = [0, 0], sizes = [16, 32], strides = [1, 1]} : vector<40x128xf32> to vector<16x32xf32>
    %6 = vector.extract_strided_slice %4 {offsets = [16, 0], sizes = [1, 32], strides = [1, 1]} : vector<40x128xf32> to vector<1x32xf32>
    %7 = vector.extract_strided_slice %4 {offsets = [17, 0], sizes = [1, 32], strides = [1, 1]} : vector<40x128xf32> to vector<1x32xf32>
    %8 = vector.extract_strided_slice %4 {offsets = [18, 0], sizes = [1, 32], strides = [1, 1]} : vector<40x128xf32> to vector<1x32xf32>
    %9 = vector.extract_strided_slice %4 {offsets = [19, 0], sizes = [1, 32], strides = [1, 1]} : vector<40x128xf32> to vector<1x32xf32>
    %10 = vector.extract_strided_slice %4 {offsets = [20, 0], sizes = [1, 32], strides = [1, 1]} : vector<40x128xf32> to vector<1x32xf32>
    %11 = vector.extract_strided_slice %4 {offsets = [21, 0], sizes = [1, 128], strides = [1, 1]} : vector<40x128xf32> to vector<1x128xf32>
    %12 = vector.extract_strided_slice %4 {offsets = [22, 0], sizes = [1, 128], strides = [1, 1]} : vector<40x128xf32> to vector<1x128xf32>
    %13 = vector.extract_strided_slice %4 {offsets = [24, 0], sizes = [16, 16], strides = [1, 1]} : vector<40x128xf32> to vector<16x16xf32>
    %14 = tpu.iota {dimensions = array<i32: 1>} : vector<16x128xi32>
    %15 = vector.broadcast %1 : vector<16x1xi32> to vector<16x128xi32>
    %16 = arith.cmpi eq, %14, %15 : vector<16x128xi32>
    %17 = arith.extui %16 : vector<16x128xi1> to vector<16x128xi32>
    %18 = arith.sitofp %17 : vector<16x128xi32> to vector<16x128xf32>
    %c0_3 = arith.constant 0 : index
    %c0_4 = arith.constant 0 : index
    %19 = vector.load %arg2[%c0_3, %c0_4] : memref<128x32xf32, #tpu.memory_space<vmem>>, vector<128x32xf32>
    %cst = arith.constant dense<0.000000e+00> : vector<16x32xf32>
    %20 = tpu.matmul %18, %19, %cst {dimension_numbers = #tpu.dot_dimension_numbers<[1], [0], [0], [1], [0, 0, 1, 1], [], []>} : vector<16x128xf32>, vector<128x32xf32>, vector<16x32xf32> -> vector<16x32xf32>
    %21 = arith.subf %7, %6 : vector<1x32xf32>
    %22 = vector.broadcast %3 : vector<16x1xf32> to vector<16x32xf32>
    %23 = vector.broadcast %21 : vector<1x32xf32> to vector<16x32xf32>
    %24 = arith.mulf %22, %23 : vector<16x32xf32>
    %25 = vector.broadcast %6 : vector<1x32xf32> to vector<16x32xf32>
    %26 = arith.addf %25, %24 : vector<16x32xf32>
    %27 = arith.addf %20, %5 : vector<16x32xf32>
    %28 = arith.addf %27, %26 : vector<16x32xf32>
    %cst_5 = arith.constant dense<0.000000e+00> : vector<16xf32>
    %29 = vector.multi_reduction <add>, %28, %cst_5 [1] : vector<16x32xf32> to vector<16xf32>
    %30 = vector.shape_cast %29 : vector<16xf32> to vector<16x1xf32>
    %cst_6 = arith.constant 3.200000e+01 : f32
    %31 = vector.broadcast %cst_6 : f32 to vector<16x1xf32>
    %32 = arith.divf %30, %31 : vector<16x1xf32>
    %33 = arith.mulf %28, %28 : vector<16x32xf32>
    %cst_7 = arith.constant dense<0.000000e+00> : vector<16xf32>
    %34 = vector.multi_reduction <add>, %33, %cst_7 [1] : vector<16x32xf32> to vector<16xf32>
    %35 = vector.shape_cast %34 : vector<16xf32> to vector<16x1xf32>
    %cst_8 = arith.constant 3.200000e+01 : f32
    %36 = vector.broadcast %cst_8 : f32 to vector<16x1xf32>
    %37 = arith.divf %35, %36 : vector<16x1xf32>
    %38 = arith.mulf %32, %32 : vector<16x1xf32>
    %39 = arith.subf %37, %38 : vector<16x1xf32>
    %cst_9 = arith.constant 0.000000e+00 : f32
    %40 = vector.broadcast %cst_9 : f32 to vector<16x1xf32>
    %41 = arith.maximumf %39, %40 : vector<16x1xf32>
    %42 = vector.broadcast %32 : vector<16x1xf32> to vector<16x32xf32>
    %43 = arith.subf %28, %42 : vector<16x32xf32>
    %cst_10 = arith.constant 9.99999996E-13 : f32
    %44 = vector.broadcast %cst_10 : f32 to vector<16x1xf32>
    %45 = arith.addf %41, %44 : vector<16x1xf32>
    %46 = math.rsqrt %45 : vector<16x1xf32>
    %47 = vector.broadcast %46 : vector<16x1xf32> to vector<16x32xf32>
    %48 = arith.mulf %43, %47 : vector<16x32xf32>
    %49 = vector.broadcast %8 : vector<1x32xf32> to vector<16x32xf32>
    %50 = arith.mulf %48, %49 : vector<16x32xf32>
    %51 = vector.broadcast %9 : vector<1x32xf32> to vector<16x32xf32>
    %52 = arith.addf %50, %51 : vector<16x32xf32>
    %c0_11 = arith.constant 0 : index
    %c0_12 = arith.constant 0 : index
    %53 = vector.load %arg1[%c0_11, %c0_12] : memref<1x16xf32, #tpu.memory_space<vmem>>, vector<1x16xf32>
    %cst_13 = arith.constant 1.000000e+00 : f32
    %54 = vector.broadcast %cst_13 : f32 to vector<1x16xf32>
    %55 = arith.subf %54, %53 : vector<1x16xf32>
    %cst_14 = arith.constant -1.000000e+09 : f32
    %56 = vector.broadcast %cst_14 : f32 to vector<1x16xf32>
    %57 = arith.mulf %55, %56 : vector<1x16xf32>
    %58 = vector.broadcast %57 : vector<1x16xf32> to vector<16x16xf32>
    %59 = arith.addf %13, %58 : vector<16x16xf32>
    %c0_15 = arith.constant 0 : index
    %c0_16 = arith.constant 0 : index
    %c0_17 = arith.constant 0 : index
    %60 = vector.load %arg8[%c0_15, %c0_16, %c0_17] : memref<2x24x64xf32, #tpu.memory_space<vmem>>, vector<1x24x64xf32>
    %61 = vector.shape_cast %60 : vector<1x24x64xf32> to vector<24x64xf32>
    %62 = vector.extract_strided_slice %61 {offsets = [12, 0], sizes = [1, 32], strides = [1, 1]} : vector<24x64xf32> to vector<1x32xf32>
    %63 = vector.extract_strided_slice %61 {offsets = [13, 0], sizes = [1, 32], strides = [1, 1]} : vector<24x64xf32> to vector<1x32xf32>
    %64 = vector.extract_strided_slice %61 {offsets = [14, 0], sizes = [1, 32], strides = [1, 1]} : vector<24x64xf32> to vector<1x32xf32>
    %65 = vector.extract_strided_slice %61 {offsets = [15, 0], sizes = [1, 64], strides = [1, 1]} : vector<24x64xf32> to vector<1x64xf32>
    %66 = vector.extract_strided_slice %61 {offsets = [16, 0], sizes = [1, 32], strides = [1, 1]} : vector<24x64xf32> to vector<1x32xf32>
    %67 = vector.extract_strided_slice %61 {offsets = [17, 0], sizes = [1, 32], strides = [1, 1]} : vector<24x64xf32> to vector<1x32xf32>
    %68 = vector.extract_strided_slice %61 {offsets = [18, 0], sizes = [1, 32], strides = [1, 1]} : vector<24x64xf32> to vector<1x32xf32>
    %c0_18 = arith.constant 0 : index
    %c0_19 = arith.constant 0 : index
    %c0_20 = arith.constant 0 : index
    %69 = vector.load %arg4[%c0_18, %c0_19, %c0_20] : memref<24x32x8xf32, #tpu.memory_space<vmem>>, vector<1x32x8xf32>
    %70 = vector.shape_cast %69 : vector<1x32x8xf32> to vector<32x8xf32>
    %c4 = arith.constant 4 : index
    %c0_21 = arith.constant 0 : index
    %c0_22 = arith.constant 0 : index
    %71 = vector.load %arg4[%c4, %c0_21, %c0_22] : memref<24x32x8xf32, #tpu.memory_space<vmem>>, vector<1x32x8xf32>
    %72 = vector.shape_cast %71 : vector<1x32x8xf32> to vector<32x8xf32>
    %c8 = arith.constant 8 : index
    %c0_23 = arith.constant 0 : index
    %c0_24 = arith.constant 0 : index
    %73 = vector.load %arg4[%c8, %c0_23, %c0_24] : memref<24x32x8xf32, #tpu.memory_space<vmem>>, vector<1x32x8xf32>
    %74 = vector.shape_cast %73 : vector<1x32x8xf32> to vector<32x8xf32>
    %75 = vector.extract_strided_slice %61 {offsets = [0, 0], sizes = [1, 8], strides = [1, 1]} : vector<24x64xf32> to vector<1x8xf32>
    %76 = vector.extract_strided_slice %61 {offsets = [4, 0], sizes = [1, 8], strides = [1, 1]} : vector<24x64xf32> to vector<1x8xf32>
    %77 = vector.extract_strided_slice %61 {offsets = [8, 0], sizes = [1, 8], strides = [1, 1]} : vector<24x64xf32> to vector<1x8xf32>
    %cst_25 = arith.constant dense<0.000000e+00> : vector<16x8xf32>
    %78 = tpu.matmul %52, %70, %cst_25 {dimension_numbers = #tpu.dot_dimension_numbers<[1], [0], [0], [1], [0, 0, 1, 1], [], []>} : vector<16x32xf32>, vector<32x8xf32>, vector<16x8xf32> -> vector<16x8xf32>
    %79 = vector.broadcast %75 : vector<1x8xf32> to vector<16x8xf32>
    %80 = arith.addf %78, %79 : vector<16x8xf32>
    %cst_26 = arith.constant dense<0.000000e+00> : vector<16x8xf32>
    %81 = tpu.matmul %52, %72, %cst_26 {dimension_numbers = #tpu.dot_dimension_numbers<[1], [0], [0], [1], [0, 0, 1, 1], [], []>} : vector<16x32xf32>, vector<32x8xf32>, vector<16x8xf32> -> vector<16x8xf32>
    %82 = vector.broadcast %76 : vector<1x8xf32> to vector<16x8xf32>
    %83 = arith.addf %81, %82 : vector<16x8xf32>
    %cst_27 = arith.constant dense<0.000000e+00> : vector<16x8xf32>
    %84 = tpu.matmul %52, %74, %cst_27 {dimension_numbers = #tpu.dot_dimension_numbers<[1], [0], [0], [1], [0, 0, 1, 1], [], []>} : vector<16x32xf32>, vector<32x8xf32>, vector<16x8xf32> -> vector<16x8xf32>
    %85 = vector.broadcast %77 : vector<1x8xf32> to vector<16x8xf32>
    %86 = arith.addf %84, %85 : vector<16x8xf32>
    %cst_28 = arith.constant dense<0.000000e+00> : vector<16x16xf32>
    %87 = tpu.matmul %80, %83, %cst_28 {dimension_numbers = #tpu.dot_dimension_numbers<[1], [1], [0], [0], [0, 0, 1, 0], [], []>} : vector<16x8xf32>, vector<16x8xf32>, vector<16x16xf32> -> vector<16x16xf32>
    %cst_29 = arith.constant 0.353553385 : f32
    %88 = vector.broadcast %cst_29 : f32 to vector<16x16xf32>
    %89 = arith.mulf %87, %88 : vector<16x16xf32>
    %90 = arith.addf %89, %59 : vector<16x16xf32>
    %cst_30 = arith.constant dense<0xFF800000> : vector<16xf32>
    %91 = vector.multi_reduction <maximumf>, %90, %cst_30 [1] : vector<16x16xf32> to vector<16xf32>
    %92 = vector.shape_cast %91 : vector<16xf32> to vector<16x1xf32>
    %93 = vector.broadcast %92 : vector<16x1xf32> to vector<16x16xf32>
    %94 = arith.subf %90, %93 : vector<16x16xf32>
    %95 = math.exp %94 : vector<16x16xf32>
    %cst_31 = arith.constant dense<0.000000e+00> : vector<16xf32>
    %96 = vector.multi_reduction <add>, %95, %cst_31 [1] : vector<16x16xf32> to vector<16xf32>
    %97 = vector.shape_cast %96 : vector<16xf32> to vector<16x1xf32>
    %98 = tpu.reciprocal %97 {approx = true} : vector<16x1xf32> -> vector<16x1xf32>
    %99 = vector.broadcast %98 : vector<16x1xf32> to vector<16x16xf32>
    %100 = arith.mulf %95, %99 : vector<16x16xf32>
    %cst_32 = arith.constant dense<0.000000e+00> : vector<16x8xf32>
    %101 = tpu.matmul %100, %86, %cst_32 {dimension_numbers = #tpu.dot_dimension_numbers<[1], [0], [0], [1], [0, 0, 1, 1], [], []>} : vector<16x16xf32>, vector<16x8xf32>, vector<16x8xf32> -> vector<16x8xf32>
    %c0_33 = arith.constant 0 : index
    %c0_34 = arith.constant 0 : index
    %c0_35 = arith.constant 0 : index
    %102 = vector.load %arg5[%c0_33, %c0_34, %c0_35] : memref<8x8x32xf32, #tpu.memory_space<vmem>>, vector<1x8x32xf32>
    %103 = vector.shape_cast %102 : vector<1x8x32xf32> to vector<8x32xf32>
    %cst_36 = arith.constant dense<0.000000e+00> : vector<16x32xf32>
    %104 = tpu.matmul %101, %103, %cst_36 {dimension_numbers = #tpu.dot_dimension_numbers<[1], [0], [0], [1], [0, 0, 1, 1], [], []>} : vector<16x8xf32>, vector<8x32xf32>, vector<16x32xf32> -> vector<16x32xf32>
    %c1 = arith.constant 1 : index
    %c0_37 = arith.constant 0 : index
    %c0_38 = arith.constant 0 : index
    %105 = vector.load %arg4[%c1, %c0_37, %c0_38] : memref<24x32x8xf32, #tpu.memory_space<vmem>>, vector<1x32x8xf32>
    %106 = vector.shape_cast %105 : vector<1x32x8xf32> to vector<32x8xf32>
    %c5 = arith.constant 5 : index
    %c0_39 = arith.constant 0 : index
    %c0_40 = arith.constant 0 : index
    %107 = vector.load %arg4[%c5, %c0_39, %c0_40] : memref<24x32x8xf32, #tpu.memory_space<vmem>>, vector<1x32x8xf32>
    %108 = vector.shape_cast %107 : vector<1x32x8xf32> to vector<32x8xf32>
    %c9 = arith.constant 9 : index
    %c0_41 = arith.constant 0 : index
    %c0_42 = arith.constant 0 : index
    %109 = vector.load %arg4[%c9, %c0_41, %c0_42] : memref<24x32x8xf32, #tpu.memory_space<vmem>>, vector<1x32x8xf32>
    %110 = vector.shape_cast %109 : vector<1x32x8xf32> to vector<32x8xf32>
    %111 = vector.extract_strided_slice %61 {offsets = [1, 0], sizes = [1, 8], strides = [1, 1]} : vector<24x64xf32> to vector<1x8xf32>
    %112 = vector.extract_strided_slice %61 {offsets = [5, 0], sizes = [1, 8], strides = [1, 1]} : vector<24x64xf32> to vector<1x8xf32>
    %113 = vector.extract_strided_slice %61 {offsets = [9, 0], sizes = [1, 8], strides = [1, 1]} : vector<24x64xf32> to vector<1x8xf32>
    %cst_43 = arith.constant dense<0.000000e+00> : vector<16x8xf32>
    %114 = tpu.matmul %52, %106, %cst_43 {dimension_numbers = #tpu.dot_dimension_numbers<[1], [0], [0], [1], [0, 0, 1, 1], [], []>} : vector<16x32xf32>, vector<32x8xf32>, vector<16x8xf32> -> vector<16x8xf32>
    %115 = vector.broadcast %111 : vector<1x8xf32> to vector<16x8xf32>
    %116 = arith.addf %114, %115 : vector<16x8xf32>
    %cst_44 = arith.constant dense<0.000000e+00> : vector<16x8xf32>
    %117 = tpu.matmul %52, %108, %cst_44 {dimension_numbers = #tpu.dot_dimension_numbers<[1], [0], [0], [1], [0, 0, 1, 1], [], []>} : vector<16x32xf32>, vector<32x8xf32>, vector<16x8xf32> -> vector<16x8xf32>
    %118 = vector.broadcast %112 : vector<1x8xf32> to vector<16x8xf32>
    %119 = arith.addf %117, %118 : vector<16x8xf32>
    %cst_45 = arith.constant dense<0.000000e+00> : vector<16x8xf32>
    %120 = tpu.matmul %52, %110, %cst_45 {dimension_numbers = #tpu.dot_dimension_numbers<[1], [0], [0], [1], [0, 0, 1, 1], [], []>} : vector<16x32xf32>, vector<32x8xf32>, vector<16x8xf32> -> vector<16x8xf32>
    %121 = vector.broadcast %113 : vector<1x8xf32> to vector<16x8xf32>
    %122 = arith.addf %120, %121 : vector<16x8xf32>
    %cst_46 = arith.constant dense<0.000000e+00> : vector<16x16xf32>
    %123 = tpu.matmul %116, %119, %cst_46 {dimension_numbers = #tpu.dot_dimension_numbers<[1], [1], [0], [0], [0, 0, 1, 0], [], []>} : vector<16x8xf32>, vector<16x8xf32>, vector<16x16xf32> -> vector<16x16xf32>
    %cst_47 = arith.constant 0.353553385 : f32
    %124 = vector.broadcast %cst_47 : f32 to vector<16x16xf32>
    %125 = arith.mulf %123, %124 : vector<16x16xf32>
    %126 = arith.addf %125, %59 : vector<16x16xf32>
    %cst_48 = arith.constant dense<0xFF800000> : vector<16xf32>
    %127 = vector.multi_reduction <maximumf>, %126, %cst_48 [1] : vector<16x16xf32> to vector<16xf32>
    %128 = vector.shape_cast %127 : vector<16xf32> to vector<16x1xf32>
    %129 = vector.broadcast %128 : vector<16x1xf32> to vector<16x16xf32>
    %130 = arith.subf %126, %129 : vector<16x16xf32>
    %131 = math.exp %130 : vector<16x16xf32>
    %cst_49 = arith.constant dense<0.000000e+00> : vector<16xf32>
    %132 = vector.multi_reduction <add>, %131, %cst_49 [1] : vector<16x16xf32> to vector<16xf32>
    %133 = vector.shape_cast %132 : vector<16xf32> to vector<16x1xf32>
    %134 = tpu.reciprocal %133 {approx = true} : vector<16x1xf32> -> vector<16x1xf32>
    %135 = vector.broadcast %134 : vector<16x1xf32> to vector<16x16xf32>
    %136 = arith.mulf %131, %135 : vector<16x16xf32>
    %cst_50 = arith.constant dense<0.000000e+00> : vector<16x8xf32>
    %137 = tpu.matmul %136, %122, %cst_50 {dimension_numbers = #tpu.dot_dimension_numbers<[1], [0], [0], [1], [0, 0, 1, 1], [], []>} : vector<16x16xf32>, vector<16x8xf32>, vector<16x8xf32> -> vector<16x8xf32>
    %c1_51 = arith.constant 1 : index
    %c0_52 = arith.constant 0 : index
    %c0_53 = arith.constant 0 : index
    %138 = vector.load %arg5[%c1_51, %c0_52, %c0_53] : memref<8x8x32xf32, #tpu.memory_space<vmem>>, vector<1x8x32xf32>
    %139 = vector.shape_cast %138 : vector<1x8x32xf32> to vector<8x32xf32>
    %cst_54 = arith.constant dense<0.000000e+00> : vector<16x32xf32>
    %140 = tpu.matmul %137, %139, %cst_54 {dimension_numbers = #tpu.dot_dimension_numbers<[1], [0], [0], [1], [0, 0, 1, 1], [], []>} : vector<16x8xf32>, vector<8x32xf32>, vector<16x32xf32> -> vector<16x32xf32>
    %141 = arith.addf %104, %140 : vector<16x32xf32>
    %c2 = arith.constant 2 : index
    %c0_55 = arith.constant 0 : index
    %c0_56 = arith.constant 0 : index
    %142 = vector.load %arg4[%c2, %c0_55, %c0_56] : memref<24x32x8xf32, #tpu.memory_space<vmem>>, vector<1x32x8xf32>
    %143 = vector.shape_cast %142 : vector<1x32x8xf32> to vector<32x8xf32>
    %c6 = arith.constant 6 : index
    %c0_57 = arith.constant 0 : index
    %c0_58 = arith.constant 0 : index
    %144 = vector.load %arg4[%c6, %c0_57, %c0_58] : memref<24x32x8xf32, #tpu.memory_space<vmem>>, vector<1x32x8xf32>
    %145 = vector.shape_cast %144 : vector<1x32x8xf32> to vector<32x8xf32>
    %c10 = arith.constant 10 : index
    %c0_59 = arith.constant 0 : index
    %c0_60 = arith.constant 0 : index
    %146 = vector.load %arg4[%c10, %c0_59, %c0_60] : memref<24x32x8xf32, #tpu.memory_space<vmem>>, vector<1x32x8xf32>
    %147 = vector.shape_cast %146 : vector<1x32x8xf32> to vector<32x8xf32>
    %148 = vector.extract_strided_slice %61 {offsets = [2, 0], sizes = [1, 8], strides = [1, 1]} : vector<24x64xf32> to vector<1x8xf32>
    %149 = vector.extract_strided_slice %61 {offsets = [6, 0], sizes = [1, 8], strides = [1, 1]} : vector<24x64xf32> to vector<1x8xf32>
    %150 = vector.extract_strided_slice %61 {offsets = [10, 0], sizes = [1, 8], strides = [1, 1]} : vector<24x64xf32> to vector<1x8xf32>
    %cst_61 = arith.constant dense<0.000000e+00> : vector<16x8xf32>
    %151 = tpu.matmul %52, %143, %cst_61 {dimension_numbers = #tpu.dot_dimension_numbers<[1], [0], [0], [1], [0, 0, 1, 1], [], []>} : vector<16x32xf32>, vector<32x8xf32>, vector<16x8xf32> -> vector<16x8xf32>
    %152 = vector.broadcast %148 : vector<1x8xf32> to vector<16x8xf32>
    %153 = arith.addf %151, %152 : vector<16x8xf32>
    %cst_62 = arith.constant dense<0.000000e+00> : vector<16x8xf32>
    %154 = tpu.matmul %52, %145, %cst_62 {dimension_numbers = #tpu.dot_dimension_numbers<[1], [0], [0], [1], [0, 0, 1, 1], [], []>} : vector<16x32xf32>, vector<32x8xf32>, vector<16x8xf32> -> vector<16x8xf32>
    %155 = vector.broadcast %149 : vector<1x8xf32> to vector<16x8xf32>
    %156 = arith.addf %154, %155 : vector<16x8xf32>
    %cst_63 = arith.constant dense<0.000000e+00> : vector<16x8xf32>
    %157 = tpu.matmul %52, %147, %cst_63 {dimension_numbers = #tpu.dot_dimension_numbers<[1], [0], [0], [1], [0, 0, 1, 1], [], []>} : vector<16x32xf32>, vector<32x8xf32>, vector<16x8xf32> -> vector<16x8xf32>
    %158 = vector.broadcast %150 : vector<1x8xf32> to vector<16x8xf32>
    %159 = arith.addf %157, %158 : vector<16x8xf32>
    %cst_64 = arith.constant dense<0.000000e+00> : vector<16x16xf32>
    %160 = tpu.matmul %153, %156, %cst_64 {dimension_numbers = #tpu.dot_dimension_numbers<[1], [1], [0], [0], [0, 0, 1, 0], [], []>} : vector<16x8xf32>, vector<16x8xf32>, vector<16x16xf32> -> vector<16x16xf32>
    %cst_65 = arith.constant 0.353553385 : f32
    %161 = vector.broadcast %cst_65 : f32 to vector<16x16xf32>
    %162 = arith.mulf %160, %161 : vector<16x16xf32>
    %163 = arith.addf %162, %59 : vector<16x16xf32>
    %cst_66 = arith.constant dense<0xFF800000> : vector<16xf32>
    %164 = vector.multi_reduction <maximumf>, %163, %cst_66 [1] : vector<16x16xf32> to vector<16xf32>
    %165 = vector.shape_cast %164 : vector<16xf32> to vector<16x1xf32>
    %166 = vector.broadcast %165 : vector<16x1xf32> to vector<16x16xf32>
    %167 = arith.subf %163, %166 : vector<16x16xf32>
    %168 = math.exp %167 : vector<16x16xf32>
    %cst_67 = arith.constant dense<0.000000e+00> : vector<16xf32>
    %169 = vector.multi_reduction <add>, %168, %cst_67 [1] : vector<16x16xf32> to vector<16xf32>
    %170 = vector.shape_cast %169 : vector<16xf32> to vector<16x1xf32>
    %171 = tpu.reciprocal %170 {approx = true} : vector<16x1xf32> -> vector<16x1xf32>
    %172 = vector.broadcast %171 : vector<16x1xf32> to vector<16x16xf32>
    %173 = arith.mulf %168, %172 : vector<16x16xf32>
    %cst_68 = arith.constant dense<0.000000e+00> : vector<16x8xf32>
    %174 = tpu.matmul %173, %159, %cst_68 {dimension_numbers = #tpu.dot_dimension_numbers<[1], [0], [0], [1], [0, 0, 1, 1], [], []>} : vector<16x16xf32>, vector<16x8xf32>, vector<16x8xf32> -> vector<16x8xf32>
    %c2_69 = arith.constant 2 : index
    %c0_70 = arith.constant 0 : index
    %c0_71 = arith.constant 0 : index
    %175 = vector.load %arg5[%c2_69, %c0_70, %c0_71] : memref<8x8x32xf32, #tpu.memory_space<vmem>>, vector<1x8x32xf32>
    %176 = vector.shape_cast %175 : vector<1x8x32xf32> to vector<8x32xf32>
    %cst_72 = arith.constant dense<0.000000e+00> : vector<16x32xf32>
    %177 = tpu.matmul %174, %176, %cst_72 {dimension_numbers = #tpu.dot_dimension_numbers<[1], [0], [0], [1], [0, 0, 1, 1], [], []>} : vector<16x8xf32>, vector<8x32xf32>, vector<16x32xf32> -> vector<16x32xf32>
    %178 = arith.addf %141, %177 : vector<16x32xf32>
    %c3 = arith.constant 3 : index
    %c0_73 = arith.constant 0 : index
    %c0_74 = arith.constant 0 : index
    %179 = vector.load %arg4[%c3, %c0_73, %c0_74] : memref<24x32x8xf32, #tpu.memory_space<vmem>>, vector<1x32x8xf32>
    %180 = vector.shape_cast %179 : vector<1x32x8xf32> to vector<32x8xf32>
    %c7 = arith.constant 7 : index
    %c0_75 = arith.constant 0 : index
    %c0_76 = arith.constant 0 : index
    %181 = vector.load %arg4[%c7, %c0_75, %c0_76] : memref<24x32x8xf32, #tpu.memory_space<vmem>>, vector<1x32x8xf32>
    %182 = vector.shape_cast %181 : vector<1x32x8xf32> to vector<32x8xf32>
    %c11 = arith.constant 11 : index
    %c0_77 = arith.constant 0 : index
    %c0_78 = arith.constant 0 : index
    %183 = vector.load %arg4[%c11, %c0_77, %c0_78] : memref<24x32x8xf32, #tpu.memory_space<vmem>>, vector<1x32x8xf32>
    %184 = vector.shape_cast %183 : vector<1x32x8xf32> to vector<32x8xf32>
    %185 = vector.extract_strided_slice %61 {offsets = [3, 0], sizes = [1, 8], strides = [1, 1]} : vector<24x64xf32> to vector<1x8xf32>
    %186 = vector.extract_strided_slice %61 {offsets = [7, 0], sizes = [1, 8], strides = [1, 1]} : vector<24x64xf32> to vector<1x8xf32>
    %187 = vector.extract_strided_slice %61 {offsets = [11, 0], sizes = [1, 8], strides = [1, 1]} : vector<24x64xf32> to vector<1x8xf32>
    %cst_79 = arith.constant dense<0.000000e+00> : vector<16x8xf32>
    %188 = tpu.matmul %52, %180, %cst_79 {dimension_numbers = #tpu.dot_dimension_numbers<[1], [0], [0], [1], [0, 0, 1, 1], [], []>} : vector<16x32xf32>, vector<32x8xf32>, vector<16x8xf32> -> vector<16x8xf32>
    %189 = vector.broadcast %185 : vector<1x8xf32> to vector<16x8xf32>
    %190 = arith.addf %188, %189 : vector<16x8xf32>
    %cst_80 = arith.constant dense<0.000000e+00> : vector<16x8xf32>
    %191 = tpu.matmul %52, %182, %cst_80 {dimension_numbers = #tpu.dot_dimension_numbers<[1], [0], [0], [1], [0, 0, 1, 1], [], []>} : vector<16x32xf32>, vector<32x8xf32>, vector<16x8xf32> -> vector<16x8xf32>
    %192 = vector.broadcast %186 : vector<1x8xf32> to vector<16x8xf32>
    %193 = arith.addf %191, %192 : vector<16x8xf32>
    %cst_81 = arith.constant dense<0.000000e+00> : vector<16x8xf32>
    %194 = tpu.matmul %52, %184, %cst_81 {dimension_numbers = #tpu.dot_dimension_numbers<[1], [0], [0], [1], [0, 0, 1, 1], [], []>} : vector<16x32xf32>, vector<32x8xf32>, vector<16x8xf32> -> vector<16x8xf32>
    %195 = vector.broadcast %187 : vector<1x8xf32> to vector<16x8xf32>
    %196 = arith.addf %194, %195 : vector<16x8xf32>
    %cst_82 = arith.constant dense<0.000000e+00> : vector<16x16xf32>
    %197 = tpu.matmul %190, %193, %cst_82 {dimension_numbers = #tpu.dot_dimension_numbers<[1], [1], [0], [0], [0, 0, 1, 0], [], []>} : vector<16x8xf32>, vector<16x8xf32>, vector<16x16xf32> -> vector<16x16xf32>
    %cst_83 = arith.constant 0.353553385 : f32
    %198 = vector.broadcast %cst_83 : f32 to vector<16x16xf32>
    %199 = arith.mulf %197, %198 : vector<16x16xf32>
    %200 = arith.addf %199, %59 : vector<16x16xf32>
    %cst_84 = arith.constant dense<0xFF800000> : vector<16xf32>
    %201 = vector.multi_reduction <maximumf>, %200, %cst_84 [1] : vector<16x16xf32> to vector<16xf32>
    %202 = vector.shape_cast %201 : vector<16xf32> to vector<16x1xf32>
    %203 = vector.broadcast %202 : vector<16x1xf32> to vector<16x16xf32>
    %204 = arith.subf %200, %203 : vector<16x16xf32>
    %205 = math.exp %204 : vector<16x16xf32>
    %cst_85 = arith.constant dense<0.000000e+00> : vector<16xf32>
    %206 = vector.multi_reduction <add>, %205, %cst_85 [1] : vector<16x16xf32> to vector<16xf32>
    %207 = vector.shape_cast %206 : vector<16xf32> to vector<16x1xf32>
    %208 = tpu.reciprocal %207 {approx = true} : vector<16x1xf32> -> vector<16x1xf32>
    %209 = vector.broadcast %208 : vector<16x1xf32> to vector<16x16xf32>
    %210 = arith.mulf %205, %209 : vector<16x16xf32>
    %cst_86 = arith.constant dense<0.000000e+00> : vector<16x8xf32>
    %211 = tpu.matmul %210, %196, %cst_86 {dimension_numbers = #tpu.dot_dimension_numbers<[1], [0], [0], [1], [0, 0, 1, 1], [], []>} : vector<16x16xf32>, vector<16x8xf32>, vector<16x8xf32> -> vector<16x8xf32>
    %c3_87 = arith.constant 3 : index
    %c0_88 = arith.constant 0 : index
    %c0_89 = arith.constant 0 : index
    %212 = vector.load %arg5[%c3_87, %c0_88, %c0_89] : memref<8x8x32xf32, #tpu.memory_space<vmem>>, vector<1x8x32xf32>
    %213 = vector.shape_cast %212 : vector<1x8x32xf32> to vector<8x32xf32>
    %cst_90 = arith.constant dense<0.000000e+00> : vector<16x32xf32>
    %214 = tpu.matmul %211, %213, %cst_90 {dimension_numbers = #tpu.dot_dimension_numbers<[1], [0], [0], [1], [0, 0, 1, 1], [], []>} : vector<16x8xf32>, vector<8x32xf32>, vector<16x32xf32> -> vector<16x32xf32>
    %215 = arith.addf %178, %214 : vector<16x32xf32>
    %216 = arith.addf %52, %215 : vector<16x32xf32>
    %217 = vector.broadcast %62 : vector<1x32xf32> to vector<16x32xf32>
    %218 = arith.addf %216, %217 : vector<16x32xf32>
    %cst_91 = arith.constant dense<0.000000e+00> : vector<16xf32>
    %219 = vector.multi_reduction <add>, %218, %cst_91 [1] : vector<16x32xf32> to vector<16xf32>
    %220 = vector.shape_cast %219 : vector<16xf32> to vector<16x1xf32>
    %cst_92 = arith.constant 3.200000e+01 : f32
    %221 = vector.broadcast %cst_92 : f32 to vector<16x1xf32>
    %222 = arith.divf %220, %221 : vector<16x1xf32>
    %223 = arith.mulf %218, %218 : vector<16x32xf32>
    %cst_93 = arith.constant dense<0.000000e+00> : vector<16xf32>
    %224 = vector.multi_reduction <add>, %223, %cst_93 [1] : vector<16x32xf32> to vector<16xf32>
    %225 = vector.shape_cast %224 : vector<16xf32> to vector<16x1xf32>
    %cst_94 = arith.constant 3.200000e+01 : f32
    %226 = vector.broadcast %cst_94 : f32 to vector<16x1xf32>
    %227 = arith.divf %225, %226 : vector<16x1xf32>
    %228 = arith.mulf %222, %222 : vector<16x1xf32>
    %229 = arith.subf %227, %228 : vector<16x1xf32>
    %cst_95 = arith.constant 0.000000e+00 : f32
    %230 = vector.broadcast %cst_95 : f32 to vector<16x1xf32>
    %231 = arith.maximumf %229, %230 : vector<16x1xf32>
    %232 = vector.broadcast %222 : vector<16x1xf32> to vector<16x32xf32>
    %233 = arith.subf %218, %232 : vector<16x32xf32>
    %cst_96 = arith.constant 9.99999996E-13 : f32
    %234 = vector.broadcast %cst_96 : f32 to vector<16x1xf32>
    %235 = arith.addf %231, %234 : vector<16x1xf32>
    %236 = math.rsqrt %235 : vector<16x1xf32>
    %237 = vector.broadcast %236 : vector<16x1xf32> to vector<16x32xf32>
    %238 = arith.mulf %233, %237 : vector<16x32xf32>
    %239 = vector.broadcast %63 : vector<1x32xf32> to vector<16x32xf32>
    %240 = arith.mulf %238, %239 : vector<16x32xf32>
    %241 = vector.broadcast %64 : vector<1x32xf32> to vector<16x32xf32>
    %242 = arith.addf %240, %241 : vector<16x32xf32>
    %c0_97 = arith.constant 0 : index
    %c0_98 = arith.constant 0 : index
    %c0_99 = arith.constant 0 : index
    %243 = vector.load %arg6[%c0_97, %c0_98, %c0_99] : memref<2x32x64xf32, #tpu.memory_space<vmem>>, vector<1x32x64xf32>
    %244 = vector.shape_cast %243 : vector<1x32x64xf32> to vector<32x64xf32>
    %cst_100 = arith.constant dense<0.000000e+00> : vector<16x64xf32>
    %245 = tpu.matmul %242, %244, %cst_100 {dimension_numbers = #tpu.dot_dimension_numbers<[1], [0], [0], [1], [0, 0, 1, 1], [], []>} : vector<16x32xf32>, vector<32x64xf32>, vector<16x64xf32> -> vector<16x64xf32>
    %246 = vector.broadcast %65 : vector<1x64xf32> to vector<16x64xf32>
    %247 = arith.addf %245, %246 : vector<16x64xf32>
    %cst_101 = arith.constant 5.000000e-01 : f32
    %248 = vector.broadcast %cst_101 : f32 to vector<16x64xf32>
    %249 = arith.mulf %248, %247 : vector<16x64xf32>
    %cst_102 = arith.constant 0.707106769 : f32
    %250 = vector.broadcast %cst_102 : f32 to vector<16x64xf32>
    %251 = arith.mulf %247, %250 : vector<16x64xf32>
    %252 = math.erf %251 : vector<16x64xf32>
    %cst_103 = arith.constant 1.000000e+00 : f32
    %253 = vector.broadcast %cst_103 : f32 to vector<16x64xf32>
    %254 = arith.addf %253, %252 : vector<16x64xf32>
    %255 = arith.mulf %249, %254 : vector<16x64xf32>
    %c0_104 = arith.constant 0 : index
    %c0_105 = arith.constant 0 : index
    %c0_106 = arith.constant 0 : index
    %256 = vector.load %arg7[%c0_104, %c0_105, %c0_106] : memref<2x64x32xf32, #tpu.memory_space<vmem>>, vector<1x64x32xf32>
    %257 = vector.shape_cast %256 : vector<1x64x32xf32> to vector<64x32xf32>
    %cst_107 = arith.constant dense<0.000000e+00> : vector<16x32xf32>
    %258 = tpu.matmul %255, %257, %cst_107 {dimension_numbers = #tpu.dot_dimension_numbers<[1], [0], [0], [1], [0, 0, 1, 1], [], []>} : vector<16x64xf32>, vector<64x32xf32>, vector<16x32xf32> -> vector<16x32xf32>
    %259 = vector.broadcast %66 : vector<1x32xf32> to vector<16x32xf32>
    %260 = arith.addf %258, %259 : vector<16x32xf32>
    %261 = arith.addf %242, %260 : vector<16x32xf32>
    %cst_108 = arith.constant dense<0.000000e+00> : vector<16xf32>
    %262 = vector.multi_reduction <add>, %261, %cst_108 [1] : vector<16x32xf32> to vector<16xf32>
    %263 = vector.shape_cast %262 : vector<16xf32> to vector<16x1xf32>
    %cst_109 = arith.constant 3.200000e+01 : f32
    %264 = vector.broadcast %cst_109 : f32 to vector<16x1xf32>
    %265 = arith.divf %263, %264 : vector<16x1xf32>
    %266 = arith.mulf %261, %261 : vector<16x32xf32>
    %cst_110 = arith.constant dense<0.000000e+00> : vector<16xf32>
    %267 = vector.multi_reduction <add>, %266, %cst_110 [1] : vector<16x32xf32> to vector<16xf32>
    %268 = vector.shape_cast %267 : vector<16xf32> to vector<16x1xf32>
    %cst_111 = arith.constant 3.200000e+01 : f32
    %269 = vector.broadcast %cst_111 : f32 to vector<16x1xf32>
    %270 = arith.divf %268, %269 : vector<16x1xf32>
    %271 = arith.mulf %265, %265 : vector<16x1xf32>
    %272 = arith.subf %270, %271 : vector<16x1xf32>
    %cst_112 = arith.constant 0.000000e+00 : f32
    %273 = vector.broadcast %cst_112 : f32 to vector<16x1xf32>
    %274 = arith.maximumf %272, %273 : vector<16x1xf32>
    %275 = vector.broadcast %265 : vector<16x1xf32> to vector<16x32xf32>
    %276 = arith.subf %261, %275 : vector<16x32xf32>
    %cst_113 = arith.constant 9.99999996E-13 : f32
    %277 = vector.broadcast %cst_113 : f32 to vector<16x1xf32>
    %278 = arith.addf %274, %277 : vector<16x1xf32>
    %279 = math.rsqrt %278 : vector<16x1xf32>
    %280 = vector.broadcast %279 : vector<16x1xf32> to vector<16x32xf32>
    %281 = arith.mulf %276, %280 : vector<16x32xf32>
    %282 = vector.broadcast %67 : vector<1x32xf32> to vector<16x32xf32>
    %283 = arith.mulf %281, %282 : vector<16x32xf32>
    %284 = vector.broadcast %68 : vector<1x32xf32> to vector<16x32xf32>
    %285 = arith.addf %283, %284 : vector<16x32xf32>
    %c1_114 = arith.constant 1 : index
    %c0_115 = arith.constant 0 : index
    %c0_116 = arith.constant 0 : index
    %286 = vector.load %arg8[%c1_114, %c0_115, %c0_116] : memref<2x24x64xf32, #tpu.memory_space<vmem>>, vector<1x24x64xf32>
    %287 = vector.shape_cast %286 : vector<1x24x64xf32> to vector<24x64xf32>
    %288 = vector.extract_strided_slice %287 {offsets = [12, 0], sizes = [1, 32], strides = [1, 1]} : vector<24x64xf32> to vector<1x32xf32>
    %289 = vector.extract_strided_slice %287 {offsets = [13, 0], sizes = [1, 32], strides = [1, 1]} : vector<24x64xf32> to vector<1x32xf32>
    %290 = vector.extract_strided_slice %287 {offsets = [14, 0], sizes = [1, 32], strides = [1, 1]} : vector<24x64xf32> to vector<1x32xf32>
    %291 = vector.extract_strided_slice %287 {offsets = [15, 0], sizes = [1, 64], strides = [1, 1]} : vector<24x64xf32> to vector<1x64xf32>
    %292 = vector.extract_strided_slice %287 {offsets = [16, 0], sizes = [1, 32], strides = [1, 1]} : vector<24x64xf32> to vector<1x32xf32>
    %293 = vector.extract_strided_slice %287 {offsets = [17, 0], sizes = [1, 32], strides = [1, 1]} : vector<24x64xf32> to vector<1x32xf32>
    %294 = vector.extract_strided_slice %287 {offsets = [18, 0], sizes = [1, 32], strides = [1, 1]} : vector<24x64xf32> to vector<1x32xf32>
    %c12 = arith.constant 12 : index
    %c0_117 = arith.constant 0 : index
    %c0_118 = arith.constant 0 : index
    %295 = vector.load %arg4[%c12, %c0_117, %c0_118] : memref<24x32x8xf32, #tpu.memory_space<vmem>>, vector<1x32x8xf32>
    %296 = vector.shape_cast %295 : vector<1x32x8xf32> to vector<32x8xf32>
    %c16 = arith.constant 16 : index
    %c0_119 = arith.constant 0 : index
    %c0_120 = arith.constant 0 : index
    %297 = vector.load %arg4[%c16, %c0_119, %c0_120] : memref<24x32x8xf32, #tpu.memory_space<vmem>>, vector<1x32x8xf32>
    %298 = vector.shape_cast %297 : vector<1x32x8xf32> to vector<32x8xf32>
    %c20 = arith.constant 20 : index
    %c0_121 = arith.constant 0 : index
    %c0_122 = arith.constant 0 : index
    %299 = vector.load %arg4[%c20, %c0_121, %c0_122] : memref<24x32x8xf32, #tpu.memory_space<vmem>>, vector<1x32x8xf32>
    %300 = vector.shape_cast %299 : vector<1x32x8xf32> to vector<32x8xf32>
    %301 = vector.extract_strided_slice %287 {offsets = [0, 0], sizes = [1, 8], strides = [1, 1]} : vector<24x64xf32> to vector<1x8xf32>
    %302 = vector.extract_strided_slice %287 {offsets = [4, 0], sizes = [1, 8], strides = [1, 1]} : vector<24x64xf32> to vector<1x8xf32>
    %303 = vector.extract_strided_slice %287 {offsets = [8, 0], sizes = [1, 8], strides = [1, 1]} : vector<24x64xf32> to vector<1x8xf32>
    %cst_123 = arith.constant dense<0.000000e+00> : vector<16x8xf32>
    %304 = tpu.matmul %285, %296, %cst_123 {dimension_numbers = #tpu.dot_dimension_numbers<[1], [0], [0], [1], [0, 0, 1, 1], [], []>} : vector<16x32xf32>, vector<32x8xf32>, vector<16x8xf32> -> vector<16x8xf32>
    %305 = vector.broadcast %301 : vector<1x8xf32> to vector<16x8xf32>
    %306 = arith.addf %304, %305 : vector<16x8xf32>
    %cst_124 = arith.constant dense<0.000000e+00> : vector<16x8xf32>
    %307 = tpu.matmul %285, %298, %cst_124 {dimension_numbers = #tpu.dot_dimension_numbers<[1], [0], [0], [1], [0, 0, 1, 1], [], []>} : vector<16x32xf32>, vector<32x8xf32>, vector<16x8xf32> -> vector<16x8xf32>
    %308 = vector.broadcast %302 : vector<1x8xf32> to vector<16x8xf32>
    %309 = arith.addf %307, %308 : vector<16x8xf32>
    %cst_125 = arith.constant dense<0.000000e+00> : vector<16x8xf32>
    %310 = tpu.matmul %285, %300, %cst_125 {dimension_numbers = #tpu.dot_dimension_numbers<[1], [0], [0], [1], [0, 0, 1, 1], [], []>} : vector<16x32xf32>, vector<32x8xf32>, vector<16x8xf32> -> vector<16x8xf32>
    %311 = vector.broadcast %303 : vector<1x8xf32> to vector<16x8xf32>
    %312 = arith.addf %310, %311 : vector<16x8xf32>
    %cst_126 = arith.constant dense<0.000000e+00> : vector<16x16xf32>
    %313 = tpu.matmul %306, %309, %cst_126 {dimension_numbers = #tpu.dot_dimension_numbers<[1], [1], [0], [0], [0, 0, 1, 0], [], []>} : vector<16x8xf32>, vector<16x8xf32>, vector<16x16xf32> -> vector<16x16xf32>
    %cst_127 = arith.constant 0.353553385 : f32
    %314 = vector.broadcast %cst_127 : f32 to vector<16x16xf32>
    %315 = arith.mulf %313, %314 : vector<16x16xf32>
    %316 = arith.addf %315, %59 : vector<16x16xf32>
    %cst_128 = arith.constant dense<0xFF800000> : vector<16xf32>
    %317 = vector.multi_reduction <maximumf>, %316, %cst_128 [1] : vector<16x16xf32> to vector<16xf32>
    %318 = vector.shape_cast %317 : vector<16xf32> to vector<16x1xf32>
    %319 = vector.broadcast %318 : vector<16x1xf32> to vector<16x16xf32>
    %320 = arith.subf %316, %319 : vector<16x16xf32>
    %321 = math.exp %320 : vector<16x16xf32>
    %cst_129 = arith.constant dense<0.000000e+00> : vector<16xf32>
    %322 = vector.multi_reduction <add>, %321, %cst_129 [1] : vector<16x16xf32> to vector<16xf32>
    %323 = vector.shape_cast %322 : vector<16xf32> to vector<16x1xf32>
    %324 = tpu.reciprocal %323 {approx = true} : vector<16x1xf32> -> vector<16x1xf32>
    %325 = vector.broadcast %324 : vector<16x1xf32> to vector<16x16xf32>
    %326 = arith.mulf %321, %325 : vector<16x16xf32>
    %cst_130 = arith.constant dense<0.000000e+00> : vector<16x8xf32>
    %327 = tpu.matmul %326, %312, %cst_130 {dimension_numbers = #tpu.dot_dimension_numbers<[1], [0], [0], [1], [0, 0, 1, 1], [], []>} : vector<16x16xf32>, vector<16x8xf32>, vector<16x8xf32> -> vector<16x8xf32>
    %c4_131 = arith.constant 4 : index
    %c0_132 = arith.constant 0 : index
    %c0_133 = arith.constant 0 : index
    %328 = vector.load %arg5[%c4_131, %c0_132, %c0_133] : memref<8x8x32xf32, #tpu.memory_space<vmem>>, vector<1x8x32xf32>
    %329 = vector.shape_cast %328 : vector<1x8x32xf32> to vector<8x32xf32>
    %cst_134 = arith.constant dense<0.000000e+00> : vector<16x32xf32>
    %330 = tpu.matmul %327, %329, %cst_134 {dimension_numbers = #tpu.dot_dimension_numbers<[1], [0], [0], [1], [0, 0, 1, 1], [], []>} : vector<16x8xf32>, vector<8x32xf32>, vector<16x32xf32> -> vector<16x32xf32>
    %c13 = arith.constant 13 : index
    %c0_135 = arith.constant 0 : index
    %c0_136 = arith.constant 0 : index
    %331 = vector.load %arg4[%c13, %c0_135, %c0_136] : memref<24x32x8xf32, #tpu.memory_space<vmem>>, vector<1x32x8xf32>
    %332 = vector.shape_cast %331 : vector<1x32x8xf32> to vector<32x8xf32>
    %c17 = arith.constant 17 : index
    %c0_137 = arith.constant 0 : index
    %c0_138 = arith.constant 0 : index
    %333 = vector.load %arg4[%c17, %c0_137, %c0_138] : memref<24x32x8xf32, #tpu.memory_space<vmem>>, vector<1x32x8xf32>
    %334 = vector.shape_cast %333 : vector<1x32x8xf32> to vector<32x8xf32>
    %c21 = arith.constant 21 : index
    %c0_139 = arith.constant 0 : index
    %c0_140 = arith.constant 0 : index
    %335 = vector.load %arg4[%c21, %c0_139, %c0_140] : memref<24x32x8xf32, #tpu.memory_space<vmem>>, vector<1x32x8xf32>
    %336 = vector.shape_cast %335 : vector<1x32x8xf32> to vector<32x8xf32>
    %337 = vector.extract_strided_slice %287 {offsets = [1, 0], sizes = [1, 8], strides = [1, 1]} : vector<24x64xf32> to vector<1x8xf32>
    %338 = vector.extract_strided_slice %287 {offsets = [5, 0], sizes = [1, 8], strides = [1, 1]} : vector<24x64xf32> to vector<1x8xf32>
    %339 = vector.extract_strided_slice %287 {offsets = [9, 0], sizes = [1, 8], strides = [1, 1]} : vector<24x64xf32> to vector<1x8xf32>
    %cst_141 = arith.constant dense<0.000000e+00> : vector<16x8xf32>
    %340 = tpu.matmul %285, %332, %cst_141 {dimension_numbers = #tpu.dot_dimension_numbers<[1], [0], [0], [1], [0, 0, 1, 1], [], []>} : vector<16x32xf32>, vector<32x8xf32>, vector<16x8xf32> -> vector<16x8xf32>
    %341 = vector.broadcast %337 : vector<1x8xf32> to vector<16x8xf32>
    %342 = arith.addf %340, %341 : vector<16x8xf32>
    %cst_142 = arith.constant dense<0.000000e+00> : vector<16x8xf32>
    %343 = tpu.matmul %285, %334, %cst_142 {dimension_numbers = #tpu.dot_dimension_numbers<[1], [0], [0], [1], [0, 0, 1, 1], [], []>} : vector<16x32xf32>, vector<32x8xf32>, vector<16x8xf32> -> vector<16x8xf32>
    %344 = vector.broadcast %338 : vector<1x8xf32> to vector<16x8xf32>
    %345 = arith.addf %343, %344 : vector<16x8xf32>
    %cst_143 = arith.constant dense<0.000000e+00> : vector<16x8xf32>
    %346 = tpu.matmul %285, %336, %cst_143 {dimension_numbers = #tpu.dot_dimension_numbers<[1], [0], [0], [1], [0, 0, 1, 1], [], []>} : vector<16x32xf32>, vector<32x8xf32>, vector<16x8xf32> -> vector<16x8xf32>
    %347 = vector.broadcast %339 : vector<1x8xf32> to vector<16x8xf32>
    %348 = arith.addf %346, %347 : vector<16x8xf32>
    %cst_144 = arith.constant dense<0.000000e+00> : vector<16x16xf32>
    %349 = tpu.matmul %342, %345, %cst_144 {dimension_numbers = #tpu.dot_dimension_numbers<[1], [1], [0], [0], [0, 0, 1, 0], [], []>} : vector<16x8xf32>, vector<16x8xf32>, vector<16x16xf32> -> vector<16x16xf32>
    %cst_145 = arith.constant 0.353553385 : f32
    %350 = vector.broadcast %cst_145 : f32 to vector<16x16xf32>
    %351 = arith.mulf %349, %350 : vector<16x16xf32>
    %352 = arith.addf %351, %59 : vector<16x16xf32>
    %cst_146 = arith.constant dense<0xFF800000> : vector<16xf32>
    %353 = vector.multi_reduction <maximumf>, %352, %cst_146 [1] : vector<16x16xf32> to vector<16xf32>
    %354 = vector.shape_cast %353 : vector<16xf32> to vector<16x1xf32>
    %355 = vector.broadcast %354 : vector<16x1xf32> to vector<16x16xf32>
    %356 = arith.subf %352, %355 : vector<16x16xf32>
    %357 = math.exp %356 : vector<16x16xf32>
    %cst_147 = arith.constant dense<0.000000e+00> : vector<16xf32>
    %358 = vector.multi_reduction <add>, %357, %cst_147 [1] : vector<16x16xf32> to vector<16xf32>
    %359 = vector.shape_cast %358 : vector<16xf32> to vector<16x1xf32>
    %360 = tpu.reciprocal %359 {approx = true} : vector<16x1xf32> -> vector<16x1xf32>
    %361 = vector.broadcast %360 : vector<16x1xf32> to vector<16x16xf32>
    %362 = arith.mulf %357, %361 : vector<16x16xf32>
    %cst_148 = arith.constant dense<0.000000e+00> : vector<16x8xf32>
    %363 = tpu.matmul %362, %348, %cst_148 {dimension_numbers = #tpu.dot_dimension_numbers<[1], [0], [0], [1], [0, 0, 1, 1], [], []>} : vector<16x16xf32>, vector<16x8xf32>, vector<16x8xf32> -> vector<16x8xf32>
    %c5_149 = arith.constant 5 : index
    %c0_150 = arith.constant 0 : index
    %c0_151 = arith.constant 0 : index
    %364 = vector.load %arg5[%c5_149, %c0_150, %c0_151] : memref<8x8x32xf32, #tpu.memory_space<vmem>>, vector<1x8x32xf32>
    %365 = vector.shape_cast %364 : vector<1x8x32xf32> to vector<8x32xf32>
    %cst_152 = arith.constant dense<0.000000e+00> : vector<16x32xf32>
    %366 = tpu.matmul %363, %365, %cst_152 {dimension_numbers = #tpu.dot_dimension_numbers<[1], [0], [0], [1], [0, 0, 1, 1], [], []>} : vector<16x8xf32>, vector<8x32xf32>, vector<16x32xf32> -> vector<16x32xf32>
    %367 = arith.addf %330, %366 : vector<16x32xf32>
    %c14 = arith.constant 14 : index
    %c0_153 = arith.constant 0 : index
    %c0_154 = arith.constant 0 : index
    %368 = vector.load %arg4[%c14, %c0_153, %c0_154] : memref<24x32x8xf32, #tpu.memory_space<vmem>>, vector<1x32x8xf32>
    %369 = vector.shape_cast %368 : vector<1x32x8xf32> to vector<32x8xf32>
    %c18 = arith.constant 18 : index
    %c0_155 = arith.constant 0 : index
    %c0_156 = arith.constant 0 : index
    %370 = vector.load %arg4[%c18, %c0_155, %c0_156] : memref<24x32x8xf32, #tpu.memory_space<vmem>>, vector<1x32x8xf32>
    %371 = vector.shape_cast %370 : vector<1x32x8xf32> to vector<32x8xf32>
    %c22 = arith.constant 22 : index
    %c0_157 = arith.constant 0 : index
    %c0_158 = arith.constant 0 : index
    %372 = vector.load %arg4[%c22, %c0_157, %c0_158] : memref<24x32x8xf32, #tpu.memory_space<vmem>>, vector<1x32x8xf32>
    %373 = vector.shape_cast %372 : vector<1x32x8xf32> to vector<32x8xf32>
    %374 = vector.extract_strided_slice %287 {offsets = [2, 0], sizes = [1, 8], strides = [1, 1]} : vector<24x64xf32> to vector<1x8xf32>
    %375 = vector.extract_strided_slice %287 {offsets = [6, 0], sizes = [1, 8], strides = [1, 1]} : vector<24x64xf32> to vector<1x8xf32>
    %376 = vector.extract_strided_slice %287 {offsets = [10, 0], sizes = [1, 8], strides = [1, 1]} : vector<24x64xf32> to vector<1x8xf32>
    %cst_159 = arith.constant dense<0.000000e+00> : vector<16x8xf32>
    %377 = tpu.matmul %285, %369, %cst_159 {dimension_numbers = #tpu.dot_dimension_numbers<[1], [0], [0], [1], [0, 0, 1, 1], [], []>} : vector<16x32xf32>, vector<32x8xf32>, vector<16x8xf32> -> vector<16x8xf32>
    %378 = vector.broadcast %374 : vector<1x8xf32> to vector<16x8xf32>
    %379 = arith.addf %377, %378 : vector<16x8xf32>
    %cst_160 = arith.constant dense<0.000000e+00> : vector<16x8xf32>
    %380 = tpu.matmul %285, %371, %cst_160 {dimension_numbers = #tpu.dot_dimension_numbers<[1], [0], [0], [1], [0, 0, 1, 1], [], []>} : vector<16x32xf32>, vector<32x8xf32>, vector<16x8xf32> -> vector<16x8xf32>
    %381 = vector.broadcast %375 : vector<1x8xf32> to vector<16x8xf32>
    %382 = arith.addf %380, %381 : vector<16x8xf32>
    %cst_161 = arith.constant dense<0.000000e+00> : vector<16x8xf32>
    %383 = tpu.matmul %285, %373, %cst_161 {dimension_numbers = #tpu.dot_dimension_numbers<[1], [0], [0], [1], [0, 0, 1, 1], [], []>} : vector<16x32xf32>, vector<32x8xf32>, vector<16x8xf32> -> vector<16x8xf32>
    %384 = vector.broadcast %376 : vector<1x8xf32> to vector<16x8xf32>
    %385 = arith.addf %383, %384 : vector<16x8xf32>
    %cst_162 = arith.constant dense<0.000000e+00> : vector<16x16xf32>
    %386 = tpu.matmul %379, %382, %cst_162 {dimension_numbers = #tpu.dot_dimension_numbers<[1], [1], [0], [0], [0, 0, 1, 0], [], []>} : vector<16x8xf32>, vector<16x8xf32>, vector<16x16xf32> -> vector<16x16xf32>
    %cst_163 = arith.constant 0.353553385 : f32
    %387 = vector.broadcast %cst_163 : f32 to vector<16x16xf32>
    %388 = arith.mulf %386, %387 : vector<16x16xf32>
    %389 = arith.addf %388, %59 : vector<16x16xf32>
    %cst_164 = arith.constant dense<0xFF800000> : vector<16xf32>
    %390 = vector.multi_reduction <maximumf>, %389, %cst_164 [1] : vector<16x16xf32> to vector<16xf32>
    %391 = vector.shape_cast %390 : vector<16xf32> to vector<16x1xf32>
    %392 = vector.broadcast %391 : vector<16x1xf32> to vector<16x16xf32>
    %393 = arith.subf %389, %392 : vector<16x16xf32>
    %394 = math.exp %393 : vector<16x16xf32>
    %cst_165 = arith.constant dense<0.000000e+00> : vector<16xf32>
    %395 = vector.multi_reduction <add>, %394, %cst_165 [1] : vector<16x16xf32> to vector<16xf32>
    %396 = vector.shape_cast %395 : vector<16xf32> to vector<16x1xf32>
    %397 = tpu.reciprocal %396 {approx = true} : vector<16x1xf32> -> vector<16x1xf32>
    %398 = vector.broadcast %397 : vector<16x1xf32> to vector<16x16xf32>
    %399 = arith.mulf %394, %398 : vector<16x16xf32>
    %cst_166 = arith.constant dense<0.000000e+00> : vector<16x8xf32>
    %400 = tpu.matmul %399, %385, %cst_166 {dimension_numbers = #tpu.dot_dimension_numbers<[1], [0], [0], [1], [0, 0, 1, 1], [], []>} : vector<16x16xf32>, vector<16x8xf32>, vector<16x8xf32> -> vector<16x8xf32>
    %c6_167 = arith.constant 6 : index
    %c0_168 = arith.constant 0 : index
    %c0_169 = arith.constant 0 : index
    %401 = vector.load %arg5[%c6_167, %c0_168, %c0_169] : memref<8x8x32xf32, #tpu.memory_space<vmem>>, vector<1x8x32xf32>
    %402 = vector.shape_cast %401 : vector<1x8x32xf32> to vector<8x32xf32>
    %cst_170 = arith.constant dense<0.000000e+00> : vector<16x32xf32>
    %403 = tpu.matmul %400, %402, %cst_170 {dimension_numbers = #tpu.dot_dimension_numbers<[1], [0], [0], [1], [0, 0, 1, 1], [], []>} : vector<16x8xf32>, vector<8x32xf32>, vector<16x32xf32> -> vector<16x32xf32>
    %404 = arith.addf %367, %403 : vector<16x32xf32>
    %c15 = arith.constant 15 : index
    %c0_171 = arith.constant 0 : index
    %c0_172 = arith.constant 0 : index
    %405 = vector.load %arg4[%c15, %c0_171, %c0_172] : memref<24x32x8xf32, #tpu.memory_space<vmem>>, vector<1x32x8xf32>
    %406 = vector.shape_cast %405 : vector<1x32x8xf32> to vector<32x8xf32>
    %c19 = arith.constant 19 : index
    %c0_173 = arith.constant 0 : index
    %c0_174 = arith.constant 0 : index
    %407 = vector.load %arg4[%c19, %c0_173, %c0_174] : memref<24x32x8xf32, #tpu.memory_space<vmem>>, vector<1x32x8xf32>
    %408 = vector.shape_cast %407 : vector<1x32x8xf32> to vector<32x8xf32>
    %c23 = arith.constant 23 : index
    %c0_175 = arith.constant 0 : index
    %c0_176 = arith.constant 0 : index
    %409 = vector.load %arg4[%c23, %c0_175, %c0_176] : memref<24x32x8xf32, #tpu.memory_space<vmem>>, vector<1x32x8xf32>
    %410 = vector.shape_cast %409 : vector<1x32x8xf32> to vector<32x8xf32>
    %411 = vector.extract_strided_slice %287 {offsets = [3, 0], sizes = [1, 8], strides = [1, 1]} : vector<24x64xf32> to vector<1x8xf32>
    %412 = vector.extract_strided_slice %287 {offsets = [7, 0], sizes = [1, 8], strides = [1, 1]} : vector<24x64xf32> to vector<1x8xf32>
    %413 = vector.extract_strided_slice %287 {offsets = [11, 0], sizes = [1, 8], strides = [1, 1]} : vector<24x64xf32> to vector<1x8xf32>
    %cst_177 = arith.constant dense<0.000000e+00> : vector<16x8xf32>
    %414 = tpu.matmul %285, %406, %cst_177 {dimension_numbers = #tpu.dot_dimension_numbers<[1], [0], [0], [1], [0, 0, 1, 1], [], []>} : vector<16x32xf32>, vector<32x8xf32>, vector<16x8xf32> -> vector<16x8xf32>
    %415 = vector.broadcast %411 : vector<1x8xf32> to vector<16x8xf32>
    %416 = arith.addf %414, %415 : vector<16x8xf32>
    %cst_178 = arith.constant dense<0.000000e+00> : vector<16x8xf32>
    %417 = tpu.matmul %285, %408, %cst_178 {dimension_numbers = #tpu.dot_dimension_numbers<[1], [0], [0], [1], [0, 0, 1, 1], [], []>} : vector<16x32xf32>, vector<32x8xf32>, vector<16x8xf32> -> vector<16x8xf32>
    %418 = vector.broadcast %412 : vector<1x8xf32> to vector<16x8xf32>
    %419 = arith.addf %417, %418 : vector<16x8xf32>
    %cst_179 = arith.constant dense<0.000000e+00> : vector<16x8xf32>
    %420 = tpu.matmul %285, %410, %cst_179 {dimension_numbers = #tpu.dot_dimension_numbers<[1], [0], [0], [1], [0, 0, 1, 1], [], []>} : vector<16x32xf32>, vector<32x8xf32>, vector<16x8xf32> -> vector<16x8xf32>
    %421 = vector.broadcast %413 : vector<1x8xf32> to vector<16x8xf32>
    %422 = arith.addf %420, %421 : vector<16x8xf32>
    %cst_180 = arith.constant dense<0.000000e+00> : vector<16x16xf32>
    %423 = tpu.matmul %416, %419, %cst_180 {dimension_numbers = #tpu.dot_dimension_numbers<[1], [1], [0], [0], [0, 0, 1, 0], [], []>} : vector<16x8xf32>, vector<16x8xf32>, vector<16x16xf32> -> vector<16x16xf32>
    %cst_181 = arith.constant 0.353553385 : f32
    %424 = vector.broadcast %cst_181 : f32 to vector<16x16xf32>
    %425 = arith.mulf %423, %424 : vector<16x16xf32>
    %426 = arith.addf %425, %59 : vector<16x16xf32>
    %cst_182 = arith.constant dense<0xFF800000> : vector<16xf32>
    %427 = vector.multi_reduction <maximumf>, %426, %cst_182 [1] : vector<16x16xf32> to vector<16xf32>
    %428 = vector.shape_cast %427 : vector<16xf32> to vector<16x1xf32>
    %429 = vector.broadcast %428 : vector<16x1xf32> to vector<16x16xf32>
    %430 = arith.subf %426, %429 : vector<16x16xf32>
    %431 = math.exp %430 : vector<16x16xf32>
    %cst_183 = arith.constant dense<0.000000e+00> : vector<16xf32>
    %432 = vector.multi_reduction <add>, %431, %cst_183 [1] : vector<16x16xf32> to vector<16xf32>
    %433 = vector.shape_cast %432 : vector<16xf32> to vector<16x1xf32>
    %434 = tpu.reciprocal %433 {approx = true} : vector<16x1xf32> -> vector<16x1xf32>
    %435 = vector.broadcast %434 : vector<16x1xf32> to vector<16x16xf32>
    %436 = arith.mulf %431, %435 : vector<16x16xf32>
    %cst_184 = arith.constant dense<0.000000e+00> : vector<16x8xf32>
    %437 = tpu.matmul %436, %422, %cst_184 {dimension_numbers = #tpu.dot_dimension_numbers<[1], [0], [0], [1], [0, 0, 1, 1], [], []>} : vector<16x16xf32>, vector<16x8xf32>, vector<16x8xf32> -> vector<16x8xf32>
    %c7_185 = arith.constant 7 : index
    %c0_186 = arith.constant 0 : index
    %c0_187 = arith.constant 0 : index
    %438 = vector.load %arg5[%c7_185, %c0_186, %c0_187] : memref<8x8x32xf32, #tpu.memory_space<vmem>>, vector<1x8x32xf32>
    %439 = vector.shape_cast %438 : vector<1x8x32xf32> to vector<8x32xf32>
    %cst_188 = arith.constant dense<0.000000e+00> : vector<16x32xf32>
    %440 = tpu.matmul %437, %439, %cst_188 {dimension_numbers = #tpu.dot_dimension_numbers<[1], [0], [0], [1], [0, 0, 1, 1], [], []>} : vector<16x8xf32>, vector<8x32xf32>, vector<16x32xf32> -> vector<16x32xf32>
    %441 = arith.addf %404, %440 : vector<16x32xf32>
    %442 = arith.addf %285, %441 : vector<16x32xf32>
    %443 = vector.broadcast %288 : vector<1x32xf32> to vector<16x32xf32>
    %444 = arith.addf %442, %443 : vector<16x32xf32>
    %cst_189 = arith.constant dense<0.000000e+00> : vector<16xf32>
    %445 = vector.multi_reduction <add>, %444, %cst_189 [1] : vector<16x32xf32> to vector<16xf32>
    %446 = vector.shape_cast %445 : vector<16xf32> to vector<16x1xf32>
    %cst_190 = arith.constant 3.200000e+01 : f32
    %447 = vector.broadcast %cst_190 : f32 to vector<16x1xf32>
    %448 = arith.divf %446, %447 : vector<16x1xf32>
    %449 = arith.mulf %444, %444 : vector<16x32xf32>
    %cst_191 = arith.constant dense<0.000000e+00> : vector<16xf32>
    %450 = vector.multi_reduction <add>, %449, %cst_191 [1] : vector<16x32xf32> to vector<16xf32>
    %451 = vector.shape_cast %450 : vector<16xf32> to vector<16x1xf32>
    %cst_192 = arith.constant 3.200000e+01 : f32
    %452 = vector.broadcast %cst_192 : f32 to vector<16x1xf32>
    %453 = arith.divf %451, %452 : vector<16x1xf32>
    %454 = arith.mulf %448, %448 : vector<16x1xf32>
    %455 = arith.subf %453, %454 : vector<16x1xf32>
    %cst_193 = arith.constant 0.000000e+00 : f32
    %456 = vector.broadcast %cst_193 : f32 to vector<16x1xf32>
    %457 = arith.maximumf %455, %456 : vector<16x1xf32>
    %458 = vector.broadcast %448 : vector<16x1xf32> to vector<16x32xf32>
    %459 = arith.subf %444, %458 : vector<16x32xf32>
    %cst_194 = arith.constant 9.99999996E-13 : f32
    %460 = vector.broadcast %cst_194 : f32 to vector<16x1xf32>
    %461 = arith.addf %457, %460 : vector<16x1xf32>
    %462 = math.rsqrt %461 : vector<16x1xf32>
    %463 = vector.broadcast %462 : vector<16x1xf32> to vector<16x32xf32>
    %464 = arith.mulf %459, %463 : vector<16x32xf32>
    %465 = vector.broadcast %289 : vector<1x32xf32> to vector<16x32xf32>
    %466 = arith.mulf %464, %465 : vector<16x32xf32>
    %467 = vector.broadcast %290 : vector<1x32xf32> to vector<16x32xf32>
    %468 = arith.addf %466, %467 : vector<16x32xf32>
    %c1_195 = arith.constant 1 : index
    %c0_196 = arith.constant 0 : index
    %c0_197 = arith.constant 0 : index
    %469 = vector.load %arg6[%c1_195, %c0_196, %c0_197] : memref<2x32x64xf32, #tpu.memory_space<vmem>>, vector<1x32x64xf32>
    %470 = vector.shape_cast %469 : vector<1x32x64xf32> to vector<32x64xf32>
    %cst_198 = arith.constant dense<0.000000e+00> : vector<16x64xf32>
    %471 = tpu.matmul %468, %470, %cst_198 {dimension_numbers = #tpu.dot_dimension_numbers<[1], [0], [0], [1], [0, 0, 1, 1], [], []>} : vector<16x32xf32>, vector<32x64xf32>, vector<16x64xf32> -> vector<16x64xf32>
    %472 = vector.broadcast %291 : vector<1x64xf32> to vector<16x64xf32>
    %473 = arith.addf %471, %472 : vector<16x64xf32>
    %cst_199 = arith.constant 5.000000e-01 : f32
    %474 = vector.broadcast %cst_199 : f32 to vector<16x64xf32>
    %475 = arith.mulf %474, %473 : vector<16x64xf32>
    %cst_200 = arith.constant 0.707106769 : f32
    %476 = vector.broadcast %cst_200 : f32 to vector<16x64xf32>
    %477 = arith.mulf %473, %476 : vector<16x64xf32>
    %478 = math.erf %477 : vector<16x64xf32>
    %cst_201 = arith.constant 1.000000e+00 : f32
    %479 = vector.broadcast %cst_201 : f32 to vector<16x64xf32>
    %480 = arith.addf %479, %478 : vector<16x64xf32>
    %481 = arith.mulf %475, %480 : vector<16x64xf32>
    %c1_202 = arith.constant 1 : index
    %c0_203 = arith.constant 0 : index
    %c0_204 = arith.constant 0 : index
    %482 = vector.load %arg7[%c1_202, %c0_203, %c0_204] : memref<2x64x32xf32, #tpu.memory_space<vmem>>, vector<1x64x32xf32>
    %483 = vector.shape_cast %482 : vector<1x64x32xf32> to vector<64x32xf32>
    %cst_205 = arith.constant dense<0.000000e+00> : vector<16x32xf32>
    %484 = tpu.matmul %481, %483, %cst_205 {dimension_numbers = #tpu.dot_dimension_numbers<[1], [0], [0], [1], [0, 0, 1, 1], [], []>} : vector<16x64xf32>, vector<64x32xf32>, vector<16x32xf32> -> vector<16x32xf32>
    %485 = vector.broadcast %292 : vector<1x32xf32> to vector<16x32xf32>
    %486 = arith.addf %484, %485 : vector<16x32xf32>
    %487 = arith.addf %468, %486 : vector<16x32xf32>
    %cst_206 = arith.constant dense<0.000000e+00> : vector<16xf32>
    %488 = vector.multi_reduction <add>, %487, %cst_206 [1] : vector<16x32xf32> to vector<16xf32>
    %489 = vector.shape_cast %488 : vector<16xf32> to vector<16x1xf32>
    %cst_207 = arith.constant 3.200000e+01 : f32
    %490 = vector.broadcast %cst_207 : f32 to vector<16x1xf32>
    %491 = arith.divf %489, %490 : vector<16x1xf32>
    %492 = arith.mulf %487, %487 : vector<16x32xf32>
    %cst_208 = arith.constant dense<0.000000e+00> : vector<16xf32>
    %493 = vector.multi_reduction <add>, %492, %cst_208 [1] : vector<16x32xf32> to vector<16xf32>
    %494 = vector.shape_cast %493 : vector<16xf32> to vector<16x1xf32>
    %cst_209 = arith.constant 3.200000e+01 : f32
    %495 = vector.broadcast %cst_209 : f32 to vector<16x1xf32>
    %496 = arith.divf %494, %495 : vector<16x1xf32>
    %497 = arith.mulf %491, %491 : vector<16x1xf32>
    %498 = arith.subf %496, %497 : vector<16x1xf32>
    %cst_210 = arith.constant 0.000000e+00 : f32
    %499 = vector.broadcast %cst_210 : f32 to vector<16x1xf32>
    %500 = arith.maximumf %498, %499 : vector<16x1xf32>
    %501 = vector.broadcast %491 : vector<16x1xf32> to vector<16x32xf32>
    %502 = arith.subf %487, %501 : vector<16x32xf32>
    %cst_211 = arith.constant 9.99999996E-13 : f32
    %503 = vector.broadcast %cst_211 : f32 to vector<16x1xf32>
    %504 = arith.addf %500, %503 : vector<16x1xf32>
    %505 = math.rsqrt %504 : vector<16x1xf32>
    %506 = vector.broadcast %505 : vector<16x1xf32> to vector<16x32xf32>
    %507 = arith.mulf %502, %506 : vector<16x32xf32>
    %508 = vector.broadcast %293 : vector<1x32xf32> to vector<16x32xf32>
    %509 = arith.mulf %507, %508 : vector<16x32xf32>
    %510 = vector.broadcast %294 : vector<1x32xf32> to vector<16x32xf32>
    %511 = arith.addf %509, %510 : vector<16x32xf32>
    %c1_212 = arith.constant 1 : index
    %c0_213 = arith.constant 0 : index
    %c0_214 = arith.constant 0 : index
    %512 = vector.load %arg9[%c1_212, %c0_213, %c0_214] : memref<3x32x128xf32, #tpu.memory_space<vmem>>, vector<1x32x128xf32>
    %513 = vector.shape_cast %512 : vector<1x32x128xf32> to vector<32x128xf32>
    %cst_215 = arith.constant dense<0.000000e+00> : vector<16x128xf32>
    %514 = tpu.matmul %511, %513, %cst_215 {dimension_numbers = #tpu.dot_dimension_numbers<[1], [0], [0], [1], [0, 0, 1, 1], [], []>} : vector<16x32xf32>, vector<32x128xf32>, vector<16x128xf32> -> vector<16x128xf32>
    %515 = vector.broadcast %11 : vector<1x128xf32> to vector<16x128xf32>
    %516 = arith.addf %514, %515 : vector<16x128xf32>
    %c0_216 = arith.constant 0 : index
    %c0_217 = arith.constant 0 : index
    %c0_218 = arith.constant 0 : index
    %517 = vector.load %arg9[%c0_216, %c0_217, %c0_218] : memref<3x32x128xf32, #tpu.memory_space<vmem>>, vector<1x32x128xf32>
    %518 = vector.shape_cast %517 : vector<1x32x128xf32> to vector<32x128xf32>
    %519 = vector.extract_strided_slice %518 {offsets = [0, 0], sizes = [32, 32], strides = [1, 1]} : vector<32x128xf32> to vector<32x32xf32>
    %cst_219 = arith.constant dense<0.000000e+00> : vector<16x32xf32>
    %520 = tpu.matmul %511, %519, %cst_219 {dimension_numbers = #tpu.dot_dimension_numbers<[1], [0], [0], [1], [0, 0, 1, 1], [], []>} : vector<16x32xf32>, vector<32x32xf32>, vector<16x32xf32> -> vector<16x32xf32>
    %521 = vector.broadcast %10 : vector<1x32xf32> to vector<16x32xf32>
    %522 = arith.addf %520, %521 : vector<16x32xf32>
    %523 = math.tanh %522 : vector<16x32xf32>
    %c2_220 = arith.constant 2 : index
    %c0_221 = arith.constant 0 : index
    %c0_222 = arith.constant 0 : index
    %524 = vector.load %arg9[%c2_220, %c0_221, %c0_222] : memref<3x32x128xf32, #tpu.memory_space<vmem>>, vector<1x32x128xf32>
    %525 = vector.shape_cast %524 : vector<1x32x128xf32> to vector<32x128xf32>
    %cst_223 = arith.constant dense<0.000000e+00> : vector<16x128xf32>
    %526 = tpu.matmul %523, %525, %cst_223 {dimension_numbers = #tpu.dot_dimension_numbers<[1], [0], [0], [1], [0, 0, 1, 1], [], []>} : vector<16x32xf32>, vector<32x128xf32>, vector<16x128xf32> -> vector<16x128xf32>
    %527 = vector.broadcast %12 : vector<1x128xf32> to vector<16x128xf32>
    %528 = arith.addf %526, %527 : vector<16x128xf32>
    %c0_224 = arith.constant 0 : index
    %c0_225 = arith.constant 0 : index
    %529 = vector.load %arg10[%c0_224, %c0_225] : memref<32x128xf32, #tpu.memory_space<vmem>>, vector<16x128xf32>
    tpu.vector_store %arg10[%c0_224, %c0_225], %516 {strides = array<i32>} : memref<32x128xf32, #tpu.memory_space<vmem>>, vector<16x128xf32>,
    %c16_226 = arith.constant 16 : index
    %c0_227 = arith.constant 0 : index
    %530 = vector.load %arg10[%c16_226, %c0_227] : memref<32x128xf32, #tpu.memory_space<vmem>>, vector<16x128xf32>
    tpu.vector_store %arg10[%c16_226, %c0_227], %528 {strides = array<i32>} : memref<32x128xf32, #tpu.memory_space<vmem>>, vector<16x128xf32>,
    return
  }
}

</mosaic_0001>

<llo_original>
// kernel: model_bert_forward.1
$region0: #{model_bert_forward.1}
  #allocation0 [shape = 'u32[]', space=smem, size = 0x4, offset = 0x4, fixed_abs, tag = 'smem constant byte address 0x4 - core index']
  #allocation1 [shape = 'u32[144,128]{1,0:T(1,128)}', space=vmem, size = 0x12000, scoped, tag = 'internal scratch']
  %s0 = inlined_call_operand.vmem [shape: s32[16,2], index: 0, kind: input, shape index: {}]
  %s1 = inlined_call_operand.vmem [shape: f32[1,16], index: 1, kind: input, shape index: {}]
  %s2 = inlined_call_operand.vmem [shape: f32[128,32], index: 2, kind: input, shape index: {}]
  %s3 = inlined_call_operand.vmem [shape: f32[40,128], index: 3, kind: input, shape index: {}]
  %s4 = inlined_call_operand.vmem [shape: f32[24,32,8], index: 4, kind: input, shape index: {}]
  %s5 = inlined_call_operand.vmem [shape: f32[8,8,32], index: 5, kind: input, shape index: {}]
  %s6 = inlined_call_operand.vmem [shape: f32[2,32,64], index: 6, kind: input, shape index: {}]
  %s7 = inlined_call_operand.vmem [shape: f32[2,64,32], index: 7, kind: input, shape index: {}]
  %s8 = inlined_call_operand.vmem [shape: f32[2,24,64], index: 8, kind: input, shape index: {}]
  %s9 = inlined_call_operand.vmem [shape: f32[3,32,128], index: 9, kind: input, shape index: {}]
  %s10 = inlined_call_operand.vmem [shape: f32[32,128], index: 10, kind: output, shape index: {}]
  %s11 = sld [smem:[#allocation0]]
  $region50: #{model_bert_forward.1} parent=0
    _
  %s13 = ssub.s32 1, %s11
  %s14 = scalar_select 0, %s13, %s11
  // Predicated region
  $region2: #{model_bert_forward.1} parent=0 // pred_check
    _
  $region3: #{model_bert_forward.1} parent=0 // pred_check_branch
    %16 = sbr.rel (0) target = $region5
  $region4: #{model_bert_forward.1} parent=0 // pred_region
    _
  $region5: #{model_bert_forward.1} parent=0 // pred_fallthru
    _
  // Predicated region
  $region6: #{model_bert_forward.1} parent=0 // pred_check
    _
  $region7: #{model_bert_forward.1} parent=0 // pred_check_branch
    %18 = sbr.rel (0) target = $region9
  $region8: #{model_bert_forward.1} parent=0 // pred_region
    _
  $region9: #{model_bert_forward.1} parent=0 // pred_fallthru
    _
  // Predicated region
  $region10: #{model_bert_forward.1} parent=0 // pred_check
    _
  $region11: #{model_bert_forward.1} parent=0 // pred_check_branch
    %20 = sbr.rel (0) target = $region13
  $region12: #{model_bert_forward.1} parent=0 // pred_region
    _
  $region13: #{model_bert_forward.1} parent=0 // pred_fallthru
    _
  // Predicated region
  $region14: #{model_bert_forward.1} parent=0 // pred_check
    _
  $region15: #{model_bert_forward.1} parent=0 // pred_check_branch
    %22 = sbr.rel (0) target = $region17
  $region16: #{model_bert_forward.1} parent=0 // pred_region
    _
  $region17: #{model_bert_forward.1} parent=0 // pred_fallthru
    _
  // Predicated region
  $region18: #{model_bert_forward.1} parent=0 // pred_check
    _
  $region19: #{model_bert_forward.1} parent=0 // pred_check_branch
    %24 = sbr.rel (0) target = $region21
  $region20: #{model_bert_forward.1} parent=0 // pred_region
    _
  $region21: #{model_bert_forward.1} parent=0 // pred_fallthru
    _
  // Predicated region
  $region22: #{model_bert_forward.1} parent=0 // pred_check
    _
  $region23: #{model_bert_forward.1} parent=0 // pred_check_branch
    %26 = sbr.rel (0) target = $region25
  $region24: #{model_bert_forward.1} parent=0 // pred_region
    _
  $region25: #{model_bert_forward.1} parent=0 // pred_fallthru
    _
  // Predicated region
  $region26: #{model_bert_forward.1} parent=0 // pred_check
    _
  $region27: #{model_bert_forward.1} parent=0 // pred_check_branch
    %28 = sbr.rel (0) target = $region29
  $region28: #{model_bert_forward.1} parent=0 // pred_region
    _
  $region29: #{model_bert_forward.1} parent=0 // pred_fallthru
    _
  // Predicated region
  $region30: #{model_bert_forward.1} parent=0 // pred_check
    _
  $region31: #{model_bert_forward.1} parent=0 // pred_check_branch
    %30 = sbr.rel (0) target = $region33
  $region32: #{model_bert_forward.1} parent=0 // pred_region
    _
  $region33: #{model_bert_forward.1} parent=0 // pred_fallthru
    _
  // Predicated region
  $region34: #{model_bert_forward.1} parent=0 // pred_check
    _
  $region35: #{model_bert_forward.1} parent=0 // pred_check_branch
    %32 = sbr.rel (0) target = $region37
  $region36: #{model_bert_forward.1} parent=0 // pred_region
    _
  $region37: #{model_bert_forward.1} parent=0 // pred_fallthru
    _
  // Predicated region
  $region38: #{model_bert_forward.1} parent=0 // pred_check
    _
  $region39: #{model_bert_forward.1} parent=0 // pred_check_branch
    %34 = sbr.rel (0) target = $region41
  $region40: #{model_bert_forward.1} parent=0 // pred_region
    _
  $region41: #{model_bert_forward.1} parent=0 // pred_fallthru
    _
  %v35 = vld [vmem:[%s0] sm:$0xff]
  %v36 = vld [vmem:[%s0 + $0x8] sm:$0xff]
  %v37 = vcvt.s32.f32 %v35
  %v38 = vcvt.s32.f32 %v36
  %v39 = vld [vmem:[%s3] sm:$0xff]
  %v40 = vld [vmem:[%s3 + $0x8] sm:$0xff]
  %v41 = vld [vmem:[%s3 + $0x10] sm:$0xff]
  %v42 = vld [vmem:[%s3 + $0x18] sm:$0xff]
  %v43 = vld [vmem:[%s3 + $0x20] sm:$0xff]
  %v44 = vlaneseq
  %v45 = vand.u32 %v44, 127
  %46 = vset.pattern.permute.xlu0 0
  %47 = vperm.xlu0 %46, %v35
  %v48 = vpop.permute.xlu0 %47
  %49 = vset.pattern.permute.xlu0 0
  %50 = vperm.xlu0 %49, %v36
  %v51 = vpop.permute.xlu0 %50
  %vm52 = vcmp.eq.s32.totalorder %v45, %v48
  %vm53 = vcmp.eq.s32.totalorder %v45, %v51
  %v54 = vsel %vm52, 1, 0
  %v55 = vsel %vm53, 1, 0
  %v56 = vcvt.s32.f32 %v54
  %v57 = vcvt.s32.f32 %v55
  %v58 = vld [vmem:[%s2] sm:$0xff]
  %v59 = vld [vmem:[%s2 + $0x8] sm:$0xff]
  %v60 = vld [vmem:[%s2 + $0x10] sm:$0xff]
  %v61 = vld [vmem:[%s2 + $0x18] sm:$0xff]
  %v62 = vld [vmem:[%s2 + $0x20] sm:$0xff]
  %v63 = vld [vmem:[%s2 + $0x28] sm:$0xff]
  %v64 = vld [vmem:[%s2 + $0x30] sm:$0xff]
  %v65 = vld [vmem:[%s2 + $0x38] sm:$0xff]
  %v66 = vld [vmem:[%s2 + $0x40] sm:$0xff]
  %v67 = vld [vmem:[%s2 + $0x48] sm:$0xff]
  %v68 = vld [vmem:[%s2 + $0x50] sm:$0xff]
  %v69 = vld [vmem:[%s2 + $0x58] sm:$0xff]
  %v70 = vld [vmem:[%s2 + $0x60] sm:$0xff]
  %v71 = vld [vmem:[%s2 + $0x68] sm:$0xff]
  %v72 = vld [vmem:[%s2 + $0x70] sm:$0xff]
  %v73 = vld [vmem:[%s2 + $0x78] sm:$0xff]
  %v75 = vrot.slane %v41, 7
  %v77 = vsub.f32 %v41, %v75
  %79 = vset.pattern.permute.xlu0 1
  %80 = vperm.xlu0 %79, %v37
  %v81 = vpop.permute.xlu0 %80
  %84 = vset.pattern.permute.xlu0 1
  %85 = vperm.xlu0 %84, %v38
  %v86 = vpop.permute.xlu0 %85
  %v88 = vlaneseq
  %v89 = vshrl.u32 %v88, 7
  %v90 = vsub.s32 1, %v89
  %v91 = vrot.slane %v77, %v90
  %v92 = vmul.f32 %v81, %v91
  %v93 = vmul.f32 %v86, %v91
  %v94 = vlaneseq
  %v95 = vshrl.u32 %v94, 7
  %v96 = vsub.s32 0, %v95
  %v97 = vrot.slane %v41, %v96
  %v98 = vadd.f32 %v97, %v92
  %v99 = vadd.f32 %v97, %v93
  %100 = vmatprep.subr.mxu0 0.0
  %101 = vmatpush1.msra.mxu0 %v58
  %102 = vmatprep.subr.mxu0 0.0
  %103 = vmatpush1.msra.mxu0 %v59
  %104 = vmatprep.subr.mxu0 0.0
  %105 = vmatpush1.msra.mxu0 %v60
  %106 = vmatprep.subr.mxu0 0.0
  %107 = vmatpush1.msra.mxu0 %v61
  %108 = vmatprep.subr.mxu0 0.0
  %109 = vmatpush1.msra.mxu0 %v62
  %110 = vmatprep.subr.mxu0 0.0
  %111 = vmatpush1.msra.mxu0 %v63
  %112 = vmatprep.subr.mxu0 0.0
  %113 = vmatpush1.msra.mxu0 %v64
  %114 = vmatprep.subr.mxu0 0.0
  %115 = vmatpush1.msra.mxu0 %v65
  %116 = vmatprep.subr.mxu0 0.0
  %117 = vmatpush1.msra.mxu0 %v66
  %118 = vmatprep.subr.mxu0 0.0
  %119 = vmatpush1.msra.mxu0 %v67
  %120 = vmatprep.subr.mxu0 0.0
  %121 = vmatpush1.msra.mxu0 %v68
  %122 = vmatprep.subr.mxu0 0.0
  %123 = vmatpush1.msra.mxu0 %v69
  %124 = vmatprep.subr.mxu0 0.0
  %125 = vmatpush1.msra.mxu0 %v70
  %126 = vmatprep.subr.mxu0 0.0
  %127 = vmatpush1.msra.mxu0 %v71
  %128 = vmatprep.subr.mxu0 0.0
  %129 = vmatpush1.msra.mxu0 %v72
  %130 = vmatprep.subr.mxu0 0.0
  %131 = vmatpush1.msra.mxu0 %v73
  %132 = vmatprep.subr.mxu0 0.0
  %133 = vmatpush1.msra.mxu0 0.0
  %134 = vmatprep.subr.mxu0 0.0
  %135 = vmatpush1.msra.mxu0 0.0
  %136 = vmatprep.subr.mxu0 0.0
  %137 = vmatpush1.msra.mxu0 0.0
  %138 = vmatprep.subr.mxu0 0.0
  %139 = vmatpush1.msra.mxu0 0.0
  %140 = vmatprep.subr.mxu0 0.0
  %141 = vmatpush1.msra.mxu0 0.0
  %142 = vmatprep.subr.mxu0 0.0
  %143 = vmatpush1.msra.mxu0 0.0
  %144 = vmatprep.subr.mxu0 0.0
  %145 = vmatpush1.msra.mxu0 0.0
  %146 = vmatprep.subr.mxu0 0.0
  %147 = vmatpush1.msra.mxu0 0.0
  %148 = vmatprep.subr.mxu0 0.0
  %149 = vmatpush1.msra.mxu0 0.0
  %150 = vmatprep.subr.mxu0 0.0
  %151 = vmatpush1.msra.mxu0 0.0
  %152 = vmatprep.subr.mxu0 0.0
  %153 = vmatpush1.msra.mxu0 0.0
  %154 = vmatprep.subr.mxu0 0.0
  %155 = vmatpush1.msra.mxu0 0.0
  %156 = vmatprep.subr.mxu0 0.0
  %157 = vmatpush1.msra.mxu0 0.0
  %158 = vmatprep.subr.mxu0 0.0
  %159 = vmatpush1.msra.mxu0 0.0
  %160 = vmatprep.subr.mxu0 0.0
  %161 = vmatpush1.msra.mxu0 0.0
  %162 = vmatprep.subr.mxu0 0.0
  %163 = vmatpush1.msra.mxu0 0.0
  %164 = vmatprep.mubr.f32.mxu0 0.0
  %165 = vmatmul.mubr.f32.gmra.mrb[0].mxu0 %v56
  %v166 = vpop.f32.mrb[0].mxu0
  %v167 = vadd.f32 %v39, %v166
  %v168 = vpop.f32.mrb[0].mxu0
  %169 = vmatprep.mubr.f32.mxu0 0.0
  %170 = vmatmul.mubr.f32.gmra.mrb[0].mxu0 %v57
  %v171 = vpop.f32.mrb[0].mxu0
  %v172 = vadd.f32 %v40, %v171
  %v173 = vpop.f32.mrb[0].mxu0
  %174 = vdwg.mxu0
  %v175 = vadd.f32 %v167, %v98
  %v176 = vadd.f32 %v172, %v99
  %vm177 = vcmask 261120
  %v178 = vsel %vm177, %v175, 0.0
  %179 = vadd.xlane.f32.xlu0 %v178
  %v180 = vpop.xlane.xlu0 %179
  %v181 = vsel %vm177, %v176, 0.0
  %182 = vadd.xlane.f32.xlu0 %v181
  %v183 = vpop.xlane.xlu0 %182
  %v184 = vrcp.pop 32.0
  %v185 = vmul.f32 %v180, %v184
  %v186 = vmul.f32 %v183, %v184
  %v187 = vmul.f32 %v175, %v175
  %v188 = vmul.f32 %v176, %v176
  %v189 = vsel %vm177, %v187, 0.0
  %190 = vadd.xlane.f32.xlu0 %v189
  %v191 = vpop.xlane.xlu0 %190
  %v192 = vsel %vm177, %v188, 0.0
  %193 = vadd.xlane.f32.xlu0 %v192
  %v194 = vpop.xlane.xlu0 %193
  %v195 = vmul.f32 %v191, %v184
  %v196 = vmul.f32 %v194, %v184
  %v197 = vmul.f32 %v185, %v185
  %v198 = vmul.f32 %v186, %v186
  %v199 = vsub.f32 %v195, %v197
  %v200 = vsub.f32 %v196, %v198
  %v201 = vmax.f32 %v199, 0.0
  %v202 = vmax.f32 %v200, 0.0
  %v203 = vsub.f32 %v175, %v185
  %v204 = vsub.f32 %v176, %v186
  %v205 = vadd.f32 %v201, 1e-12
  %v206 = vadd.f32 %v202, 1e-12
  %v207 = vrsqrt.pop %v205
  %v208 = vrsqrt.pop %v206
  %v209 = vmul.f32 %v203, %v207
  %v210 = vmul.f32 %v204, %v208
  %v211 = vlaneseq
  %v212 = vshrl.u32 %v211, 7
  %v213 = vsub.s32 2, %v212
  %v214 = vrot.slane %v41, %v213
  %v215 = vmul.f32 %v209, %v214
  %v216 = vmul.f32 %v210, %v214
  %v217 = vlaneseq
  %v218 = vshrl.u32 %v217, 7
  %v219 = vsub.s32 3, %v218
  %v220 = vrot.slane %v41, %v219
  %v221 = vadd.f32 %v215, %v220
  %v222 = vadd.f32 %v216, %v220
  %v223 = vld [vmem:[%s1] sm:$0x1]
  %v224 = vsub.f32 1.0, %v223
  %v225 = vmul.f32 %v224, -1e+09
  %v227 = vlaneseq
  %v228 = vshrl.u32 %v227, 7
  %v229 = vsub.s32 0, %v228
  %v230 = vrot.slane %v225, %v229
  %v232 = vadd.f32 %v42, %v230
  %v233 = vadd.f32 %v43, %v230
  %v234 = vld [vmem:[%s8] sm:$0xff]
  %v235 = vld [vmem:[%s8 + $0x8] sm:$0xff]
  %v236 = vld [vmem:[%s8 + $0x10] sm:$0xff]
  %v237 = vld [vmem:[%s4] sm:$0xff]
  %v238 = vld [vmem:[%s4 + $0x8] sm:$0xff]
  %v239 = vld [vmem:[%s4 + $0x10] sm:$0xff]
  %v240 = vld [vmem:[%s4 + $0x18] sm:$0xff]
  %s241 = scalar_lea.vmem %s4, 128
  %v242 = vld [vmem:[%s241] sm:$0xff]
  %v243 = vld [vmem:[%s241 + $0x8] sm:$0xff]
  %v244 = vld [vmem:[%s241 + $0x10] sm:$0xff]
  %v245 = vld [vmem:[%s241 + $0x18] sm:$0xff]
  %s246 = scalar_lea.vmem %s4, 256
  %v247 = vld [vmem:[%s246] sm:$0xff]
  %v248 = vld [vmem:[%s246 + $0x8] sm:$0xff]
  %v249 = vld [vmem:[%s246 + $0x10] sm:$0xff]
  %v250 = vld [vmem:[%s246 + $0x18] sm:$0xff]
  %v251 = vlaneseq
  %v252 = vshrl.u32 %v251, 7
  %v253 = vsub.s32 0, %v252
  %v254 = vrot.slane %v234, %v253
  %v256 = vsel %vm177, %v221, 0
  %v259 = vsel %vm177, %v222, 0
  %261 = vmatprep.subr.mxu0 0.0
  %262 = vmatpush1.msra.mxu0 %v237
  %263 = vmatprep.subr.mxu0 0.0
  %264 = vmatpush1.msra.mxu0 %v238
  %265 = vmatprep.subr.mxu0 0.0
  %266 = vmatpush1.msra.mxu0 %v239
  %267 = vmatprep.subr.mxu0 0.0
  %268 = vmatpush1.msra.mxu0 %v240
  %269 = vmatprep.subr.mxu0 0.0
  %270 = vmatpush1.msra.mxu0 0.0
  %271 = vmatprep.subr.mxu0 0.0
  %272 = vmatpush1.msra.mxu0 0.0
  %273 = vmatprep.subr.mxu0 0.0
  %274 = vmatpush1.msra.mxu0 0.0
  %275 = vmatprep.subr.mxu0 0.0
  %276 = vmatpush1.msra.mxu0 0.0
  %277 = vmatprep.subr.mxu0 0.0
  %278 = vmatpush1.msra.mxu0 0.0
  %279 = vmatprep.subr.mxu0 0.0
  %280 = vmatpush1.msra.mxu0 0.0
  %281 = vmatprep.subr.mxu0 0.0
  %282 = vmatpush1.msra.mxu0 0.0
  %283 = vmatprep.subr.mxu0 0.0
  %284 = vmatpush1.msra.mxu0 0.0
  %285 = vmatprep.subr.mxu0 0.0
  %286 = vmatpush1.msra.mxu0 0.0
  %287 = vmatprep.subr.mxu0 0.0
  %288 = vmatpush1.msra.mxu0 0.0
  %289 = vmatprep.subr.mxu0 0.0
  %290 = vmatpush1.msra.mxu0 0.0
  %291 = vmatprep.subr.mxu0 0.0
  %292 = vmatpush1.msra.mxu0 0.0
  %293 = vmatprep.subr.mxu0 0.0
  %294 = vmatpush1.msra.mxu0 0.0
  %295 = vmatprep.subr.mxu0 0.0
  %296 = vmatpush1.msra.mxu0 0.0
  %297 = vmatprep.subr.mxu0 0.0
  %298 = vmatpush1.msra.mxu0 0.0
  %299 = vmatprep.subr.mxu0 0.0
  %300 = vmatpush1.msra.mxu0 0.0
  %301 = vmatprep.subr.mxu0 0.0
  %302 = vmatpush1.msra.mxu0 0.0
  %303 = vmatprep.subr.mxu0 0.0
  %304 = vmatpush1.msra.mxu0 0.0
  %305 = vmatprep.subr.mxu0 0.0
  %306 = vmatpush1.msra.mxu0 0.0
  %307 = vmatprep.subr.mxu0 0.0
  %308 = vmatpush1.msra.mxu0 0.0
  %309 = vmatprep.subr.mxu0 0.0
  %310 = vmatpush1.msra.mxu0 0.0
  %311 = vmatprep.subr.mxu0 0.0
  %312 = vmatpush1.msra.mxu0 0.0
  %313 = vmatprep.subr.mxu0 0.0
  %314 = vmatpush1.msra.mxu0 0.0
  %315 = vmatprep.subr.mxu0 0.0
  %316 = vmatpush1.msra.mxu0 0.0
  %317 = vmatprep.subr.mxu0 0.0
  %318 = vmatpush1.msra.mxu0 0.0
  %319 = vmatprep.subr.mxu0 0.0
  %320 = vmatpush1.msra.mxu0 0.0
  %321 = vmatprep.subr.mxu0 0.0
  %322 = vmatpush1.msra.mxu0 0.0
  %323 = vmatprep.subr.mxu0 0.0
  %324 = vmatpush1.msra.mxu0 0.0
  %325 = vmatprep.mubr.f32.mxu0 0.0
  %326 = vmatmul.mubr.f32.gmra.mrb[0].mxu0 %v256
  %v327 = vpop.f32.mrb[0].mxu0
  %v328 = vadd.f32 %v254, %v327
  %v329 = vpop.f32.mrb[0].mxu0
  %330 = vmatprep.mubr.f32.mxu0 0.0
  %331 = vmatmul.mubr.f32.gmra.mrb[0].mxu0 %v259
  %v332 = vpop.f32.mrb[0].mxu0
  %v333 = vadd.f32 %v254, %v332
  %v334 = vpop.f32.mrb[0].mxu0
  %335 = vdwg.mxu0
  %v336 = vlaneseq
  %v337 = vshrl.u32 %v336, 7
  %v338 = vsub.s32 4, %v337
  %v339 = vrot.slane %v234, %v338
  %340 = vmatprep.subr.mxu0 0.0
  %341 = vmatpush1.msra.mxu0 %v242
  %342 = vmatprep.subr.mxu0 0.0
  %343 = vmatpush1.msra.mxu0 %v243
  %344 = vmatprep.subr.mxu0 0.0
  %345 = vmatpush1.msra.mxu0 %v244
  %346 = vmatprep.subr.mxu0 0.0
  %347 = vmatpush1.msra.mxu0 %v245
  %348 = vmatprep.subr.mxu0 0.0
  %349 = vmatpush1.msra.mxu0 0.0
  %350 = vmatprep.subr.mxu0 0.0
  %351 = vmatpush1.msra.mxu0 0.0
  %352 = vmatprep.subr.mxu0 0.0
  %353 = vmatpush1.msra.mxu0 0.0
  %354 = vmatprep.subr.mxu0 0.0
  %355 = vmatpush1.msra.mxu0 0.0
  %356 = vmatprep.subr.mxu0 0.0
  %357 = vmatpush1.msra.mxu0 0.0
  %358 = vmatprep.subr.mxu0 0.0
  %359 = vmatpush1.msra.mxu0 0.0
  %360 = vmatprep.subr.mxu0 0.0
  %361 = vmatpush1.msra.mxu0 0.0
  %362 = vmatprep.subr.mxu0 0.0
  %363 = vmatpush1.msra.mxu0 0.0
  %364 = vmatprep.subr.mxu0 0.0
  %365 = vmatpush1.msra.mxu0 0.0
  %366 = vmatprep.subr.mxu0 0.0
  %367 = vmatpush1.msra.mxu0 0.0
  %368 = vmatprep.subr.mxu0 0.0
  %369 = vmatpush1.msra.mxu0 0.0
  %370 = vmatprep.subr.mxu0 0.0
  %371 = vmatpush1.msra.mxu0 0.0
  %372 = vmatprep.subr.mxu0 0.0
  %373 = vmatpush1.msra.mxu0 0.0
  %374 = vmatprep.subr.mxu0 0.0
  %375 = vmatpush1.msra.mxu0 0.0
  %376 = vmatprep.subr.mxu0 0.0
  %377 = vmatpush1.msra.mxu0 0.0
  %378 = vmatprep.subr.mxu0 0.0
  %379 = vmatpush1.msra.mxu0 0.0
  %380 = vmatprep.subr.mxu0 0.0
  %381 = vmatpush1.msra.mxu0 0.0
  %382 = vmatprep.subr.mxu0 0.0
  %383 = vmatpush1.msra.mxu0 0.0
  %384 = vmatprep.subr.mxu0 0.0
  %385 = vmatpush1.msra.mxu0 0.0
  %386 = vmatprep.subr.mxu0 0.0
  %387 = vmatpush1.msra.mxu0 0.0
  %388 = vmatprep.subr.mxu0 0.0
  %389 = vmatpush1.msra.mxu0 0.0
  %390 = vmatprep.subr.mxu0 0.0
  %391 = vmatpush1.msra.mxu0 0.0
  %392 = vmatprep.subr.mxu0 0.0
  %393 = vmatpush1.msra.mxu0 0.0
  %394 = vmatprep.subr.mxu0 0.0
  %395 = vmatpush1.msra.mxu0 0.0
  %396 = vmatprep.subr.mxu0 0.0
  %397 = vmatpush1.msra.mxu0 0.0
  %398 = vmatprep.subr.mxu0 0.0
  %399 = vmatpush1.msra.mxu0 0.0
  %400 = vmatprep.subr.mxu0 0.0
  %401 = vmatpush1.msra.mxu0 0.0
  %402 = vmatprep.subr.mxu0 0.0
  %403 = vmatpush1.msra.mxu0 0.0
  %404 = vmatprep.mubr.f32.mxu0 0.0
  %405 = vmatmul.mubr.f32.gmra.mrb[0].mxu0 %v256
  %v406 = vpop.f32.mrb[0].mxu0
  %v407 = vadd.f32 %v339, %v406
  %v408 = vpop.f32.mrb[0].mxu0
  %409 = vmatprep.mubr.f32.mxu0 0.0
  %410 = vmatmul.mubr.f32.gmra.mrb[0].mxu0 %v259
  %v411 = vpop.f32.mrb[0].mxu0
  %v412 = vadd.f32 %v339, %v411
  %v413 = vpop.f32.mrb[0].mxu0
  %414 = vdwg.mxu0
  %v415 = vlaneseq
  %v416 = vshrl.u32 %v415, 7
  %v417 = vsub.s32 0, %v416
  %v418 = vrot.slane %v235, %v417
  %419 = vmatprep.subr.mxu0 0.0
  %420 = vmatpush1.msra.mxu0 %v247
  %421 = vmatprep.subr.mxu0 0.0
  %422 = vmatpush1.msra.mxu0 %v248
  %423 = vmatprep.subr.mxu0 0.0
  %424 = vmatpush1.msra.mxu0 %v249
  %425 = vmatprep.subr.mxu0 0.0
  %426 = vmatpush1.msra.mxu0 %v250
  %427 = vmatprep.subr.mxu0 0.0
  %428 = vmatpush1.msra.mxu0 0.0
  %429 = vmatprep.subr.mxu0 0.0
  %430 = vmatpush1.msra.mxu0 0.0
  %431 = vmatprep.subr.mxu0 0.0
  %432 = vmatpush1.msra.mxu0 0.0
  %433 = vmatprep.subr.mxu0 0.0
  %434 = vmatpush1.msra.mxu0 0.0
  %435 = vmatprep.subr.mxu0 0.0
  %436 = vmatpush1.msra.mxu0 0.0
  %437 = vmatprep.subr.mxu0 0.0
  %438 = vmatpush1.msra.mxu0 0.0
  %439 = vmatprep.subr.mxu0 0.0
  %440 = vmatpush1.msra.mxu0 0.0
  %441 = vmatprep.subr.mxu0 0.0
  %442 = vmatpush1.msra.mxu0 0.0
  %443 = vmatprep.subr.mxu0 0.0
  %444 = vmatpush1.msra.mxu0 0.0
  %445 = vmatprep.subr.mxu0 0.0
  %446 = vmatpush1.msra.mxu0 0.0
  %447 = vmatprep.subr.mxu0 0.0
  %448 = vmatpush1.msra.mxu0 0.0
  %449 = vmatprep.subr.mxu0 0.0
  %450 = vmatpush1.msra.mxu0 0.0
  %451 = vmatprep.subr.mxu0 0.0
  %452 = vmatpush1.msra.mxu0 0.0
  %453 = vmatprep.subr.mxu0 0.0
  %454 = vmatpush1.msra.mxu0 0.0
  %455 = vmatprep.subr.mxu0 0.0
  %456 = vmatpush1.msra.mxu0 0.0
  %457 = vmatprep.subr.mxu0 0.0
  %458 = vmatpush1.msra.mxu0 0.0
  %459 = vmatprep.subr.mxu0 0.0
  %460 = vmatpush1.msra.mxu0 0.0
  %461 = vmatprep.subr.mxu0 0.0
  %462 = vmatpush1.msra.mxu0 0.0
  %463 = vmatprep.subr.mxu0 0.0
  %464 = vmatpush1.msra.mxu0 0.0
  %465 = vmatprep.subr.mxu0 0.0
  %466 = vmatpush1.msra.mxu0 0.0
  %467 = vmatprep.subr.mxu0 0.0
  %468 = vmatpush1.msra.mxu0 0.0
  %469 = vmatprep.subr.mxu0 0.0
  %470 = vmatpush1.msra.mxu0 0.0
  %471 = vmatprep.subr.mxu0 0.0
  %472 = vmatpush1.msra.mxu0 0.0
  %473 = vmatprep.subr.mxu0 0.0
  %474 = vmatpush1.msra.mxu0 0.0
  %475 = vmatprep.subr.mxu0 0.0
  %476 = vmatpush1.msra.mxu0 0.0
  %477 = vmatprep.subr.mxu0 0.0
  %478 = vmatpush1.msra.mxu0 0.0
  %479 = vmatprep.subr.mxu0 0.0
  %480 = vmatpush1.msra.mxu0 0.0
  %481 = vmatprep.subr.mxu0 0.0
  %482 = vmatpush1.msra.mxu0 0.0
  %483 = vmatprep.mubr.f32.mxu0 0.0
  %484 = vmatmul.mubr.f32.gmra.mrb[0].mxu0 %v256
  %v485 = vpop.f32.mrb[0].mxu0
  %v486 = vadd.f32 %v418, %v485
  %v487 = vpop.f32.mrb[0].mxu0
  %488 = vmatprep.mubr.f32.mxu0 0.0
  %489 = vmatmul.mubr.f32.gmra.mrb[0].mxu0 %v259
  %v490 = vpop.f32.mrb[0].mxu0
  %v491 = vadd.f32 %v418, %v490
  %v492 = vpop.f32.mrb[0].mxu0
  %493 = vdwg.mxu0
  %vm494 = vcmask 64512
  %v496 = vsel %vm494, %v328, 0
  %v499 = vsel %vm494, %v333, 0
  %v502 = vsel %vm494, %v407, 0
  %v505 = vsel %vm494, %v412, 0
  %507 = vmatprep.subr.mxu0 0.0
  %508 = vmatpush1.xpose.msra.mxu0 %v502
  %509 = vmatprep.subr.mxu0 0.0
  %510 = vmatpush1.xpose.msra.mxu0 %v505
  %511 = vmatprep.subr.mxu0 0.0
  %512 = vmatpush1.xpose.msra.mxu0 0.0
  %513 = vmatprep.subr.mxu0 0.0
  %514 = vmatpush1.xpose.msra.mxu0 0.0
  %515 = vmatprep.subr.mxu0 0.0
  %516 = vmatpush1.xpose.msra.mxu0 0.0
  %517 = vmatprep.subr.mxu0 0.0
  %518 = vmatpush1.xpose.msra.mxu0 0.0
  %519 = vmatprep.subr.mxu0 0.0
  %520 = vmatpush1.xpose.msra.mxu0 0.0
  %521 = vmatprep.subr.mxu0 0.0
  %522 = vmatpush1.xpose.msra.mxu0 0.0
  %523 = vmatprep.subr.mxu0 0.0
  %524 = vmatpush1.xpose.msra.mxu0 0.0
  %525 = vmatprep.subr.mxu0 0.0
  %526 = vmatpush1.xpose.msra.mxu0 0.0
  %527 = vmatprep.subr.mxu0 0.0
  %528 = vmatpush1.xpose.msra.mxu0 0.0
  %529 = vmatprep.subr.mxu0 0.0
  %530 = vmatpush1.xpose.msra.mxu0 0.0
  %531 = vmatprep.subr.mxu0 0.0
  %532 = vmatpush1.xpose.msra.mxu0 0.0
  %533 = vmatprep.subr.mxu0 0.0
  %534 = vmatpush1.xpose.msra.mxu0 0.0
  %535 = vmatprep.subr.mxu0 0.0
  %536 = vmatpush1.xpose.msra.mxu0 0.0
  %537 = vmatprep.subr.mxu0 0.0
  %538 = vmatpush1.xpose.msra.mxu0 0.0
  %539 = vmatprep.subr.mxu0 0.0
  %540 = vmatpush1.xpose.msra.mxu0 0.0
  %541 = vmatprep.subr.mxu0 0.0
  %542 = vmatpush1.xpose.msra.mxu0 0.0
  %543 = vmatprep.subr.mxu0 0.0
  %544 = vmatpush1.xpose.msra.mxu0 0.0
  %545 = vmatprep.subr.mxu0 0.0
  %546 = vmatpush1.xpose.msra.mxu0 0.0
  %547 = vmatprep.subr.mxu0 0.0
  %548 = vmatpush1.xpose.msra.mxu0 0.0
  %549 = vmatprep.subr.mxu0 0.0
  %550 = vmatpush1.xpose.msra.mxu0 0.0
  %551 = vmatprep.subr.mxu0 0.0
  %552 = vmatpush1.xpose.msra.mxu0 0.0
  %553 = vmatprep.subr.mxu0 0.0
  %554 = vmatpush1.xpose.msra.mxu0 0.0
  %555 = vmatprep.subr.mxu0 0.0
  %556 = vmatpush1.xpose.msra.mxu0 0.0
  %557 = vmatprep.subr.mxu0 0.0
  %558 = vmatpush1.xpose.msra.mxu0 0.0
  %559 = vmatprep.subr.mxu0 0.0
  %560 = vmatpush1.xpose.msra.mxu0 0.0
  %561 = vmatprep.subr.mxu0 0.0
  %562 = vmatpush1.xpose.msra.mxu0 0.0
  %563 = vmatprep.subr.mxu0 0.0
  %564 = vmatpush1.xpose.msra.mxu0 0.0
  %565 = vmatprep.subr.mxu0 0.0
  %566 = vmatpush1.xpose.msra.mxu0 0.0
  %567 = vmatprep.subr.mxu0 0.0
  %568 = vmatpush1.xpose.msra.mxu0 0.0
  %569 = vmatprep.subr.mxu0 0.0
  %570 = vmatpush1.xpose.msra.mxu0 0.0
  %571 = vmatprep.mubr.f32.mxu0 0.0
  %572 = vmatmul.mubr.f32.gmra.mrb[0].mxu0 %v496
  %v573 = vpop.f32.mrb[0].mxu0
  %v574 = vadd.f32 0.0, %v573
  %v575 = vpop.f32.mrb[0].mxu0
  %576 = vmatprep.mubr.f32.mxu0 0.0
  %577 = vmatmul.mubr.f32.gmra.mrb[0].mxu0 %v499
  %v578 = vpop.f32.mrb[0].mxu0
  %v579 = vadd.f32 0.0, %v578
  %v580 = vpop.f32.mrb[0].mxu0
  %581 = vdwg.mxu0
  %v582 = vmul.f32 %v574, 0.35355338
  %v583 = vmul.f32 %v579, 0.35355338
  %v584 = vadd.f32 %v582, %v232
  %v585 = vadd.f32 %v583, %v233
  %vm586 = vcmask 130048
  %v587 = vsel %vm586, %v584, -inf
  %588 = vmax.xlane.f32.xlu0 %v587
  %v589 = vpop.xlane.xlu0 %588
  %v590 = vsel %vm586, %v585, -inf
  %591 = vmax.xlane.f32.xlu0 %v590
  %v592 = vpop.xlane.xlu0 %591
  %v593 = vsub.f32 %v584, %v589
  %v594 = vsub.f32 %v585, %v592
  %v595 = vmul.f32 %v593, 1.442695
  %v596 = vpow.pop %v595
  %v597 = vmul.f32 %v594, 1.442695
  %v598 = vpow.pop %v597
  %v599 = vsel %vm586, %v596, 0.0
  %600 = vadd.xlane.f32.xlu0 %v599
  %v601 = vpop.xlane.xlu0 %600
  %v602 = vsel %vm586, %v598, 0.0
  %603 = vadd.xlane.f32.xlu0 %v602
  %v604 = vpop.xlane.xlu0 %603
  %v605 = vrcp.pop %v601
  %v606 = vrcp.pop %v604
  %v607 = vmul.f32 %v596, %v605
  %v608 = vmul.f32 %v598, %v606
  %v610 = vsel %vm586, %v607, 0
  %v613 = vsel %vm586, %v608, 0
  %615 = vmatprep.subr.mxu0 0.0
  %616 = vmatpush1.msra.mxu0 %v486
  %617 = vmatprep.subr.mxu0 0.0
  %618 = vmatpush1.msra.mxu0 %v491
  %619 = vmatprep.subr.mxu0 0.0
  %620 = vmatpush1.msra.mxu0 0.0
  %621 = vmatprep.subr.mxu0 0.0
  %622 = vmatpush1.msra.mxu0 0.0
  %623 = vmatprep.subr.mxu0 0.0
  %624 = vmatpush1.msra.mxu0 0.0
  %625 = vmatprep.subr.mxu0 0.0
  %626 = vmatpush1.msra.mxu0 0.0
  %627 = vmatprep.subr.mxu0 0.0
  %628 = vmatpush1.msra.mxu0 0.0
  %629 = vmatprep.subr.mxu0 0.0
  %630 = vmatpush1.msra.mxu0 0.0
  %631 = vmatprep.subr.mxu0 0.0
  %632 = vmatpush1.msra.mxu0 0.0
  %633 = vmatprep.subr.mxu0 0.0
  %634 = vmatpush1.msra.mxu0 0.0
  %635 = vmatprep.subr.mxu0 0.0
  %636 = vmatpush1.msra.mxu0 0.0
  %637 = vmatprep.subr.mxu0 0.0
  %638 = vmatpush1.msra.mxu0 0.0
  %639 = vmatprep.subr.mxu0 0.0
  %640 = vmatpush1.msra.mxu0 0.0
  %641 = vmatprep.subr.mxu0 0.0
  %642 = vmatpush1.msra.mxu0 0.0
  %643 = vmatprep.subr.mxu0 0.0
  %644 = vmatpush1.msra.mxu0 0.0
  %645 = vmatprep.subr.mxu0 0.0
  %646 = vmatpush1.msra.mxu0 0.0
  %647 = vmatprep.subr.mxu0 0.0
  %648 = vmatpush1.msra.mxu0 0.0
  %649 = vmatprep.subr.mxu0 0.0
  %650 = vmatpush1.msra.mxu0 0.0
  %651 = vmatprep.subr.mxu0 0.0
  %652 = vmatpush1.msra.mxu0 0.0
  %653 = vmatprep.subr.mxu0 0.0
  %654 = vmatpush1.msra.mxu0 0.0
  %655 = vmatprep.subr.mxu0 0.0
  %656 = vmatpush1.msra.mxu0 0.0
  %657 = vmatprep.subr.mxu0 0.0
  %658 = vmatpush1.msra.mxu0 0.0
  %659 = vmatprep.subr.mxu0 0.0
  %660 = vmatpush1.msra.mxu0 0.0
  %661 = vmatprep.subr.mxu0 0.0
  %662 = vmatpush1.msra.mxu0 0.0
  %663 = vmatprep.subr.mxu0 0.0
  %664 = vmatpush1.msra.mxu0 0.0
  %665 = vmatprep.subr.mxu0 0.0
  %666 = vmatpush1.msra.mxu0 0.0
  %667 = vmatprep.subr.mxu0 0.0
  %668 = vmatpush1.msra.mxu0 0.0
  %669 = vmatprep.subr.mxu0 0.0
  %670 = vmatpush1.msra.mxu0 0.0
  %671 = vmatprep.subr.mxu0 0.0
  %672 = vmatpush1.msra.mxu0 0.0
  %673 = vmatprep.subr.mxu0 0.0
  %674 = vmatpush1.msra.mxu0 0.0
  %675 = vmatprep.subr.mxu0 0.0
  %676 = vmatpush1.msra.mxu0 0.0
  %677 = vmatprep.subr.mxu0 0.0
  %678 = vmatpush1.msra.mxu0 0.0
  %679 = vmatprep.mubr.f32.mxu0 0.0
  %680 = vmatmul.mubr.f32.gmra.mrb[0].mxu0 %v610
  %v681 = vpop.f32.mrb[0].mxu0
  %v682 = vadd.f32 0.0, %v681
  %v683 = vpop.f32.mrb[0].mxu0
  %684 = vmatprep.mubr.f32.mxu0 0.0
  %685 = vmatmul.mubr.f32.gmra.mrb[0].mxu0 %v613
  %v686 = vpop.f32.mrb[0].mxu0
  %v687 = vadd.f32 0.0, %v686
  %v688 = vpop.f32.mrb[0].mxu0
  %689 = vdwg.mxu0
  %v690 = vld [vmem:[%s5] sm:$0xff]
  %s691 = scalar_lea.vmem %s4, 32
  %v692 = vld [vmem:[%s691] sm:$0xff]
  %v693 = vld [vmem:[%s691 + $0x8] sm:$0xff]
  %v694 = vld [vmem:[%s691 + $0x10] sm:$0xff]
  %v695 = vld [vmem:[%s691 + $0x18] sm:$0xff]
  %s696 = scalar_lea.vmem %s4, 160
  %v697 = vld [vmem:[%s696] sm:$0xff]
  %v698 = vld [vmem:[%s696 + $0x8] sm:$0xff]
  %v699 = vld [vmem:[%s696 + $0x10] sm:$0xff]
  %v700 = vld [vmem:[%s696 + $0x18] sm:$0xff]
  %s701 = scalar_lea.vmem %s4, 288
  %v702 = vld [vmem:[%s701] sm:$0xff]
  %v703 = vld [vmem:[%s701 + $0x8] sm:$0xff]
  %v704 = vld [vmem:[%s701 + $0x10] sm:$0xff]
  %v705 = vld [vmem:[%s701 + $0x18] sm:$0xff]
  %v706 = vlaneseq
  %v707 = vshrl.u32 %v706, 7
  %v708 = vsub.s32 1, %v707
  %v709 = vrot.slane %v234, %v708
  %710 = vmatprep.subr.mxu0 0.0
  %711 = vmatpush1.msra.mxu0 %v692
  %712 = vmatprep.subr.mxu0 0.0
  %713 = vmatpush1.msra.mxu0 %v693
  %714 = vmatprep.subr.mxu0 0.0
  %715 = vmatpush1.msra.mxu0 %v694
  %716 = vmatprep.subr.mxu0 0.0
  %717 = vmatpush1.msra.mxu0 %v695
  %718 = vmatprep.subr.mxu0 0.0
  %719 = vmatpush1.msra.mxu0 0.0
  %720 = vmatprep.subr.mxu0 0.0
  %721 = vmatpush1.msra.mxu0 0.0
  %722 = vmatprep.subr.mxu0 0.0
  %723 = vmatpush1.msra.mxu0 0.0
  %724 = vmatprep.subr.mxu0 0.0
  %725 = vmatpush1.msra.mxu0 0.0
  %726 = vmatprep.subr.mxu0 0.0
  %727 = vmatpush1.msra.mxu0 0.0
  %728 = vmatprep.subr.mxu0 0.0
  %729 = vmatpush1.msra.mxu0 0.0
  %730 = vmatprep.subr.mxu0 0.0
  %731 = vmatpush1.msra.mxu0 0.0
  %732 = vmatprep.subr.mxu0 0.0
  %733 = vmatpush1.msra.mxu0 0.0
  %734 = vmatprep.subr.mxu0 0.0
  %735 = vmatpush1.msra.mxu0 0.0
  %736 = vmatprep.subr.mxu0 0.0
  %737 = vmatpush1.msra.mxu0 0.0
  %738 = vmatprep.subr.mxu0 0.0
  %739 = vmatpush1.msra.mxu0 0.0
  %740 = vmatprep.subr.mxu0 0.0
  %741 = vmatpush1.msra.mxu0 0.0
  %742 = vmatprep.subr.mxu0 0.0
  %743 = vmatpush1.msra.mxu0 0.0
  %744 = vmatprep.subr.mxu0 0.0
  %745 = vmatpush1.msra.mxu0 0.0
  %746 = vmatprep.subr.mxu0 0.0
  %747 = vmatpush1.msra.mxu0 0.0
  %748 = vmatprep.subr.mxu0 0.0
  %749 = vmatpush1.msra.mxu0 0.0
  %750 = vmatprep.subr.mxu0 0.0
  %751 = vmatpush1.msra.mxu0 0.0
  %752 = vmatprep.subr.mxu0 0.0
  %753 = vmatpush1.msra.mxu0 0.0
  %754 = vmatprep.subr.mxu0 0.0
  %755 = vmatpush1.msra.mxu0 0.0
  %756 = vmatprep.subr.mxu0 0.0
  %757 = vmatpush1.msra.mxu0 0.0
  %758 = vmatprep.subr.mxu0 0.0
  %759 = vmatpush1.msra.mxu0 0.0
  %760 = vmatprep.subr.mxu0 0.0
  %761 = vmatpush1.msra.mxu0 0.0
  %762 = vmatprep.subr.mxu0 0.0
  %763 = vmatpush1.msra.mxu0 0.0
  %764 = vmatprep.subr.mxu0 0.0
  %765 = vmatpush1.msra.mxu0 0.0
  %766 = vmatprep.subr.mxu0 0.0
  %767 = vmatpush1.msra.mxu0 0.0
  %768 = vmatprep.subr.mxu0 0.0
  %769 = vmatpush1.msra.mxu0 0.0
  %770 = vmatprep.subr.mxu0 0.0
  %771 = vmatpush1.msra.mxu0 0.0
  %772 = vmatprep.subr.mxu0 0.0
  %773 = vmatpush1.msra.mxu0 0.0
  %774 = vmatprep.mubr.f32.mxu0 0.0
  %775 = vmatmul.mubr.f32.gmra.mrb[0].mxu0 %v256
  %v776 = vpop.f32.mrb[0].mxu0
  %v777 = vadd.f32 %v709, %v776
  %v778 = vpop.f32.mrb[0].mxu0
  %779 = vmatprep.mubr.f32.mxu0 0.0
  %780 = vmatmul.mubr.f32.gmra.mrb[0].mxu0 %v259
  %v781 = vpop.f32.mrb[0].mxu0
  %v782 = vadd.f32 %v709, %v781
  %v783 = vpop.f32.mrb[0].mxu0
  %784 = vdwg.mxu0
  %v785 = vlaneseq
  %v786 = vshrl.u32 %v785, 7
  %v787 = vsub.s32 5, %v786
  %v788 = vrot.slane %v234, %v787
  %789 = vmatprep.subr.mxu0 0.0
  %790 = vmatpush1.msra.mxu0 %v697
  %791 = vmatprep.subr.mxu0 0.0
  %792 = vmatpush1.msra.mxu0 %v698
  %793 = vmatprep.subr.mxu0 0.0
  %794 = vmatpush1.msra.mxu0 %v699
  %795 = vmatprep.subr.mxu0 0.0
  %796 = vmatpush1.msra.mxu0 %v700
  %797 = vmatprep.subr.mxu0 0.0
  %798 = vmatpush1.msra.mxu0 0.0
  %799 = vmatprep.subr.mxu0 0.0
  %800 = vmatpush1.msra.mxu0 0.0
  %801 = vmatprep.subr.mxu0 0.0
  %802 = vmatpush1.msra.mxu0 0.0
  %803 = vmatprep.subr.mxu0 0.0
  %804 = vmatpush1.msra.mxu0 0.0
  %805 = vmatprep.subr.mxu0 0.0
  %806 = vmatpush1.msra.mxu0 0.0
  %807 = vmatprep.subr.mxu0 0.0
  %808 = vmatpush1.msra.mxu0 0.0
  %809 = vmatprep.subr.mxu0 0.0
  %810 = vmatpush1.msra.mxu0 0.0
  %811 = vmatprep.subr.mxu0 0.0
  %812 = vmatpush1.msra.mxu0 0.0
  %813 = vmatprep.subr.mxu0 0.0
  %814 = vmatpush1.msra.mxu0 0.0
  %815 = vmatprep.subr.mxu0 0.0
  %816 = vmatpush1.msra.mxu0 0.0
  %817 = vmatprep.subr.mxu0 0.0
  %818 = vmatpush1.msra.mxu0 0.0
  %819 = vmatprep.subr.mxu0 0.0
  %820 = vmatpush1.msra.mxu0 0.0
  %821 = vmatprep.subr.mxu0 0.0
  %822 = vmatpush1.msra.mxu0 0.0
  %823 = vmatprep.subr.mxu0 0.0
  %824 = vmatpush1.msra.mxu0 0.0
  %825 = vmatprep.subr.mxu0 0.0
  %826 = vmatpush1.msra.mxu0 0.0
  %827 = vmatprep.subr.mxu0 0.0
  %828 = vmatpush1.msra.mxu0 0.0
  %829 = vmatprep.subr.mxu0 0.0
  %830 = vmatpush1.msra.mxu0 0.0
  %831 = vmatprep.subr.mxu0 0.0
  %832 = vmatpush1.msra.mxu0 0.0
  %833 = vmatprep.subr.mxu0 0.0
  %834 = vmatpush1.msra.mxu0 0.0
  %835 = vmatprep.subr.mxu0 0.0
  %836 = vmatpush1.msra.mxu0 0.0
  %837 = vmatprep.subr.mxu0 0.0
  %838 = vmatpush1.msra.mxu0 0.0
  %839 = vmatprep.subr.mxu0 0.0
  %840 = vmatpush1.msra.mxu0 0.0
  %841 = vmatprep.subr.mxu0 0.0
  %842 = vmatpush1.msra.mxu0 0.0
  %843 = vmatprep.subr.mxu0 0.0
  %844 = vmatpush1.msra.mxu0 0.0
  %845 = vmatprep.subr.mxu0 0.0
  %846 = vmatpush1.msra.mxu0 0.0
  %847 = vmatprep.subr.mxu0 0.0
  %848 = vmatpush1.msra.mxu0 0.0
  %849 = vmatprep.subr.mxu0 0.0
  %850 = vmatpush1.msra.mxu0 0.0
  %851 = vmatprep.subr.mxu0 0.0
  %852 = vmatpush1.msra.mxu0 0.0
  %853 = vmatprep.mubr.f32.mxu0 0.0
  %854 = vmatmul.mubr.f32.gmra.mrb[0].mxu0 %v256
  %v855 = vpop.f32.mrb[0].mxu0
  %v856 = vadd.f32 %v788, %v855
  %v857 = vpop.f32.mrb[0].mxu0
  %858 = vmatprep.mubr.f32.mxu0 0.0
  %859 = vmatmul.mubr.f32.gmra.mrb[0].mxu0 %v259
  %v860 = vpop.f32.mrb[0].mxu0
  %v861 = vadd.f32 %v788, %v860
  %v862 = vpop.f32.mrb[0].mxu0
  %863 = vdwg.mxu0
  %v864 = vlaneseq
  %v865 = vshrl.u32 %v864, 7
  %v866 = vsub.s32 1, %v865
  %v867 = vrot.slane %v235, %v866
  %868 = vmatprep.subr.mxu0 0.0
  %869 = vmatpush1.msra.mxu0 %v702
  %870 = vmatprep.subr.mxu0 0.0
  %871 = vmatpush1.msra.mxu0 %v703
  %872 = vmatprep.subr.mxu0 0.0
  %873 = vmatpush1.msra.mxu0 %v704
  %874 = vmatprep.subr.mxu0 0.0
  %875 = vmatpush1.msra.mxu0 %v705
  %876 = vmatprep.subr.mxu0 0.0
  %877 = vmatpush1.msra.mxu0 0.0
  %878 = vmatprep.subr.mxu0 0.0
  %879 = vmatpush1.msra.mxu0 0.0
  %880 = vmatprep.subr.mxu0 0.0
  %881 = vmatpush1.msra.mxu0 0.0
  %882 = vmatprep.subr.mxu0 0.0
  %883 = vmatpush1.msra.mxu0 0.0
  %884 = vmatprep.subr.mxu0 0.0
  %885 = vmatpush1.msra.mxu0 0.0
  %886 = vmatprep.subr.mxu0 0.0
  %887 = vmatpush1.msra.mxu0 0.0
  %888 = vmatprep.subr.mxu0 0.0
  %889 = vmatpush1.msra.mxu0 0.0
  %890 = vmatprep.subr.mxu0 0.0
  %891 = vmatpush1.msra.mxu0 0.0
  %892 = vmatprep.subr.mxu0 0.0
  %893 = vmatpush1.msra.mxu0 0.0
  %894 = vmatprep.subr.mxu0 0.0
  %895 = vmatpush1.msra.mxu0 0.0
  %896 = vmatprep.subr.mxu0 0.0
  %897 = vmatpush1.msra.mxu0 0.0
  %898 = vmatprep.subr.mxu0 0.0
  %899 = vmatpush1.msra.mxu0 0.0
  %900 = vmatprep.subr.mxu0 0.0
  %901 = vmatpush1.msra.mxu0 0.0
  %902 = vmatprep.subr.mxu0 0.0
  %903 = vmatpush1.msra.mxu0 0.0
  %904 = vmatprep.subr.mxu0 0.0
  %905 = vmatpush1.msra.mxu0 0.0
  %906 = vmatprep.subr.mxu0 0.0
  %907 = vmatpush1.msra.mxu0 0.0
  %908 = vmatprep.subr.mxu0 0.0
  %909 = vmatpush1.msra.mxu0 0.0
  %910 = vmatprep.subr.mxu0 0.0
  %911 = vmatpush1.msra.mxu0 0.0
  %912 = vmatprep.subr.mxu0 0.0
  %913 = vmatpush1.msra.mxu0 0.0
  %914 = vmatprep.subr.mxu0 0.0
  %915 = vmatpush1.msra.mxu0 0.0
  %916 = vmatprep.subr.mxu0 0.0
  %917 = vmatpush1.msra.mxu0 0.0
  %918 = vmatprep.subr.mxu0 0.0
  %919 = vmatpush1.msra.mxu0 0.0
  %920 = vmatprep.subr.mxu0 0.0
  %921 = vmatpush1.msra.mxu0 0.0
  %922 = vmatprep.subr.mxu0 0.0
  %923 = vmatpush1.msra.mxu0 0.0
  %924 = vmatprep.subr.mxu0 0.0
  %925 = vmatpush1.msra.mxu0 0.0
  %926 = vmatprep.subr.mxu0 0.0
  %927 = vmatpush1.msra.mxu0 0.0
  %928 = vmatprep.subr.mxu0 0.0
  %929 = vmatpush1.msra.mxu0 0.0
  %930 = vmatprep.subr.mxu0 0.0
  %931 = vmatpush1.msra.mxu0 0.0
  %932 = vmatprep.mubr.f32.mxu0 0.0
  %933 = vmatmul.mubr.f32.gmra.mrb[0].mxu0 %v256
  %v934 = vpop.f32.mrb[0].mxu0
  %v935 = vadd.f32 %v867, %v934
  %v936 = vpop.f32.mrb[0].mxu0
  %937 = vmatprep.mubr.f32.mxu0 0.0
  %938 = vmatmul.mubr.f32.gmra.mrb[0].mxu0 %v259
  %v939 = vpop.f32.mrb[0].mxu0
  %v940 = vadd.f32 %v867, %v939
  %v941 = vpop.f32.mrb[0].mxu0
  %942 = vdwg.mxu0
  %v944 = vsel %vm494, %v777, 0
  %v947 = vsel %vm494, %v782, 0
  %v950 = vsel %vm494, %v856, 0
  %v953 = vsel %vm494, %v861, 0
  %955 = vmatprep.subr.mxu0 0.0
  %956 = vmatpush1.xpose.msra.mxu0 %v950
  %957 = vmatprep.subr.mxu0 0.0
  %958 = vmatpush1.xpose.msra.mxu0 %v953
  %959 = vmatprep.subr.mxu0 0.0
  %960 = vmatpush1.xpose.msra.mxu0 0.0
  %961 = vmatprep.subr.mxu0 0.0
  %962 = vmatpush1.xpose.msra.mxu0 0.0
  %963 = vmatprep.subr.mxu0 0.0
  %964 = vmatpush1.xpose.msra.mxu0 0.0
  %965 = vmatprep.subr.mxu0 0.0
  %966 = vmatpush1.xpose.msra.mxu0 0.0
  %967 = vmatprep.subr.mxu0 0.0
  %968 = vmatpush1.xpose.msra.mxu0 0.0
  %969 = vmatprep.subr.mxu0 0.0
  %970 = vmatpush1.xpose.msra.mxu0 0.0
  %971 = vmatprep.subr.mxu0 0.0
  %972 = vmatpush1.xpose.msra.mxu0 0.0
  %973 = vmatprep.subr.mxu0 0.0
  %974 = vmatpush1.xpose.msra.mxu0 0.0
  %975 = vmatprep.subr.mxu0 0.0
  %976 = vmatpush1.xpose.msra.mxu0 0.0
  %977 = vmatprep.subr.mxu0 0.0
  %978 = vmatpush1.xpose.msra.mxu0 0.0
  %979 = vmatprep.subr.mxu0 0.0
  %980 = vmatpush1.xpose.msra.mxu0 0.0
  %981 = vmatprep.subr.mxu0 0.0
  %982 = vmatpush1.xpose.msra.mxu0 0.0
  %983 = vmatprep.subr.mxu0 0.0
  %984 = vmatpush1.xpose.msra.mxu0 0.0
  %985 = vmatprep.subr.mxu0 0.0
  %986 = vmatpush1.xpose.msra.mxu0 0.0
  %987 = vmatprep.subr.mxu0 0.0
  %988 = vmatpush1.xpose.msra.mxu0 0.0
  %989 = vmatprep.subr.mxu0 0.0
  %990 = vmatpush1.xpose.msra.mxu0 0.0
  %991 = vmatprep.subr.mxu0 0.0
  %992 = vmatpush1.xpose.msra.mxu0 0.0
  %993 = vmatprep.subr.mxu0 0.0
  %994 = vmatpush1.xpose.msra.mxu0 0.0
  %995 = vmatprep.subr.mxu0 0.0
  %996 = vmatpush1.xpose.msra.mxu0 0.0
  %997 = vmatprep.subr.mxu0 0.0
  %998 = vmatpush1.xpose.msra.mxu0 0.0
  %999 = vmatprep.subr.mxu0 0.0
  %1000 = vmatpush1.xpose.msra.mxu0 0.0
  %1001 = vmatprep.subr.mxu0 0.0
  %1002 = vmatpush1.xpose.msra.mxu0 0.0
  %1003 = vmatprep.subr.mxu0 0.0
  %1004 = vmatpush1.xpose.msra.mxu0 0.0
  %1005 = vmatprep.subr.mxu0 0.0
  %1006 = vmatpush1.xpose.msra.mxu0 0.0
  %1007 = vmatprep.subr.mxu0 0.0
  %1008 = vmatpush1.xpose.msra.mxu0 0.0
  %1009 = vmatprep.subr.mxu0 0.0
  %1010 = vmatpush1.xpose.msra.mxu0 0.0
  %1011 = vmatprep.subr.mxu0 0.0
  %1012 = vmatpush1.xpose.msra.mxu0 0.0
  %1013 = vmatprep.subr.mxu0 0.0
  %1014 = vmatpush1.xpose.msra.mxu0 0.0
  %1015 = vmatprep.subr.mxu0 0.0
  %1016 = vmatpush1.xpose.msra.mxu0 0.0
  %1017 = vmatprep.subr.mxu0 0.0
  %1018 = vmatpush1.xpose.msra.mxu0 0.0
  %1019 = vmatprep.mubr.f32.mxu0 0.0
  %1020 = vmatmul.mubr.f32.gmra.mrb[0].mxu0 %v944
  %v1021 = vpop.f32.mrb[0].mxu0
  %v1022 = vadd.f32 0.0, %v1021
  %v1023 = vpop.f32.mrb[0].mxu0
  %1024 = vmatprep.mubr.f32.mxu0 0.0
  %1025 = vmatmul.mubr.f32.gmra.mrb[0].mxu0 %v947
  %v1026 = vpop.f32.mrb[0].mxu0
  %v1027 = vadd.f32 0.0, %v1026
  %v1028 = vpop.f32.mrb[0].mxu0
  %1029 = vdwg.mxu0
  %v1030 = vmul.f32 %v1022, 0.35355338
  %v1031 = vmul.f32 %v1027, 0.35355338
  %v1032 = vadd.f32 %v1030, %v232
  %v1033 = vadd.f32 %v1031, %v233
  %v1034 = vsel %vm586, %v1032, -inf
  %1035 = vmax.xlane.f32.xlu0 %v1034
  %v1036 = vpop.xlane.xlu0 %1035
  %v1037 = vsel %vm586, %v1033, -inf
  %1038 = vmax.xlane.f32.xlu0 %v1037
  %v1039 = vpop.xlane.xlu0 %1038
  %v1040 = vsub.f32 %v1032, %v1036
  %v1041 = vsub.f32 %v1033, %v1039
  %v1042 = vmul.f32 %v1040, 1.442695
  %v1043 = vpow.pop %v1042
  %v1044 = vmul.f32 %v1041, 1.442695
  %v1045 = vpow.pop %v1044
  %v1046 = vsel %vm586, %v1043, 0.0
  %1047 = vadd.xlane.f32.xlu0 %v1046
  %v1048 = vpop.xlane.xlu0 %1047
  %v1049 = vsel %vm586, %v1045, 0.0
  %1050 = vadd.xlane.f32.xlu0 %v1049
  %v1051 = vpop.xlane.xlu0 %1050
  %v1052 = vrcp.pop %v1048
  %v1053 = vrcp.pop %v1051
  %v1054 = vmul.f32 %v1043, %v1052
  %v1055 = vmul.f32 %v1045, %v1053
  %v1057 = vsel %vm586, %v1054, 0
  %v1060 = vsel %vm586, %v1055, 0
  %1062 = vmatprep.subr.mxu0 0.0
  %1063 = vmatpush1.msra.mxu0 %v935
  %1064 = vmatprep.subr.mxu0 0.0
  %1065 = vmatpush1.msra.mxu0 %v940
  %1066 = vmatprep.subr.mxu0 0.0
  %1067 = vmatpush1.msra.mxu0 0.0
  %1068 = vmatprep.subr.mxu0 0.0
  %1069 = vmatpush1.msra.mxu0 0.0
  %1070 = vmatprep.subr.mxu0 0.0
  %1071 = vmatpush1.msra.mxu0 0.0
  %1072 = vmatprep.subr.mxu0 0.0
  %1073 = vmatpush1.msra.mxu0 0.0
  %1074 = vmatprep.subr.mxu0 0.0
  %1075 = vmatpush1.msra.mxu0 0.0
  %1076 = vmatprep.subr.mxu0 0.0
  %1077 = vmatpush1.msra.mxu0 0.0
  %1078 = vmatprep.subr.mxu0 0.0
  %1079 = vmatpush1.msra.mxu0 0.0
  %1080 = vmatprep.subr.mxu0 0.0
  %1081 = vmatpush1.msra.mxu0 0.0
  %1082 = vmatprep.subr.mxu0 0.0
  %1083 = vmatpush1.msra.mxu0 0.0
  %1084 = vmatprep.subr.mxu0 0.0
  %1085 = vmatpush1.msra.mxu0 0.0
  %1086 = vmatprep.subr.mxu0 0.0
  %1087 = vmatpush1.msra.mxu0 0.0
  %1088 = vmatprep.subr.mxu0 0.0
  %1089 = vmatpush1.msra.mxu0 0.0
  %1090 = vmatprep.subr.mxu0 0.0
  %1091 = vmatpush1.msra.mxu0 0.0
  %1092 = vmatprep.subr.mxu0 0.0
  %1093 = vmatpush1.msra.mxu0 0.0
  %1094 = vmatprep.subr.mxu0 0.0
  %1095 = vmatpush1.msra.mxu0 0.0
  %1096 = vmatprep.subr.mxu0 0.0
  %1097 = vmatpush1.msra.mxu0 0.0
  %1098 = vmatprep.subr.mxu0 0.0
  %1099 = vmatpush1.msra.mxu0 0.0
  %1100 = vmatprep.subr.mxu0 0.0
  %1101 = vmatpush1.msra.mxu0 0.0
  %1102 = vmatprep.subr.mxu0 0.0
  %1103 = vmatpush1.msra.mxu0 0.0
  %1104 = vmatprep.subr.mxu0 0.0
  %1105 = vmatpush1.msra.mxu0 0.0
  %1106 = vmatprep.subr.mxu0 0.0
  %1107 = vmatpush1.msra.mxu0 0.0
  %1108 = vmatprep.subr.mxu0 0.0
  %1109 = vmatpush1.msra.mxu0 0.0
  %1110 = vmatprep.subr.mxu0 0.0
  %1111 = vmatpush1.msra.mxu0 0.0
  %1112 = vmatprep.subr.mxu0 0.0
  %1113 = vmatpush1.msra.mxu0 0.0
  %1114 = vmatprep.subr.mxu0 0.0
  %1115 = vmatpush1.msra.mxu0 0.0
  %1116 = vmatprep.subr.mxu0 0.0
  %1117 = vmatpush1.msra.mxu0 0.0
  %1118 = vmatprep.subr.mxu0 0.0
  %1119 = vmatpush1.msra.mxu0 0.0
  %1120 = vmatprep.subr.mxu0 0.0
  %1121 = vmatpush1.msra.mxu0 0.0
  %1122 = vmatprep.subr.mxu0 0.0
  %1123 = vmatpush1.msra.mxu0 0.0
  %1124 = vmatprep.subr.mxu0 0.0
  %1125 = vmatpush1.msra.mxu0 0.0
  %1126 = vmatprep.mubr.f32.mxu0 0.0
  %1127 = vmatmul.mubr.f32.gmra.mrb[0].mxu0 %v1057
  %v1128 = vpop.f32.mrb[0].mxu0
  %v1129 = vadd.f32 0.0, %v1128
  %v1130 = vpop.f32.mrb[0].mxu0
  %1131 = vmatprep.mubr.f32.mxu0 0.0
  %1132 = vmatmul.mubr.f32.gmra.mrb[0].mxu0 %v1060
  %v1133 = vpop.f32.mrb[0].mxu0
  %v1134 = vadd.f32 0.0, %v1133
  %v1135 = vpop.f32.mrb[0].mxu0
  %1136 = vdwg.mxu0
  %s1137 = scalar_lea.vmem %s5, 8
  %v1138 = vld [vmem:[%s1137] sm:$0xff]
  %v1140 = vsel %vm494, %v1129, 0
  %v1143 = vsel %vm494, %v1134, 0
  %1145 = vmatprep.subr.mxu0 0.0
  %1146 = vmatpush1.msra.mxu0 %v1138
  %1147 = vmatprep.subr.mxu0 0.0
  %1148 = vmatpush1.msra.mxu0 0.0
  %1149 = vmatprep.subr.mxu0 0.0
  %1150 = vmatpush1.msra.mxu0 0.0
  %1151 = vmatprep.subr.mxu0 0.0
  %1152 = vmatpush1.msra.mxu0 0.0
  %1153 = vmatprep.subr.mxu0 0.0
  %1154 = vmatpush1.msra.mxu0 0.0
  %1155 = vmatprep.subr.mxu0 0.0
  %1156 = vmatpush1.msra.mxu0 0.0
  %1157 = vmatprep.subr.mxu0 0.0
  %1158 = vmatpush1.msra.mxu0 0.0
  %1159 = vmatprep.subr.mxu0 0.0
  %1160 = vmatpush1.msra.mxu0 0.0
  %1161 = vmatprep.subr.mxu0 0.0
  %1162 = vmatpush1.msra.mxu0 0.0
  %1163 = vmatprep.subr.mxu0 0.0
  %1164 = vmatpush1.msra.mxu0 0.0
  %1165 = vmatprep.subr.mxu0 0.0
  %1166 = vmatpush1.msra.mxu0 0.0
  %1167 = vmatprep.subr.mxu0 0.0
  %1168 = vmatpush1.msra.mxu0 0.0
  %1169 = vmatprep.subr.mxu0 0.0
  %1170 = vmatpush1.msra.mxu0 0.0
  %1171 = vmatprep.subr.mxu0 0.0
  %1172 = vmatpush1.msra.mxu0 0.0
  %1173 = vmatprep.subr.mxu0 0.0
  %1174 = vmatpush1.msra.mxu0 0.0
  %1175 = vmatprep.subr.mxu0 0.0
  %1176 = vmatpush1.msra.mxu0 0.0
  %1177 = vmatprep.subr.mxu0 0.0
  %1178 = vmatpush1.msra.mxu0 0.0
  %1179 = vmatprep.subr.mxu0 0.0
  %1180 = vmatpush1.msra.mxu0 0.0
  %1181 = vmatprep.subr.mxu0 0.0
  %1182 = vmatpush1.msra.mxu0 0.0
  %1183 = vmatprep.subr.mxu0 0.0
  %1184 = vmatpush1.msra.mxu0 0.0
  %1185 = vmatprep.subr.mxu0 0.0
  %1186 = vmatpush1.msra.mxu0 0.0
  %1187 = vmatprep.subr.mxu0 0.0
  %1188 = vmatpush1.msra.mxu0 0.0
  %1189 = vmatprep.subr.mxu0 0.0
  %1190 = vmatpush1.msra.mxu0 0.0
  %1191 = vmatprep.subr.mxu0 0.0
  %1192 = vmatpush1.msra.mxu0 0.0
  %1193 = vmatprep.subr.mxu0 0.0
  %1194 = vmatpush1.msra.mxu0 0.0
  %1195 = vmatprep.subr.mxu0 0.0
  %1196 = vmatpush1.msra.mxu0 0.0
  %1197 = vmatprep.subr.mxu0 0.0
  %1198 = vmatpush1.msra.mxu0 0.0
  %1199 = vmatprep.subr.mxu0 0.0
  %1200 = vmatpush1.msra.mxu0 0.0
  %1201 = vmatprep.subr.mxu0 0.0
  %1202 = vmatpush1.msra.mxu0 0.0
  %1203 = vmatprep.subr.mxu0 0.0
  %1204 = vmatpush1.msra.mxu0 0.0
  %1205 = vmatprep.subr.mxu0 0.0
  %1206 = vmatpush1.msra.mxu0 0.0
  %1207 = vmatprep.subr.mxu0 0.0
  %1208 = vmatpush1.msra.mxu0 0.0
  %1209 = vmatprep.mubr.f32.mxu0 0.0
  %1210 = vmatmul.mubr.f32.gmra.mrb[0].mxu0 %v1140
  %v1211 = vpop.f32.mrb[0].mxu0
  %v1212 = vadd.f32 0.0, %v1211
  %v1213 = vpop.f32.mrb[0].mxu0
  %1214 = vmatprep.mubr.f32.mxu0 0.0
  %1215 = vmatmul.mubr.f32.gmra.mrb[0].mxu0 %v1143
  %v1216 = vpop.f32.mrb[0].mxu0
  %v1217 = vadd.f32 0.0, %v1216
  %v1218 = vpop.f32.mrb[0].mxu0
  %1219 = vdwg.mxu0
  %v1221 = vsel %vm494, %v682, 0
  %v1224 = vsel %vm494, %v687, 0
  %1226 = vmatprep.subr.mxu0 0.0
  %1227 = vmatpush1.msra.mxu0 %v690
  %1228 = vmatprep.subr.mxu0 0.0
  %1229 = vmatpush1.msra.mxu0 0.0
  %1230 = vmatprep.subr.mxu0 0.0
  %1231 = vmatpush1.msra.mxu0 0.0
  %1232 = vmatprep.subr.mxu0 0.0
  %1233 = vmatpush1.msra.mxu0 0.0
  %1234 = vmatprep.subr.mxu0 0.0
  %1235 = vmatpush1.msra.mxu0 0.0
  %1236 = vmatprep.subr.mxu0 0.0
  %1237 = vmatpush1.msra.mxu0 0.0
  %1238 = vmatprep.subr.mxu0 0.0
  %1239 = vmatpush1.msra.mxu0 0.0
  %1240 = vmatprep.subr.mxu0 0.0
  %1241 = vmatpush1.msra.mxu0 0.0
  %1242 = vmatprep.subr.mxu0 0.0
  %1243 = vmatpush1.msra.mxu0 0.0
  %1244 = vmatprep.subr.mxu0 0.0
  %1245 = vmatpush1.msra.mxu0 0.0
  %1246 = vmatprep.subr.mxu0 0.0
  %1247 = vmatpush1.msra.mxu0 0.0
  %1248 = vmatprep.subr.mxu0 0.0
  %1249 = vmatpush1.msra.mxu0 0.0
  %1250 = vmatprep.subr.mxu0 0.0
  %1251 = vmatpush1.msra.mxu0 0.0
  %1252 = vmatprep.subr.mxu0 0.0
  %1253 = vmatpush1.msra.mxu0 0.0
  %1254 = vmatprep.subr.mxu0 0.0
  %1255 = vmatpush1.msra.mxu0 0.0
  %1256 = vmatprep.subr.mxu0 0.0
  %1257 = vmatpush1.msra.mxu0 0.0
  %1258 = vmatprep.subr.mxu0 0.0
  %1259 = vmatpush1.msra.mxu0 0.0
  %1260 = vmatprep.subr.mxu0 0.0
  %1261 = vmatpush1.msra.mxu0 0.0
  %1262 = vmatprep.subr.mxu0 0.0
  %1263 = vmatpush1.msra.mxu0 0.0
  %1264 = vmatprep.subr.mxu0 0.0
  %1265 = vmatpush1.msra.mxu0 0.0
  %1266 = vmatprep.subr.mxu0 0.0
  %1267 = vmatpush1.msra.mxu0 0.0
  %1268 = vmatprep.subr.mxu0 0.0
  %1269 = vmatpush1.msra.mxu0 0.0
  %1270 = vmatprep.subr.mxu0 0.0
  %1271 = vmatpush1.msra.mxu0 0.0
  %1272 = vmatprep.subr.mxu0 0.0
  %1273 = vmatpush1.msra.mxu0 0.0
  %1274 = vmatprep.subr.mxu0 0.0
  %1275 = vmatpush1.msra.mxu0 0.0
  %1276 = vmatprep.subr.mxu0 0.0
  %1277 = vmatpush1.msra.mxu0 0.0
  %1278 = vmatprep.subr.mxu0 0.0
  %1279 = vmatpush1.msra.mxu0 0.0
  %1280 = vmatprep.subr.mxu0 0.0
  %1281 = vmatpush1.msra.mxu0 0.0
  %1282 = vmatprep.subr.mxu0 0.0
  %1283 = vmatpush1.msra.mxu0 0.0
  %1284 = vmatprep.subr.mxu0 0.0
  %1285 = vmatpush1.msra.mxu0 0.0
  %1286 = vmatprep.subr.mxu0 0.0
  %1287 = vmatpush1.msra.mxu0 0.0
  %1288 = vmatprep.subr.mxu0 0.0
  %1289 = vmatpush1.msra.mxu0 0.0
  %1290 = vmatprep.mubr.f32.mxu0 0.0
  %1291 = vmatmul.mubr.f32.gmra.mrb[0].mxu0 %v1221
  %v1292 = vpop.f32.mrb[0].mxu0
  %v1293 = vadd.f32 %v1212, %v1292
  %v1294 = vpop.f32.mrb[0].mxu0
  %1295 = vmatprep.mubr.f32.mxu0 0.0
  %1296 = vmatmul.mubr.f32.gmra.mrb[0].mxu0 %v1224
  %v1297 = vpop.f32.mrb[0].mxu0
  %v1298 = vadd.f32 %v1217, %v1297
  %v1299 = vpop.f32.mrb[0].mxu0
  %1300 = vdwg.mxu0
  %s1301 = scalar_lea.vmem %s4, 64
  %v1302 = vld [vmem:[%s1301] sm:$0xff]
  %v1303 = vld [vmem:[%s1301 + $0x8] sm:$0xff]
  %v1304 = vld [vmem:[%s1301 + $0x10] sm:$0xff]
  %v1305 = vld [vmem:[%s1301 + $0x18] sm:$0xff]
  %s1306 = scalar_lea.vmem %s4, 192
  %v1307 = vld [vmem:[%s1306] sm:$0xff]
  %v1308 = vld [vmem:[%s1306 + $0x8] sm:$0xff]
  %v1309 = vld [vmem:[%s1306 + $0x10] sm:$0xff]
  %v1310 = vld [vmem:[%s1306 + $0x18] sm:$0xff]
  %s1311 = scalar_lea.vmem %s4, 320
  %v1312 = vld [vmem:[%s1311] sm:$0xff]
  %v1313 = vld [vmem:[%s1311 + $0x8] sm:$0xff]
  %v1314 = vld [vmem:[%s1311 + $0x10] sm:$0xff]
  %v1315 = vld [vmem:[%s1311 + $0x18] sm:$0xff]
  %v1316 = vlaneseq
  %v1317 = vshrl.u32 %v1316, 7
  %v1318 = vsub.s32 2, %v1317
  %v1319 = vrot.slane %v234, %v1318
  %1320 = vmatprep.subr.mxu0 0.0
  %1321 = vmatpush1.msra.mxu0 %v1302
  %1322 = vmatprep.subr.mxu0 0.0
  %1323 = vmatpush1.msra.mxu0 %v1303
  %1324 = vmatprep.subr.mxu0 0.0
  %1325 = vmatpush1.msra.mxu0 %v1304
  %1326 = vmatprep.subr.mxu0 0.0
  %1327 = vmatpush1.msra.mxu0 %v1305
  %1328 = vmatprep.subr.mxu0 0.0
  %1329 = vmatpush1.msra.mxu0 0.0
  %1330 = vmatprep.subr.mxu0 0.0
  %1331 = vmatpush1.msra.mxu0 0.0
  %1332 = vmatprep.subr.mxu0 0.0
  %1333 = vmatpush1.msra.mxu0 0.0
  %1334 = vmatprep.subr.mxu0 0.0
  %1335 = vmatpush1.msra.mxu0 0.0
  %1336 = vmatprep.subr.mxu0 0.0
  %1337 = vmatpush1.msra.mxu0 0.0
  %1338 = vmatprep.subr.mxu0 0.0
  %1339 = vmatpush1.msra.mxu0 0.0
  %1340 = vmatprep.subr.mxu0 0.0
  %1341 = vmatpush1.msra.mxu0 0.0
  %1342 = vmatprep.subr.mxu0 0.0
  %1343 = vmatpush1.msra.mxu0 0.0
  %1344 = vmatprep.subr.mxu0 0.0
  %1345 = vmatpush1.msra.mxu0 0.0
  %1346 = vmatprep.subr.mxu0 0.0
  %1347 = vmatpush1.msra.mxu0 0.0
  %1348 = vmatprep.subr.mxu0 0.0
  %1349 = vmatpush1.msra.mxu0 0.0
  %1350 = vmatprep.subr.mxu0 0.0
  %1351 = vmatpush1.msra.mxu0 0.0
  %1352 = vmatprep.subr.mxu0 0.0
  %1353 = vmatpush1.msra.mxu0 0.0
  %1354 = vmatprep.subr.mxu0 0.0
  %1355 = vmatpush1.msra.mxu0 0.0
  %1356 = vmatprep.subr.mxu0 0.0
  %1357 = vmatpush1.msra.mxu0 0.0
  %1358 = vmatprep.subr.mxu0 0.0
  %1359 = vmatpush1.msra.mxu0 0.0
  %1360 = vmatprep.subr.mxu0 0.0
  %1361 = vmatpush1.msra.mxu0 0.0
  %1362 = vmatprep.subr.mxu0 0.0
  %1363 = vmatpush1.msra.mxu0 0.0
  %1364 = vmatprep.subr.mxu0 0.0
  %1365 = vmatpush1.msra.mxu0 0.0
  %1366 = vmatprep.subr.mxu0 0.0
  %1367 = vmatpush1.msra.mxu0 0.0
  %1368 = vmatprep.subr.mxu0 0.0
  %1369 = vmatpush1.msra.mxu0 0.0
  %1370 = vmatprep.subr.mxu0 0.0
  %1371 = vmatpush1.msra.mxu0 0.0
  %1372 = vmatprep.subr.mxu0 0.0
  %1373 = vmatpush1.msra.mxu0 0.0
  %1374 = vmatprep.subr.mxu0 0.0
  %1375 = vmatpush1.msra.mxu0 0.0
  %1376 = vmatprep.subr.mxu0 0.0
  %1377 = vmatpush1.msra.mxu0 0.0
  %1378 = vmatprep.subr.mxu0 0.0
  %1379 = vmatpush1.msra.mxu0 0.0
  %1380 = vmatprep.subr.mxu0 0.0
  %1381 = vmatpush1.msra.mxu0 0.0
  %1382 = vmatprep.subr.mxu0 0.0
  %1383 = vmatpush1.msra.mxu0 0.0
  %1384 = vmatprep.mubr.f32.mxu0 0.0
  %1385 = vmatmul.mubr.f32.gmra.mrb[0].mxu0 %v256
  %v1386 = vpop.f32.mrb[0].mxu0
  %v1387 = vadd.f32 %v1319, %v1386
  %v1388 = vpop.f32.mrb[0].mxu0
  %1389 = vmatprep.mubr.f32.mxu0 0.0
  %1390 = vmatmul.mubr.f32.gmra.mrb[0].mxu0 %v259
  %v1391 = vpop.f32.mrb[0].mxu0
  %v1392 = vadd.f32 %v1319, %v1391
  %v1393 = vpop.f32.mrb[0].mxu0
  %1394 = vdwg.mxu0
  %v1395 = vlaneseq
  %v1396 = vshrl.u32 %v1395, 7
  %v1397 = vsub.s32 6, %v1396
  %v1398 = vrot.slane %v234, %v1397
  %1399 = vmatprep.subr.mxu0 0.0
  %1400 = vmatpush1.msra.mxu0 %v1307
  %1401 = vmatprep.subr.mxu0 0.0
  %1402 = vmatpush1.msra.mxu0 %v1308
  %1403 = vmatprep.subr.mxu0 0.0
  %1404 = vmatpush1.msra.mxu0 %v1309
  %1405 = vmatprep.subr.mxu0 0.0
  %1406 = vmatpush1.msra.mxu0 %v1310
  %1407 = vmatprep.subr.mxu0 0.0
  %1408 = vmatpush1.msra.mxu0 0.0
  %1409 = vmatprep.subr.mxu0 0.0
  %1410 = vmatpush1.msra.mxu0 0.0
  %1411 = vmatprep.subr.mxu0 0.0
  %1412 = vmatpush1.msra.mxu0 0.0
  %1413 = vmatprep.subr.mxu0 0.0
  %1414 = vmatpush1.msra.mxu0 0.0
  %1415 = vmatprep.subr.mxu0 0.0
  %1416 = vmatpush1.msra.mxu0 0.0
  %1417 = vmatprep.subr.mxu0 0.0
  %1418 = vmatpush1.msra.mxu0 0.0
  %1419 = vmatprep.subr.mxu0 0.0
  %1420 = vmatpush1.msra.mxu0 0.0
  %1421 = vmatprep.subr.mxu0 0.0
  %1422 = vmatpush1.msra.mxu0 0.0
  %1423 = vmatprep.subr.mxu0 0.0
  %1424 = vmatpush1.msra.mxu0 0.0
  %1425 = vmatprep.subr.mxu0 0.0
  %1426 = vmatpush1.msra.mxu0 0.0
  %1427 = vmatprep.subr.mxu0 0.0
  %1428 = vmatpush1.msra.mxu0 0.0
  %1429 = vmatprep.subr.mxu0 0.0
  %1430 = vmatpush1.msra.mxu0 0.0
  %1431 = vmatprep.subr.mxu0 0.0
  %1432 = vmatpush1.msra.mxu0 0.0
  %1433 = vmatprep.subr.mxu0 0.0
  %1434 = vmatpush1.msra.mxu0 0.0
  %1435 = vmatprep.subr.mxu0 0.0
  %1436 = vmatpush1.msra.mxu0 0.0
  %1437 = vmatprep.subr.mxu0 0.0
  %1438 = vmatpush1.msra.mxu0 0.0
  %1439 = vmatprep.subr.mxu0 0.0
  %1440 = vmatpush1.msra.mxu0 0.0
  %1441 = vmatprep.subr.mxu0 0.0
  %1442 = vmatpush1.msra.mxu0 0.0
  %1443 = vmatprep.subr.mxu0 0.0
  %1444 = vmatpush1.msra.mxu0 0.0
  %1445 = vmatprep.subr.mxu0 0.0
  %1446 = vmatpush1.msra.mxu0 0.0
  %1447 = vmatprep.subr.mxu0 0.0
  %1448 = vmatpush1.msra.mxu0 0.0
  %1449 = vmatprep.subr.mxu0 0.0
  %1450 = vmatpush1.msra.mxu0 0.0
  %1451 = vmatprep.subr.mxu0 0.0
  %1452 = vmatpush1.msra.mxu0 0.0
  %1453 = vmatprep.subr.mxu0 0.0
  %1454 = vmatpush1.msra.mxu0 0.0
  %1455 = vmatprep.subr.mxu0 0.0
  %1456 = vmatpush1.msra.mxu0 0.0
  %1457 = vmatprep.subr.mxu0 0.0
  %1458 = vmatpush1.msra.mxu0 0.0
  %1459 = vmatprep.subr.mxu0 0.0
  %1460 = vmatpush1.msra.mxu0 0.0
  %1461 = vmatprep.subr.mxu0 0.0
  %1462 = vmatpush1.msra.mxu0 0.0
  %1463 = vmatprep.mubr.f32.mxu0 0.0
  %1464 = vmatmul.mubr.f32.gmra.mrb[0].mxu0 %v256
  %v1465 = vpop.f32.mrb[0].mxu0
  %v1466 = vadd.f32 %v1398, %v1465
  %v1467 = vpop.f32.mrb[0].mxu0
  %1468 = vmatprep.mubr.f32.mxu0 0.0
  %1469 = vmatmul.mubr.f32.gmra.mrb[0].mxu0 %v259
  %v1470 = vpop.f32.mrb[0].mxu0
  %v1471 = vadd.f32 %v1398, %v1470
  %v1472 = vpop.f32.mrb[0].mxu0
  %1473 = vdwg.mxu0
  %v1474 = vlaneseq
  %v1475 = vshrl.u32 %v1474, 7
  %v1476 = vsub.s32 2, %v1475
  %v1477 = vrot.slane %v235, %v1476
  %1478 = vmatprep.subr.mxu0 0.0
  %1479 = vmatpush1.msra.mxu0 %v1312
  %1480 = vmatprep.subr.mxu0 0.0
  %1481 = vmatpush1.msra.mxu0 %v1313
  %1482 = vmatprep.subr.mxu0 0.0
  %1483 = vmatpush1.msra.mxu0 %v1314
  %1484 = vmatprep.subr.mxu0 0.0
  %1485 = vmatpush1.msra.mxu0 %v1315
  %1486 = vmatprep.subr.mxu0 0.0
  %1487 = vmatpush1.msra.mxu0 0.0
  %1488 = vmatprep.subr.mxu0 0.0
  %1489 = vmatpush1.msra.mxu0 0.0
  %1490 = vmatprep.subr.mxu0 0.0
  %1491 = vmatpush1.msra.mxu0 0.0
  %1492 = vmatprep.subr.mxu0 0.0
  %1493 = vmatpush1.msra.mxu0 0.0
  %1494 = vmatprep.subr.mxu0 0.0
  %1495 = vmatpush1.msra.mxu0 0.0
  %1496 = vmatprep.subr.mxu0 0.0
  %1497 = vmatpush1.msra.mxu0 0.0
  %1498 = vmatprep.subr.mxu0 0.0
  %1499 = vmatpush1.msra.mxu0 0.0
  %1500 = vmatprep.subr.mxu0 0.0
  %1501 = vmatpush1.msra.mxu0 0.0
  %1502 = vmatprep.subr.mxu0 0.0
  %1503 = vmatpush1.msra.mxu0 0.0
  %1504 = vmatprep.subr.mxu0 0.0
  %1505 = vmatpush1.msra.mxu0 0.0
  %1506 = vmatprep.subr.mxu0 0.0
  %1507 = vmatpush1.msra.mxu0 0.0
  %1508 = vmatprep.subr.mxu0 0.0
  %1509 = vmatpush1.msra.mxu0 0.0
  %1510 = vmatprep.subr.mxu0 0.0
  %1511 = vmatpush1.msra.mxu0 0.0
  %1512 = vmatprep.subr.mxu0 0.0
  %1513 = vmatpush1.msra.mxu0 0.0
  %1514 = vmatprep.subr.mxu0 0.0
  %1515 = vmatpush1.msra.mxu0 0.0
  %1516 = vmatprep.subr.mxu0 0.0
  %1517 = vmatpush1.msra.mxu0 0.0
  %1518 = vmatprep.subr.mxu0 0.0
  %1519 = vmatpush1.msra.mxu0 0.0
  %1520 = vmatprep.subr.mxu0 0.0
  %1521 = vmatpush1.msra.mxu0 0.0
  %1522 = vmatprep.subr.mxu0 0.0
  %1523 = vmatpush1.msra.mxu0 0.0
  %1524 = vmatprep.subr.mxu0 0.0
  %1525 = vmatpush1.msra.mxu0 0.0
  %1526 = vmatprep.subr.mxu0 0.0
  %1527 = vmatpush1.msra.mxu0 0.0
  %1528 = vmatprep.subr.mxu0 0.0
  %1529 = vmatpush1.msra.mxu0 0.0
  %1530 = vmatprep.subr.mxu0 0.0
  %1531 = vmatpush1.msra.mxu0 0.0
  %1532 = vmatprep.subr.mxu0 0.0
  %1533 = vmatpush1.msra.mxu0 0.0
  %1534 = vmatprep.subr.mxu0 0.0
  %1535 = vmatpush1.msra.mxu0 0.0
  %1536 = vmatprep.subr.mxu0 0.0
  %1537 = vmatpush1.msra.mxu0 0.0
  %1538 = vmatprep.subr.mxu0 0.0
  %1539 = vmatpush1.msra.mxu0 0.0
  %1540 = vmatprep.subr.mxu0 0.0
  %1541 = vmatpush1.msra.mxu0 0.0
  %1542 = vmatprep.mubr.f32.mxu0 0.0
  %1543 = vmatmul.mubr.f32.gmra.mrb[0].mxu0 %v256
  %v1544 = vpop.f32.mrb[0].mxu0
  %v1545 = vadd.f32 %v1477, %v1544
  %v1546 = vpop.f32.mrb[0].mxu0
  %1547 = vmatprep.mubr.f32.mxu0 0.0
  %1548 = vmatmul.mubr.f32.gmra.mrb[0].mxu0 %v259
  %v1549 = vpop.f32.mrb[0].mxu0
  %v1550 = vadd.f32 %v1477, %v1549
  %v1551 = vpop.f32.mrb[0].mxu0
  %1552 = vdwg.mxu0
  %v1554 = vsel %vm494, %v1387, 0
  %v1557 = vsel %vm494, %v1392, 0
  %v1560 = vsel %vm494, %v1466, 0
  %v1563 = vsel %vm494, %v1471, 0
  %1565 = vmatprep.subr.mxu0 0.0
  %1566 = vmatpush1.xpose.msra.mxu0 %v1560
  %1567 = vmatprep.subr.mxu0 0.0
  %1568 = vmatpush1.xpose.msra.mxu0 %v1563
  %1569 = vmatprep.subr.mxu0 0.0
  %1570 = vmatpush1.xpose.msra.mxu0 0.0
  %1571 = vmatprep.subr.mxu0 0.0
  %1572 = vmatpush1.xpose.msra.mxu0 0.0
  %1573 = vmatprep.subr.mxu0 0.0
  %1574 = vmatpush1.xpose.msra.mxu0 0.0
  %1575 = vmatprep.subr.mxu0 0.0
  %1576 = vmatpush1.xpose.msra.mxu0 0.0
  %1577 = vmatprep.subr.mxu0 0.0
  %1578 = vmatpush1.xpose.msra.mxu0 0.0
  %1579 = vmatprep.subr.mxu0 0.0
  %1580 = vmatpush1.xpose.msra.mxu0 0.0
  %1581 = vmatprep.subr.mxu0 0.0
  %1582 = vmatpush1.xpose.msra.mxu0 0.0
  %1583 = vmatprep.subr.mxu0 0.0
  %1584 = vmatpush1.xpose.msra.mxu0 0.0
  %1585 = vmatprep.subr.mxu0 0.0
  %1586 = vmatpush1.xpose.msra.mxu0 0.0
  %1587 = vmatprep.subr.mxu0 0.0
  %1588 = vmatpush1.xpose.msra.mxu0 0.0
  %1589 = vmatprep.subr.mxu0 0.0
  %1590 = vmatpush1.xpose.msra.mxu0 0.0
  %1591 = vmatprep.subr.mxu0 0.0
  %1592 = vmatpush1.xpose.msra.mxu0 0.0
  %1593 = vmatprep.subr.mxu0 0.0
  %1594 = vmatpush1.xpose.msra.mxu0 0.0
  %1595 = vmatprep.subr.mxu0 0.0
  %1596 = vmatpush1.xpose.msra.mxu0 0.0
  %1597 = vmatprep.subr.mxu0 0.0
  %1598 = vmatpush1.xpose.msra.mxu0 0.0
  %1599 = vmatprep.subr.mxu0 0.0
  %1600 = vmatpush1.xpose.msra.mxu0 0.0
  %1601 = vmatprep.subr.mxu0 0.0
  %1602 = vmatpush1.xpose.msra.mxu0 0.0
  %1603 = vmatprep.subr.mxu0 0.0
  %1604 = vmatpush1.xpose.msra.mxu0 0.0
  %1605 = vmatprep.subr.mxu0 0.0
  %1606 = vmatpush1.xpose.msra.mxu0 0.0
  %1607 = vmatprep.subr.mxu0 0.0
  %1608 = vmatpush1.xpose.msra.mxu0 0.0
  %1609 = vmatprep.subr.mxu0 0.0
  %1610 = vmatpush1.xpose.msra.mxu0 0.0
  %1611 = vmatprep.subr.mxu0 0.0
  %1612 = vmatpush1.xpose.msra.mxu0 0.0
  %1613 = vmatprep.subr.mxu0 0.0
  %1614 = vmatpush1.xpose.msra.mxu0 0.0
  %1615 = vmatprep.subr.mxu0 0.0
  %1616 = vmatpush1.xpose.msra.mxu0 0.0
  %1617 = vmatprep.subr.mxu0 0.0
  %1618 = vmatpush1.xpose.msra.mxu0 0.0
  %1619 = vmatprep.subr.mxu0 0.0
  %1620 = vmatpush1.xpose.msra.mxu0 0.0
  %1621 = vmatprep.subr.mxu0 0.0
  %1622 = vmatpush1.xpose.msra.mxu0 0.0
  %1623 = vmatprep.subr.mxu0 0.0
  %1624 = vmatpush1.xpose.msra.mxu0 0.0
  %1625 = vmatprep.subr.mxu0 0.0
  %1626 = vmatpush1.xpose.msra.mxu0 0.0
  %1627 = vmatprep.subr.mxu0 0.0
  %1628 = vmatpush1.xpose.msra.mxu0 0.0
  %1629 = vmatprep.mubr.f32.mxu0 0.0
  %1630 = vmatmul.mubr.f32.gmra.mrb[0].mxu0 %v1554
  %v1631 = vpop.f32.mrb[0].mxu0
  %v1632 = vadd.f32 0.0, %v1631
  %v1633 = vpop.f32.mrb[0].mxu0
  %1634 = vmatprep.mubr.f32.mxu0 0.0
  %1635 = vmatmul.mubr.f32.gmra.mrb[0].mxu0 %v1557
  %v1636 = vpop.f32.mrb[0].mxu0
  %v1637 = vadd.f32 0.0, %v1636
  %v1638 = vpop.f32.mrb[0].mxu0
  %1639 = vdwg.mxu0
  %v1640 = vmul.f32 %v1632, 0.35355338
  %v1641 = vmul.f32 %v1637, 0.35355338
  %v1642 = vadd.f32 %v1640, %v232
  %v1643 = vadd.f32 %v1641, %v233
  %v1644 = vsel %vm586, %v1642, -inf
  %1645 = vmax.xlane.f32.xlu0 %v1644
  %v1646 = vpop.xlane.xlu0 %1645
  %v1647 = vsel %vm586, %v1643, -inf
  %1648 = vmax.xlane.f32.xlu0 %v1647
  %v1649 = vpop.xlane.xlu0 %1648
  %v1650 = vsub.f32 %v1642, %v1646
  %v1651 = vsub.f32 %v1643, %v1649
  %v1652 = vmul.f32 %v1650, 1.442695
  %v1653 = vpow.pop %v1652
  %v1654 = vmul.f32 %v1651, 1.442695
  %v1655 = vpow.pop %v1654
  %v1656 = vsel %vm586, %v1653, 0.0
  %1657 = vadd.xlane.f32.xlu0 %v1656
  %v1658 = vpop.xlane.xlu0 %1657
  %v1659 = vsel %vm586, %v1655, 0.0
  %1660 = vadd.xlane.f32.xlu0 %v1659
  %v1661 = vpop.xlane.xlu0 %1660
  %v1662 = vrcp.pop %v1658
  %v1663 = vrcp.pop %v1661
  %v1664 = vmul.f32 %v1653, %v1662
  %v1665 = vmul.f32 %v1655, %v1663
  %v1667 = vsel %vm586, %v1664, 0
  %v1670 = vsel %vm586, %v1665, 0
  %1672 = vmatprep.subr.mxu0 0.0
  %1673 = vmatpush1.msra.mxu0 %v1545
  %1674 = vmatprep.subr.mxu0 0.0
  %1675 = vmatpush1.msra.mxu0 %v1550
  %1676 = vmatprep.subr.mxu0 0.0
  %1677 = vmatpush1.msra.mxu0 0.0
  %1678 = vmatprep.subr.mxu0 0.0
  %1679 = vmatpush1.msra.mxu0 0.0
  %1680 = vmatprep.subr.mxu0 0.0
  %1681 = vmatpush1.msra.mxu0 0.0
  %1682 = vmatprep.subr.mxu0 0.0
  %1683 = vmatpush1.msra.mxu0 0.0
  %1684 = vmatprep.subr.mxu0 0.0
  %1685 = vmatpush1.msra.mxu0 0.0
  %1686 = vmatprep.subr.mxu0 0.0
  %1687 = vmatpush1.msra.mxu0 0.0
  %1688 = vmatprep.subr.mxu0 0.0
  %1689 = vmatpush1.msra.mxu0 0.0
  %1690 = vmatprep.subr.mxu0 0.0
  %1691 = vmatpush1.msra.mxu0 0.0
  %1692 = vmatprep.subr.mxu0 0.0
  %1693 = vmatpush1.msra.mxu0 0.0
  %1694 = vmatprep.subr.mxu0 0.0
  %1695 = vmatpush1.msra.mxu0 0.0
  %1696 = vmatprep.subr.mxu0 0.0
  %1697 = vmatpush1.msra.mxu0 0.0
  %1698 = vmatprep.subr.mxu0 0.0
  %1699 = vmatpush1.msra.mxu0 0.0
  %1700 = vmatprep.subr.mxu0 0.0
  %1701 = vmatpush1.msra.mxu0 0.0
  %1702 = vmatprep.subr.mxu0 0.0
  %1703 = vmatpush1.msra.mxu0 0.0
  %1704 = vmatprep.subr.mxu0 0.0
  %1705 = vmatpush1.msra.mxu0 0.0
  %1706 = vmatprep.subr.mxu0 0.0
  %1707 = vmatpush1.msra.mxu0 0.0
  %1708 = vmatprep.subr.mxu0 0.0
  %1709 = vmatpush1.msra.mxu0 0.0
  %1710 = vmatprep.subr.mxu0 0.0
  %1711 = vmatpush1.msra.mxu0 0.0
  %1712 = vmatprep.subr.mxu0 0.0
  %1713 = vmatpush1.msra.mxu0 0.0
  %1714 = vmatprep.subr.mxu0 0.0
  %1715 = vmatpush1.msra.mxu0 0.0
  %1716 = vmatprep.subr.mxu0 0.0
  %1717 = vmatpush1.msra.mxu0 0.0
  %1718 = vmatprep.subr.mxu0 0.0
  %1719 = vmatpush1.msra.mxu0 0.0
  %1720 = vmatprep.subr.mxu0 0.0
  %1721 = vmatpush1.msra.mxu0 0.0
  %1722 = vmatprep.subr.mxu0 0.0
  %1723 = vmatpush1.msra.mxu0 0.0
  %1724 = vmatprep.subr.mxu0 0.0
  %1725 = vmatpush1.msra.mxu0 0.0
  %1726 = vmatprep.subr.mxu0 0.0
  %1727 = vmatpush1.msra.mxu0 0.0
  %1728 = vmatprep.subr.mxu0 0.0
  %1729 = vmatpush1.msra.mxu0 0.0
  %1730 = vmatprep.subr.mxu0 0.0
  %1731 = vmatpush1.msra.mxu0 0.0
  %1732 = vmatprep.subr.mxu0 0.0
  %1733 = vmatpush1.msra.mxu0 0.0
  %1734 = vmatprep.subr.mxu0 0.0
  %1735 = vmatpush1.msra.mxu0 0.0
  %1736 = vmatprep.mubr.f32.mxu0 0.0
  %1737 = vmatmul.mubr.f32.gmra.mrb[0].mxu0 %v1667
  %v1738 = vpop.f32.mrb[0].mxu0
  %v1739 = vadd.f32 0.0, %v1738
  %v1740 = vpop.f32.mrb[0].mxu0
  %1741 = vmatprep.mubr.f32.mxu0 0.0
  %1742 = vmatmul.mubr.f32.gmra.mrb[0].mxu0 %v1670
  %v1743 = vpop.f32.mrb[0].mxu0
  %v1744 = vadd.f32 0.0, %v1743
  %v1745 = vpop.f32.mrb[0].mxu0
  %1746 = vdwg.mxu0
  %s1747 = scalar_lea.vmem %s5, 16
  %v1748 = vld [vmem:[%s1747] sm:$0xff]
  %v1750 = vsel %vm494, %v1739, 0
  %v1753 = vsel %vm494, %v1744, 0
  %1755 = vmatprep.subr.mxu0 0.0
  %1756 = vmatpush1.msra.mxu0 %v1748
  %1757 = vmatprep.subr.mxu0 0.0
  %1758 = vmatpush1.msra.mxu0 0.0
  %1759 = vmatprep.subr.mxu0 0.0
  %1760 = vmatpush1.msra.mxu0 0.0
  %1761 = vmatprep.subr.mxu0 0.0
  %1762 = vmatpush1.msra.mxu0 0.0
  %1763 = vmatprep.subr.mxu0 0.0
  %1764 = vmatpush1.msra.mxu0 0.0
  %1765 = vmatprep.subr.mxu0 0.0
  %1766 = vmatpush1.msra.mxu0 0.0
  %1767 = vmatprep.subr.mxu0 0.0
  %1768 = vmatpush1.msra.mxu0 0.0
  %1769 = vmatprep.subr.mxu0 0.0
  %1770 = vmatpush1.msra.mxu0 0.0
  %1771 = vmatprep.subr.mxu0 0.0
  %1772 = vmatpush1.msra.mxu0 0.0
  %1773 = vmatprep.subr.mxu0 0.0
  %1774 = vmatpush1.msra.mxu0 0.0
  %1775 = vmatprep.subr.mxu0 0.0
  %1776 = vmatpush1.msra.mxu0 0.0
  %1777 = vmatprep.subr.mxu0 0.0
  %1778 = vmatpush1.msra.mxu0 0.0
  %1779 = vmatprep.subr.mxu0 0.0
  %1780 = vmatpush1.msra.mxu0 0.0
  %1781 = vmatprep.subr.mxu0 0.0
  %1782 = vmatpush1.msra.mxu0 0.0
  %1783 = vmatprep.subr.mxu0 0.0
  %1784 = vmatpush1.msra.mxu0 0.0
  %1785 = vmatprep.subr.mxu0 0.0
  %1786 = vmatpush1.msra.mxu0 0.0
  %1787 = vmatprep.subr.mxu0 0.0
  %1788 = vmatpush1.msra.mxu0 0.0
  %1789 = vmatprep.subr.mxu0 0.0
  %1790 = vmatpush1.msra.mxu0 0.0
  %1791 = vmatprep.subr.mxu0 0.0
  %1792 = vmatpush1.msra.mxu0 0.0
  %1793 = vmatprep.subr.mxu0 0.0
  %1794 = vmatpush1.msra.mxu0 0.0
  %1795 = vmatprep.subr.mxu0 0.0
  %1796 = vmatpush1.msra.mxu0 0.0
  %1797 = vmatprep.subr.mxu0 0.0
  %1798 = vmatpush1.msra.mxu0 0.0
  %1799 = vmatprep.subr.mxu0 0.0
  %1800 = vmatpush1.msra.mxu0 0.0
  %1801 = vmatprep.subr.mxu0 0.0
  %1802 = vmatpush1.msra.mxu0 0.0
  %1803 = vmatprep.subr.mxu0 0.0
  %1804 = vmatpush1.msra.mxu0 0.0
  %1805 = vmatprep.subr.mxu0 0.0
  %1806 = vmatpush1.msra.mxu0 0.0
  %1807 = vmatprep.subr.mxu0 0.0
  %1808 = vmatpush1.msra.mxu0 0.0
  %1809 = vmatprep.subr.mxu0 0.0
  %1810 = vmatpush1.msra.mxu0 0.0
  %1811 = vmatprep.subr.mxu0 0.0
  %1812 = vmatpush1.msra.mxu0 0.0
  %1813 = vmatprep.subr.mxu0 0.0
  %1814 = vmatpush1.msra.mxu0 0.0
  %1815 = vmatprep.subr.mxu0 0.0
  %1816 = vmatpush1.msra.mxu0 0.0
  %1817 = vmatprep.subr.mxu0 0.0
  %1818 = vmatpush1.msra.mxu0 0.0
  %1819 = vmatprep.mubr.f32.mxu0 0.0
  %1820 = vmatmul.mubr.f32.gmra.mrb[0].mxu0 %v1750
  %v1821 = vpop.f32.mrb[0].mxu0
  %v1822 = vadd.f32 0.0, %v1821
  %v1823 = vpop.f32.mrb[0].mxu0
  %1824 = vmatprep.mubr.f32.mxu0 0.0
  %1825 = vmatmul.mubr.f32.gmra.mrb[0].mxu0 %v1753
  %v1826 = vpop.f32.mrb[0].mxu0
  %v1827 = vadd.f32 0.0, %v1826
  %v1828 = vpop.f32.mrb[0].mxu0
  %1829 = vdwg.mxu0
  %v1830 = vadd.f32 %v1293, %v1822
  %v1831 = vadd.f32 %v1298, %v1827
  %s1832 = scalar_lea.vmem %s4, 96
  %v1833 = vld [vmem:[%s1832] sm:$0xff]
  %v1834 = vld [vmem:[%s1832 + $0x8] sm:$0xff]
  %v1835 = vld [vmem:[%s1832 + $0x10] sm:$0xff]
  %v1836 = vld [vmem:[%s1832 + $0x18] sm:$0xff]
  %s1837 = scalar_lea.vmem %s4, 224
  %v1838 = vld [vmem:[%s1837] sm:$0xff]
  %v1839 = vld [vmem:[%s1837 + $0x8] sm:$0xff]
  %v1840 = vld [vmem:[%s1837 + $0x10] sm:$0xff]
  %v1841 = vld [vmem:[%s1837 + $0x18] sm:$0xff]
  %s1842 = scalar_lea.vmem %s4, 352
  %v1843 = vld [vmem:[%s1842] sm:$0xff]
  %v1844 = vld [vmem:[%s1842 + $0x8] sm:$0xff]
  %v1845 = vld [vmem:[%s1842 + $0x10] sm:$0xff]
  %v1846 = vld [vmem:[%s1842 + $0x18] sm:$0xff]
  %v1847 = vlaneseq
  %v1848 = vshrl.u32 %v1847, 7
  %v1849 = vsub.s32 3, %v1848
  %v1850 = vrot.slane %v234, %v1849
  %1851 = vmatprep.subr.mxu0 0.0
  %1852 = vmatpush1.msra.mxu0 %v1833
  %1853 = vmatprep.subr.mxu0 0.0
  %1854 = vmatpush1.msra.mxu0 %v1834
  %1855 = vmatprep.subr.mxu0 0.0
  %1856 = vmatpush1.msra.mxu0 %v1835
  %1857 = vmatprep.subr.mxu0 0.0
  %1858 = vmatpush1.msra.mxu0 %v1836
  %1859 = vmatprep.subr.mxu0 0.0
  %1860 = vmatpush1.msra.mxu0 0.0
  %1861 = vmatprep.subr.mxu0 0.0
  %1862 = vmatpush1.msra.mxu0 0.0
  %1863 = vmatprep.subr.mxu0 0.0
  %1864 = vmatpush1.msra.mxu0 0.0
  %1865 = vmatprep.subr.mxu0 0.0
  %1866 = vmatpush1.msra.mxu0 0.0
  %1867 = vmatprep.subr.mxu0 0.0
  %1868 = vmatpush1.msra.mxu0 0.0
  %1869 = vmatprep.subr.mxu0 0.0
  %1870 = vmatpush1.msra.mxu0 0.0
  %1871 = vmatprep.subr.mxu0 0.0
  %1872 = vmatpush1.msra.mxu0 0.0
  %1873 = vmatprep.subr.mxu0 0.0
  %1874 = vmatpush1.msra.mxu0 0.0
  %1875 = vmatprep.subr.mxu0 0.0
  %1876 = vmatpush1.msra.mxu0 0.0
  %1877 = vmatprep.subr.mxu0 0.0
  %1878 = vmatpush1.msra.mxu0 0.0
  %1879 = vmatprep.subr.mxu0 0.0
  %1880 = vmatpush1.msra.mxu0 0.0
  %1881 = vmatprep.subr.mxu0 0.0
  %1882 = vmatpush1.msra.mxu0 0.0
  %1883 = vmatprep.subr.mxu0 0.0
  %1884 = vmatpush1.msra.mxu0 0.0
  %1885 = vmatprep.subr.mxu0 0.0
  %1886 = vmatpush1.msra.mxu0 0.0
  %1887 = vmatprep.subr.mxu0 0.0
  %1888 = vmatpush1.msra.mxu0 0.0
  %1889 = vmatprep.subr.mxu0 0.0
  %1890 = vmatpush1.msra.mxu0 0.0
  %1891 = vmatprep.subr.mxu0 0.0
  %1892 = vmatpush1.msra.mxu0 0.0
  %1893 = vmatprep.subr.mxu0 0.0
  %1894 = vmatpush1.msra.mxu0 0.0
  %1895 = vmatprep.subr.mxu0 0.0
  %1896 = vmatpush1.msra.mxu0 0.0
  %1897 = vmatprep.subr.mxu0 0.0
  %1898 = vmatpush1.msra.mxu0 0.0
  %1899 = vmatprep.subr.mxu0 0.0
  %1900 = vmatpush1.msra.mxu0 0.0
  %1901 = vmatprep.subr.mxu0 0.0
  %1902 = vmatpush1.msra.mxu0 0.0
  %1903 = vmatprep.subr.mxu0 0.0
  %1904 = vmatpush1.msra.mxu0 0.0
  %1905 = vmatprep.subr.mxu0 0.0
  %1906 = vmatpush1.msra.mxu0 0.0
  %1907 = vmatprep.subr.mxu0 0.0
  %1908 = vmatpush1.msra.mxu0 0.0
  %1909 = vmatprep.subr.mxu0 0.0
  %1910 = vmatpush1.msra.mxu0 0.0
  %1911 = vmatprep.subr.mxu0 0.0
  %1912 = vmatpush1.msra.mxu0 0.0
  %1913 = vmatprep.subr.mxu0 0.0
  %1914 = vmatpush1.msra.mxu0 0.0
  %1915 = vmatprep.mubr.f32.mxu0 0.0
  %1916 = vmatmul.mubr.f32.gmra.mrb[0].mxu0 %v256
  %v1917 = vpop.f32.mrb[0].mxu0
  %v1918 = vadd.f32 %v1850, %v1917
  %v1919 = vpop.f32.mrb[0].mxu0
  %1920 = vmatprep.mubr.f32.mxu0 0.0
  %1921 = vmatmul.mubr.f32.gmra.mrb[0].mxu0 %v259
  %v1922 = vpop.f32.mrb[0].mxu0
  %v1923 = vadd.f32 %v1850, %v1922
  %v1924 = vpop.f32.mrb[0].mxu0
  %1925 = vdwg.mxu0
  %v1926 = vlaneseq
  %v1927 = vshrl.u32 %v1926, 7
  %v1928 = vsub.s32 7, %v1927
  %v1929 = vrot.slane %v234, %v1928
  %1930 = vmatprep.subr.mxu0 0.0
  %1931 = vmatpush1.msra.mxu0 %v1838
  %1932 = vmatprep.subr.mxu0 0.0
  %1933 = vmatpush1.msra.mxu0 %v1839
  %1934 = vmatprep.subr.mxu0 0.0
  %1935 = vmatpush1.msra.mxu0 %v1840
  %1936 = vmatprep.subr.mxu0 0.0
  %1937 = vmatpush1.msra.mxu0 %v1841
  %1938 = vmatprep.subr.mxu0 0.0
  %1939 = vmatpush1.msra.mxu0 0.0
  %1940 = vmatprep.subr.mxu0 0.0
  %1941 = vmatpush1.msra.mxu0 0.0
  %1942 = vmatprep.subr.mxu0 0.0
  %1943 = vmatpush1.msra.mxu0 0.0
  %1944 = vmatprep.subr.mxu0 0.0
  %1945 = vmatpush1.msra.mxu0 0.0
  %1946 = vmatprep.subr.mxu0 0.0
  %1947 = vmatpush1.msra.mxu0 0.0
  %1948 = vmatprep.subr.mxu0 0.0
  %1949 = vmatpush1.msra.mxu0 0.0
  %1950 = vmatprep.subr.mxu0 0.0
  %1951 = vmatpush1.msra.mxu0 0.0
  %1952 = vmatprep.subr.mxu0 0.0
  %1953 = vmatpush1.msra.mxu0 0.0
  %1954 = vmatprep.subr.mxu0 0.0
  %1955 = vmatpush1.msra.mxu0 0.0
  %1956 = vmatprep.subr.mxu0 0.0
  %1957 = vmatpush1.msra.mxu0 0.0
  %1958 = vmatprep.subr.mxu0 0.0
  %1959 = vmatpush1.msra.mxu0 0.0
  %1960 = vmatprep.subr.mxu0 0.0
  %1961 = vmatpush1.msra.mxu0 0.0
  %1962 = vmatprep.subr.mxu0 0.0
  %1963 = vmatpush1.msra.mxu0 0.0
  %1964 = vmatprep.subr.mxu0 0.0
  %1965 = vmatpush1.msra.mxu0 0.0
  %1966 = vmatprep.subr.mxu0 0.0
  %1967 = vmatpush1.msra.mxu0 0.0
  %1968 = vmatprep.subr.mxu0 0.0
  %1969 = vmatpush1.msra.mxu0 0.0
  %1970 = vmatprep.subr.mxu0 0.0
  %1971 = vmatpush1.msra.mxu0 0.0
  %1972 = vmatprep.subr.mxu0 0.0
  %1973 = vmatpush1.msra.mxu0 0.0
  %1974 = vmatprep.subr.mxu0 0.0
  %1975 = vmatpush1.msra.mxu0 0.0
  %1976 = vmatprep.subr.mxu0 0.0
  %1977 = vmatpush1.msra.mxu0 0.0
  %1978 = vmatprep.subr.mxu0 0.0
  %1979 = vmatpush1.msra.mxu0 0.0
  %1980 = vmatprep.subr.mxu0 0.0
  %1981 = vmatpush1.msra.mxu0 0.0
  %1982 = vmatprep.subr.mxu0 0.0
  %1983 = vmatpush1.msra.mxu0 0.0
  %1984 = vmatprep.subr.mxu0 0.0
  %1985 = vmatpush1.msra.mxu0 0.0
  %1986 = vmatprep.subr.mxu0 0.0
  %1987 = vmatpush1.msra.mxu0 0.0
  %1988 = vmatprep.subr.mxu0 0.0
  %1989 = vmatpush1.msra.mxu0 0.0
  %1990 = vmatprep.subr.mxu0 0.0
  %1991 = vmatpush1.msra.mxu0 0.0
  %1992 = vmatprep.subr.mxu0 0.0
  %1993 = vmatpush1.msra.mxu0 0.0
  %1994 = vmatprep.mubr.f32.mxu0 0.0
  %1995 = vmatmul.mubr.f32.gmra.mrb[0].mxu0 %v256
  %v1996 = vpop.f32.mrb[0].mxu0
  %v1997 = vadd.f32 %v1929, %v1996
  %v1998 = vpop.f32.mrb[0].mxu0
  %1999 = vmatprep.mubr.f32.mxu0 0.0
  %2000 = vmatmul.mubr.f32.gmra.mrb[0].mxu0 %v259
  %v2001 = vpop.f32.mrb[0].mxu0
  %v2002 = vadd.f32 %v1929, %v2001
  %v2003 = vpop.f32.mrb[0].mxu0
  %2004 = vdwg.mxu0
  %v2005 = vlaneseq
  %v2006 = vshrl.u32 %v2005, 7
  %v2007 = vsub.s32 3, %v2006
  %v2008 = vrot.slane %v235, %v2007
  %2009 = vmatprep.subr.mxu0 0.0
  %2010 = vmatpush1.msra.mxu0 %v1843
  %2011 = vmatprep.subr.mxu0 0.0
  %2012 = vmatpush1.msra.mxu0 %v1844
  %2013 = vmatprep.subr.mxu0 0.0
  %2014 = vmatpush1.msra.mxu0 %v1845
  %2015 = vmatprep.subr.mxu0 0.0
  %2016 = vmatpush1.msra.mxu0 %v1846
  %2017 = vmatprep.subr.mxu0 0.0
  %2018 = vmatpush1.msra.mxu0 0.0
  %2019 = vmatprep.subr.mxu0 0.0
  %2020 = vmatpush1.msra.mxu0 0.0
  %2021 = vmatprep.subr.mxu0 0.0
  %2022 = vmatpush1.msra.mxu0 0.0
  %2023 = vmatprep.subr.mxu0 0.0
  %2024 = vmatpush1.msra.mxu0 0.0
  %2025 = vmatprep.subr.mxu0 0.0
  %2026 = vmatpush1.msra.mxu0 0.0
  %2027 = vmatprep.subr.mxu0 0.0
  %2028 = vmatpush1.msra.mxu0 0.0
  %2029 = vmatprep.subr.mxu0 0.0
  %2030 = vmatpush1.msra.mxu0 0.0
  %2031 = vmatprep.subr.mxu0 0.0
  %2032 = vmatpush1.msra.mxu0 0.0
  %2033 = vmatprep.subr.mxu0 0.0
  %2034 = vmatpush1.msra.mxu0 0.0
  %2035 = vmatprep.subr.mxu0 0.0
  %2036 = vmatpush1.msra.mxu0 0.0
  %2037 = vmatprep.subr.mxu0 0.0
  %2038 = vmatpush1.msra.mxu0 0.0
  %2039 = vmatprep.subr.mxu0 0.0
  %2040 = vmatpush1.msra.mxu0 0.0
  %2041 = vmatprep.subr.mxu0 0.0
  %2042 = vmatpush1.msra.mxu0 0.0
  %2043 = vmatprep.subr.mxu0 0.0
  %2044 = vmatpush1.msra.mxu0 0.0
  %2045 = vmatprep.subr.mxu0 0.0
  %2046 = vmatpush1.msra.mxu0 0.0
  %2047 = vmatprep.subr.mxu0 0.0
  %2048 = vmatpush1.msra.mxu0 0.0
  %2049 = vmatprep.subr.mxu0 0.0
  %2050 = vmatpush1.msra.mxu0 0.0
  %2051 = vmatprep.subr.mxu0 0.0
  %2052 = vmatpush1.msra.mxu0 0.0
  %2053 = vmatprep.subr.mxu0 0.0
  %2054 = vmatpush1.msra.mxu0 0.0
  %2055 = vmatprep.subr.mxu0 0.0
  %2056 = vmatpush1.msra.mxu0 0.0
  %2057 = vmatprep.subr.mxu0 0.0
  %2058 = vmatpush1.msra.mxu0 0.0
  %2059 = vmatprep.subr.mxu0 0.0
  %2060 = vmatpush1.msra.mxu0 0.0
  %2061 = vmatprep.subr.mxu0 0.0
  %2062 = vmatpush1.msra.mxu0 0.0
  %2063 = vmatprep.subr.mxu0 0.0
  %2064 = vmatpush1.msra.mxu0 0.0
  %2065 = vmatprep.subr.mxu0 0.0
  %2066 = vmatpush1.msra.mxu0 0.0
  %2067 = vmatprep.subr.mxu0 0.0
  %2068 = vmatpush1.msra.mxu0 0.0
  %2069 = vmatprep.subr.mxu0 0.0
  %2070 = vmatpush1.msra.mxu0 0.0
  %2071 = vmatprep.subr.mxu0 0.0
  %2072 = vmatpush1.msra.mxu0 0.0
  %2073 = vmatprep.mubr.f32.mxu0 0.0
  %2074 = vmatmul.mubr.f32.gmra.mrb[0].mxu0 %v256
  %v2075 = vpop.f32.mrb[0].mxu0
  %v2076 = vadd.f32 %v2008, %v2075
  %v2077 = vpop.f32.mrb[0].mxu0
  %2078 = vmatprep.mubr.f32.mxu0 0.0
  %2079 = vmatmul.mubr.f32.gmra.mrb[0].mxu0 %v259
  %v2080 = vpop.f32.mrb[0].mxu0
  %v2081 = vadd.f32 %v2008, %v2080
  %v2082 = vpop.f32.mrb[0].mxu0
  %2083 = vdwg.mxu0
  %v2085 = vsel %vm494, %v1918, 0
  %v2088 = vsel %vm494, %v1923, 0
  %v2091 = vsel %vm494, %v1997, 0
  %v2094 = vsel %vm494, %v2002, 0
  %2096 = vmatprep.subr.mxu0 0.0
  %2097 = vmatpush1.xpose.msra.mxu0 %v2091
  %2098 = vmatprep.subr.mxu0 0.0
  %2099 = vmatpush1.xpose.msra.mxu0 %v2094
  %2100 = vmatprep.subr.mxu0 0.0
  %2101 = vmatpush1.xpose.msra.mxu0 0.0
  %2102 = vmatprep.subr.mxu0 0.0
  %2103 = vmatpush1.xpose.msra.mxu0 0.0
  %2104 = vmatprep.subr.mxu0 0.0
  %2105 = vmatpush1.xpose.msra.mxu0 0.0
  %2106 = vmatprep.subr.mxu0 0.0
  %2107 = vmatpush1.xpose.msra.mxu0 0.0
  %2108 = vmatprep.subr.mxu0 0.0
  %2109 = vmatpush1.xpose.msra.mxu0 0.0
  %2110 = vmatprep.subr.mxu0 0.0
  %2111 = vmatpush1.xpose.msra.mxu0 0.0
  %2112 = vmatprep.subr.mxu0 0.0
  %2113 = vmatpush1.xpose.msra.mxu0 0.0
  %2114 = vmatprep.subr.mxu0 0.0
  %2115 = vmatpush1.xpose.msra.mxu0 0.0
  %2116 = vmatprep.subr.mxu0 0.0
  %2117 = vmatpush1.xpose.msra.mxu0 0.0
  %2118 = vmatprep.subr.mxu0 0.0
  %2119 = vmatpush1.xpose.msra.mxu0 0.0
  %2120 = vmatprep.subr.mxu0 0.0
  %2121 = vmatpush1.xpose.msra.mxu0 0.0
  %2122 = vmatprep.subr.mxu0 0.0
  %2123 = vmatpush1.xpose.msra.mxu0 0.0
  %2124 = vmatprep.subr.mxu0 0.0
  %2125 = vmatpush1.xpose.msra.mxu0 0.0
  %2126 = vmatprep.subr.mxu0 0.0
  %2127 = vmatpush1.xpose.msra.mxu0 0.0
  %2128 = vmatprep.subr.mxu0 0.0
  %2129 = vmatpush1.xpose.msra.mxu0 0.0
  %2130 = vmatprep.subr.mxu0 0.0
  %2131 = vmatpush1.xpose.msra.mxu0 0.0
  %2132 = vmatprep.subr.mxu0 0.0
  %2133 = vmatpush1.xpose.msra.mxu0 0.0
  %2134 = vmatprep.subr.mxu0 0.0
  %2135 = vmatpush1.xpose.msra.mxu0 0.0
  %2136 = vmatprep.subr.mxu0 0.0
  %2137 = vmatpush1.xpose.msra.mxu0 0.0
  %2138 = vmatprep.subr.mxu0 0.0
  %2139 = vmatpush1.xpose.msra.mxu0 0.0
  %2140 = vmatprep.subr.mxu0 0.0
  %2141 = vmatpush1.xpose.msra.mxu0 0.0
  %2142 = vmatprep.subr.mxu0 0.0
  %2143 = vmatpush1.xpose.msra.mxu0 0.0
  %2144 = vmatprep.subr.mxu0 0.0
  %2145 = vmatpush1.xpose.msra.mxu0 0.0
  %2146 = vmatprep.subr.mxu0 0.0
  %2147 = vmatpush1.xpose.msra.mxu0 0.0
  %2148 = vmatprep.subr.mxu0 0.0
  %2149 = vmatpush1.xpose.msra.mxu0 0.0
  %2150 = vmatprep.subr.mxu0 0.0
  %2151 = vmatpush1.xpose.msra.mxu0 0.0
  %2152 = vmatprep.subr.mxu0 0.0
  %2153 = vmatpush1.xpose.msra.mxu0 0.0
  %2154 = vmatprep.subr.mxu0 0.0
  %2155 = vmatpush1.xpose.msra.mxu0 0.0
  %2156 = vmatprep.subr.mxu0 0.0
  %2157 = vmatpush1.xpose.msra.mxu0 0.0
  %2158 = vmatprep.subr.mxu0 0.0
  %2159 = vmatpush1.xpose.msra.mxu0 0.0
  %2160 = vmatprep.mubr.f32.mxu0 0.0
  %2161 = vmatmul.mubr.f32.gmra.mrb[0].mxu0 %v2085
  %v2162 = vpop.f32.mrb[0].mxu0
  %v2163 = vadd.f32 0.0, %v2162
  %v2164 = vpop.f32.mrb[0].mxu0
  %2165 = vmatprep.mubr.f32.mxu0 0.0
  %2166 = vmatmul.mubr.f32.gmra.mrb[0].mxu0 %v2088
  %v2167 = vpop.f32.mrb[0].mxu0
  %v2168 = vadd.f32 0.0, %v2167
  %v2169 = vpop.f32.mrb[0].mxu0
  %2170 = vdwg.mxu0
  %v2171 = vmul.f32 %v2163, 0.35355338
  %v2172 = vmul.f32 %v2168, 0.35355338
  %v2173 = vadd.f32 %v2171, %v232
  %v2174 = vadd.f32 %v2172, %v233
  %v2175 = vsel %vm586, %v2173, -inf
  %2176 = vmax.xlane.f32.xlu0 %v2175
  %v2177 = vpop.xlane.xlu0 %2176
  %v2178 = vsel %vm586, %v2174, -inf
  %2179 = vmax.xlane.f32.xlu0 %v2178
  %v2180 = vpop.xlane.xlu0 %2179
  %v2181 = vsub.f32 %v2173, %v2177
  %v2182 = vsub.f32 %v2174, %v2180
  %v2183 = vmul.f32 %v2181, 1.442695
  %v2184 = vpow.pop %v2183
  %v2185 = vmul.f32 %v2182, 1.442695
  %v2186 = vpow.pop %v2185
  %v2187 = vsel %vm586, %v2184, 0.0
  %2188 = vadd.xlane.f32.xlu0 %v2187
  %v2189 = vpop.xlane.xlu0 %2188
  %v2190 = vsel %vm586, %v2186, 0.0
  %2191 = vadd.xlane.f32.xlu0 %v2190
  %v2192 = vpop.xlane.xlu0 %2191
  %v2193 = vrcp.pop %v2189
  %v2194 = vrcp.pop %v2192
  %v2195 = vmul.f32 %v2184, %v2193
  %v2196 = vmul.f32 %v2186, %v2194
  %v2198 = vsel %vm586, %v2195, 0
  %v2201 = vsel %vm586, %v2196, 0
  %2203 = vmatprep.subr.mxu0 0.0
  %2204 = vmatpush1.msra.mxu0 %v2076
  %2205 = vmatprep.subr.mxu0 0.0
  %2206 = vmatpush1.msra.mxu0 %v2081
  %2207 = vmatprep.subr.mxu0 0.0
  %2208 = vmatpush1.msra.mxu0 0.0
  %2209 = vmatprep.subr.mxu0 0.0
  %2210 = vmatpush1.msra.mxu0 0.0
  %2211 = vmatprep.subr.mxu0 0.0
  %2212 = vmatpush1.msra.mxu0 0.0
  %2213 = vmatprep.subr.mxu0 0.0
  %2214 = vmatpush1.msra.mxu0 0.0
  %2215 = vmatprep.subr.mxu0 0.0
  %2216 = vmatpush1.msra.mxu0 0.0
  %2217 = vmatprep.subr.mxu0 0.0
  %2218 = vmatpush1.msra.mxu0 0.0
  %2219 = vmatprep.subr.mxu0 0.0
  %2220 = vmatpush1.msra.mxu0 0.0
  %2221 = vmatprep.subr.mxu0 0.0
  %2222 = vmatpush1.msra.mxu0 0.0
  %2223 = vmatprep.subr.mxu0 0.0
  %2224 = vmatpush1.msra.mxu0 0.0
  %2225 = vmatprep.subr.mxu0 0.0
  %2226 = vmatpush1.msra.mxu0 0.0
  %2227 = vmatprep.subr.mxu0 0.0
  %2228 = vmatpush1.msra.mxu0 0.0
  %2229 = vmatprep.subr.mxu0 0.0
  %2230 = vmatpush1.msra.mxu0 0.0
  %2231 = vmatprep.subr.mxu0 0.0
  %2232 = vmatpush1.msra.mxu0 0.0
  %2233 = vmatprep.subr.mxu0 0.0
  %2234 = vmatpush1.msra.mxu0 0.0
  %2235 = vmatprep.subr.mxu0 0.0
  %2236 = vmatpush1.msra.mxu0 0.0
  %2237 = vmatprep.subr.mxu0 0.0
  %2238 = vmatpush1.msra.mxu0 0.0
  %2239 = vmatprep.subr.mxu0 0.0
  %2240 = vmatpush1.msra.mxu0 0.0
  %2241 = vmatprep.subr.mxu0 0.0
  %2242 = vmatpush1.msra.mxu0 0.0
  %2243 = vmatprep.subr.mxu0 0.0
  %2244 = vmatpush1.msra.mxu0 0.0
  %2245 = vmatprep.subr.mxu0 0.0
  %2246 = vmatpush1.msra.mxu0 0.0
  %2247 = vmatprep.subr.mxu0 0.0
  %2248 = vmatpush1.msra.mxu0 0.0
  %2249 = vmatprep.subr.mxu0 0.0
  %2250 = vmatpush1.msra.mxu0 0.0
  %2251 = vmatprep.subr.mxu0 0.0
  %2252 = vmatpush1.msra.mxu0 0.0
  %2253 = vmatprep.subr.mxu0 0.0
  %2254 = vmatpush1.msra.mxu0 0.0
  %2255 = vmatprep.subr.mxu0 0.0
  %2256 = vmatpush1.msra.mxu0 0.0
  %2257 = vmatprep.subr.mxu0 0.0
  %2258 = vmatpush1.msra.mxu0 0.0
  %2259 = vmatprep.subr.mxu0 0.0
  %2260 = vmatpush1.msra.mxu0 0.0
  %2261 = vmatprep.subr.mxu0 0.0
  %2262 = vmatpush1.msra.mxu0 0.0
  %2263 = vmatprep.subr.mxu0 0.0
  %2264 = vmatpush1.msra.mxu0 0.0
  %2265 = vmatprep.subr.mxu0 0.0
  %2266 = vmatpush1.msra.mxu0 0.0
  %2267 = vmatprep.mubr.f32.mxu0 0.0
  %2268 = vmatmul.mubr.f32.gmra.mrb[0].mxu0 %v2198
  %v2269 = vpop.f32.mrb[0].mxu0
  %v2270 = vadd.f32 0.0, %v2269
  %v2271 = vpop.f32.mrb[0].mxu0
  %2272 = vmatprep.mubr.f32.mxu0 0.0
  %2273 = vmatmul.mubr.f32.gmra.mrb[0].mxu0 %v2201
  %v2274 = vpop.f32.mrb[0].mxu0
  %v2275 = vadd.f32 0.0, %v2274
  %v2276 = vpop.f32.mrb[0].mxu0
  %2277 = vdwg.mxu0
  %s2278 = scalar_lea.vmem %s5, 24
  %v2279 = vld [vmem:[%s2278] sm:$0xff]
  %v2281 = vsel %vm494, %v2270, 0
  %v2284 = vsel %vm494, %v2275, 0
  %2286 = vmatprep.subr.mxu0 0.0
  %2287 = vmatpush1.msra.mxu0 %v2279
  %2288 = vmatprep.subr.mxu0 0.0
  %2289 = vmatpush1.msra.mxu0 0.0
  %2290 = vmatprep.subr.mxu0 0.0
  %2291 = vmatpush1.msra.mxu0 0.0
  %2292 = vmatprep.subr.mxu0 0.0
  %2293 = vmatpush1.msra.mxu0 0.0
  %2294 = vmatprep.subr.mxu0 0.0
  %2295 = vmatpush1.msra.mxu0 0.0
  %2296 = vmatprep.subr.mxu0 0.0
  %2297 = vmatpush1.msra.mxu0 0.0
  %2298 = vmatprep.subr.mxu0 0.0
  %2299 = vmatpush1.msra.mxu0 0.0
  %2300 = vmatprep.subr.mxu0 0.0
  %2301 = vmatpush1.msra.mxu0 0.0
  %2302 = vmatprep.subr.mxu0 0.0
  %2303 = vmatpush1.msra.mxu0 0.0
  %2304 = vmatprep.subr.mxu0 0.0
  %2305 = vmatpush1.msra.mxu0 0.0
  %2306 = vmatprep.subr.mxu0 0.0
  %2307 = vmatpush1.msra.mxu0 0.0
  %2308 = vmatprep.subr.mxu0 0.0
  %2309 = vmatpush1.msra.mxu0 0.0
  %2310 = vmatprep.subr.mxu0 0.0
  %2311 = vmatpush1.msra.mxu0 0.0
  %2312 = vmatprep.subr.mxu0 0.0
  %2313 = vmatpush1.msra.mxu0 0.0
  %2314 = vmatprep.subr.mxu0 0.0
  %2315 = vmatpush1.msra.mxu0 0.0
  %2316 = vmatprep.subr.mxu0 0.0
  %2317 = vmatpush1.msra.mxu0 0.0
  %2318 = vmatprep.subr.mxu0 0.0
  %2319 = vmatpush1.msra.mxu0 0.0
  %2320 = vmatprep.subr.mxu0 0.0
  %2321 = vmatpush1.msra.mxu0 0.0
  %2322 = vmatprep.subr.mxu0 0.0
  %2323 = vmatpush1.msra.mxu0 0.0
  %2324 = vmatprep.subr.mxu0 0.0
  %2325 = vmatpush1.msra.mxu0 0.0
  %2326 = vmatprep.subr.mxu0 0.0
  %2327 = vmatpush1.msra.mxu0 0.0
  %2328 = vmatprep.subr.mxu0 0.0
  %2329 = vmatpush1.msra.mxu0 0.0
  %2330 = vmatprep.subr.mxu0 0.0
  %2331 = vmatpush1.msra.mxu0 0.0
  %2332 = vmatprep.subr.mxu0 0.0
  %2333 = vmatpush1.msra.mxu0 0.0
  %2334 = vmatprep.subr.mxu0 0.0
  %2335 = vmatpush1.msra.mxu0 0.0
  %2336 = vmatprep.subr.mxu0 0.0
  %2337 = vmatpush1.msra.mxu0 0.0
  %2338 = vmatprep.subr.mxu0 0.0
  %2339 = vmatpush1.msra.mxu0 0.0
  %2340 = vmatprep.subr.mxu0 0.0
  %2341 = vmatpush1.msra.mxu0 0.0
  %2342 = vmatprep.subr.mxu0 0.0
  %2343 = vmatpush1.msra.mxu0 0.0
  %2344 = vmatprep.subr.mxu0 0.0
  %2345 = vmatpush1.msra.mxu0 0.0
  %2346 = vmatprep.subr.mxu0 0.0
  %2347 = vmatpush1.msra.mxu0 0.0
  %2348 = vmatprep.subr.mxu0 0.0
  %2349 = vmatpush1.msra.mxu0 0.0
  %2350 = vmatprep.mubr.f32.mxu0 0.0
  %2351 = vmatmul.mubr.f32.gmra.mrb[0].mxu0 %v2281
  %v2352 = vpop.f32.mrb[0].mxu0
  %v2353 = vadd.f32 0.0, %v2352
  %v2354 = vpop.f32.mrb[0].mxu0
  %2355 = vmatprep.mubr.f32.mxu0 0.0
  %2356 = vmatmul.mubr.f32.gmra.mrb[0].mxu0 %v2284
  %v2357 = vpop.f32.mrb[0].mxu0
  %v2358 = vadd.f32 0.0, %v2357
  %v2359 = vpop.f32.mrb[0].mxu0
  %2360 = vdwg.mxu0
  %v2361 = vadd.f32 %v1830, %v2353
  %v2362 = vadd.f32 %v1831, %v2358
  %v2363 = vadd.f32 %v221, %v2361
  %v2364 = vadd.f32 %v222, %v2362
  %v2365 = vlaneseq
  %v2366 = vshrl.u32 %v2365, 7
  %v2367 = vsub.s32 4, %v2366
  %v2368 = vrot.slane %v235, %v2367
  %v2369 = vadd.f32 %v2363, %v2368
  %v2370 = vadd.f32 %v2364, %v2368
  %v2371 = vsel %vm177, %v2369, 0.0
  %2372 = vadd.xlane.f32.xlu0 %v2371
  %v2373 = vpop.xlane.xlu0 %2372
  %v2374 = vsel %vm177, %v2370, 0.0
  %2375 = vadd.xlane.f32.xlu0 %v2374
  %v2376 = vpop.xlane.xlu0 %2375
  %v2377 = vmul.f32 %v2373, %v184
  %v2378 = vmul.f32 %v2376, %v184
  %v2379 = vmul.f32 %v2369, %v2369
  %v2380 = vmul.f32 %v2370, %v2370
  %v2381 = vsel %vm177, %v2379, 0.0
  %2382 = vadd.xlane.f32.xlu0 %v2381
  %v2383 = vpop.xlane.xlu0 %2382
  %v2384 = vsel %vm177, %v2380, 0.0
  %2385 = vadd.xlane.f32.xlu0 %v2384
  %v2386 = vpop.xlane.xlu0 %2385
  %v2387 = vmul.f32 %v2383, %v184
  %v2388 = vmul.f32 %v2386, %v184
  %v2389 = vmul.f32 %v2377, %v2377
  %v2390 = vmul.f32 %v2378, %v2378
  %v2391 = vsub.f32 %v2387, %v2389
  %v2392 = vsub.f32 %v2388, %v2390
  %v2393 = vmax.f32 %v2391, 0.0
  %v2394 = vmax.f32 %v2392, 0.0
  %v2395 = vsub.f32 %v2369, %v2377
  %v2396 = vsub.f32 %v2370, %v2378
  %v2397 = vadd.f32 %v2393, 1e-12
  %v2398 = vadd.f32 %v2394, 1e-12
  %v2399 = vrsqrt.pop %v2397
  %v2400 = vrsqrt.pop %v2398
  %v2401 = vmul.f32 %v2395, %v2399
  %v2402 = vmul.f32 %v2396, %v2400
  %v2403 = vlaneseq
  %v2404 = vshrl.u32 %v2403, 7
  %v2405 = vsub.s32 5, %v2404
  %v2406 = vrot.slane %v235, %v2405
  %v2407 = vmul.f32 %v2401, %v2406
  %v2408 = vmul.f32 %v2402, %v2406
  %v2409 = vlaneseq
  %v2410 = vshrl.u32 %v2409, 7
  %v2411 = vsub.s32 6, %v2410
  %v2412 = vrot.slane %v235, %v2411
  %v2413 = vadd.f32 %v2407, %v2412
  %v2414 = vadd.f32 %v2408, %v2412
  %v2415 = vld [vmem:[%s6] sm:$0xff]
  %v2416 = vld [vmem:[%s6 + $0x8] sm:$0xff]
  %v2417 = vld [vmem:[%s6 + $0x10] sm:$0xff]
  %v2418 = vld [vmem:[%s6 + $0x18] sm:$0xff]
  %v2419 = vlaneseq
  %v2420 = vshrl.u32 %v2419, 7
  %v2421 = vsub.s32 7, %v2420
  %v2422 = vrot.slane %v235, %v2421
  %v2424 = vsel %vm177, %v2413, 0
  %v2427 = vsel %vm177, %v2414, 0
  %2429 = vmatprep.subr.mxu0 0.0
  %2430 = vmatpush1.msra.mxu0 %v2415
  %2431 = vmatprep.subr.mxu0 0.0
  %2432 = vmatpush1.msra.mxu0 %v2416
  %2433 = vmatprep.subr.mxu0 0.0
  %2434 = vmatpush1.msra.mxu0 %v2417
  %2435 = vmatprep.subr.mxu0 0.0
  %2436 = vmatpush1.msra.mxu0 %v2418
  %2437 = vmatprep.subr.mxu0 0.0
  %2438 = vmatpush1.msra.mxu0 0.0
  %2439 = vmatprep.subr.mxu0 0.0
  %2440 = vmatpush1.msra.mxu0 0.0
  %2441 = vmatprep.subr.mxu0 0.0
  %2442 = vmatpush1.msra.mxu0 0.0
  %2443 = vmatprep.subr.mxu0 0.0
  %2444 = vmatpush1.msra.mxu0 0.0
  %2445 = vmatprep.subr.mxu0 0.0
  %2446 = vmatpush1.msra.mxu0 0.0
  %2447 = vmatprep.subr.mxu0 0.0
  %2448 = vmatpush1.msra.mxu0 0.0
  %2449 = vmatprep.subr.mxu0 0.0
  %2450 = vmatpush1.msra.mxu0 0.0
  %2451 = vmatprep.subr.mxu0 0.0
  %2452 = vmatpush1.msra.mxu0 0.0
  %2453 = vmatprep.subr.mxu0 0.0
  %2454 = vmatpush1.msra.mxu0 0.0
  %2455 = vmatprep.subr.mxu0 0.0
  %2456 = vmatpush1.msra.mxu0 0.0
  %2457 = vmatprep.subr.mxu0 0.0
  %2458 = vmatpush1.msra.mxu0 0.0
  %2459 = vmatprep.subr.mxu0 0.0
  %2460 = vmatpush1.msra.mxu0 0.0
  %2461 = vmatprep.subr.mxu0 0.0
  %2462 = vmatpush1.msra.mxu0 0.0
  %2463 = vmatprep.subr.mxu0 0.0
  %2464 = vmatpush1.msra.mxu0 0.0
  %2465 = vmatprep.subr.mxu0 0.0
  %2466 = vmatpush1.msra.mxu0 0.0
  %2467 = vmatprep.subr.mxu0 0.0
  %2468 = vmatpush1.msra.mxu0 0.0
  %2469 = vmatprep.subr.mxu0 0.0
  %2470 = vmatpush1.msra.mxu0 0.0
  %2471 = vmatprep.subr.mxu0 0.0
  %2472 = vmatpush1.msra.mxu0 0.0
  %2473 = vmatprep.subr.mxu0 0.0
  %2474 = vmatpush1.msra.mxu0 0.0
  %2475 = vmatprep.subr.mxu0 0.0
  %2476 = vmatpush1.msra.mxu0 0.0
  %2477 = vmatprep.subr.mxu0 0.0
  %2478 = vmatpush1.msra.mxu0 0.0
  %2479 = vmatprep.subr.mxu0 0.0
  %2480 = vmatpush1.msra.mxu0 0.0
  %2481 = vmatprep.subr.mxu0 0.0
  %2482 = vmatpush1.msra.mxu0 0.0
  %2483 = vmatprep.subr.mxu0 0.0
  %2484 = vmatpush1.msra.mxu0 0.0
  %2485 = vmatprep.subr.mxu0 0.0
  %2486 = vmatpush1.msra.mxu0 0.0
  %2487 = vmatprep.subr.mxu0 0.0
  %2488 = vmatpush1.msra.mxu0 0.0
  %2489 = vmatprep.subr.mxu0 0.0
  %2490 = vmatpush1.msra.mxu0 0.0
  %2491 = vmatprep.subr.mxu0 0.0
  %2492 = vmatpush1.msra.mxu0 0.0
  %2493 = vmatprep.mubr.f32.mxu0 0.0
  %2494 = vmatmul.mubr.f32.gmra.mrb[0].mxu0 %v2424
  %v2495 = vpop.f32.mrb[0].mxu0
  %v2496 = vadd.f32 %v2422, %v2495
  %v2497 = vpop.f32.mrb[0].mxu0
  %2498 = vmatprep.mubr.f32.mxu0 0.0
  %2499 = vmatmul.mubr.f32.gmra.mrb[0].mxu0 %v2427
  %v2500 = vpop.f32.mrb[0].mxu0
  %v2501 = vadd.f32 %v2422, %v2500
  %v2502 = vpop.f32.mrb[0].mxu0
  %2503 = vdwg.mxu0
  %v2504 = vmul.f32 %v2496, 0.5
  %v2505 = vmul.f32 %v2501, 0.5
  %v2506 = vmul.f32 %v2496, 0.70710677
  %v2507 = vmul.f32 %v2501, 0.70710677
  %v2508 = verf.f32.pop %v2506
  %v2509 = verf.f32.pop %v2507
  %v2510 = vadd.f32 %v2508, 1.0
  %v2511 = vadd.f32 %v2509, 1.0
  %v2512 = vmul.f32 %v2504, %v2510
  %v2513 = vmul.f32 %v2505, %v2511
  %v2514 = vld [vmem:[%s7] sm:$0xff]
  %v2515 = vld [vmem:[%s7 + $0x8] sm:$0xff]
  %v2516 = vld [vmem:[%s7 + $0x10] sm:$0xff]
  %v2517 = vld [vmem:[%s7 + $0x18] sm:$0xff]
  %v2518 = vld [vmem:[%s7 + $0x20] sm:$0xff]
  %v2519 = vld [vmem:[%s7 + $0x28] sm:$0xff]
  %v2520 = vld [vmem:[%s7 + $0x30] sm:$0xff]
  %v2521 = vld [vmem:[%s7 + $0x38] sm:$0xff]
  %v2522 = vlaneseq
  %v2523 = vshrl.u32 %v2522, 7
  %v2524 = vsub.s32 0, %v2523
  %v2525 = vrot.slane %v236, %v2524
  %vm2526 = vcmask 523264
  %v2528 = vsel %vm2526, %v2512, 0
  %v2531 = vsel %vm2526, %v2513, 0
  %2533 = vmatprep.subr.mxu0 0.0
  %2534 = vmatpush1.msra.mxu0 %v2514
  %2535 = vmatprep.subr.mxu0 0.0
  %2536 = vmatpush1.msra.mxu0 %v2515
  %2537 = vmatprep.subr.mxu0 0.0
  %2538 = vmatpush1.msra.mxu0 %v2516
  %2539 = vmatprep.subr.mxu0 0.0
  %2540 = vmatpush1.msra.mxu0 %v2517
  %2541 = vmatprep.subr.mxu0 0.0
  %2542 = vmatpush1.msra.mxu0 %v2518
  %2543 = vmatprep.subr.mxu0 0.0
  %2544 = vmatpush1.msra.mxu0 %v2519
  %2545 = vmatprep.subr.mxu0 0.0
  %2546 = vmatpush1.msra.mxu0 %v2520
  %2547 = vmatprep.subr.mxu0 0.0
  %2548 = vmatpush1.msra.mxu0 %v2521
  %2549 = vmatprep.subr.mxu0 0.0
  %2550 = vmatpush1.msra.mxu0 0.0
  %2551 = vmatprep.subr.mxu0 0.0
  %2552 = vmatpush1.msra.mxu0 0.0
  %2553 = vmatprep.subr.mxu0 0.0
  %2554 = vmatpush1.msra.mxu0 0.0
  %2555 = vmatprep.subr.mxu0 0.0
  %2556 = vmatpush1.msra.mxu0 0.0
  %2557 = vmatprep.subr.mxu0 0.0
  %2558 = vmatpush1.msra.mxu0 0.0
  %2559 = vmatprep.subr.mxu0 0.0
  %2560 = vmatpush1.msra.mxu0 0.0
  %2561 = vmatprep.subr.mxu0 0.0
  %2562 = vmatpush1.msra.mxu0 0.0
  %2563 = vmatprep.subr.mxu0 0.0
  %2564 = vmatpush1.msra.mxu0 0.0
  %2565 = vmatprep.subr.mxu0 0.0
  %2566 = vmatpush1.msra.mxu0 0.0
  %2567 = vmatprep.subr.mxu0 0.0
  %2568 = vmatpush1.msra.mxu0 0.0
  %2569 = vmatprep.subr.mxu0 0.0
  %2570 = vmatpush1.msra.mxu0 0.0
  %2571 = vmatprep.subr.mxu0 0.0
  %2572 = vmatpush1.msra.mxu0 0.0
  %2573 = vmatprep.subr.mxu0 0.0
  %2574 = vmatpush1.msra.mxu0 0.0
  %2575 = vmatprep.subr.mxu0 0.0
  %2576 = vmatpush1.msra.mxu0 0.0
  %2577 = vmatprep.subr.mxu0 0.0
  %2578 = vmatpush1.msra.mxu0 0.0
  %2579 = vmatprep.subr.mxu0 0.0
  %2580 = vmatpush1.msra.mxu0 0.0
  %2581 = vmatprep.subr.mxu0 0.0
  %2582 = vmatpush1.msra.mxu0 0.0
  %2583 = vmatprep.subr.mxu0 0.0
  %2584 = vmatpush1.msra.mxu0 0.0
  %2585 = vmatprep.subr.mxu0 0.0
  %2586 = vmatpush1.msra.mxu0 0.0
  %2587 = vmatprep.subr.mxu0 0.0
  %2588 = vmatpush1.msra.mxu0 0.0
  %2589 = vmatprep.subr.mxu0 0.0
  %2590 = vmatpush1.msra.mxu0 0.0
  %2591 = vmatprep.subr.mxu0 0.0
  %2592 = vmatpush1.msra.mxu0 0.0
  %2593 = vmatprep.subr.mxu0 0.0
  %2594 = vmatpush1.msra.mxu0 0.0
  %2595 = vmatprep.subr.mxu0 0.0
  %2596 = vmatpush1.msra.mxu0 0.0
  %2597 = vmatprep.mubr.f32.mxu0 0.0
  %2598 = vmatmul.mubr.f32.gmra.mrb[0].mxu0 %v2528
  %v2599 = vpop.f32.mrb[0].mxu0
  %v2600 = vadd.f32 %v2525, %v2599
  %v2601 = vpop.f32.mrb[0].mxu0
  %2602 = vmatprep.mubr.f32.mxu0 0.0
  %2603 = vmatmul.mubr.f32.gmra.mrb[0].mxu0 %v2531
  %v2604 = vpop.f32.mrb[0].mxu0
  %v2605 = vadd.f32 %v2525, %v2604
  %v2606 = vpop.f32.mrb[0].mxu0
  %2607 = vdwg.mxu0
  %v2608 = vadd.f32 %v2413, %v2600
  %v2609 = vadd.f32 %v2414, %v2605
  %v2610 = vsel %vm177, %v2608, 0.0
  %2611 = vadd.xlane.f32.xlu0 %v2610
  %v2612 = vpop.xlane.xlu0 %2611
  %v2613 = vsel %vm177, %v2609, 0.0
  %2614 = vadd.xlane.f32.xlu0 %v2613
  %v2615 = vpop.xlane.xlu0 %2614
  %v2616 = vmul.f32 %v2612, %v184
  %v2617 = vmul.f32 %v2615, %v184
  %v2618 = vmul.f32 %v2608, %v2608
  %v2619 = vmul.f32 %v2609, %v2609
  %v2620 = vsel %vm177, %v2618, 0.0
  %2621 = vadd.xlane.f32.xlu0 %v2620
  %v2622 = vpop.xlane.xlu0 %2621
  %v2623 = vsel %vm177, %v2619, 0.0
  %2624 = vadd.xlane.f32.xlu0 %v2623
  %v2625 = vpop.xlane.xlu0 %2624
  %v2626 = vmul.f32 %v2622, %v184
  %v2627 = vmul.f32 %v2625, %v184
  %v2628 = vmul.f32 %v2616, %v2616
  %v2629 = vmul.f32 %v2617, %v2617
  %v2630 = vsub.f32 %v2626, %v2628
  %v2631 = vsub.f32 %v2627, %v2629
  %v2632 = vmax.f32 %v2630, 0.0
  %v2633 = vmax.f32 %v2631, 0.0
  %v2634 = vsub.f32 %v2608, %v2616
  %v2635 = vsub.f32 %v2609, %v2617
  %v2636 = vadd.f32 %v2632, 1e-12
  %v2637 = vadd.f32 %v2633, 1e-12
  %v2638 = vrsqrt.pop %v2636
  %v2639 = vrsqrt.pop %v2637
  %v2640 = vmul.f32 %v2634, %v2638
  %v2641 = vmul.f32 %v2635, %v2639
  %v2642 = vlaneseq
  %v2643 = vshrl.u32 %v2642, 7
  %v2644 = vsub.s32 1, %v2643
  %v2645 = vrot.slane %v236, %v2644
  %v2646 = vmul.f32 %v2640, %v2645
  %v2647 = vmul.f32 %v2641, %v2645
  %v2648 = vlaneseq
  %v2649 = vshrl.u32 %v2648, 7
  %v2650 = vsub.s32 2, %v2649
  %v2651 = vrot.slane %v236, %v2650
  %v2652 = vadd.f32 %v2646, %v2651
  %v2653 = vadd.f32 %v2647, %v2651
  %s2654 = scalar_lea.vmem %s8, 24
  %v2655 = vld [vmem:[%s2654] sm:$0xff]
  %v2656 = vld [vmem:[%s2654 + $0x8] sm:$0xff]
  %v2657 = vld [vmem:[%s2654 + $0x10] sm:$0xff]
  %s2658 = scalar_lea.vmem %s4, 384
  %v2659 = vld [vmem:[%s2658] sm:$0xff]
  %v2660 = vld [vmem:[%s2658 + $0x8] sm:$0xff]
  %v2661 = vld [vmem:[%s2658 + $0x10] sm:$0xff]
  %v2662 = vld [vmem:[%s2658 + $0x18] sm:$0xff]
  %s2663 = scalar_lea.vmem %s4, 512
  %v2664 = vld [vmem:[%s2663] sm:$0xff]
  %v2665 = vld [vmem:[%s2663 + $0x8] sm:$0xff]
  %v2666 = vld [vmem:[%s2663 + $0x10] sm:$0xff]
  %v2667 = vld [vmem:[%s2663 + $0x18] sm:$0xff]
  %s2668 = scalar_lea.vmem %s4, 640
  %v2669 = vld [vmem:[%s2668] sm:$0xff]
  %v2670 = vld [vmem:[%s2668 + $0x8] sm:$0xff]
  %v2671 = vld [vmem:[%s2668 + $0x10] sm:$0xff]
  %v2672 = vld [vmem:[%s2668 + $0x18] sm:$0xff]
  %v2673 = vlaneseq
  %v2674 = vshrl.u32 %v2673, 7
  %v2675 = vsub.s32 0, %v2674
  %v2676 = vrot.slane %v2655, %v2675
  %v2678 = vsel %vm177, %v2652, 0
  %v2681 = vsel %vm177, %v2653, 0
  %2683 = vmatprep.subr.mxu0 0.0
  %2684 = vmatpush1.msra.mxu0 %v2659
  %2685 = vmatprep.subr.mxu0 0.0
  %2686 = vmatpush1.msra.mxu0 %v2660
  %2687 = vmatprep.subr.mxu0 0.0
  %2688 = vmatpush1.msra.mxu0 %v2661
  %2689 = vmatprep.subr.mxu0 0.0
  %2690 = vmatpush1.msra.mxu0 %v2662
  %2691 = vmatprep.subr.mxu0 0.0
  %2692 = vmatpush1.msra.mxu0 0.0
  %2693 = vmatprep.subr.mxu0 0.0
  %2694 = vmatpush1.msra.mxu0 0.0
  %2695 = vmatprep.subr.mxu0 0.0
  %2696 = vmatpush1.msra.mxu0 0.0
  %2697 = vmatprep.subr.mxu0 0.0
  %2698 = vmatpush1.msra.mxu0 0.0
  %2699 = vmatprep.subr.mxu0 0.0
  %2700 = vmatpush1.msra.mxu0 0.0
  %2701 = vmatprep.subr.mxu0 0.0
  %2702 = vmatpush1.msra.mxu0 0.0
  %2703 = vmatprep.subr.mxu0 0.0
  %2704 = vmatpush1.msra.mxu0 0.0
  %2705 = vmatprep.subr.mxu0 0.0
  %2706 = vmatpush1.msra.mxu0 0.0
  %2707 = vmatprep.subr.mxu0 0.0
  %2708 = vmatpush1.msra.mxu0 0.0
  %2709 = vmatprep.subr.mxu0 0.0
  %2710 = vmatpush1.msra.mxu0 0.0
  %2711 = vmatprep.subr.mxu0 0.0
  %2712 = vmatpush1.msra.mxu0 0.0
  %2713 = vmatprep.subr.mxu0 0.0
  %2714 = vmatpush1.msra.mxu0 0.0
  %2715 = vmatprep.subr.mxu0 0.0
  %2716 = vmatpush1.msra.mxu0 0.0
  %2717 = vmatprep.subr.mxu0 0.0
  %2718 = vmatpush1.msra.mxu0 0.0
  %2719 = vmatprep.subr.mxu0 0.0
  %2720 = vmatpush1.msra.mxu0 0.0
  %2721 = vmatprep.subr.mxu0 0.0
  %2722 = vmatpush1.msra.mxu0 0.0
  %2723 = vmatprep.subr.mxu0 0.0
  %2724 = vmatpush1.msra.mxu0 0.0
  %2725 = vmatprep.subr.mxu0 0.0
  %2726 = vmatpush1.msra.mxu0 0.0
  %2727 = vmatprep.subr.mxu0 0.0
  %2728 = vmatpush1.msra.mxu0 0.0
  %2729 = vmatprep.subr.mxu0 0.0
  %2730 = vmatpush1.msra.mxu0 0.0
  %2731 = vmatprep.subr.mxu0 0.0
  %2732 = vmatpush1.msra.mxu0 0.0
  %2733 = vmatprep.subr.mxu0 0.0
  %2734 = vmatpush1.msra.mxu0 0.0
  %2735 = vmatprep.subr.mxu0 0.0
  %2736 = vmatpush1.msra.mxu0 0.0
  %2737 = vmatprep.subr.mxu0 0.0
  %2738 = vmatpush1.msra.mxu0 0.0
  %2739 = vmatprep.subr.mxu0 0.0
  %2740 = vmatpush1.msra.mxu0 0.0
  %2741 = vmatprep.subr.mxu0 0.0
  %2742 = vmatpush1.msra.mxu0 0.0
  %2743 = vmatprep.subr.mxu0 0.0
  %2744 = vmatpush1.msra.mxu0 0.0
  %2745 = vmatprep.subr.mxu0 0.0
  %2746 = vmatpush1.msra.mxu0 0.0
  %2747 = vmatprep.mubr.f32.mxu0 0.0
  %2748 = vmatmul.mubr.f32.gmra.mrb[0].mxu0 %v2678
  %v2749 = vpop.f32.mrb[0].mxu0
  %v2750 = vadd.f32 %v2676, %v2749
  %v2751 = vpop.f32.mrb[0].mxu0
  %2752 = vmatprep.mubr.f32.mxu0 0.0
  %2753 = vmatmul.mubr.f32.gmra.mrb[0].mxu0 %v2681
  %v2754 = vpop.f32.mrb[0].mxu0
  %v2755 = vadd.f32 %v2676, %v2754
  %v2756 = vpop.f32.mrb[0].mxu0
  %2757 = vdwg.mxu0
  %v2758 = vlaneseq
  %v2759 = vshrl.u32 %v2758, 7
  %v2760 = vsub.s32 4, %v2759
  %v2761 = vrot.slane %v2655, %v2760
  %2762 = vmatprep.subr.mxu0 0.0
  %2763 = vmatpush1.msra.mxu0 %v2664
  %2764 = vmatprep.subr.mxu0 0.0
  %2765 = vmatpush1.msra.mxu0 %v2665
  %2766 = vmatprep.subr.mxu0 0.0
  %2767 = vmatpush1.msra.mxu0 %v2666
  %2768 = vmatprep.subr.mxu0 0.0
  %2769 = vmatpush1.msra.mxu0 %v2667
  %2770 = vmatprep.subr.mxu0 0.0
  %2771 = vmatpush1.msra.mxu0 0.0
  %2772 = vmatprep.subr.mxu0 0.0
  %2773 = vmatpush1.msra.mxu0 0.0
  %2774 = vmatprep.subr.mxu0 0.0
  %2775 = vmatpush1.msra.mxu0 0.0
  %2776 = vmatprep.subr.mxu0 0.0
  %2777 = vmatpush1.msra.mxu0 0.0
  %2778 = vmatprep.subr.mxu0 0.0
  %2779 = vmatpush1.msra.mxu0 0.0
  %2780 = vmatprep.subr.mxu0 0.0
  %2781 = vmatpush1.msra.mxu0 0.0
  %2782 = vmatprep.subr.mxu0 0.0
  %2783 = vmatpush1.msra.mxu0 0.0
  %2784 = vmatprep.subr.mxu0 0.0
  %2785 = vmatpush1.msra.mxu0 0.0
  %2786 = vmatprep.subr.mxu0 0.0
  %2787 = vmatpush1.msra.mxu0 0.0
  %2788 = vmatprep.subr.mxu0 0.0
  %2789 = vmatpush1.msra.mxu0 0.0
  %2790 = vmatprep.subr.mxu0 0.0
  %2791 = vmatpush1.msra.mxu0 0.0
  %2792 = vmatprep.subr.mxu0 0.0
  %2793 = vmatpush1.msra.mxu0 0.0
  %2794 = vmatprep.subr.mxu0 0.0
  %2795 = vmatpush1.msra.mxu0 0.0
  %2796 = vmatprep.subr.mxu0 0.0
  %2797 = vmatpush1.msra.mxu0 0.0
  %2798 = vmatprep.subr.mxu0 0.0
  %2799 = vmatpush1.msra.mxu0 0.0
  %2800 = vmatprep.subr.mxu0 0.0
  %2801 = vmatpush1.msra.mxu0 0.0
  %2802 = vmatprep.subr.mxu0 0.0
  %2803 = vmatpush1.msra.mxu0 0.0
  %2804 = vmatprep.subr.mxu0 0.0
  %2805 = vmatpush1.msra.mxu0 0.0
  %2806 = vmatprep.subr.mxu0 0.0
  %2807 = vmatpush1.msra.mxu0 0.0
  %2808 = vmatprep.subr.mxu0 0.0
  %2809 = vmatpush1.msra.mxu0 0.0
  %2810 = vmatprep.subr.mxu0 0.0
  %2811 = vmatpush1.msra.mxu0 0.0
  %2812 = vmatprep.subr.mxu0 0.0
  %2813 = vmatpush1.msra.mxu0 0.0
  %2814 = vmatprep.subr.mxu0 0.0
  %2815 = vmatpush1.msra.mxu0 0.0
  %2816 = vmatprep.subr.mxu0 0.0
  %2817 = vmatpush1.msra.mxu0 0.0
  %2818 = vmatprep.subr.mxu0 0.0
  %2819 = vmatpush1.msra.mxu0 0.0
  %2820 = vmatprep.subr.mxu0 0.0
  %2821 = vmatpush1.msra.mxu0 0.0
  %2822 = vmatprep.subr.mxu0 0.0
  %2823 = vmatpush1.msra.mxu0 0.0
  %2824 = vmatprep.subr.mxu0 0.0
  %2825 = vmatpush1.msra.mxu0 0.0
  %2826 = vmatprep.mubr.f32.mxu0 0.0
  %2827 = vmatmul.mubr.f32.gmra.mrb[0].mxu0 %v2678
  %v2828 = vpop.f32.mrb[0].mxu0
  %v2829 = vadd.f32 %v2761, %v2828
  %v2830 = vpop.f32.mrb[0].mxu0
  %2831 = vmatprep.mubr.f32.mxu0 0.0
  %2832 = vmatmul.mubr.f32.gmra.mrb[0].mxu0 %v2681
  %v2833 = vpop.f32.mrb[0].mxu0
  %v2834 = vadd.f32 %v2761, %v2833
  %v2835 = vpop.f32.mrb[0].mxu0
  %2836 = vdwg.mxu0
  %v2837 = vlaneseq
  %v2838 = vshrl.u32 %v2837, 7
  %v2839 = vsub.s32 0, %v2838
  %v2840 = vrot.slane %v2656, %v2839
  %2841 = vmatprep.subr.mxu0 0.0
  %2842 = vmatpush1.msra.mxu0 %v2669
  %2843 = vmatprep.subr.mxu0 0.0
  %2844 = vmatpush1.msra.mxu0 %v2670
  %2845 = vmatprep.subr.mxu0 0.0
  %2846 = vmatpush1.msra.mxu0 %v2671
  %2847 = vmatprep.subr.mxu0 0.0
  %2848 = vmatpush1.msra.mxu0 %v2672
  %2849 = vmatprep.subr.mxu0 0.0
  %2850 = vmatpush1.msra.mxu0 0.0
  %2851 = vmatprep.subr.mxu0 0.0
  %2852 = vmatpush1.msra.mxu0 0.0
  %2853 = vmatprep.subr.mxu0 0.0
  %2854 = vmatpush1.msra.mxu0 0.0
  %2855 = vmatprep.subr.mxu0 0.0
  %2856 = vmatpush1.msra.mxu0 0.0
  %2857 = vmatprep.subr.mxu0 0.0
  %2858 = vmatpush1.msra.mxu0 0.0
  %2859 = vmatprep.subr.mxu0 0.0
  %2860 = vmatpush1.msra.mxu0 0.0
  %2861 = vmatprep.subr.mxu0 0.0
  %2862 = vmatpush1.msra.mxu0 0.0
  %2863 = vmatprep.subr.mxu0 0.0
  %2864 = vmatpush1.msra.mxu0 0.0
  %2865 = vmatprep.subr.mxu0 0.0
  %2866 = vmatpush1.msra.mxu0 0.0
  %2867 = vmatprep.subr.mxu0 0.0
  %2868 = vmatpush1.msra.mxu0 0.0
  %2869 = vmatprep.subr.mxu0 0.0
  %2870 = vmatpush1.msra.mxu0 0.0
  %2871 = vmatprep.subr.mxu0 0.0
  %2872 = vmatpush1.msra.mxu0 0.0
  %2873 = vmatprep.subr.mxu0 0.0
  %2874 = vmatpush1.msra.mxu0 0.0
  %2875 = vmatprep.subr.mxu0 0.0
  %2876 = vmatpush1.msra.mxu0 0.0
  %2877 = vmatprep.subr.mxu0 0.0
  %2878 = vmatpush1.msra.mxu0 0.0
  %2879 = vmatprep.subr.mxu0 0.0
  %2880 = vmatpush1.msra.mxu0 0.0
  %2881 = vmatprep.subr.mxu0 0.0
  %2882 = vmatpush1.msra.mxu0 0.0
  %2883 = vmatprep.subr.mxu0 0.0
  %2884 = vmatpush1.msra.mxu0 0.0
  %2885 = vmatprep.subr.mxu0 0.0
  %2886 = vmatpush1.msra.mxu0 0.0
  %2887 = vmatprep.subr.mxu0 0.0
  %2888 = vmatpush1.msra.mxu0 0.0
  %2889 = vmatprep.subr.mxu0 0.0
  %2890 = vmatpush1.msra.mxu0 0.0
  %2891 = vmatprep.subr.mxu0 0.0
  %2892 = vmatpush1.msra.mxu0 0.0
  %2893 = vmatprep.subr.mxu0 0.0
  %2894 = vmatpush1.msra.mxu0 0.0
  %2895 = vmatprep.subr.mxu0 0.0
  %2896 = vmatpush1.msra.mxu0 0.0
  %2897 = vmatprep.subr.mxu0 0.0
  %2898 = vmatpush1.msra.mxu0 0.0
  %2899 = vmatprep.subr.mxu0 0.0
  %2900 = vmatpush1.msra.mxu0 0.0
  %2901 = vmatprep.subr.mxu0 0.0
  %2902 = vmatpush1.msra.mxu0 0.0
  %2903 = vmatprep.subr.mxu0 0.0
  %2904 = vmatpush1.msra.mxu0 0.0
  %2905 = vmatprep.mubr.f32.mxu0 0.0
  %2906 = vmatmul.mubr.f32.gmra.mrb[0].mxu0 %v2678
  %v2907 = vpop.f32.mrb[0].mxu0
  %v2908 = vadd.f32 %v2840, %v2907
  %v2909 = vpop.f32.mrb[0].mxu0
  %2910 = vmatprep.mubr.f32.mxu0 0.0
  %2911 = vmatmul.mubr.f32.gmra.mrb[0].mxu0 %v2681
  %v2912 = vpop.f32.mrb[0].mxu0
  %v2913 = vadd.f32 %v2840, %v2912
  %v2914 = vpop.f32.mrb[0].mxu0
  %2915 = vdwg.mxu0
  %v2917 = vsel %vm494, %v2750, 0
  %v2920 = vsel %vm494, %v2755, 0
  %v2923 = vsel %vm494, %v2829, 0
  %v2926 = vsel %vm494, %v2834, 0
  %2928 = vmatprep.subr.mxu0 0.0
  %2929 = vmatpush1.xpose.msra.mxu0 %v2923
  %2930 = vmatprep.subr.mxu0 0.0
  %2931 = vmatpush1.xpose.msra.mxu0 %v2926
  %2932 = vmatprep.subr.mxu0 0.0
  %2933 = vmatpush1.xpose.msra.mxu0 0.0
  %2934 = vmatprep.subr.mxu0 0.0
  %2935 = vmatpush1.xpose.msra.mxu0 0.0
  %2936 = vmatprep.subr.mxu0 0.0
  %2937 = vmatpush1.xpose.msra.mxu0 0.0
  %2938 = vmatprep.subr.mxu0 0.0
  %2939 = vmatpush1.xpose.msra.mxu0 0.0
  %2940 = vmatprep.subr.mxu0 0.0
  %2941 = vmatpush1.xpose.msra.mxu0 0.0
  %2942 = vmatprep.subr.mxu0 0.0
  %2943 = vmatpush1.xpose.msra.mxu0 0.0
  %2944 = vmatprep.subr.mxu0 0.0
  %2945 = vmatpush1.xpose.msra.mxu0 0.0
  %2946 = vmatprep.subr.mxu0 0.0
  %2947 = vmatpush1.xpose.msra.mxu0 0.0
  %2948 = vmatprep.subr.mxu0 0.0
  %2949 = vmatpush1.xpose.msra.mxu0 0.0
  %2950 = vmatprep.subr.mxu0 0.0
  %2951 = vmatpush1.xpose.msra.mxu0 0.0
  %2952 = vmatprep.subr.mxu0 0.0
  %2953 = vmatpush1.xpose.msra.mxu0 0.0
  %2954 = vmatprep.subr.mxu0 0.0
  %2955 = vmatpush1.xpose.msra.mxu0 0.0
  %2956 = vmatprep.subr.mxu0 0.0
  %2957 = vmatpush1.xpose.msra.mxu0 0.0
  %2958 = vmatprep.subr.mxu0 0.0
  %2959 = vmatpush1.xpose.msra.mxu0 0.0
  %2960 = vmatprep.subr.mxu0 0.0
  %2961 = vmatpush1.xpose.msra.mxu0 0.0
  %2962 = vmatprep.subr.mxu0 0.0
  %2963 = vmatpush1.xpose.msra.mxu0 0.0
  %2964 = vmatprep.subr.mxu0 0.0
  %2965 = vmatpush1.xpose.msra.mxu0 0.0
  %2966 = vmatprep.subr.mxu0 0.0
  %2967 = vmatpush1.xpose.msra.mxu0 0.0
  %2968 = vmatprep.subr.mxu0 0.0
  %2969 = vmatpush1.xpose.msra.mxu0 0.0
  %2970 = vmatprep.subr.mxu0 0.0
  %2971 = vmatpush1.xpose.msra.mxu0 0.0
  %2972 = vmatprep.subr.mxu0 0.0
  %2973 = vmatpush1.xpose.msra.mxu0 0.0
  %2974 = vmatprep.subr.mxu0 0.0
  %2975 = vmatpush1.xpose.msra.mxu0 0.0
  %2976 = vmatprep.subr.mxu0 0.0
  %2977 = vmatpush1.xpose.msra.mxu0 0.0
  %2978 = vmatprep.subr.mxu0 0.0
  %2979 = vmatpush1.xpose.msra.mxu0 0.0
  %2980 = vmatprep.subr.mxu0 0.0
  %2981 = vmatpush1.xpose.msra.mxu0 0.0
  %2982 = vmatprep.subr.mxu0 0.0
  %2983 = vmatpush1.xpose.msra.mxu0 0.0
  %2984 = vmatprep.subr.mxu0 0.0
  %2985 = vmatpush1.xpose.msra.mxu0 0.0
  %2986 = vmatprep.subr.mxu0 0.0
  %2987 = vmatpush1.xpose.msra.mxu0 0.0
  %2988 = vmatprep.subr.mxu0 0.0
  %2989 = vmatpush1.xpose.msra.mxu0 0.0
  %2990 = vmatprep.subr.mxu0 0.0
  %2991 = vmatpush1.xpose.msra.mxu0 0.0
  %2992 = vmatprep.mubr.f32.mxu0 0.0
  %2993 = vmatmul.mubr.f32.gmra.mrb[0].mxu0 %v2917
  %v2994 = vpop.f32.mrb[0].mxu0
  %v2995 = vadd.f32 0.0, %v2994
  %v2996 = vpop.f32.mrb[0].mxu0
  %2997 = vmatprep.mubr.f32.mxu0 0.0
  %2998 = vmatmul.mubr.f32.gmra.mrb[0].mxu0 %v2920
  %v2999 = vpop.f32.mrb[0].mxu0
  %v3000 = vadd.f32 0.0, %v2999
  %v3001 = vpop.f32.mrb[0].mxu0
  %3002 = vdwg.mxu0
  %v3003 = vmul.f32 %v2995, 0.35355338
  %v3004 = vmul.f32 %v3000, 0.35355338
  %v3005 = vadd.f32 %v3003, %v232
  %v3006 = vadd.f32 %v3004, %v233
  %v3007 = vsel %vm586, %v3005, -inf
  %3008 = vmax.xlane.f32.xlu0 %v3007
  %v3009 = vpop.xlane.xlu0 %3008
  %v3010 = vsel %vm586, %v3006, -inf
  %3011 = vmax.xlane.f32.xlu0 %v3010
  %v3012 = vpop.xlane.xlu0 %3011
  %v3013 = vsub.f32 %v3005, %v3009
  %v3014 = vsub.f32 %v3006, %v3012
  %v3015 = vmul.f32 %v3013, 1.442695
  %v3016 = vpow.pop %v3015
  %v3017 = vmul.f32 %v3014, 1.442695
  %v3018 = vpow.pop %v3017
  %v3019 = vsel %vm586, %v3016, 0.0
  %3020 = vadd.xlane.f32.xlu0 %v3019
  %v3021 = vpop.xlane.xlu0 %3020
  %v3022 = vsel %vm586, %v3018, 0.0
  %3023 = vadd.xlane.f32.xlu0 %v3022
  %v3024 = vpop.xlane.xlu0 %3023
  %v3025 = vrcp.pop %v3021
  %v3026 = vrcp.pop %v3024
  %v3027 = vmul.f32 %v3016, %v3025
  %v3028 = vmul.f32 %v3018, %v3026
  %v3030 = vsel %vm586, %v3027, 0
  %v3033 = vsel %vm586, %v3028, 0
  %3035 = vmatprep.subr.mxu0 0.0
  %3036 = vmatpush1.msra.mxu0 %v2908
  %3037 = vmatprep.subr.mxu0 0.0
  %3038 = vmatpush1.msra.mxu0 %v2913
  %3039 = vmatprep.subr.mxu0 0.0
  %3040 = vmatpush1.msra.mxu0 0.0
  %3041 = vmatprep.subr.mxu0 0.0
  %3042 = vmatpush1.msra.mxu0 0.0
  %3043 = vmatprep.subr.mxu0 0.0
  %3044 = vmatpush1.msra.mxu0 0.0
  %3045 = vmatprep.subr.mxu0 0.0
  %3046 = vmatpush1.msra.mxu0 0.0
  %3047 = vmatprep.subr.mxu0 0.0
  %3048 = vmatpush1.msra.mxu0 0.0
  %3049 = vmatprep.subr.mxu0 0.0
  %3050 = vmatpush1.msra.mxu0 0.0
  %3051 = vmatprep.subr.mxu0 0.0
  %3052 = vmatpush1.msra.mxu0 0.0
  %3053 = vmatprep.subr.mxu0 0.0
  %3054 = vmatpush1.msra.mxu0 0.0
  %3055 = vmatprep.subr.mxu0 0.0
  %3056 = vmatpush1.msra.mxu0 0.0
  %3057 = vmatprep.subr.mxu0 0.0
  %3058 = vmatpush1.msra.mxu0 0.0
  %3059 = vmatprep.subr.mxu0 0.0
  %3060 = vmatpush1.msra.mxu0 0.0
  %3061 = vmatprep.subr.mxu0 0.0
  %3062 = vmatpush1.msra.mxu0 0.0
  %3063 = vmatprep.subr.mxu0 0.0
  %3064 = vmatpush1.msra.mxu0 0.0
  %3065 = vmatprep.subr.mxu0 0.0
  %3066 = vmatpush1.msra.mxu0 0.0
  %3067 = vmatprep.subr.mxu0 0.0
  %3068 = vmatpush1.msra.mxu0 0.0
  %3069 = vmatprep.subr.mxu0 0.0
  %3070 = vmatpush1.msra.mxu0 0.0
  %3071 = vmatprep.subr.mxu0 0.0
  %3072 = vmatpush1.msra.mxu0 0.0
  %3073 = vmatprep.subr.mxu0 0.0
  %3074 = vmatpush1.msra.mxu0 0.0
  %3075 = vmatprep.subr.mxu0 0.0
  %3076 = vmatpush1.msra.mxu0 0.0
  %3077 = vmatprep.subr.mxu0 0.0
  %3078 = vmatpush1.msra.mxu0 0.0
  %3079 = vmatprep.subr.mxu0 0.0
  %3080 = vmatpush1.msra.mxu0 0.0
  %3081 = vmatprep.subr.mxu0 0.0
  %3082 = vmatpush1.msra.mxu0 0.0
  %3083 = vmatprep.subr.mxu0 0.0
  %3084 = vmatpush1.msra.mxu0 0.0
  %3085 = vmatprep.subr.mxu0 0.0
  %3086 = vmatpush1.msra.mxu0 0.0
  %3087 = vmatprep.subr.mxu0 0.0
  %3088 = vmatpush1.msra.mxu0 0.0
  %3089 = vmatprep.subr.mxu0 0.0
  %3090 = vmatpush1.msra.mxu0 0.0
  %3091 = vmatprep.subr.mxu0 0.0
  %3092 = vmatpush1.msra.mxu0 0.0
  %3093 = vmatprep.subr.mxu0 0.0
  %3094 = vmatpush1.msra.mxu0 0.0
  %3095 = vmatprep.subr.mxu0 0.0
  %3096 = vmatpush1.msra.mxu0 0.0
  %3097 = vmatprep.subr.mxu0 0.0
  %3098 = vmatpush1.msra.mxu0 0.0
  %3099 = vmatprep.mubr.f32.mxu0 0.0
  %3100 = vmatmul.mubr.f32.gmra.mrb[0].mxu0 %v3030
  %v3101 = vpop.f32.mrb[0].mxu0
  %v3102 = vadd.f32 0.0, %v3101
  %v3103 = vpop.f32.mrb[0].mxu0
  %3104 = vmatprep.mubr.f32.mxu0 0.0
  %3105 = vmatmul.mubr.f32.gmra.mrb[0].mxu0 %v3033
  %v3106 = vpop.f32.mrb[0].mxu0
  %v3107 = vadd.f32 0.0, %v3106
  %v3108 = vpop.f32.mrb[0].mxu0
  %3109 = vdwg.mxu0
  %s3110 = scalar_lea.vmem %s5, 32
  %v3111 = vld [vmem:[%s3110] sm:$0xff]
  %s3112 = scalar_lea.vmem %s4, 416
  %v3113 = vld [vmem:[%s3112] sm:$0xff]
  %v3114 = vld [vmem:[%s3112 + $0x8] sm:$0xff]
  %v3115 = vld [vmem:[%s3112 + $0x10] sm:$0xff]
  %v3116 = vld [vmem:[%s3112 + $0x18] sm:$0xff]
  %s3117 = scalar_lea.vmem %s4, 544
  %v3118 = vld [vmem:[%s3117] sm:$0xff]
  %v3119 = vld [vmem:[%s3117 + $0x8] sm:$0xff]
  %v3120 = vld [vmem:[%s3117 + $0x10] sm:$0xff]
  %v3121 = vld [vmem:[%s3117 + $0x18] sm:$0xff]
  %s3122 = scalar_lea.vmem %s4, 672
  %v3123 = vld [vmem:[%s3122] sm:$0xff]
  %v3124 = vld [vmem:[%s3122 + $0x8] sm:$0xff]
  %v3125 = vld [vmem:[%s3122 + $0x10] sm:$0xff]
  %v3126 = vld [vmem:[%s3122 + $0x18] sm:$0xff]
  %v3127 = vlaneseq
  %v3128 = vshrl.u32 %v3127, 7
  %v3129 = vsub.s32 1, %v3128
  %v3130 = vrot.slane %v2655, %v3129
  %3131 = vmatprep.subr.mxu0 0.0
  %3132 = vmatpush1.msra.mxu0 %v3113
  %3133 = vmatprep.subr.mxu0 0.0
  %3134 = vmatpush1.msra.mxu0 %v3114
  %3135 = vmatprep.subr.mxu0 0.0
  %3136 = vmatpush1.msra.mxu0 %v3115
  %3137 = vmatprep.subr.mxu0 0.0
  %3138 = vmatpush1.msra.mxu0 %v3116
  %3139 = vmatprep.subr.mxu0 0.0
  %3140 = vmatpush1.msra.mxu0 0.0
  %3141 = vmatprep.subr.mxu0 0.0
  %3142 = vmatpush1.msra.mxu0 0.0
  %3143 = vmatprep.subr.mxu0 0.0
  %3144 = vmatpush1.msra.mxu0 0.0
  %3145 = vmatprep.subr.mxu0 0.0
  %3146 = vmatpush1.msra.mxu0 0.0
  %3147 = vmatprep.subr.mxu0 0.0
  %3148 = vmatpush1.msra.mxu0 0.0
  %3149 = vmatprep.subr.mxu0 0.0
  %3150 = vmatpush1.msra.mxu0 0.0
  %3151 = vmatprep.subr.mxu0 0.0
  %3152 = vmatpush1.msra.mxu0 0.0
  %3153 = vmatprep.subr.mxu0 0.0
  %3154 = vmatpush1.msra.mxu0 0.0
  %3155 = vmatprep.subr.mxu0 0.0
  %3156 = vmatpush1.msra.mxu0 0.0
  %3157 = vmatprep.subr.mxu0 0.0
  %3158 = vmatpush1.msra.mxu0 0.0
  %3159 = vmatprep.subr.mxu0 0.0
  %3160 = vmatpush1.msra.mxu0 0.0
  %3161 = vmatprep.subr.mxu0 0.0
  %3162 = vmatpush1.msra.mxu0 0.0
  %3163 = vmatprep.subr.mxu0 0.0
  %3164 = vmatpush1.msra.mxu0 0.0
  %3165 = vmatprep.subr.mxu0 0.0
  %3166 = vmatpush1.msra.mxu0 0.0
  %3167 = vmatprep.subr.mxu0 0.0
  %3168 = vmatpush1.msra.mxu0 0.0
  %3169 = vmatprep.subr.mxu0 0.0
  %3170 = vmatpush1.msra.mxu0 0.0
  %3171 = vmatprep.subr.mxu0 0.0
  %3172 = vmatpush1.msra.mxu0 0.0
  %3173 = vmatprep.subr.mxu0 0.0
  %3174 = vmatpush1.msra.mxu0 0.0
  %3175 = vmatprep.subr.mxu0 0.0
  %3176 = vmatpush1.msra.mxu0 0.0
  %3177 = vmatprep.subr.mxu0 0.0
  %3178 = vmatpush1.msra.mxu0 0.0
  %3179 = vmatprep.subr.mxu0 0.0
  %3180 = vmatpush1.msra.mxu0 0.0
  %3181 = vmatprep.subr.mxu0 0.0
  %3182 = vmatpush1.msra.mxu0 0.0
  %3183 = vmatprep.subr.mxu0 0.0
  %3184 = vmatpush1.msra.mxu0 0.0
  %3185 = vmatprep.subr.mxu0 0.0
  %3186 = vmatpush1.msra.mxu0 0.0
  %3187 = vmatprep.subr.mxu0 0.0
  %3188 = vmatpush1.msra.mxu0 0.0
  %3189 = vmatprep.subr.mxu0 0.0
  %3190 = vmatpush1.msra.mxu0 0.0
  %3191 = vmatprep.subr.mxu0 0.0
  %3192 = vmatpush1.msra.mxu0 0.0
  %3193 = vmatprep.subr.mxu0 0.0
  %3194 = vmatpush1.msra.mxu0 0.0
  %3195 = vmatprep.mubr.f32.mxu0 0.0
  %3196 = vmatmul.mubr.f32.gmra.mrb[0].mxu0 %v2678
  %v3197 = vpop.f32.mrb[0].mxu0
  %v3198 = vadd.f32 %v3130, %v3197
  %v3199 = vpop.f32.mrb[0].mxu0
  %3200 = vmatprep.mubr.f32.mxu0 0.0
  %3201 = vmatmul.mubr.f32.gmra.mrb[0].mxu0 %v2681
  %v3202 = vpop.f32.mrb[0].mxu0
  %v3203 = vadd.f32 %v3130, %v3202
  %v3204 = vpop.f32.mrb[0].mxu0
  %3205 = vdwg.mxu0
  %v3206 = vlaneseq
  %v3207 = vshrl.u32 %v3206, 7
  %v3208 = vsub.s32 5, %v3207
  %v3209 = vrot.slane %v2655, %v3208
  %3210 = vmatprep.subr.mxu0 0.0
  %3211 = vmatpush1.msra.mxu0 %v3118
  %3212 = vmatprep.subr.mxu0 0.0
  %3213 = vmatpush1.msra.mxu0 %v3119
  %3214 = vmatprep.subr.mxu0 0.0
  %3215 = vmatpush1.msra.mxu0 %v3120
  %3216 = vmatprep.subr.mxu0 0.0
  %3217 = vmatpush1.msra.mxu0 %v3121
  %3218 = vmatprep.subr.mxu0 0.0
  %3219 = vmatpush1.msra.mxu0 0.0
  %3220 = vmatprep.subr.mxu0 0.0
  %3221 = vmatpush1.msra.mxu0 0.0
  %3222 = vmatprep.subr.mxu0 0.0
  %3223 = vmatpush1.msra.mxu0 0.0
  %3224 = vmatprep.subr.mxu0 0.0
  %3225 = vmatpush1.msra.mxu0 0.0
  %3226 = vmatprep.subr.mxu0 0.0
  %3227 = vmatpush1.msra.mxu0 0.0
  %3228 = vmatprep.subr.mxu0 0.0
  %3229 = vmatpush1.msra.mxu0 0.0
  %3230 = vmatprep.subr.mxu0 0.0
  %3231 = vmatpush1.msra.mxu0 0.0
  %3232 = vmatprep.subr.mxu0 0.0
  %3233 = vmatpush1.msra.mxu0 0.0
  %3234 = vmatprep.subr.mxu0 0.0
  %3235 = vmatpush1.msra.mxu0 0.0
  %3236 = vmatprep.subr.mxu0 0.0
  %3237 = vmatpush1.msra.mxu0 0.0
  %3238 = vmatprep.subr.mxu0 0.0
  %3239 = vmatpush1.msra.mxu0 0.0
  %3240 = vmatprep.subr.mxu0 0.0
  %3241 = vmatpush1.msra.mxu0 0.0
  %3242 = vmatprep.subr.mxu0 0.0
  %3243 = vmatpush1.msra.mxu0 0.0
  %3244 = vmatprep.subr.mxu0 0.0
  %3245 = vmatpush1.msra.mxu0 0.0
  %3246 = vmatprep.subr.mxu0 0.0
  %3247 = vmatpush1.msra.mxu0 0.0
  %3248 = vmatprep.subr.mxu0 0.0
  %3249 = vmatpush1.msra.mxu0 0.0
  %3250 = vmatprep.subr.mxu0 0.0
  %3251 = vmatpush1.msra.mxu0 0.0
  %3252 = vmatprep.subr.mxu0 0.0
  %3253 = vmatpush1.msra.mxu0 0.0
  %3254 = vmatprep.subr.mxu0 0.0
  %3255 = vmatpush1.msra.mxu0 0.0
  %3256 = vmatprep.subr.mxu0 0.0
  %3257 = vmatpush1.msra.mxu0 0.0
  %3258 = vmatprep.subr.mxu0 0.0
  %3259 = vmatpush1.msra.mxu0 0.0
  %3260 = vmatprep.subr.mxu0 0.0
  %3261 = vmatpush1.msra.mxu0 0.0
  %3262 = vmatprep.subr.mxu0 0.0
  %3263 = vmatpush1.msra.mxu0 0.0
  %3264 = vmatprep.subr.mxu0 0.0
  %3265 = vmatpush1.msra.mxu0 0.0
  %3266 = vmatprep.subr.mxu0 0.0
  %3267 = vmatpush1.msra.mxu0 0.0
  %3268 = vmatprep.subr.mxu0 0.0
  %3269 = vmatpush1.msra.mxu0 0.0
  %3270 = vmatprep.subr.mxu0 0.0
  %3271 = vmatpush1.msra.mxu0 0.0
  %3272 = vmatprep.subr.mxu0 0.0
  %3273 = vmatpush1.msra.mxu0 0.0
  %3274 = vmatprep.mubr.f32.mxu0 0.0
  %3275 = vmatmul.mubr.f32.gmra.mrb[0].mxu0 %v2678
  %v3276 = vpop.f32.mrb[0].mxu0
  %v3277 = vadd.f32 %v3209, %v3276
  %v3278 = vpop.f32.mrb[0].mxu0
  %3279 = vmatprep.mubr.f32.mxu0 0.0
  %3280 = vmatmul.mubr.f32.gmra.mrb[0].mxu0 %v2681
  %v3281 = vpop.f32.mrb[0].mxu0
  %v3282 = vadd.f32 %v3209, %v3281
  %v3283 = vpop.f32.mrb[0].mxu0
  %3284 = vdwg.mxu0
  %v3285 = vlaneseq
  %v3286 = vshrl.u32 %v3285, 7
  %v3287 = vsub.s32 1, %v3286
  %v3288 = vrot.slane %v2656, %v3287
  %3289 = vmatprep.subr.mxu0 0.0
  %3290 = vmatpush1.msra.mxu0 %v3123
  %3291 = vmatprep.subr.mxu0 0.0
  %3292 = vmatpush1.msra.mxu0 %v3124
  %3293 = vmatprep.subr.mxu0 0.0
  %3294 = vmatpush1.msra.mxu0 %v3125
  %3295 = vmatprep.subr.mxu0 0.0
  %3296 = vmatpush1.msra.mxu0 %v3126
  %3297 = vmatprep.subr.mxu0 0.0
  %3298 = vmatpush1.msra.mxu0 0.0
  %3299 = vmatprep.subr.mxu0 0.0
  %3300 = vmatpush1.msra.mxu0 0.0
  %3301 = vmatprep.subr.mxu0 0.0
  %3302 = vmatpush1.msra.mxu0 0.0
  %3303 = vmatprep.subr.mxu0 0.0
  %3304 = vmatpush1.msra.mxu0 0.0
  %3305 = vmatprep.subr.mxu0 0.0
  %3306 = vmatpush1.msra.mxu0 0.0
  %3307 = vmatprep.subr.mxu0 0.0
  %3308 = vmatpush1.msra.mxu0 0.0
  %3309 = vmatprep.subr.mxu0 0.0
  %3310 = vmatpush1.msra.mxu0 0.0
  %3311 = vmatprep.subr.mxu0 0.0
  %3312 = vmatpush1.msra.mxu0 0.0
  %3313 = vmatprep.subr.mxu0 0.0
  %3314 = vmatpush1.msra.mxu0 0.0
  %3315 = vmatprep.subr.mxu0 0.0
  %3316 = vmatpush1.msra.mxu0 0.0
  %3317 = vmatprep.subr.mxu0 0.0
  %3318 = vmatpush1.msra.mxu0 0.0
  %3319 = vmatprep.subr.mxu0 0.0
  %3320 = vmatpush1.msra.mxu0 0.0
  %3321 = vmatprep.subr.mxu0 0.0
  %3322 = vmatpush1.msra.mxu0 0.0
  %3323 = vmatprep.subr.mxu0 0.0
  %3324 = vmatpush1.msra.mxu0 0.0
  %3325 = vmatprep.subr.mxu0 0.0
  %3326 = vmatpush1.msra.mxu0 0.0
  %3327 = vmatprep.subr.mxu0 0.0
  %3328 = vmatpush1.msra.mxu0 0.0
  %3329 = vmatprep.subr.mxu0 0.0
  %3330 = vmatpush1.msra.mxu0 0.0
  %3331 = vmatprep.subr.mxu0 0.0
  %3332 = vmatpush1.msra.mxu0 0.0
  %3333 = vmatprep.subr.mxu0 0.0
  %3334 = vmatpush1.msra.mxu0 0.0
  %3335 = vmatprep.subr.mxu0 0.0
  %3336 = vmatpush1.msra.mxu0 0.0
  %3337 = vmatprep.subr.mxu0 0.0
  %3338 = vmatpush1.msra.mxu0 0.0
  %3339 = vmatprep.subr.mxu0 0.0
  %3340 = vmatpush1.msra.mxu0 0.0
  %3341 = vmatprep.subr.mxu0 0.0
  %3342 = vmatpush1.msra.mxu0 0.0
  %3343 = vmatprep.subr.mxu0 0.0
  %3344 = vmatpush1.msra.mxu0 0.0
  %3345 = vmatprep.subr.mxu0 0.0
  %3346 = vmatpush1.msra.mxu0 0.0
  %3347 = vmatprep.subr.mxu0 0.0
  %3348 = vmatpush1.msra.mxu0 0.0
  %3349 = vmatprep.subr.mxu0 0.0
  %3350 = vmatpush1.msra.mxu0 0.0
  %3351 = vmatprep.subr.mxu0 0.0
  %3352 = vmatpush1.msra.mxu0 0.0
  %3353 = vmatprep.mubr.f32.mxu0 0.0
  %3354 = vmatmul.mubr.f32.gmra.mrb[0].mxu0 %v2678
  %v3355 = vpop.f32.mrb[0].mxu0
  %v3356 = vadd.f32 %v3288, %v3355
  %v3357 = vpop.f32.mrb[0].mxu0
  %3358 = vmatprep.mubr.f32.mxu0 0.0
  %3359 = vmatmul.mubr.f32.gmra.mrb[0].mxu0 %v2681
  %v3360 = vpop.f32.mrb[0].mxu0
  %v3361 = vadd.f32 %v3288, %v3360
  %v3362 = vpop.f32.mrb[0].mxu0
  %3363 = vdwg.mxu0
  %v3365 = vsel %vm494, %v3198, 0
  %v3368 = vsel %vm494, %v3203, 0
  %v3371 = vsel %vm494, %v3277, 0
  %v3374 = vsel %vm494, %v3282, 0
  %3376 = vmatprep.subr.mxu0 0.0
  %3377 = vmatpush1.xpose.msra.mxu0 %v3371
  %3378 = vmatprep.subr.mxu0 0.0
  %3379 = vmatpush1.xpose.msra.mxu0 %v3374
  %3380 = vmatprep.subr.mxu0 0.0
  %3381 = vmatpush1.xpose.msra.mxu0 0.0
  %3382 = vmatprep.subr.mxu0 0.0
  %3383 = vmatpush1.xpose.msra.mxu0 0.0
  %3384 = vmatprep.subr.mxu0 0.0
  %3385 = vmatpush1.xpose.msra.mxu0 0.0
  %3386 = vmatprep.subr.mxu0 0.0
  %3387 = vmatpush1.xpose.msra.mxu0 0.0
  %3388 = vmatprep.subr.mxu0 0.0
  %3389 = vmatpush1.xpose.msra.mxu0 0.0
  %3390 = vmatprep.subr.mxu0 0.0
  %3391 = vmatpush1.xpose.msra.mxu0 0.0
  %3392 = vmatprep.subr.mxu0 0.0
  %3393 = vmatpush1.xpose.msra.mxu0 0.0
  %3394 = vmatprep.subr.mxu0 0.0
  %3395 = vmatpush1.xpose.msra.mxu0 0.0
  %3396 = vmatprep.subr.mxu0 0.0
  %3397 = vmatpush1.xpose.msra.mxu0 0.0
  %3398 = vmatprep.subr.mxu0 0.0
  %3399 = vmatpush1.xpose.msra.mxu0 0.0
  %3400 = vmatprep.subr.mxu0 0.0
  %3401 = vmatpush1.xpose.msra.mxu0 0.0
  %3402 = vmatprep.subr.mxu0 0.0
  %3403 = vmatpush1.xpose.msra.mxu0 0.0
  %3404 = vmatprep.subr.mxu0 0.0
  %3405 = vmatpush1.xpose.msra.mxu0 0.0
  %3406 = vmatprep.subr.mxu0 0.0
  %3407 = vmatpush1.xpose.msra.mxu0 0.0
  %3408 = vmatprep.subr.mxu0 0.0
  %3409 = vmatpush1.xpose.msra.mxu0 0.0
  %3410 = vmatprep.subr.mxu0 0.0
  %3411 = vmatpush1.xpose.msra.mxu0 0.0
  %3412 = vmatprep.subr.mxu0 0.0
  %3413 = vmatpush1.xpose.msra.mxu0 0.0
  %3414 = vmatprep.subr.mxu0 0.0
  %3415 = vmatpush1.xpose.msra.mxu0 0.0
  %3416 = vmatprep.subr.mxu0 0.0
  %3417 = vmatpush1.xpose.msra.mxu0 0.0
  %3418 = vmatprep.subr.mxu0 0.0
  %3419 = vmatpush1.xpose.msra.mxu0 0.0
  %3420 = vmatprep.subr.mxu0 0.0
  %3421 = vmatpush1.xpose.msra.mxu0 0.0
  %3422 = vmatprep.subr.mxu0 0.0
  %3423 = vmatpush1.xpose.msra.mxu0 0.0
  %3424 = vmatprep.subr.mxu0 0.0
  %3425 = vmatpush1.xpose.msra.mxu0 0.0
  %3426 = vmatprep.subr.mxu0 0.0
  %3427 = vmatpush1.xpose.msra.mxu0 0.0
  %3428 = vmatprep.subr.mxu0 0.0
  %3429 = vmatpush1.xpose.msra.mxu0 0.0
  %3430 = vmatprep.subr.mxu0 0.0
  %3431 = vmatpush1.xpose.msra.mxu0 0.0
  %3432 = vmatprep.subr.mxu0 0.0
  %3433 = vmatpush1.xpose.msra.mxu0 0.0
  %3434 = vmatprep.subr.mxu0 0.0
  %3435 = vmatpush1.xpose.msra.mxu0 0.0
  %3436 = vmatprep.subr.mxu0 0.0
  %3437 = vmatpush1.xpose.msra.mxu0 0.0
  %3438 = vmatprep.subr.mxu0 0.0
  %3439 = vmatpush1.xpose.msra.mxu0 0.0
  %3440 = vmatprep.mubr.f32.mxu0 0.0
  %3441 = vmatmul.mubr.f32.gmra.mrb[0].mxu0 %v3365
  %v3442 = vpop.f32.mrb[0].mxu0
  %v3443 = vadd.f32 0.0, %v3442
  %v3444 = vpop.f32.mrb[0].mxu0
  %3445 = vmatprep.mubr.f32.mxu0 0.0
  %3446 = vmatmul.mubr.f32.gmra.mrb[0].mxu0 %v3368
  %v3447 = vpop.f32.mrb[0].mxu0
  %v3448 = vadd.f32 0.0, %v3447
  %v3449 = vpop.f32.mrb[0].mxu0
  %3450 = vdwg.mxu0
  %v3451 = vmul.f32 %v3443, 0.35355338
  %v3452 = vmul.f32 %v3448, 0.35355338
  %v3453 = vadd.f32 %v3451, %v232
  %v3454 = vadd.f32 %v3452, %v233
  %v3455 = vsel %vm586, %v3453, -inf
  %3456 = vmax.xlane.f32.xlu0 %v3455
  %v3457 = vpop.xlane.xlu0 %3456
  %v3458 = vsel %vm586, %v3454, -inf
  %3459 = vmax.xlane.f32.xlu0 %v3458
  %v3460 = vpop.xlane.xlu0 %3459
  %v3461 = vsub.f32 %v3453, %v3457
  %v3462 = vsub.f32 %v3454, %v3460
  %v3463 = vmul.f32 %v3461, 1.442695
  %v3464 = vpow.pop %v3463
  %v3465 = vmul.f32 %v3462, 1.442695
  %v3466 = vpow.pop %v3465
  %v3467 = vsel %vm586, %v3464, 0.0
  %3468 = vadd.xlane.f32.xlu0 %v3467
  %v3469 = vpop.xlane.xlu0 %3468
  %v3470 = vsel %vm586, %v3466, 0.0
  %3471 = vadd.xlane.f32.xlu0 %v3470
  %v3472 = vpop.xlane.xlu0 %3471
  %v3473 = vrcp.pop %v3469
  %v3474 = vrcp.pop %v3472
  %v3475 = vmul.f32 %v3464, %v3473
  %v3476 = vmul.f32 %v3466, %v3474
  %v3478 = vsel %vm586, %v3475, 0
  %v3481 = vsel %vm586, %v3476, 0
  %3483 = vmatprep.subr.mxu0 0.0
  %3484 = vmatpush1.msra.mxu0 %v3356
  %3485 = vmatprep.subr.mxu0 0.0
  %3486 = vmatpush1.msra.mxu0 %v3361
  %3487 = vmatprep.subr.mxu0 0.0
  %3488 = vmatpush1.msra.mxu0 0.0
  %3489 = vmatprep.subr.mxu0 0.0
  %3490 = vmatpush1.msra.mxu0 0.0
  %3491 = vmatprep.subr.mxu0 0.0
  %3492 = vmatpush1.msra.mxu0 0.0
  %3493 = vmatprep.subr.mxu0 0.0
  %3494 = vmatpush1.msra.mxu0 0.0
  %3495 = vmatprep.subr.mxu0 0.0
  %3496 = vmatpush1.msra.mxu0 0.0
  %3497 = vmatprep.subr.mxu0 0.0
  %3498 = vmatpush1.msra.mxu0 0.0
  %3499 = vmatprep.subr.mxu0 0.0
  %3500 = vmatpush1.msra.mxu0 0.0
  %3501 = vmatprep.subr.mxu0 0.0
  %3502 = vmatpush1.msra.mxu0 0.0
  %3503 = vmatprep.subr.mxu0 0.0
  %3504 = vmatpush1.msra.mxu0 0.0
  %3505 = vmatprep.subr.mxu0 0.0
  %3506 = vmatpush1.msra.mxu0 0.0
  %3507 = vmatprep.subr.mxu0 0.0
  %3508 = vmatpush1.msra.mxu0 0.0
  %3509 = vmatprep.subr.mxu0 0.0
  %3510 = vmatpush1.msra.mxu0 0.0
  %3511 = vmatprep.subr.mxu0 0.0
  %3512 = vmatpush1.msra.mxu0 0.0
  %3513 = vmatprep.subr.mxu0 0.0
  %3514 = vmatpush1.msra.mxu0 0.0
  %3515 = vmatprep.subr.mxu0 0.0
  %3516 = vmatpush1.msra.mxu0 0.0
  %3517 = vmatprep.subr.mxu0 0.0
  %3518 = vmatpush1.msra.mxu0 0.0
  %3519 = vmatprep.subr.mxu0 0.0
  %3520 = vmatpush1.msra.mxu0 0.0
  %3521 = vmatprep.subr.mxu0 0.0
  %3522 = vmatpush1.msra.mxu0 0.0
  %3523 = vmatprep.subr.mxu0 0.0
  %3524 = vmatpush1.msra.mxu0 0.0
  %3525 = vmatprep.subr.mxu0 0.0
  %3526 = vmatpush1.msra.mxu0 0.0
  %3527 = vmatprep.subr.mxu0 0.0
  %3528 = vmatpush1.msra.mxu0 0.0
  %3529 = vmatprep.subr.mxu0 0.0
  %3530 = vmatpush1.msra.mxu0 0.0
  %3531 = vmatprep.subr.mxu0 0.0
  %3532 = vmatpush1.msra.mxu0 0.0
  %3533 = vmatprep.subr.mxu0 0.0
  %3534 = vmatpush1.msra.mxu0 0.0
  %3535 = vmatprep.subr.mxu0 0.0
  %3536 = vmatpush1.msra.mxu0 0.0
  %3537 = vmatprep.subr.mxu0 0.0
  %3538 = vmatpush1.msra.mxu0 0.0
  %3539 = vmatprep.subr.mxu0 0.0
  %3540 = vmatpush1.msra.mxu0 0.0
  %3541 = vmatprep.subr.mxu0 0.0
  %3542 = vmatpush1.msra.mxu0 0.0
  %3543 = vmatprep.subr.mxu0 0.0
  %3544 = vmatpush1.msra.mxu0 0.0
  %3545 = vmatprep.subr.mxu0 0.0
  %3546 = vmatpush1.msra.mxu0 0.0
  %3547 = vmatprep.mubr.f32.mxu0 0.0
  %3548 = vmatmul.mubr.f32.gmra.mrb[0].mxu0 %v3478
  %v3549 = vpop.f32.mrb[0].mxu0
  %v3550 = vadd.f32 0.0, %v3549
  %v3551 = vpop.f32.mrb[0].mxu0
  %3552 = vmatprep.mubr.f32.mxu0 0.0
  %3553 = vmatmul.mubr.f32.gmra.mrb[0].mxu0 %v3481
  %v3554 = vpop.f32.mrb[0].mxu0
  %v3555 = vadd.f32 0.0, %v3554
  %v3556 = vpop.f32.mrb[0].mxu0
  %3557 = vdwg.mxu0
  %s3558 = scalar_lea.vmem %s5, 40
  %v3559 = vld [vmem:[%s3558] sm:$0xff]
  %v3561 = vsel %vm494, %v3550, 0
  %v3564 = vsel %vm494, %v3555, 0
  %3566 = vmatprep.subr.mxu0 0.0
  %3567 = vmatpush1.msra.mxu0 %v3559
  %3568 = vmatprep.subr.mxu0 0.0
  %3569 = vmatpush1.msra.mxu0 0.0
  %3570 = vmatprep.subr.mxu0 0.0
  %3571 = vmatpush1.msra.mxu0 0.0
  %3572 = vmatprep.subr.mxu0 0.0
  %3573 = vmatpush1.msra.mxu0 0.0
  %3574 = vmatprep.subr.mxu0 0.0
  %3575 = vmatpush1.msra.mxu0 0.0
  %3576 = vmatprep.subr.mxu0 0.0
  %3577 = vmatpush1.msra.mxu0 0.0
  %3578 = vmatprep.subr.mxu0 0.0
  %3579 = vmatpush1.msra.mxu0 0.0
  %3580 = vmatprep.subr.mxu0 0.0
  %3581 = vmatpush1.msra.mxu0 0.0
  %3582 = vmatprep.subr.mxu0 0.0
  %3583 = vmatpush1.msra.mxu0 0.0
  %3584 = vmatprep.subr.mxu0 0.0
  %3585 = vmatpush1.msra.mxu0 0.0
  %3586 = vmatprep.subr.mxu0 0.0
  %3587 = vmatpush1.msra.mxu0 0.0
  %3588 = vmatprep.subr.mxu0 0.0
  %3589 = vmatpush1.msra.mxu0 0.0
  %3590 = vmatprep.subr.mxu0 0.0
  %3591 = vmatpush1.msra.mxu0 0.0
  %3592 = vmatprep.subr.mxu0 0.0
  %3593 = vmatpush1.msra.mxu0 0.0
  %3594 = vmatprep.subr.mxu0 0.0
  %3595 = vmatpush1.msra.mxu0 0.0
  %3596 = vmatprep.subr.mxu0 0.0
  %3597 = vmatpush1.msra.mxu0 0.0
  %3598 = vmatprep.subr.mxu0 0.0
  %3599 = vmatpush1.msra.mxu0 0.0
  %3600 = vmatprep.subr.mxu0 0.0
  %3601 = vmatpush1.msra.mxu0 0.0
  %3602 = vmatprep.subr.mxu0 0.0
  %3603 = vmatpush1.msra.mxu0 0.0
  %3604 = vmatprep.subr.mxu0 0.0
  %3605 = vmatpush1.msra.mxu0 0.0
  %3606 = vmatprep.subr.mxu0 0.0
  %3607 = vmatpush1.msra.mxu0 0.0
  %3608 = vmatprep.subr.mxu0 0.0
  %3609 = vmatpush1.msra.mxu0 0.0
  %3610 = vmatprep.subr.mxu0 0.0
  %3611 = vmatpush1.msra.mxu0 0.0
  %3612 = vmatprep.subr.mxu0 0.0
  %3613 = vmatpush1.msra.mxu0 0.0
  %3614 = vmatprep.subr.mxu0 0.0
  %3615 = vmatpush1.msra.mxu0 0.0
  %3616 = vmatprep.subr.mxu0 0.0
  %3617 = vmatpush1.msra.mxu0 0.0
  %3618 = vmatprep.subr.mxu0 0.0
  %3619 = vmatpush1.msra.mxu0 0.0
  %3620 = vmatprep.subr.mxu0 0.0
  %3621 = vmatpush1.msra.mxu0 0.0
  %3622 = vmatprep.subr.mxu0 0.0
  %3623 = vmatpush1.msra.mxu0 0.0
  %3624 = vmatprep.subr.mxu0 0.0
  %3625 = vmatpush1.msra.mxu0 0.0
  %3626 = vmatprep.subr.mxu0 0.0
  %3627 = vmatpush1.msra.mxu0 0.0
  %3628 = vmatprep.subr.mxu0 0.0
  %3629 = vmatpush1.msra.mxu0 0.0
  %3630 = vmatprep.mubr.f32.mxu0 0.0
  %3631 = vmatmul.mubr.f32.gmra.mrb[0].mxu0 %v3561
  %v3632 = vpop.f32.mrb[0].mxu0
  %v3633 = vadd.f32 0.0, %v3632
  %v3634 = vpop.f32.mrb[0].mxu0
  %3635 = vmatprep.mubr.f32.mxu0 0.0
  %3636 = vmatmul.mubr.f32.gmra.mrb[0].mxu0 %v3564
  %v3637 = vpop.f32.mrb[0].mxu0
  %v3638 = vadd.f32 0.0, %v3637
  %v3639 = vpop.f32.mrb[0].mxu0
  %3640 = vdwg.mxu0
  %v3642 = vsel %vm494, %v3102, 0
  %v3645 = vsel %vm494, %v3107, 0
  %3647 = vmatprep.subr.mxu0 0.0
  %3648 = vmatpush1.msra.mxu0 %v3111
  %3649 = vmatprep.subr.mxu0 0.0
  %3650 = vmatpush1.msra.mxu0 0.0
  %3651 = vmatprep.subr.mxu0 0.0
  %3652 = vmatpush1.msra.mxu0 0.0
  %3653 = vmatprep.subr.mxu0 0.0
  %3654 = vmatpush1.msra.mxu0 0.0
  %3655 = vmatprep.subr.mxu0 0.0
  %3656 = vmatpush1.msra.mxu0 0.0
  %3657 = vmatprep.subr.mxu0 0.0
  %3658 = vmatpush1.msra.mxu0 0.0
  %3659 = vmatprep.subr.mxu0 0.0
  %3660 = vmatpush1.msra.mxu0 0.0
  %3661 = vmatprep.subr.mxu0 0.0
  %3662 = vmatpush1.msra.mxu0 0.0
  %3663 = vmatprep.subr.mxu0 0.0
  %3664 = vmatpush1.msra.mxu0 0.0
  %3665 = vmatprep.subr.mxu0 0.0
  %3666 = vmatpush1.msra.mxu0 0.0
  %3667 = vmatprep.subr.mxu0 0.0
  %3668 = vmatpush1.msra.mxu0 0.0
  %3669 = vmatprep.subr.mxu0 0.0
  %3670 = vmatpush1.msra.mxu0 0.0
  %3671 = vmatprep.subr.mxu0 0.0
  %3672 = vmatpush1.msra.mxu0 0.0
  %3673 = vmatprep.subr.mxu0 0.0
  %3674 = vmatpush1.msra.mxu0 0.0
  %3675 = vmatprep.subr.mxu0 0.0
  %3676 = vmatpush1.msra.mxu0 0.0
  %3677 = vmatprep.subr.mxu0 0.0
  %3678 = vmatpush1.msra.mxu0 0.0
  %3679 = vmatprep.subr.mxu0 0.0
  %3680 = vmatpush1.msra.mxu0 0.0
  %3681 = vmatprep.subr.mxu0 0.0
  %3682 = vmatpush1.msra.mxu0 0.0
  %3683 = vmatprep.subr.mxu0 0.0
  %3684 = vmatpush1.msra.mxu0 0.0
  %3685 = vmatprep.subr.mxu0 0.0
  %3686 = vmatpush1.msra.mxu0 0.0
  %3687 = vmatprep.subr.mxu0 0.0
  %3688 = vmatpush1.msra.mxu0 0.0
  %3689 = vmatprep.subr.mxu0 0.0
  %3690 = vmatpush1.msra.mxu0 0.0
  %3691 = vmatprep.subr.mxu0 0.0
  %3692 = vmatpush1.msra.mxu0 0.0
  %3693 = vmatprep.subr.mxu0 0.0
  %3694 = vmatpush1.msra.mxu0 0.0
  %3695 = vmatprep.subr.mxu0 0.0
  %3696 = vmatpush1.msra.mxu0 0.0
  %3697 = vmatprep.subr.mxu0 0.0
  %3698 = vmatpush1.msra.mxu0 0.0
  %3699 = vmatprep.subr.mxu0 0.0
  %3700 = vmatpush1.msra.mxu0 0.0
  %3701 = vmatprep.subr.mxu0 0.0
  %3702 = vmatpush1.msra.mxu0 0.0
  %3703 = vmatprep.subr.mxu0 0.0
  %3704 = vmatpush1.msra.mxu0 0.0
  %3705 = vmatprep.subr.mxu0 0.0
  %3706 = vmatpush1.msra.mxu0 0.0
  %3707 = vmatprep.subr.mxu0 0.0
  %3708 = vmatpush1.msra.mxu0 0.0
  %3709 = vmatprep.subr.mxu0 0.0
  %3710 = vmatpush1.msra.mxu0 0.0
  %3711 = vmatprep.mubr.f32.mxu0 0.0
  %3712 = vmatmul.mubr.f32.gmra.mrb[0].mxu0 %v3642
  %v3713 = vpop.f32.mrb[0].mxu0
  %v3714 = vadd.f32 %v3633, %v3713
  %v3715 = vpop.f32.mrb[0].mxu0
  %3716 = vmatprep.mubr.f32.mxu0 0.0
  %3717 = vmatmul.mubr.f32.gmra.mrb[0].mxu0 %v3645
  %v3718 = vpop.f32.mrb[0].mxu0
  %v3719 = vadd.f32 %v3638, %v3718
  %v3720 = vpop.f32.mrb[0].mxu0
  %3721 = vdwg.mxu0
  %s3722 = scalar_lea.vmem %s4, 448
  %v3723 = vld [vmem:[%s3722] sm:$0xff]
  %v3724 = vld [vmem:[%s3722 + $0x8] sm:$0xff]
  %v3725 = vld [vmem:[%s3722 + $0x10] sm:$0xff]
  %v3726 = vld [vmem:[%s3722 + $0x18] sm:$0xff]
  %s3727 = scalar_lea.vmem %s4, 576
  %v3728 = vld [vmem:[%s3727] sm:$0xff]
  %v3729 = vld [vmem:[%s3727 + $0x8] sm:$0xff]
  %v3730 = vld [vmem:[%s3727 + $0x10] sm:$0xff]
  %v3731 = vld [vmem:[%s3727 + $0x18] sm:$0xff]
  %s3732 = scalar_lea.vmem %s4, 704
  %v3733 = vld [vmem:[%s3732] sm:$0xff]
  %v3734 = vld [vmem:[%s3732 + $0x8] sm:$0xff]
  %v3735 = vld [vmem:[%s3732 + $0x10] sm:$0xff]
  %v3736 = vld [vmem:[%s3732 + $0x18] sm:$0xff]
  %v3737 = vlaneseq
  %v3738 = vshrl.u32 %v3737, 7
  %v3739 = vsub.s32 2, %v3738
  %v3740 = vrot.slane %v2655, %v3739
  %3741 = vmatprep.subr.mxu0 0.0
  %3742 = vmatpush1.msra.mxu0 %v3723
  %3743 = vmatprep.subr.mxu0 0.0
  %3744 = vmatpush1.msra.mxu0 %v3724
  %3745 = vmatprep.subr.mxu0 0.0
  %3746 = vmatpush1.msra.mxu0 %v3725
  %3747 = vmatprep.subr.mxu0 0.0
  %3748 = vmatpush1.msra.mxu0 %v3726
  %3749 = vmatprep.subr.mxu0 0.0
  %3750 = vmatpush1.msra.mxu0 0.0
  %3751 = vmatprep.subr.mxu0 0.0
  %3752 = vmatpush1.msra.mxu0 0.0
  %3753 = vmatprep.subr.mxu0 0.0
  %3754 = vmatpush1.msra.mxu0 0.0
  %3755 = vmatprep.subr.mxu0 0.0
  %3756 = vmatpush1.msra.mxu0 0.0
  %3757 = vmatprep.subr.mxu0 0.0
  %3758 = vmatpush1.msra.mxu0 0.0
  %3759 = vmatprep.subr.mxu0 0.0
  %3760 = vmatpush1.msra.mxu0 0.0
  %3761 = vmatprep.subr.mxu0 0.0
  %3762 = vmatpush1.msra.mxu0 0.0
  %3763 = vmatprep.subr.mxu0 0.0
  %3764 = vmatpush1.msra.mxu0 0.0
  %3765 = vmatprep.subr.mxu0 0.0
  %3766 = vmatpush1.msra.mxu0 0.0
  %3767 = vmatprep.subr.mxu0 0.0
  %3768 = vmatpush1.msra.mxu0 0.0
  %3769 = vmatprep.subr.mxu0 0.0
  %3770 = vmatpush1.msra.mxu0 0.0
  %3771 = vmatprep.subr.mxu0 0.0
  %3772 = vmatpush1.msra.mxu0 0.0
  %3773 = vmatprep.subr.mxu0 0.0
  %3774 = vmatpush1.msra.mxu0 0.0
  %3775 = vmatprep.subr.mxu0 0.0
  %3776 = vmatpush1.msra.mxu0 0.0
  %3777 = vmatprep.subr.mxu0 0.0
  %3778 = vmatpush1.msra.mxu0 0.0
  %3779 = vmatprep.subr.mxu0 0.0
  %3780 = vmatpush1.msra.mxu0 0.0
  %3781 = vmatprep.subr.mxu0 0.0
  %3782 = vmatpush1.msra.mxu0 0.0
  %3783 = vmatprep.subr.mxu0 0.0
  %3784 = vmatpush1.msra.mxu0 0.0
  %3785 = vmatprep.subr.mxu0 0.0
  %3786 = vmatpush1.msra.mxu0 0.0
  %3787 = vmatprep.subr.mxu0 0.0
  %3788 = vmatpush1.msra.mxu0 0.0
  %3789 = vmatprep.subr.mxu0 0.0
  %3790 = vmatpush1.msra.mxu0 0.0
  %3791 = vmatprep.subr.mxu0 0.0
  %3792 = vmatpush1.msra.mxu0 0.0
  %3793 = vmatprep.subr.mxu0 0.0
  %3794 = vmatpush1.msra.mxu0 0.0
  %3795 = vmatprep.subr.mxu0 0.0
  %3796 = vmatpush1.msra.mxu0 0.0
  %3797 = vmatprep.subr.mxu0 0.0
  %3798 = vmatpush1.msra.mxu0 0.0
  %3799 = vmatprep.subr.mxu0 0.0
  %3800 = vmatpush1.msra.mxu0 0.0
  %3801 = vmatprep.subr.mxu0 0.0
  %3802 = vmatpush1.msra.mxu0 0.0
  %3803 = vmatprep.subr.mxu0 0.0
  %3804 = vmatpush1.msra.mxu0 0.0
  %3805 = vmatprep.mubr.f32.mxu0 0.0
  %3806 = vmatmul.mubr.f32.gmra.mrb[0].mxu0 %v2678
  %v3807 = vpop.f32.mrb[0].mxu0
  %v3808 = vadd.f32 %v3740, %v3807
  %v3809 = vpop.f32.mrb[0].mxu0
  %3810 = vmatprep.mubr.f32.mxu0 0.0
  %3811 = vmatmul.mubr.f32.gmra.mrb[0].mxu0 %v2681
  %v3812 = vpop.f32.mrb[0].mxu0
  %v3813 = vadd.f32 %v3740, %v3812
  %v3814 = vpop.f32.mrb[0].mxu0
  %3815 = vdwg.mxu0
  %v3816 = vlaneseq
  %v3817 = vshrl.u32 %v3816, 7
  %v3818 = vsub.s32 6, %v3817
  %v3819 = vrot.slane %v2655, %v3818
  %3820 = vmatprep.subr.mxu0 0.0
  %3821 = vmatpush1.msra.mxu0 %v3728
  %3822 = vmatprep.subr.mxu0 0.0
  %3823 = vmatpush1.msra.mxu0 %v3729
  %3824 = vmatprep.subr.mxu0 0.0
  %3825 = vmatpush1.msra.mxu0 %v3730
  %3826 = vmatprep.subr.mxu0 0.0
  %3827 = vmatpush1.msra.mxu0 %v3731
  %3828 = vmatprep.subr.mxu0 0.0
  %3829 = vmatpush1.msra.mxu0 0.0
  %3830 = vmatprep.subr.mxu0 0.0
  %3831 = vmatpush1.msra.mxu0 0.0
  %3832 = vmatprep.subr.mxu0 0.0
  %3833 = vmatpush1.msra.mxu0 0.0
  %3834 = vmatprep.subr.mxu0 0.0
  %3835 = vmatpush1.msra.mxu0 0.0
  %3836 = vmatprep.subr.mxu0 0.0
  %3837 = vmatpush1.msra.mxu0 0.0
  %3838 = vmatprep.subr.mxu0 0.0
  %3839 = vmatpush1.msra.mxu0 0.0
  %3840 = vmatprep.subr.mxu0 0.0
  %3841 = vmatpush1.msra.mxu0 0.0
  %3842 = vmatprep.subr.mxu0 0.0
  %3843 = vmatpush1.msra.mxu0 0.0
  %3844 = vmatprep.subr.mxu0 0.0
  %3845 = vmatpush1.msra.mxu0 0.0
  %3846 = vmatprep.subr.mxu0 0.0
  %3847 = vmatpush1.msra.mxu0 0.0
  %3848 = vmatprep.subr.mxu0 0.0
  %3849 = vmatpush1.msra.mxu0 0.0
  %3850 = vmatprep.subr.mxu0 0.0
  %3851 = vmatpush1.msra.mxu0 0.0
  %3852 = vmatprep.subr.mxu0 0.0
  %3853 = vmatpush1.msra.mxu0 0.0
  %3854 = vmatprep.subr.mxu0 0.0
  %3855 = vmatpush1.msra.mxu0 0.0
  %3856 = vmatprep.subr.mxu0 0.0
  %3857 = vmatpush1.msra.mxu0 0.0
  %3858 = vmatprep.subr.mxu0 0.0
  %3859 = vmatpush1.msra.mxu0 0.0
  %3860 = vmatprep.subr.mxu0 0.0
  %3861 = vmatpush1.msra.mxu0 0.0
  %3862 = vmatprep.subr.mxu0 0.0
  %3863 = vmatpush1.msra.mxu0 0.0
  %3864 = vmatprep.subr.mxu0 0.0
  %3865 = vmatpush1.msra.mxu0 0.0
  %3866 = vmatprep.subr.mxu0 0.0
  %3867 = vmatpush1.msra.mxu0 0.0
  %3868 = vmatprep.subr.mxu0 0.0
  %3869 = vmatpush1.msra.mxu0 0.0
  %3870 = vmatprep.subr.mxu0 0.0
  %3871 = vmatpush1.msra.mxu0 0.0
  %3872 = vmatprep.subr.mxu0 0.0
  %3873 = vmatpush1.msra.mxu0 0.0
  %3874 = vmatprep.subr.mxu0 0.0
  %3875 = vmatpush1.msra.mxu0 0.0
  %3876 = vmatprep.subr.mxu0 0.0
  %3877 = vmatpush1.msra.mxu0 0.0
  %3878 = vmatprep.subr.mxu0 0.0
  %3879 = vmatpush1.msra.mxu0 0.0
  %3880 = vmatprep.subr.mxu0 0.0
  %3881 = vmatpush1.msra.mxu0 0.0
  %3882 = vmatprep.subr.mxu0 0.0
  %3883 = vmatpush1.msra.mxu0 0.0
  %3884 = vmatprep.mubr.f32.mxu0 0.0
  %3885 = vmatmul.mubr.f32.gmra.mrb[0].mxu0 %v2678
  %v3886 = vpop.f32.mrb[0].mxu0
  %v3887 = vadd.f32 %v3819, %v3886
  %v3888 = vpop.f32.mrb[0].mxu0
  %3889 = vmatprep.mubr.f32.mxu0 0.0
  %3890 = vmatmul.mubr.f32.gmra.mrb[0].mxu0 %v2681
  %v3891 = vpop.f32.mrb[0].mxu0
  %v3892 = vadd.f32 %v3819, %v3891
  %v3893 = vpop.f32.mrb[0].mxu0
  %3894 = vdwg.mxu0
  %v3895 = vlaneseq
  %v3896 = vshrl.u32 %v3895, 7
  %v3897 = vsub.s32 2, %v3896
  %v3898 = vrot.slane %v2656, %v3897
  %3899 = vmatprep.subr.mxu0 0.0
  %3900 = vmatpush1.msra.mxu0 %v3733
  %3901 = vmatprep.subr.mxu0 0.0
  %3902 = vmatpush1.msra.mxu0 %v3734
  %3903 = vmatprep.subr.mxu0 0.0
  %3904 = vmatpush1.msra.mxu0 %v3735
  %3905 = vmatprep.subr.mxu0 0.0
  %3906 = vmatpush1.msra.mxu0 %v3736
  %3907 = vmatprep.subr.mxu0 0.0
  %3908 = vmatpush1.msra.mxu0 0.0
  %3909 = vmatprep.subr.mxu0 0.0
  %3910 = vmatpush1.msra.mxu0 0.0
  %3911 = vmatprep.subr.mxu0 0.0
  %3912 = vmatpush1.msra.mxu0 0.0
  %3913 = vmatprep.subr.mxu0 0.0
  %3914 = vmatpush1.msra.mxu0 0.0
  %3915 = vmatprep.subr.mxu0 0.0
  %3916 = vmatpush1.msra.mxu0 0.0
  %3917 = vmatprep.subr.mxu0 0.0
  %3918 = vmatpush1.msra.mxu0 0.0
  %3919 = vmatprep.subr.mxu0 0.0
  %3920 = vmatpush1.msra.mxu0 0.0
  %3921 = vmatprep.subr.mxu0 0.0
  %3922 = vmatpush1.msra.mxu0 0.0
  %3923 = vmatprep.subr.mxu0 0.0
  %3924 = vmatpush1.msra.mxu0 0.0
  %3925 = vmatprep.subr.mxu0 0.0
  %3926 = vmatpush1.msra.mxu0 0.0
  %3927 = vmatprep.subr.mxu0 0.0
  %3928 = vmatpush1.msra.mxu0 0.0
  %3929 = vmatprep.subr.mxu0 0.0
  %3930 = vmatpush1.msra.mxu0 0.0
  %3931 = vmatprep.subr.mxu0 0.0
  %3932 = vmatpush1.msra.mxu0 0.0
  %3933 = vmatprep.subr.mxu0 0.0
  %3934 = vmatpush1.msra.mxu0 0.0
  %3935 = vmatprep.subr.mxu0 0.0
  %3936 = vmatpush1.msra.mxu0 0.0
  %3937 = vmatprep.subr.mxu0 0.0
  %3938 = vmatpush1.msra.mxu0 0.0
  %3939 = vmatprep.subr.mxu0 0.0
  %3940 = vmatpush1.msra.mxu0 0.0
  %3941 = vmatprep.subr.mxu0 0.0
  %3942 = vmatpush1.msra.mxu0 0.0
  %3943 = vmatprep.subr.mxu0 0.0
  %3944 = vmatpush1.msra.mxu0 0.0
  %3945 = vmatprep.subr.mxu0 0.0
  %3946 = vmatpush1.msra.mxu0 0.0
  %3947 = vmatprep.subr.mxu0 0.0
  %3948 = vmatpush1.msra.mxu0 0.0
  %3949 = vmatprep.subr.mxu0 0.0
  %3950 = vmatpush1.msra.mxu0 0.0
  %3951 = vmatprep.subr.mxu0 0.0
  %3952 = vmatpush1.msra.mxu0 0.0
  %3953 = vmatprep.subr.mxu0 0.0
  %3954 = vmatpush1.msra.mxu0 0.0
  %3955 = vmatprep.subr.mxu0 0.0
  %3956 = vmatpush1.msra.mxu0 0.0
  %3957 = vmatprep.subr.mxu0 0.0
  %3958 = vmatpush1.msra.mxu0 0.0
  %3959 = vmatprep.subr.mxu0 0.0
  %3960 = vmatpush1.msra.mxu0 0.0
  %3961 = vmatprep.subr.mxu0 0.0
  %3962 = vmatpush1.msra.mxu0 0.0
  %3963 = vmatprep.mubr.f32.mxu0 0.0
  %3964 = vmatmul.mubr.f32.gmra.mrb[0].mxu0 %v2678
  %v3965 = vpop.f32.mrb[0].mxu0
  %v3966 = vadd.f32 %v3898, %v3965
  %v3967 = vpop.f32.mrb[0].mxu0
  %3968 = vmatprep.mubr.f32.mxu0 0.0
  %3969 = vmatmul.mubr.f32.gmra.mrb[0].mxu0 %v2681
  %v3970 = vpop.f32.mrb[0].mxu0
  %v3971 = vadd.f32 %v3898, %v3970
  %v3972 = vpop.f32.mrb[0].mxu0
  %3973 = vdwg.mxu0
  %v3975 = vsel %vm494, %v3808, 0
  %v3978 = vsel %vm494, %v3813, 0
  %v3981 = vsel %vm494, %v3887, 0
  %v3984 = vsel %vm494, %v3892, 0
  %3986 = vmatprep.subr.mxu0 0.0
  %3987 = vmatpush1.xpose.msra.mxu0 %v3981
  %3988 = vmatprep.subr.mxu0 0.0
  %3989 = vmatpush1.xpose.msra.mxu0 %v3984
  %3990 = vmatprep.subr.mxu0 0.0
  %3991 = vmatpush1.xpose.msra.mxu0 0.0
  %3992 = vmatprep.subr.mxu0 0.0
  %3993 = vmatpush1.xpose.msra.mxu0 0.0
  %3994 = vmatprep.subr.mxu0 0.0
  %3995 = vmatpush1.xpose.msra.mxu0 0.0
  %3996 = vmatprep.subr.mxu0 0.0
  %3997 = vmatpush1.xpose.msra.mxu0 0.0
  %3998 = vmatprep.subr.mxu0 0.0
  %3999 = vmatpush1.xpose.msra.mxu0 0.0
  %4000 = vmatprep.subr.mxu0 0.0
  %4001 = vmatpush1.xpose.msra.mxu0 0.0
  %4002 = vmatprep.subr.mxu0 0.0
  %4003 = vmatpush1.xpose.msra.mxu0 0.0
  %4004 = vmatprep.subr.mxu0 0.0
  %4005 = vmatpush1.xpose.msra.mxu0 0.0
  %4006 = vmatprep.subr.mxu0 0.0
  %4007 = vmatpush1.xpose.msra.mxu0 0.0
  %4008 = vmatprep.subr.mxu0 0.0
  %4009 = vmatpush1.xpose.msra.mxu0 0.0
  %4010 = vmatprep.subr.mxu0 0.0
  %4011 = vmatpush1.xpose.msra.mxu0 0.0
  %4012 = vmatprep.subr.mxu0 0.0
  %4013 = vmatpush1.xpose.msra.mxu0 0.0
  %4014 = vmatprep.subr.mxu0 0.0
  %4015 = vmatpush1.xpose.msra.mxu0 0.0
  %4016 = vmatprep.subr.mxu0 0.0
  %4017 = vmatpush1.xpose.msra.mxu0 0.0
  %4018 = vmatprep.subr.mxu0 0.0
  %4019 = vmatpush1.xpose.msra.mxu0 0.0
  %4020 = vmatprep.subr.mxu0 0.0
  %4021 = vmatpush1.xpose.msra.mxu0 0.0
  %4022 = vmatprep.subr.mxu0 0.0
  %4023 = vmatpush1.xpose.msra.mxu0 0.0
  %4024 = vmatprep.subr.mxu0 0.0
  %4025 = vmatpush1.xpose.msra.mxu0 0.0
  %4026 = vmatprep.subr.mxu0 0.0
  %4027 = vmatpush1.xpose.msra.mxu0 0.0
  %4028 = vmatprep.subr.mxu0 0.0
  %4029 = vmatpush1.xpose.msra.mxu0 0.0
  %4030 = vmatprep.subr.mxu0 0.0
  %4031 = vmatpush1.xpose.msra.mxu0 0.0
  %4032 = vmatprep.subr.mxu0 0.0
  %4033 = vmatpush1.xpose.msra.mxu0 0.0
  %4034 = vmatprep.subr.mxu0 0.0
  %4035 = vmatpush1.xpose.msra.mxu0 0.0
  %4036 = vmatprep.subr.mxu0 0.0
  %4037 = vmatpush1.xpose.msra.mxu0 0.0
  %4038 = vmatprep.subr.mxu0 0.0
  %4039 = vmatpush1.xpose.msra.mxu0 0.0
  %4040 = vmatprep.subr.mxu0 0.0
  %4041 = vmatpush1.xpose.msra.mxu0 0.0
  %4042 = vmatprep.subr.mxu0 0.0
  %4043 = vmatpush1.xpose.msra.mxu0 0.0
  %4044 = vmatprep.subr.mxu0 0.0
  %4045 = vmatpush1.xpose.msra.mxu0 0.0
  %4046 = vmatprep.subr.mxu0 0.0
  %4047 = vmatpush1.xpose.msra.mxu0 0.0
  %4048 = vmatprep.subr.mxu0 0.0
  %4049 = vmatpush1.xpose.msra.mxu0 0.0
  %4050 = vmatprep.mubr.f32.mxu0 0.0
  %4051 = vmatmul.mubr.f32.gmra.mrb[0].mxu0 %v3975
  %v4052 = vpop.f32.mrb[0].mxu0
  %v4053 = vadd.f32 0.0, %v4052
  %v4054 = vpop.f32.mrb[0].mxu0
  %4055 = vmatprep.mubr.f32.mxu0 0.0
  %4056 = vmatmul.mubr.f32.gmra.mrb[0].mxu0 %v3978
  %v4057 = vpop.f32.mrb[0].mxu0
  %v4058 = vadd.f32 0.0, %v4057
  %v4059 = vpop.f32.mrb[0].mxu0
  %4060 = vdwg.mxu0
  %v4061 = vmul.f32 %v4053, 0.35355338
  %v4062 = vmul.f32 %v4058, 0.35355338
  %v4063 = vadd.f32 %v4061, %v232
  %v4064 = vadd.f32 %v4062, %v233
  %v4065 = vsel %vm586, %v4063, -inf
  %4066 = vmax.xlane.f32.xlu0 %v4065
  %v4067 = vpop.xlane.xlu0 %4066
  %v4068 = vsel %vm586, %v4064, -inf
  %4069 = vmax.xlane.f32.xlu0 %v4068
  %v4070 = vpop.xlane.xlu0 %4069
  %v4071 = vsub.f32 %v4063, %v4067
  %v4072 = vsub.f32 %v4064, %v4070
  %v4073 = vmul.f32 %v4071, 1.442695
  %v4074 = vpow.pop %v4073
  %v4075 = vmul.f32 %v4072, 1.442695
  %v4076 = vpow.pop %v4075
  %v4077 = vsel %vm586, %v4074, 0.0
  %4078 = vadd.xlane.f32.xlu0 %v4077
  %v4079 = vpop.xlane.xlu0 %4078
  %v4080 = vsel %vm586, %v4076, 0.0
  %4081 = vadd.xlane.f32.xlu0 %v4080
  %v4082 = vpop.xlane.xlu0 %4081
  %v4083 = vrcp.pop %v4079
  %v4084 = vrcp.pop %v4082
  %v4085 = vmul.f32 %v4074, %v4083
  %v4086 = vmul.f32 %v4076, %v4084
  %v4088 = vsel %vm586, %v4085, 0
  %v4091 = vsel %vm586, %v4086, 0
  %4093 = vmatprep.subr.mxu0 0.0
  %4094 = vmatpush1.msra.mxu0 %v3966
  %4095 = vmatprep.subr.mxu0 0.0
  %4096 = vmatpush1.msra.mxu0 %v3971
  %4097 = vmatprep.subr.mxu0 0.0
  %4098 = vmatpush1.msra.mxu0 0.0
  %4099 = vmatprep.subr.mxu0 0.0
  %4100 = vmatpush1.msra.mxu0 0.0
  %4101 = vmatprep.subr.mxu0 0.0
  %4102 = vmatpush1.msra.mxu0 0.0
  %4103 = vmatprep.subr.mxu0 0.0
  %4104 = vmatpush1.msra.mxu0 0.0
  %4105 = vmatprep.subr.mxu0 0.0
  %4106 = vmatpush1.msra.mxu0 0.0
  %4107 = vmatprep.subr.mxu0 0.0
  %4108 = vmatpush1.msra.mxu0 0.0
  %4109 = vmatprep.subr.mxu0 0.0
  %4110 = vmatpush1.msra.mxu0 0.0
  %4111 = vmatprep.subr.mxu0 0.0
  %4112 = vmatpush1.msra.mxu0 0.0
  %4113 = vmatprep.subr.mxu0 0.0
  %4114 = vmatpush1.msra.mxu0 0.0
  %4115 = vmatprep.subr.mxu0 0.0
  %4116 = vmatpush1.msra.mxu0 0.0
  %4117 = vmatprep.subr.mxu0 0.0
  %4118 = vmatpush1.msra.mxu0 0.0
  %4119 = vmatprep.subr.mxu0 0.0
  %4120 = vmatpush1.msra.mxu0 0.0
  %4121 = vmatprep.subr.mxu0 0.0
  %4122 = vmatpush1.msra.mxu0 0.0
  %4123 = vmatprep.subr.mxu0 0.0
  %4124 = vmatpush1.msra.mxu0 0.0
  %4125 = vmatprep.subr.mxu0 0.0
  %4126 = vmatpush1.msra.mxu0 0.0
  %4127 = vmatprep.subr.mxu0 0.0
  %4128 = vmatpush1.msra.mxu0 0.0
  %4129 = vmatprep.subr.mxu0 0.0
  %4130 = vmatpush1.msra.mxu0 0.0
  %4131 = vmatprep.subr.mxu0 0.0
  %4132 = vmatpush1.msra.mxu0 0.0
  %4133 = vmatprep.subr.mxu0 0.0
  %4134 = vmatpush1.msra.mxu0 0.0
  %4135 = vmatprep.subr.mxu0 0.0
  %4136 = vmatpush1.msra.mxu0 0.0
  %4137 = vmatprep.subr.mxu0 0.0
  %4138 = vmatpush1.msra.mxu0 0.0
  %4139 = vmatprep.subr.mxu0 0.0
  %4140 = vmatpush1.msra.mxu0 0.0
  %4141 = vmatprep.subr.mxu0 0.0
  %4142 = vmatpush1.msra.mxu0 0.0
  %4143 = vmatprep.subr.mxu0 0.0
  %4144 = vmatpush1.msra.mxu0 0.0
  %4145 = vmatprep.subr.mxu0 0.0
  %4146 = vmatpush1.msra.mxu0 0.0
  %4147 = vmatprep.subr.mxu0 0.0
  %4148 = vmatpush1.msra.mxu0 0.0
  %4149 = vmatprep.subr.mxu0 0.0
  %4150 = vmatpush1.msra.mxu0 0.0
  %4151 = vmatprep.subr.mxu0 0.0
  %4152 = vmatpush1.msra.mxu0 0.0
  %4153 = vmatprep.subr.mxu0 0.0
  %4154 = vmatpush1.msra.mxu0 0.0
  %4155 = vmatprep.subr.mxu0 0.0
  %4156 = vmatpush1.msra.mxu0 0.0
  %4157 = vmatprep.mubr.f32.mxu0 0.0
  %4158 = vmatmul.mubr.f32.gmra.mrb[0].mxu0 %v4088
  %v4159 = vpop.f32.mrb[0].mxu0
  %v4160 = vadd.f32 0.0, %v4159
  %v4161 = vpop.f32.mrb[0].mxu0
  %4162 = vmatprep.mubr.f32.mxu0 0.0
  %4163 = vmatmul.mubr.f32.gmra.mrb[0].mxu0 %v4091
  %v4164 = vpop.f32.mrb[0].mxu0
  %v4165 = vadd.f32 0.0, %v4164
  %v4166 = vpop.f32.mrb[0].mxu0
  %4167 = vdwg.mxu0
  %s4168 = scalar_lea.vmem %s5, 48
  %v4169 = vld [vmem:[%s4168] sm:$0xff]
  %v4171 = vsel %vm494, %v4160, 0
  %v4174 = vsel %vm494, %v4165, 0
  %4176 = vmatprep.subr.mxu0 0.0
  %4177 = vmatpush1.msra.mxu0 %v4169
  %4178 = vmatprep.subr.mxu0 0.0
  %4179 = vmatpush1.msra.mxu0 0.0
  %4180 = vmatprep.subr.mxu0 0.0
  %4181 = vmatpush1.msra.mxu0 0.0
  %4182 = vmatprep.subr.mxu0 0.0
  %4183 = vmatpush1.msra.mxu0 0.0
  %4184 = vmatprep.subr.mxu0 0.0
  %4185 = vmatpush1.msra.mxu0 0.0
  %4186 = vmatprep.subr.mxu0 0.0
  %4187 = vmatpush1.msra.mxu0 0.0
  %4188 = vmatprep.subr.mxu0 0.0
  %4189 = vmatpush1.msra.mxu0 0.0
  %4190 = vmatprep.subr.mxu0 0.0
  %4191 = vmatpush1.msra.mxu0 0.0
  %4192 = vmatprep.subr.mxu0 0.0
  %4193 = vmatpush1.msra.mxu0 0.0
  %4194 = vmatprep.subr.mxu0 0.0
  %4195 = vmatpush1.msra.mxu0 0.0
  %4196 = vmatprep.subr.mxu0 0.0
  %4197 = vmatpush1.msra.mxu0 0.0
  %4198 = vmatprep.subr.mxu0 0.0
  %4199 = vmatpush1.msra.mxu0 0.0
  %4200 = vmatprep.subr.mxu0 0.0
  %4201 = vmatpush1.msra.mxu0 0.0
  %4202 = vmatprep.subr.mxu0 0.0
  %4203 = vmatpush1.msra.mxu0 0.0
  %4204 = vmatprep.subr.mxu0 0.0
  %4205 = vmatpush1.msra.mxu0 0.0
  %4206 = vmatprep.subr.mxu0 0.0
  %4207 = vmatpush1.msra.mxu0 0.0
  %4208 = vmatprep.subr.mxu0 0.0
  %4209 = vmatpush1.msra.mxu0 0.0
  %4210 = vmatprep.subr.mxu0 0.0
  %4211 = vmatpush1.msra.mxu0 0.0
  %4212 = vmatprep.subr.mxu0 0.0
  %4213 = vmatpush1.msra.mxu0 0.0
  %4214 = vmatprep.subr.mxu0 0.0
  %4215 = vmatpush1.msra.mxu0 0.0
  %4216 = vmatprep.subr.mxu0 0.0
  %4217 = vmatpush1.msra.mxu0 0.0
  %4218 = vmatprep.subr.mxu0 0.0
  %4219 = vmatpush1.msra.mxu0 0.0
  %4220 = vmatprep.subr.mxu0 0.0
  %4221 = vmatpush1.msra.mxu0 0.0
  %4222 = vmatprep.subr.mxu0 0.0
  %4223 = vmatpush1.msra.mxu0 0.0
  %4224 = vmatprep.subr.mxu0 0.0
  %4225 = vmatpush1.msra.mxu0 0.0
  %4226 = vmatprep.subr.mxu0 0.0
  %4227 = vmatpush1.msra.mxu0 0.0
  %4228 = vmatprep.subr.mxu0 0.0
  %4229 = vmatpush1.msra.mxu0 0.0
  %4230 = vmatprep.subr.mxu0 0.0
  %4231 = vmatpush1.msra.mxu0 0.0
  %4232 = vmatprep.subr.mxu0 0.0
  %4233 = vmatpush1.msra.mxu0 0.0
  %4234 = vmatprep.subr.mxu0 0.0
  %4235 = vmatpush1.msra.mxu0 0.0
  %4236 = vmatprep.subr.mxu0 0.0
  %4237 = vmatpush1.msra.mxu0 0.0
  %4238 = vmatprep.subr.mxu0 0.0
  %4239 = vmatpush1.msra.mxu0 0.0
  %4240 = vmatprep.mubr.f32.mxu0 0.0
  %4241 = vmatmul.mubr.f32.gmra.mrb[0].mxu0 %v4171
  %v4242 = vpop.f32.mrb[0].mxu0
  %v4243 = vadd.f32 0.0, %v4242
  %v4244 = vpop.f32.mrb[0].mxu0
  %4245 = vmatprep.mubr.f32.mxu0 0.0
  %4246 = vmatmul.mubr.f32.gmra.mrb[0].mxu0 %v4174
  %v4247 = vpop.f32.mrb[0].mxu0
  %v4248 = vadd.f32 0.0, %v4247
  %v4249 = vpop.f32.mrb[0].mxu0
  %4250 = vdwg.mxu0
  %v4251 = vadd.f32 %v3714, %v4243
  %v4252 = vadd.f32 %v3719, %v4248
  %s4253 = scalar_lea.vmem %s4, 480
  %v4254 = vld [vmem:[%s4253] sm:$0xff]
  %v4255 = vld [vmem:[%s4253 + $0x8] sm:$0xff]
  %v4256 = vld [vmem:[%s4253 + $0x10] sm:$0xff]
  %v4257 = vld [vmem:[%s4253 + $0x18] sm:$0xff]
  %s4258 = scalar_lea.vmem %s4, 608
  %v4259 = vld [vmem:[%s4258] sm:$0xff]
  %v4260 = vld [vmem:[%s4258 + $0x8] sm:$0xff]
  %v4261 = vld [vmem:[%s4258 + $0x10] sm:$0xff]
  %v4262 = vld [vmem:[%s4258 + $0x18] sm:$0xff]
  %s4263 = scalar_lea.vmem %s4, 736
  %v4264 = vld [vmem:[%s4263] sm:$0xff]
  %v4265 = vld [vmem:[%s4263 + $0x8] sm:$0xff]
  %v4266 = vld [vmem:[%s4263 + $0x10] sm:$0xff]
  %v4267 = vld [vmem:[%s4263 + $0x18] sm:$0xff]
  %v4268 = vlaneseq
  %v4269 = vshrl.u32 %v4268, 7
  %v4270 = vsub.s32 3, %v4269
  %v4271 = vrot.slane %v2655, %v4270
  %4272 = vmatprep.subr.mxu0 0.0
  %4273 = vmatpush1.msra.mxu0 %v4254
  %4274 = vmatprep.subr.mxu0 0.0
  %4275 = vmatpush1.msra.mxu0 %v4255
  %4276 = vmatprep.subr.mxu0 0.0
  %4277 = vmatpush1.msra.mxu0 %v4256
  %4278 = vmatprep.subr.mxu0 0.0
  %4279 = vmatpush1.msra.mxu0 %v4257
  %4280 = vmatprep.subr.mxu0 0.0
  %4281 = vmatpush1.msra.mxu0 0.0
  %4282 = vmatprep.subr.mxu0 0.0
  %4283 = vmatpush1.msra.mxu0 0.0
  %4284 = vmatprep.subr.mxu0 0.0
  %4285 = vmatpush1.msra.mxu0 0.0
  %4286 = vmatprep.subr.mxu0 0.0
  %4287 = vmatpush1.msra.mxu0 0.0
  %4288 = vmatprep.subr.mxu0 0.0
  %4289 = vmatpush1.msra.mxu0 0.0
  %4290 = vmatprep.subr.mxu0 0.0
  %4291 = vmatpush1.msra.mxu0 0.0
  %4292 = vmatprep.subr.mxu0 0.0
  %4293 = vmatpush1.msra.mxu0 0.0
  %4294 = vmatprep.subr.mxu0 0.0
  %4295 = vmatpush1.msra.mxu0 0.0
  %4296 = vmatprep.subr.mxu0 0.0
  %4297 = vmatpush1.msra.mxu0 0.0
  %4298 = vmatprep.subr.mxu0 0.0
  %4299 = vmatpush1.msra.mxu0 0.0
  %4300 = vmatprep.subr.mxu0 0.0
  %4301 = vmatpush1.msra.mxu0 0.0
  %4302 = vmatprep.subr.mxu0 0.0
  %4303 = vmatpush1.msra.mxu0 0.0
  %4304 = vmatprep.subr.mxu0 0.0
  %4305 = vmatpush1.msra.mxu0 0.0
  %4306 = vmatprep.subr.mxu0 0.0
  %4307 = vmatpush1.msra.mxu0 0.0
  %4308 = vmatprep.subr.mxu0 0.0
  %4309 = vmatpush1.msra.mxu0 0.0
  %4310 = vmatprep.subr.mxu0 0.0
  %4311 = vmatpush1.msra.mxu0 0.0
  %4312 = vmatprep.subr.mxu0 0.0
  %4313 = vmatpush1.msra.mxu0 0.0
  %4314 = vmatprep.subr.mxu0 0.0
  %4315 = vmatpush1.msra.mxu0 0.0
  %4316 = vmatprep.subr.mxu0 0.0
  %4317 = vmatpush1.msra.mxu0 0.0
  %4318 = vmatprep.subr.mxu0 0.0
  %4319 = vmatpush1.msra.mxu0 0.0
  %4320 = vmatprep.subr.mxu0 0.0
  %4321 = vmatpush1.msra.mxu0 0.0
  %4322 = vmatprep.subr.mxu0 0.0
  %4323 = vmatpush1.msra.mxu0 0.0
  %4324 = vmatprep.subr.mxu0 0.0
  %4325 = vmatpush1.msra.mxu0 0.0
  %4326 = vmatprep.subr.mxu0 0.0
  %4327 = vmatpush1.msra.mxu0 0.0
  %4328 = vmatprep.subr.mxu0 0.0
  %4329 = vmatpush1.msra.mxu0 0.0
  %4330 = vmatprep.subr.mxu0 0.0
  %4331 = vmatpush1.msra.mxu0 0.0
  %4332 = vmatprep.subr.mxu0 0.0
  %4333 = vmatpush1.msra.mxu0 0.0
  %4334 = vmatprep.subr.mxu0 0.0
  %4335 = vmatpush1.msra.mxu0 0.0
  %4336 = vmatprep.mubr.f32.mxu0 0.0
  %4337 = vmatmul.mubr.f32.gmra.mrb[0].mxu0 %v2678
  %v4338 = vpop.f32.mrb[0].mxu0
  %v4339 = vadd.f32 %v4271, %v4338
  %v4340 = vpop.f32.mrb[0].mxu0
  %4341 = vmatprep.mubr.f32.mxu0 0.0
  %4342 = vmatmul.mubr.f32.gmra.mrb[0].mxu0 %v2681
  %v4343 = vpop.f32.mrb[0].mxu0
  %v4344 = vadd.f32 %v4271, %v4343
  %v4345 = vpop.f32.mrb[0].mxu0
  %4346 = vdwg.mxu0
  %v4347 = vlaneseq
  %v4348 = vshrl.u32 %v4347, 7
  %v4349 = vsub.s32 7, %v4348
  %v4350 = vrot.slane %v2655, %v4349
  %4351 = vmatprep.subr.mxu0 0.0
  %4352 = vmatpush1.msra.mxu0 %v4259
  %4353 = vmatprep.subr.mxu0 0.0
  %4354 = vmatpush1.msra.mxu0 %v4260
  %4355 = vmatprep.subr.mxu0 0.0
  %4356 = vmatpush1.msra.mxu0 %v4261
  %4357 = vmatprep.subr.mxu0 0.0
  %4358 = vmatpush1.msra.mxu0 %v4262
  %4359 = vmatprep.subr.mxu0 0.0
  %4360 = vmatpush1.msra.mxu0 0.0
  %4361 = vmatprep.subr.mxu0 0.0
  %4362 = vmatpush1.msra.mxu0 0.0
  %4363 = vmatprep.subr.mxu0 0.0
  %4364 = vmatpush1.msra.mxu0 0.0
  %4365 = vmatprep.subr.mxu0 0.0
  %4366 = vmatpush1.msra.mxu0 0.0
  %4367 = vmatprep.subr.mxu0 0.0
  %4368 = vmatpush1.msra.mxu0 0.0
  %4369 = vmatprep.subr.mxu0 0.0
  %4370 = vmatpush1.msra.mxu0 0.0
  %4371 = vmatprep.subr.mxu0 0.0
  %4372 = vmatpush1.msra.mxu0 0.0
  %4373 = vmatprep.subr.mxu0 0.0
  %4374 = vmatpush1.msra.mxu0 0.0
  %4375 = vmatprep.subr.mxu0 0.0
  %4376 = vmatpush1.msra.mxu0 0.0
  %4377 = vmatprep.subr.mxu0 0.0
  %4378 = vmatpush1.msra.mxu0 0.0
  %4379 = vmatprep.subr.mxu0 0.0
  %4380 = vmatpush1.msra.mxu0 0.0
  %4381 = vmatprep.subr.mxu0 0.0
  %4382 = vmatpush1.msra.mxu0 0.0
  %4383 = vmatprep.subr.mxu0 0.0
  %4384 = vmatpush1.msra.mxu0 0.0
  %4385 = vmatprep.subr.mxu0 0.0
  %4386 = vmatpush1.msra.mxu0 0.0
  %4387 = vmatprep.subr.mxu0 0.0
  %4388 = vmatpush1.msra.mxu0 0.0
  %4389 = vmatprep.subr.mxu0 0.0
  %4390 = vmatpush1.msra.mxu0 0.0
  %4391 = vmatprep.subr.mxu0 0.0
  %4392 = vmatpush1.msra.mxu0 0.0
  %4393 = vmatprep.subr.mxu0 0.0
  %4394 = vmatpush1.msra.mxu0 0.0
  %4395 = vmatprep.subr.mxu0 0.0
  %4396 = vmatpush1.msra.mxu0 0.0
  %4397 = vmatprep.subr.mxu0 0.0
  %4398 = vmatpush1.msra.mxu0 0.0
  %4399 = vmatprep.subr.mxu0 0.0
  %4400 = vmatpush1.msra.mxu0 0.0
  %4401 = vmatprep.subr.mxu0 0.0
  %4402 = vmatpush1.msra.mxu0 0.0
  %4403 = vmatprep.subr.mxu0 0.0
  %4404 = vmatpush1.msra.mxu0 0.0
  %4405 = vmatprep.subr.mxu0 0.0
  %4406 = vmatpush1.msra.mxu0 0.0
  %4407 = vmatprep.subr.mxu0 0.0
  %4408 = vmatpush1.msra.mxu0 0.0
  %4409 = vmatprep.subr.mxu0 0.0
  %4410 = vmatpush1.msra.mxu0 0.0
  %4411 = vmatprep.subr.mxu0 0.0
  %4412 = vmatpush1.msra.mxu0 0.0
  %4413 = vmatprep.subr.mxu0 0.0
  %4414 = vmatpush1.msra.mxu0 0.0
  %4415 = vmatprep.mubr.f32.mxu0 0.0
  %4416 = vmatmul.mubr.f32.gmra.mrb[0].mxu0 %v2678
  %v4417 = vpop.f32.mrb[0].mxu0
  %v4418 = vadd.f32 %v4350, %v4417
  %v4419 = vpop.f32.mrb[0].mxu0
  %4420 = vmatprep.mubr.f32.mxu0 0.0
  %4421 = vmatmul.mubr.f32.gmra.mrb[0].mxu0 %v2681
  %v4422 = vpop.f32.mrb[0].mxu0
  %v4423 = vadd.f32 %v4350, %v4422
  %v4424 = vpop.f32.mrb[0].mxu0
  %4425 = vdwg.mxu0
  %v4426 = vlaneseq
  %v4427 = vshrl.u32 %v4426, 7
  %v4428 = vsub.s32 3, %v4427
  %v4429 = vrot.slane %v2656, %v4428
  %4430 = vmatprep.subr.mxu0 0.0
  %4431 = vmatpush1.msra.mxu0 %v4264
  %4432 = vmatprep.subr.mxu0 0.0
  %4433 = vmatpush1.msra.mxu0 %v4265
  %4434 = vmatprep.subr.mxu0 0.0
  %4435 = vmatpush1.msra.mxu0 %v4266
  %4436 = vmatprep.subr.mxu0 0.0
  %4437 = vmatpush1.msra.mxu0 %v4267
  %4438 = vmatprep.subr.mxu0 0.0
  %4439 = vmatpush1.msra.mxu0 0.0
  %4440 = vmatprep.subr.mxu0 0.0
  %4441 = vmatpush1.msra.mxu0 0.0
  %4442 = vmatprep.subr.mxu0 0.0
  %4443 = vmatpush1.msra.mxu0 0.0
  %4444 = vmatprep.subr.mxu0 0.0
  %4445 = vmatpush1.msra.mxu0 0.0
  %4446 = vmatprep.subr.mxu0 0.0
  %4447 = vmatpush1.msra.mxu0 0.0
  %4448 = vmatprep.subr.mxu0 0.0
  %4449 = vmatpush1.msra.mxu0 0.0
  %4450 = vmatprep.subr.mxu0 0.0
  %4451 = vmatpush1.msra.mxu0 0.0
  %4452 = vmatprep.subr.mxu0 0.0
  %4453 = vmatpush1.msra.mxu0 0.0
  %4454 = vmatprep.subr.mxu0 0.0
  %4455 = vmatpush1.msra.mxu0 0.0
  %4456 = vmatprep.subr.mxu0 0.0
  %4457 = vmatpush1.msra.mxu0 0.0
  %4458 = vmatprep.subr.mxu0 0.0
  %4459 = vmatpush1.msra.mxu0 0.0
  %4460 = vmatprep.subr.mxu0 0.0
  %4461 = vmatpush1.msra.mxu0 0.0
  %4462 = vmatprep.subr.mxu0 0.0
  %4463 = vmatpush1.msra.mxu0 0.0
  %4464 = vmatprep.subr.mxu0 0.0
  %4465 = vmatpush1.msra.mxu0 0.0
  %4466 = vmatprep.subr.mxu0 0.0
  %4467 = vmatpush1.msra.mxu0 0.0
  %4468 = vmatprep.subr.mxu0 0.0
  %4469 = vmatpush1.msra.mxu0 0.0
  %4470 = vmatprep.subr.mxu0 0.0
  %4471 = vmatpush1.msra.mxu0 0.0
  %4472 = vmatprep.subr.mxu0 0.0
  %4473 = vmatpush1.msra.mxu0 0.0
  %4474 = vmatprep.subr.mxu0 0.0
  %4475 = vmatpush1.msra.mxu0 0.0
  %4476 = vmatprep.subr.mxu0 0.0
  %4477 = vmatpush1.msra.mxu0 0.0
  %4478 = vmatprep.subr.mxu0 0.0
  %4479 = vmatpush1.msra.mxu0 0.0
  %4480 = vmatprep.subr.mxu0 0.0
  %4481 = vmatpush1.msra.mxu0 0.0
  %4482 = vmatprep.subr.mxu0 0.0
  %4483 = vmatpush1.msra.mxu0 0.0
  %4484 = vmatprep.subr.mxu0 0.0
  %4485 = vmatpush1.msra.mxu0 0.0
  %4486 = vmatprep.subr.mxu0 0.0
  %4487 = vmatpush1.msra.mxu0 0.0
  %4488 = vmatprep.subr.mxu0 0.0
  %4489 = vmatpush1.msra.mxu0 0.0
  %4490 = vmatprep.subr.mxu0 0.0
  %4491 = vmatpush1.msra.mxu0 0.0
  %4492 = vmatprep.subr.mxu0 0.0
  %4493 = vmatpush1.msra.mxu0 0.0
  %4494 = vmatprep.mubr.f32.mxu0 0.0
  %4495 = vmatmul.mubr.f32.gmra.mrb[0].mxu0 %v2678
  %v4496 = vpop.f32.mrb[0].mxu0
  %v4497 = vadd.f32 %v4429, %v4496
  %v4498 = vpop.f32.mrb[0].mxu0
  %4499 = vmatprep.mubr.f32.mxu0 0.0
  %4500 = vmatmul.mubr.f32.gmra.mrb[0].mxu0 %v2681
  %v4501 = vpop.f32.mrb[0].mxu0
  %v4502 = vadd.f32 %v4429, %v4501
  %v4503 = vpop.f32.mrb[0].mxu0
  %4504 = vdwg.mxu0
  %v4506 = vsel %vm494, %v4339, 0
  %v4509 = vsel %vm494, %v4344, 0
  %v4512 = vsel %vm494, %v4418, 0
  %v4515 = vsel %vm494, %v4423, 0
  %4517 = vmatprep.subr.mxu0 0.0
  %4518 = vmatpush1.xpose.msra.mxu0 %v4512
  %4519 = vmatprep.subr.mxu0 0.0
  %4520 = vmatpush1.xpose.msra.mxu0 %v4515
  %4521 = vmatprep.subr.mxu0 0.0
  %4522 = vmatpush1.xpose.msra.mxu0 0.0
  %4523 = vmatprep.subr.mxu0 0.0
  %4524 = vmatpush1.xpose.msra.mxu0 0.0
  %4525 = vmatprep.subr.mxu0 0.0
  %4526 = vmatpush1.xpose.msra.mxu0 0.0
  %4527 = vmatprep.subr.mxu0 0.0
  %4528 = vmatpush1.xpose.msra.mxu0 0.0
  %4529 = vmatprep.subr.mxu0 0.0
  %4530 = vmatpush1.xpose.msra.mxu0 0.0
  %4531 = vmatprep.subr.mxu0 0.0
  %4532 = vmatpush1.xpose.msra.mxu0 0.0
  %4533 = vmatprep.subr.mxu0 0.0
  %4534 = vmatpush1.xpose.msra.mxu0 0.0
  %4535 = vmatprep.subr.mxu0 0.0
  %4536 = vmatpush1.xpose.msra.mxu0 0.0
  %4537 = vmatprep.subr.mxu0 0.0
  %4538 = vmatpush1.xpose.msra.mxu0 0.0
  %4539 = vmatprep.subr.mxu0 0.0
  %4540 = vmatpush1.xpose.msra.mxu0 0.0
  %4541 = vmatprep.subr.mxu0 0.0
  %4542 = vmatpush1.xpose.msra.mxu0 0.0
  %4543 = vmatprep.subr.mxu0 0.0
  %4544 = vmatpush1.xpose.msra.mxu0 0.0
  %4545 = vmatprep.subr.mxu0 0.0
  %4546 = vmatpush1.xpose.msra.mxu0 0.0
  %4547 = vmatprep.subr.mxu0 0.0
  %4548 = vmatpush1.xpose.msra.mxu0 0.0
  %4549 = vmatprep.subr.mxu0 0.0
  %4550 = vmatpush1.xpose.msra.mxu0 0.0
  %4551 = vmatprep.subr.mxu0 0.0
  %4552 = vmatpush1.xpose.msra.mxu0 0.0
  %4553 = vmatprep.subr.mxu0 0.0
  %4554 = vmatpush1.xpose.msra.mxu0 0.0
  %4555 = vmatprep.subr.mxu0 0.0
  %4556 = vmatpush1.xpose.msra.mxu0 0.0
  %4557 = vmatprep.subr.mxu0 0.0
  %4558 = vmatpush1.xpose.msra.mxu0 0.0
  %4559 = vmatprep.subr.mxu0 0.0
  %4560 = vmatpush1.xpose.msra.mxu0 0.0
  %4561 = vmatprep.subr.mxu0 0.0
  %4562 = vmatpush1.xpose.msra.mxu0 0.0
  %4563 = vmatprep.subr.mxu0 0.0
  %4564 = vmatpush1.xpose.msra.mxu0 0.0
  %4565 = vmatprep.subr.mxu0 0.0
  %4566 = vmatpush1.xpose.msra.mxu0 0.0
  %4567 = vmatprep.subr.mxu0 0.0
  %4568 = vmatpush1.xpose.msra.mxu0 0.0
  %4569 = vmatprep.subr.mxu0 0.0
  %4570 = vmatpush1.xpose.msra.mxu0 0.0
  %4571 = vmatprep.subr.mxu0 0.0
  %4572 = vmatpush1.xpose.msra.mxu0 0.0
  %4573 = vmatprep.subr.mxu0 0.0
  %4574 = vmatpush1.xpose.msra.mxu0 0.0
  %4575 = vmatprep.subr.mxu0 0.0
  %4576 = vmatpush1.xpose.msra.mxu0 0.0
  %4577 = vmatprep.subr.mxu0 0.0
  %4578 = vmatpush1.xpose.msra.mxu0 0.0
  %4579 = vmatprep.subr.mxu0 0.0
  %4580 = vmatpush1.xpose.msra.mxu0 0.0
  %4581 = vmatprep.mubr.f32.mxu0 0.0
  %4582 = vmatmul.mubr.f32.gmra.mrb[0].mxu0 %v4506
  %v4583 = vpop.f32.mrb[0].mxu0
  %v4584 = vadd.f32 0.0, %v4583
  %v4585 = vpop.f32.mrb[0].mxu0
  %4586 = vmatprep.mubr.f32.mxu0 0.0
  %4587 = vmatmul.mubr.f32.gmra.mrb[0].mxu0 %v4509
  %v4588 = vpop.f32.mrb[0].mxu0
  %v4589 = vadd.f32 0.0, %v4588
  %v4590 = vpop.f32.mrb[0].mxu0
  %4591 = vdwg.mxu0
  %v4592 = vmul.f32 %v4584, 0.35355338
  %v4593 = vmul.f32 %v4589, 0.35355338
  %v4594 = vadd.f32 %v4592, %v232
  %v4595 = vadd.f32 %v4593, %v233
  %v4596 = vsel %vm586, %v4594, -inf
  %4597 = vmax.xlane.f32.xlu0 %v4596
  %v4598 = vpop.xlane.xlu0 %4597
  %v4599 = vsel %vm586, %v4595, -inf
  %4600 = vmax.xlane.f32.xlu0 %v4599
  %v4601 = vpop.xlane.xlu0 %4600
  %v4602 = vsub.f32 %v4594, %v4598
  %v4603 = vsub.f32 %v4595, %v4601
  %v4604 = vmul.f32 %v4602, 1.442695
  %v4605 = vpow.pop %v4604
  %v4606 = vmul.f32 %v4603, 1.442695
  %v4607 = vpow.pop %v4606
  %v4608 = vsel %vm586, %v4605, 0.0
  %4609 = vadd.xlane.f32.xlu0 %v4608
  %v4610 = vpop.xlane.xlu0 %4609
  %v4611 = vsel %vm586, %v4607, 0.0
  %4612 = vadd.xlane.f32.xlu0 %v4611
  %v4613 = vpop.xlane.xlu0 %4612
  %v4614 = vrcp.pop %v4610
  %v4615 = vrcp.pop %v4613
  %v4616 = vmul.f32 %v4605, %v4614
  %v4617 = vmul.f32 %v4607, %v4615
  %v4619 = vsel %vm586, %v4616, 0
  %v4622 = vsel %vm586, %v4617, 0
  %4624 = vmatprep.subr.mxu0 0.0
  %4625 = vmatpush1.msra.mxu0 %v4497
  %4626 = vmatprep.subr.mxu0 0.0
  %4627 = vmatpush1.msra.mxu0 %v4502
  %4628 = vmatprep.subr.mxu0 0.0
  %4629 = vmatpush1.msra.mxu0 0.0
  %4630 = vmatprep.subr.mxu0 0.0
  %4631 = vmatpush1.msra.mxu0 0.0
  %4632 = vmatprep.subr.mxu0 0.0
  %4633 = vmatpush1.msra.mxu0 0.0
  %4634 = vmatprep.subr.mxu0 0.0
  %4635 = vmatpush1.msra.mxu0 0.0
  %4636 = vmatprep.subr.mxu0 0.0
  %4637 = vmatpush1.msra.mxu0 0.0
  %4638 = vmatprep.subr.mxu0 0.0
  %4639 = vmatpush1.msra.mxu0 0.0
  %4640 = vmatprep.subr.mxu0 0.0
  %4641 = vmatpush1.msra.mxu0 0.0
  %4642 = vmatprep.subr.mxu0 0.0
  %4643 = vmatpush1.msra.mxu0 0.0
  %4644 = vmatprep.subr.mxu0 0.0
  %4645 = vmatpush1.msra.mxu0 0.0
  %4646 = vmatprep.subr.mxu0 0.0
  %4647 = vmatpush1.msra.mxu0 0.0
  %4648 = vmatprep.subr.mxu0 0.0
  %4649 = vmatpush1.msra.mxu0 0.0
  %4650 = vmatprep.subr.mxu0 0.0
  %4651 = vmatpush1.msra.mxu0 0.0
  %4652 = vmatprep.subr.mxu0 0.0
  %4653 = vmatpush1.msra.mxu0 0.0
  %4654 = vmatprep.subr.mxu0 0.0
  %4655 = vmatpush1.msra.mxu0 0.0
  %4656 = vmatprep.subr.mxu0 0.0
  %4657 = vmatpush1.msra.mxu0 0.0
  %4658 = vmatprep.subr.mxu0 0.0
  %4659 = vmatpush1.msra.mxu0 0.0
  %4660 = vmatprep.subr.mxu0 0.0
  %4661 = vmatpush1.msra.mxu0 0.0
  %4662 = vmatprep.subr.mxu0 0.0
  %4663 = vmatpush1.msra.mxu0 0.0
  %4664 = vmatprep.subr.mxu0 0.0
  %4665 = vmatpush1.msra.mxu0 0.0
  %4666 = vmatprep.subr.mxu0 0.0
  %4667 = vmatpush1.msra.mxu0 0.0
  %4668 = vmatprep.subr.mxu0 0.0
  %4669 = vmatpush1.msra.mxu0 0.0
  %4670 = vmatprep.subr.mxu0 0.0
  %4671 = vmatpush1.msra.mxu0 0.0
  %4672 = vmatprep.subr.mxu0 0.0
  %4673 = vmatpush1.msra.mxu0 0.0
  %4674 = vmatprep.subr.mxu0 0.0
  %4675 = vmatpush1.msra.mxu0 0.0
  %4676 = vmatprep.subr.mxu0 0.0
  %4677 = vmatpush1.msra.mxu0 0.0
  %4678 = vmatprep.subr.mxu0 0.0
  %4679 = vmatpush1.msra.mxu0 0.0
  %4680 = vmatprep.subr.mxu0 0.0
  %4681 = vmatpush1.msra.mxu0 0.0
  %4682 = vmatprep.subr.mxu0 0.0
  %4683 = vmatpush1.msra.mxu0 0.0
  %4684 = vmatprep.subr.mxu0 0.0
  %4685 = vmatpush1.msra.mxu0 0.0
  %4686 = vmatprep.subr.mxu0 0.0
  %4687 = vmatpush1.msra.mxu0 0.0
  %4688 = vmatprep.mubr.f32.mxu0 0.0
  %4689 = vmatmul.mubr.f32.gmra.mrb[0].mxu0 %v4619
  %v4690 = vpop.f32.mrb[0].mxu0
  %v4691 = vadd.f32 0.0, %v4690
  %v4692 = vpop.f32.mrb[0].mxu0
  %4693 = vmatprep.mubr.f32.mxu0 0.0
  %4694 = vmatmul.mubr.f32.gmra.mrb[0].mxu0 %v4622
  %v4695 = vpop.f32.mrb[0].mxu0
  %v4696 = vadd.f32 0.0, %v4695
  %v4697 = vpop.f32.mrb[0].mxu0
  %4698 = vdwg.mxu0
  %s4699 = scalar_lea.vmem %s5, 56
  %v4700 = vld [vmem:[%s4699] sm:$0xff]
  %v4702 = vsel %vm494, %v4691, 0
  %v4705 = vsel %vm494, %v4696, 0
  %4707 = vmatprep.subr.mxu0 0.0
  %4708 = vmatpush1.msra.mxu0 %v4700
  %4709 = vmatprep.subr.mxu0 0.0
  %4710 = vmatpush1.msra.mxu0 0.0
  %4711 = vmatprep.subr.mxu0 0.0
  %4712 = vmatpush1.msra.mxu0 0.0
  %4713 = vmatprep.subr.mxu0 0.0
  %4714 = vmatpush1.msra.mxu0 0.0
  %4715 = vmatprep.subr.mxu0 0.0
  %4716 = vmatpush1.msra.mxu0 0.0
  %4717 = vmatprep.subr.mxu0 0.0
  %4718 = vmatpush1.msra.mxu0 0.0
  %4719 = vmatprep.subr.mxu0 0.0
  %4720 = vmatpush1.msra.mxu0 0.0
  %4721 = vmatprep.subr.mxu0 0.0
  %4722 = vmatpush1.msra.mxu0 0.0
  %4723 = vmatprep.subr.mxu0 0.0
  %4724 = vmatpush1.msra.mxu0 0.0
  %4725 = vmatprep.subr.mxu0 0.0
  %4726 = vmatpush1.msra.mxu0 0.0
  %4727 = vmatprep.subr.mxu0 0.0
  %4728 = vmatpush1.msra.mxu0 0.0
  %4729 = vmatprep.subr.mxu0 0.0
  %4730 = vmatpush1.msra.mxu0 0.0
  %4731 = vmatprep.subr.mxu0 0.0
  %4732 = vmatpush1.msra.mxu0 0.0
  %4733 = vmatprep.subr.mxu0 0.0
  %4734 = vmatpush1.msra.mxu0 0.0
  %4735 = vmatprep.subr.mxu0 0.0
  %4736 = vmatpush1.msra.mxu0 0.0
  %4737 = vmatprep.subr.mxu0 0.0
  %4738 = vmatpush1.msra.mxu0 0.0
  %4739 = vmatprep.subr.mxu0 0.0
  %4740 = vmatpush1.msra.mxu0 0.0
  %4741 = vmatprep.subr.mxu0 0.0
  %4742 = vmatpush1.msra.mxu0 0.0
  %4743 = vmatprep.subr.mxu0 0.0
  %4744 = vmatpush1.msra.mxu0 0.0
  %4745 = vmatprep.subr.mxu0 0.0
  %4746 = vmatpush1.msra.mxu0 0.0
  %4747 = vmatprep.subr.mxu0 0.0
  %4748 = vmatpush1.msra.mxu0 0.0
  %4749 = vmatprep.subr.mxu0 0.0
  %4750 = vmatpush1.msra.mxu0 0.0
  %4751 = vmatprep.subr.mxu0 0.0
  %4752 = vmatpush1.msra.mxu0 0.0
  %4753 = vmatprep.subr.mxu0 0.0
  %4754 = vmatpush1.msra.mxu0 0.0
  %4755 = vmatprep.subr.mxu0 0.0
  %4756 = vmatpush1.msra.mxu0 0.0
  %4757 = vmatprep.subr.mxu0 0.0
  %4758 = vmatpush1.msra.mxu0 0.0
  %4759 = vmatprep.subr.mxu0 0.0
  %4760 = vmatpush1.msra.mxu0 0.0
  %4761 = vmatprep.subr.mxu0 0.0
  %4762 = vmatpush1.msra.mxu0 0.0
  %4763 = vmatprep.subr.mxu0 0.0
  %4764 = vmatpush1.msra.mxu0 0.0
  %4765 = vmatprep.subr.mxu0 0.0
  %4766 = vmatpush1.msra.mxu0 0.0
  %4767 = vmatprep.subr.mxu0 0.0
  %4768 = vmatpush1.msra.mxu0 0.0
  %4769 = vmatprep.subr.mxu0 0.0
  %4770 = vmatpush1.msra.mxu0 0.0
  %4771 = vmatprep.mubr.f32.mxu0 0.0
  %4772 = vmatmul.mubr.f32.gmra.mrb[0].mxu0 %v4702
  %v4773 = vpop.f32.mrb[0].mxu0
  %v4774 = vadd.f32 0.0, %v4773
  %v4775 = vpop.f32.mrb[0].mxu0
  %4776 = vmatprep.mubr.f32.mxu0 0.0
  %4777 = vmatmul.mubr.f32.gmra.mrb[0].mxu0 %v4705
  %v4778 = vpop.f32.mrb[0].mxu0
  %v4779 = vadd.f32 0.0, %v4778
  %v4780 = vpop.f32.mrb[0].mxu0
  %4781 = vdwg.mxu0
  %v4782 = vadd.f32 %v4251, %v4774
  %v4783 = vadd.f32 %v4252, %v4779
  %v4784 = vadd.f32 %v2652, %v4782
  %v4785 = vadd.f32 %v2653, %v4783
  %v4786 = vlaneseq
  %v4787 = vshrl.u32 %v4786, 7
  %v4788 = vsub.s32 4, %v4787
  %v4789 = vrot.slane %v2656, %v4788
  %v4790 = vadd.f32 %v4784, %v4789
  %v4791 = vadd.f32 %v4785, %v4789
  %v4792 = vsel %vm177, %v4790, 0.0
  %4793 = vadd.xlane.f32.xlu0 %v4792
  %v4794 = vpop.xlane.xlu0 %4793
  %v4795 = vsel %vm177, %v4791, 0.0
  %4796 = vadd.xlane.f32.xlu0 %v4795
  %v4797 = vpop.xlane.xlu0 %4796
  %v4798 = vmul.f32 %v4794, %v184
  %v4799 = vmul.f32 %v4797, %v184
  %v4800 = vmul.f32 %v4790, %v4790
  %v4801 = vmul.f32 %v4791, %v4791
  %v4802 = vsel %vm177, %v4800, 0.0
  %4803 = vadd.xlane.f32.xlu0 %v4802
  %v4804 = vpop.xlane.xlu0 %4803
  %v4805 = vsel %vm177, %v4801, 0.0
  %4806 = vadd.xlane.f32.xlu0 %v4805
  %v4807 = vpop.xlane.xlu0 %4806
  %v4808 = vmul.f32 %v4804, %v184
  %v4809 = vmul.f32 %v4807, %v184
  %v4810 = vmul.f32 %v4798, %v4798
  %v4811 = vmul.f32 %v4799, %v4799
  %v4812 = vsub.f32 %v4808, %v4810
  %v4813 = vsub.f32 %v4809, %v4811
  %v4814 = vmax.f32 %v4812, 0.0
  %v4815 = vmax.f32 %v4813, 0.0
  %v4816 = vsub.f32 %v4790, %v4798
  %v4817 = vsub.f32 %v4791, %v4799
  %v4818 = vadd.f32 %v4814, 1e-12
  %v4819 = vadd.f32 %v4815, 1e-12
  %v4820 = vrsqrt.pop %v4818
  %v4821 = vrsqrt.pop %v4819
  %v4822 = vmul.f32 %v4816, %v4820
  %v4823 = vmul.f32 %v4817, %v4821
  %v4824 = vlaneseq
  %v4825 = vshrl.u32 %v4824, 7
  %v4826 = vsub.s32 5, %v4825
  %v4827 = vrot.slane %v2656, %v4826
  %v4828 = vmul.f32 %v4822, %v4827
  %v4829 = vmul.f32 %v4823, %v4827
  %v4830 = vlaneseq
  %v4831 = vshrl.u32 %v4830, 7
  %v4832 = vsub.s32 6, %v4831
  %v4833 = vrot.slane %v2656, %v4832
  %v4834 = vadd.f32 %v4828, %v4833
  %v4835 = vadd.f32 %v4829, %v4833
  %s4836 = scalar_lea.vmem %s6, 32
  %v4837 = vld [vmem:[%s4836] sm:$0xff]
  %v4838 = vld [vmem:[%s4836 + $0x8] sm:$0xff]
  %v4839 = vld [vmem:[%s4836 + $0x10] sm:$0xff]
  %v4840 = vld [vmem:[%s4836 + $0x18] sm:$0xff]
  %v4841 = vlaneseq
  %v4842 = vshrl.u32 %v4841, 7
  %v4843 = vsub.s32 7, %v4842
  %v4844 = vrot.slane %v2656, %v4843
  %v4846 = vsel %vm177, %v4834, 0
  %v4849 = vsel %vm177, %v4835, 0
  %4851 = vmatprep.subr.mxu0 0.0
  %4852 = vmatpush1.msra.mxu0 %v4837
  %4853 = vmatprep.subr.mxu0 0.0
  %4854 = vmatpush1.msra.mxu0 %v4838
  %4855 = vmatprep.subr.mxu0 0.0
  %4856 = vmatpush1.msra.mxu0 %v4839
  %4857 = vmatprep.subr.mxu0 0.0
  %4858 = vmatpush1.msra.mxu0 %v4840
  %4859 = vmatprep.subr.mxu0 0.0
  %4860 = vmatpush1.msra.mxu0 0.0
  %4861 = vmatprep.subr.mxu0 0.0
  %4862 = vmatpush1.msra.mxu0 0.0
  %4863 = vmatprep.subr.mxu0 0.0
  %4864 = vmatpush1.msra.mxu0 0.0
  %4865 = vmatprep.subr.mxu0 0.0
  %4866 = vmatpush1.msra.mxu0 0.0
  %4867 = vmatprep.subr.mxu0 0.0
  %4868 = vmatpush1.msra.mxu0 0.0
  %4869 = vmatprep.subr.mxu0 0.0
  %4870 = vmatpush1.msra.mxu0 0.0
  %4871 = vmatprep.subr.mxu0 0.0
  %4872 = vmatpush1.msra.mxu0 0.0
  %4873 = vmatprep.subr.mxu0 0.0
  %4874 = vmatpush1.msra.mxu0 0.0
  %4875 = vmatprep.subr.mxu0 0.0
  %4876 = vmatpush1.msra.mxu0 0.0
  %4877 = vmatprep.subr.mxu0 0.0
  %4878 = vmatpush1.msra.mxu0 0.0
  %4879 = vmatprep.subr.mxu0 0.0
  %4880 = vmatpush1.msra.mxu0 0.0
  %4881 = vmatprep.subr.mxu0 0.0
  %4882 = vmatpush1.msra.mxu0 0.0
  %4883 = vmatprep.subr.mxu0 0.0
  %4884 = vmatpush1.msra.mxu0 0.0
  %4885 = vmatprep.subr.mxu0 0.0
  %4886 = vmatpush1.msra.mxu0 0.0
  %4887 = vmatprep.subr.mxu0 0.0
  %4888 = vmatpush1.msra.mxu0 0.0
  %4889 = vmatprep.subr.mxu0 0.0
  %4890 = vmatpush1.msra.mxu0 0.0
  %4891 = vmatprep.subr.mxu0 0.0
  %4892 = vmatpush1.msra.mxu0 0.0
  %4893 = vmatprep.subr.mxu0 0.0
  %4894 = vmatpush1.msra.mxu0 0.0
  %4895 = vmatprep.subr.mxu0 0.0
  %4896 = vmatpush1.msra.mxu0 0.0
  %4897 = vmatprep.subr.mxu0 0.0
  %4898 = vmatpush1.msra.mxu0 0.0
  %4899 = vmatprep.subr.mxu0 0.0
  %4900 = vmatpush1.msra.mxu0 0.0
  %4901 = vmatprep.subr.mxu0 0.0
  %4902 = vmatpush1.msra.mxu0 0.0
  %4903 = vmatprep.subr.mxu0 0.0
  %4904 = vmatpush1.msra.mxu0 0.0
  %4905 = vmatprep.subr.mxu0 0.0
  %4906 = vmatpush1.msra.mxu0 0.0
  %4907 = vmatprep.subr.mxu0 0.0
  %4908 = vmatpush1.msra.mxu0 0.0
  %4909 = vmatprep.subr.mxu0 0.0
  %4910 = vmatpush1.msra.mxu0 0.0
  %4911 = vmatprep.subr.mxu0 0.0
  %4912 = vmatpush1.msra.mxu0 0.0
  %4913 = vmatprep.subr.mxu0 0.0
  %4914 = vmatpush1.msra.mxu0 0.0
  %4915 = vmatprep.mubr.f32.mxu0 0.0
  %4916 = vmatmul.mubr.f32.gmra.mrb[0].mxu0 %v4846
  %v4917 = vpop.f32.mrb[0].mxu0
  %v4918 = vadd.f32 %v4844, %v4917
  %v4919 = vpop.f32.mrb[0].mxu0
  %4920 = vmatprep.mubr.f32.mxu0 0.0
  %4921 = vmatmul.mubr.f32.gmra.mrb[0].mxu0 %v4849
  %v4922 = vpop.f32.mrb[0].mxu0
  %v4923 = vadd.f32 %v4844, %v4922
  %v4924 = vpop.f32.mrb[0].mxu0
  %4925 = vdwg.mxu0
  %v4926 = vmul.f32 %v4918, 0.5
  %v4927 = vmul.f32 %v4923, 0.5
  %v4928 = vmul.f32 %v4918, 0.70710677
  %v4929 = vmul.f32 %v4923, 0.70710677
  %v4930 = verf.f32.pop %v4928
  %v4931 = verf.f32.pop %v4929
  %v4932 = vadd.f32 %v4930, 1.0
  %v4933 = vadd.f32 %v4931, 1.0
  %v4934 = vmul.f32 %v4926, %v4932
  %v4935 = vmul.f32 %v4927, %v4933
  %s4936 = scalar_lea.vmem %s7, 64
  %v4937 = vld [vmem:[%s4936] sm:$0xff]
  %v4938 = vld [vmem:[%s4936 + $0x8] sm:$0xff]
  %v4939 = vld [vmem:[%s4936 + $0x10] sm:$0xff]
  %v4940 = vld [vmem:[%s4936 + $0x18] sm:$0xff]
  %v4941 = vld [vmem:[%s4936 + $0x20] sm:$0xff]
  %v4942 = vld [vmem:[%s4936 + $0x28] sm:$0xff]
  %v4943 = vld [vmem:[%s4936 + $0x30] sm:$0xff]
  %v4944 = vld [vmem:[%s4936 + $0x38] sm:$0xff]
  %v4945 = vlaneseq
  %v4946 = vshrl.u32 %v4945, 7
  %v4947 = vsub.s32 0, %v4946
  %v4948 = vrot.slane %v2657, %v4947
  %v4950 = vsel %vm2526, %v4934, 0
  %v4953 = vsel %vm2526, %v4935, 0
  %4955 = vmatprep.subr.mxu0 0.0
  %4956 = vmatpush1.msra.mxu0 %v4937
  %4957 = vmatprep.subr.mxu0 0.0
  %4958 = vmatpush1.msra.mxu0 %v4938
  %4959 = vmatprep.subr.mxu0 0.0
  %4960 = vmatpush1.msra.mxu0 %v4939
  %4961 = vmatprep.subr.mxu0 0.0
  %4962 = vmatpush1.msra.mxu0 %v4940
  %4963 = vmatprep.subr.mxu0 0.0
  %4964 = vmatpush1.msra.mxu0 %v4941
  %4965 = vmatprep.subr.mxu0 0.0
  %4966 = vmatpush1.msra.mxu0 %v4942
  %4967 = vmatprep.subr.mxu0 0.0
  %4968 = vmatpush1.msra.mxu0 %v4943
  %4969 = vmatprep.subr.mxu0 0.0
  %4970 = vmatpush1.msra.mxu0 %v4944
  %4971 = vmatprep.subr.mxu0 0.0
  %4972 = vmatpush1.msra.mxu0 0.0
  %4973 = vmatprep.subr.mxu0 0.0
  %4974 = vmatpush1.msra.mxu0 0.0
  %4975 = vmatprep.subr.mxu0 0.0
  %4976 = vmatpush1.msra.mxu0 0.0
  %4977 = vmatprep.subr.mxu0 0.0
  %4978 = vmatpush1.msra.mxu0 0.0
  %4979 = vmatprep.subr.mxu0 0.0
  %4980 = vmatpush1.msra.mxu0 0.0
  %4981 = vmatprep.subr.mxu0 0.0
  %4982 = vmatpush1.msra.mxu0 0.0
  %4983 = vmatprep.subr.mxu0 0.0
  %4984 = vmatpush1.msra.mxu0 0.0
  %4985 = vmatprep.subr.mxu0 0.0
  %4986 = vmatpush1.msra.mxu0 0.0
  %4987 = vmatprep.subr.mxu0 0.0
  %4988 = vmatpush1.msra.mxu0 0.0
  %4989 = vmatprep.subr.mxu0 0.0
  %4990 = vmatpush1.msra.mxu0 0.0
  %4991 = vmatprep.subr.mxu0 0.0
  %4992 = vmatpush1.msra.mxu0 0.0
  %4993 = vmatprep.subr.mxu0 0.0
  %4994 = vmatpush1.msra.mxu0 0.0
  %4995 = vmatprep.subr.mxu0 0.0
  %4996 = vmatpush1.msra.mxu0 0.0
  %4997 = vmatprep.subr.mxu0 0.0
  %4998 = vmatpush1.msra.mxu0 0.0
  %4999 = vmatprep.subr.mxu0 0.0
  %5000 = vmatpush1.msra.mxu0 0.0
  %5001 = vmatprep.subr.mxu0 0.0
  %5002 = vmatpush1.msra.mxu0 0.0
  %5003 = vmatprep.subr.mxu0 0.0
  %5004 = vmatpush1.msra.mxu0 0.0
  %5005 = vmatprep.subr.mxu0 0.0
  %5006 = vmatpush1.msra.mxu0 0.0
  %5007 = vmatprep.subr.mxu0 0.0
  %5008 = vmatpush1.msra.mxu0 0.0
  %5009 = vmatprep.subr.mxu0 0.0
  %5010 = vmatpush1.msra.mxu0 0.0
  %5011 = vmatprep.subr.mxu0 0.0
  %5012 = vmatpush1.msra.mxu0 0.0
  %5013 = vmatprep.subr.mxu0 0.0
  %5014 = vmatpush1.msra.mxu0 0.0
  %5015 = vmatprep.subr.mxu0 0.0
  %5016 = vmatpush1.msra.mxu0 0.0
  %5017 = vmatprep.subr.mxu0 0.0
  %5018 = vmatpush1.msra.mxu0 0.0
  %5019 = vmatprep.mubr.f32.mxu0 0.0
  %5020 = vmatmul.mubr.f32.gmra.mrb[0].mxu0 %v4950
  %v5021 = vpop.f32.mrb[0].mxu0
  %v5022 = vadd.f32 %v4948, %v5021
  %v5023 = vpop.f32.mrb[0].mxu0
  %5024 = vmatprep.mubr.f32.mxu0 0.0
  %5025 = vmatmul.mubr.f32.gmra.mrb[0].mxu0 %v4953
  %v5026 = vpop.f32.mrb[0].mxu0
  %v5027 = vadd.f32 %v4948, %v5026
  %v5028 = vpop.f32.mrb[0].mxu0
  %5029 = vdwg.mxu0
  %v5030 = vadd.f32 %v4834, %v5022
  %v5031 = vadd.f32 %v4835, %v5027
  %v5032 = vsel %vm177, %v5030, 0.0
  %5033 = vadd.xlane.f32.xlu0 %v5032
  %v5034 = vpop.xlane.xlu0 %5033
  %v5035 = vsel %vm177, %v5031, 0.0
  %5036 = vadd.xlane.f32.xlu0 %v5035
  %v5037 = vpop.xlane.xlu0 %5036
  %v5038 = vmul.f32 %v5034, %v184
  %v5039 = vmul.f32 %v5037, %v184
  %v5040 = vmul.f32 %v5030, %v5030
  %v5041 = vmul.f32 %v5031, %v5031
  %v5042 = vsel %vm177, %v5040, 0.0
  %5043 = vadd.xlane.f32.xlu0 %v5042
  %v5044 = vpop.xlane.xlu0 %5043
  %v5045 = vsel %vm177, %v5041, 0.0
  %5046 = vadd.xlane.f32.xlu0 %v5045
  %v5047 = vpop.xlane.xlu0 %5046
  %v5048 = vmul.f32 %v5044, %v184
  %v5049 = vmul.f32 %v5047, %v184
  %v5050 = vmul.f32 %v5038, %v5038
  %v5051 = vmul.f32 %v5039, %v5039
  %v5052 = vsub.f32 %v5048, %v5050
  %v5053 = vsub.f32 %v5049, %v5051
  %v5054 = vmax.f32 %v5052, 0.0
  %v5055 = vmax.f32 %v5053, 0.0
  %v5056 = vsub.f32 %v5030, %v5038
  %v5057 = vsub.f32 %v5031, %v5039
  %v5058 = vadd.f32 %v5054, 1e-12
  %v5059 = vadd.f32 %v5055, 1e-12
  %v5060 = vrsqrt.pop %v5058
  %v5061 = vrsqrt.pop %v5059
  %v5062 = vmul.f32 %v5056, %v5060
  %v5063 = vmul.f32 %v5057, %v5061
  %v5064 = vlaneseq
  %v5065 = vshrl.u32 %v5064, 7
  %v5066 = vsub.s32 1, %v5065
  %v5067 = vrot.slane %v2657, %v5066
  %v5068 = vmul.f32 %v5062, %v5067
  %v5069 = vmul.f32 %v5063, %v5067
  %v5070 = vlaneseq
  %v5071 = vshrl.u32 %v5070, 7
  %v5072 = vsub.s32 2, %v5071
  %v5073 = vrot.slane %v2657, %v5072
  %v5074 = vadd.f32 %v5068, %v5073
  %v5075 = vadd.f32 %v5069, %v5073
  %s5076 = scalar_lea.vmem %s9, 32
  %v5077 = vld [vmem:[%s5076] sm:$0xff]
  %v5078 = vld [vmem:[%s5076 + $0x8] sm:$0xff]
  %v5079 = vld [vmem:[%s5076 + $0x10] sm:$0xff]
  %v5080 = vld [vmem:[%s5076 + $0x18] sm:$0xff]
  %v5081 = vlaneseq
  %v5082 = vshrl.u32 %v5081, 7
  %v5083 = vsub.s32 5, %v5082
  %v5084 = vrot.slane %v41, %v5083
  %v5086 = vsel %vm177, %v5074, 0
  %v5089 = vsel %vm177, %v5075, 0
  %5091 = vmatprep.subr.mxu0 0.0
  %5092 = vmatpush1.msra.mxu0 %v5077
  %5093 = vmatprep.subr.mxu0 0.0
  %5094 = vmatpush1.msra.mxu0 %v5078
  %5095 = vmatprep.subr.mxu0 0.0
  %5096 = vmatpush1.msra.mxu0 %v5079
  %5097 = vmatprep.subr.mxu0 0.0
  %5098 = vmatpush1.msra.mxu0 %v5080
  %5099 = vmatprep.subr.mxu0 0.0
  %5100 = vmatpush1.msra.mxu0 0.0
  %5101 = vmatprep.subr.mxu0 0.0
  %5102 = vmatpush1.msra.mxu0 0.0
  %5103 = vmatprep.subr.mxu0 0.0
  %5104 = vmatpush1.msra.mxu0 0.0
  %5105 = vmatprep.subr.mxu0 0.0
  %5106 = vmatpush1.msra.mxu0 0.0
  %5107 = vmatprep.subr.mxu0 0.0
  %5108 = vmatpush1.msra.mxu0 0.0
  %5109 = vmatprep.subr.mxu0 0.0
  %5110 = vmatpush1.msra.mxu0 0.0
  %5111 = vmatprep.subr.mxu0 0.0
  %5112 = vmatpush1.msra.mxu0 0.0
  %5113 = vmatprep.subr.mxu0 0.0
  %5114 = vmatpush1.msra.mxu0 0.0
  %5115 = vmatprep.subr.mxu0 0.0
  %5116 = vmatpush1.msra.mxu0 0.0
  %5117 = vmatprep.subr.mxu0 0.0
  %5118 = vmatpush1.msra.mxu0 0.0
  %5119 = vmatprep.subr.mxu0 0.0
  %5120 = vmatpush1.msra.mxu0 0.0
  %5121 = vmatprep.subr.mxu0 0.0
  %5122 = vmatpush1.msra.mxu0 0.0
  %5123 = vmatprep.subr.mxu0 0.0
  %5124 = vmatpush1.msra.mxu0 0.0
  %5125 = vmatprep.subr.mxu0 0.0
  %5126 = vmatpush1.msra.mxu0 0.0
  %5127 = vmatprep.subr.mxu0 0.0
  %5128 = vmatpush1.msra.mxu0 0.0
  %5129 = vmatprep.subr.mxu0 0.0
  %5130 = vmatpush1.msra.mxu0 0.0
  %5131 = vmatprep.subr.mxu0 0.0
  %5132 = vmatpush1.msra.mxu0 0.0
  %5133 = vmatprep.subr.mxu0 0.0
  %5134 = vmatpush1.msra.mxu0 0.0
  %5135 = vmatprep.subr.mxu0 0.0
  %5136 = vmatpush1.msra.mxu0 0.0
  %5137 = vmatprep.subr.mxu0 0.0
  %5138 = vmatpush1.msra.mxu0 0.0
  %5139 = vmatprep.subr.mxu0 0.0
  %5140 = vmatpush1.msra.mxu0 0.0
  %5141 = vmatprep.subr.mxu0 0.0
  %5142 = vmatpush1.msra.mxu0 0.0
  %5143 = vmatprep.subr.mxu0 0.0
  %5144 = vmatpush1.msra.mxu0 0.0
  %5145 = vmatprep.subr.mxu0 0.0
  %5146 = vmatpush1.msra.mxu0 0.0
  %5147 = vmatprep.subr.mxu0 0.0
  %5148 = vmatpush1.msra.mxu0 0.0
  %5149 = vmatprep.subr.mxu0 0.0
  %5150 = vmatpush1.msra.mxu0 0.0
  %5151 = vmatprep.subr.mxu0 0.0
  %5152 = vmatpush1.msra.mxu0 0.0
  %5153 = vmatprep.subr.mxu0 0.0
  %5154 = vmatpush1.msra.mxu0 0.0
  %5155 = vmatprep.mubr.f32.mxu0 0.0
  %5156 = vmatmul.mubr.f32.gmra.mrb[0].mxu0 %v5086
  %v5157 = vpop.f32.mrb[0].mxu0
  %v5158 = vadd.f32 %v5084, %v5157
  %v5159 = vpop.f32.mrb[0].mxu0
  %5160 = vmatprep.mubr.f32.mxu0 0.0
  %5161 = vmatmul.mubr.f32.gmra.mrb[0].mxu0 %v5089
  %v5162 = vpop.f32.mrb[0].mxu0
  %v5163 = vadd.f32 %v5084, %v5162
  %v5164 = vpop.f32.mrb[0].mxu0
  %5165 = vdwg.mxu0
  %v5166 = vld [vmem:[%s9] sm:$0xff]
  %v5167 = vld [vmem:[%s9 + $0x8] sm:$0xff]
  %v5168 = vld [vmem:[%s9 + $0x10] sm:$0xff]
  %v5169 = vld [vmem:[%s9 + $0x18] sm:$0xff]
  %v5170 = vlaneseq
  %v5171 = vshrl.u32 %v5170, 7
  %v5172 = vsub.s32 4, %v5171
  %v5173 = vrot.slane %v41, %v5172
  %5174 = vmatprep.subr.mxu0 0.0
  %5175 = vmatpush1.msra.mxu0 %v5166
  %5176 = vmatprep.subr.mxu0 0.0
  %5177 = vmatpush1.msra.mxu0 %v5167
  %5178 = vmatprep.subr.mxu0 0.0
  %5179 = vmatpush1.msra.mxu0 %v5168
  %5180 = vmatprep.subr.mxu0 0.0
  %5181 = vmatpush1.msra.mxu0 %v5169
  %5182 = vmatprep.subr.mxu0 0.0
  %5183 = vmatpush1.msra.mxu0 0.0
  %5184 = vmatprep.subr.mxu0 0.0
  %5185 = vmatpush1.msra.mxu0 0.0
  %5186 = vmatprep.subr.mxu0 0.0
  %5187 = vmatpush1.msra.mxu0 0.0
  %5188 = vmatprep.subr.mxu0 0.0
  %5189 = vmatpush1.msra.mxu0 0.0
  %5190 = vmatprep.subr.mxu0 0.0
  %5191 = vmatpush1.msra.mxu0 0.0
  %5192 = vmatprep.subr.mxu0 0.0
  %5193 = vmatpush1.msra.mxu0 0.0
  %5194 = vmatprep.subr.mxu0 0.0
  %5195 = vmatpush1.msra.mxu0 0.0
  %5196 = vmatprep.subr.mxu0 0.0
  %5197 = vmatpush1.msra.mxu0 0.0
  %5198 = vmatprep.subr.mxu0 0.0
  %5199 = vmatpush1.msra.mxu0 0.0
  %5200 = vmatprep.subr.mxu0 0.0
  %5201 = vmatpush1.msra.mxu0 0.0
  %5202 = vmatprep.subr.mxu0 0.0
  %5203 = vmatpush1.msra.mxu0 0.0
  %5204 = vmatprep.subr.mxu0 0.0
  %5205 = vmatpush1.msra.mxu0 0.0
  %5206 = vmatprep.subr.mxu0 0.0
  %5207 = vmatpush1.msra.mxu0 0.0
  %5208 = vmatprep.subr.mxu0 0.0
  %5209 = vmatpush1.msra.mxu0 0.0
  %5210 = vmatprep.subr.mxu0 0.0
  %5211 = vmatpush1.msra.mxu0 0.0
  %5212 = vmatprep.subr.mxu0 0.0
  %5213 = vmatpush1.msra.mxu0 0.0
  %5214 = vmatprep.subr.mxu0 0.0
  %5215 = vmatpush1.msra.mxu0 0.0
  %5216 = vmatprep.subr.mxu0 0.0
  %5217 = vmatpush1.msra.mxu0 0.0
  %5218 = vmatprep.subr.mxu0 0.0
  %5219 = vmatpush1.msra.mxu0 0.0
  %5220 = vmatprep.subr.mxu0 0.0
  %5221 = vmatpush1.msra.mxu0 0.0
  %5222 = vmatprep.subr.mxu0 0.0
  %5223 = vmatpush1.msra.mxu0 0.0
  %5224 = vmatprep.subr.mxu0 0.0
  %5225 = vmatpush1.msra.mxu0 0.0
  %5226 = vmatprep.subr.mxu0 0.0
  %5227 = vmatpush1.msra.mxu0 0.0
  %5228 = vmatprep.subr.mxu0 0.0
  %5229 = vmatpush1.msra.mxu0 0.0
  %5230 = vmatprep.subr.mxu0 0.0
  %5231 = vmatpush1.msra.mxu0 0.0
  %5232 = vmatprep.subr.mxu0 0.0
  %5233 = vmatpush1.msra.mxu0 0.0
  %5234 = vmatprep.subr.mxu0 0.0
  %5235 = vmatpush1.msra.mxu0 0.0
  %5236 = vmatprep.subr.mxu0 0.0
  %5237 = vmatpush1.msra.mxu0 0.0
  %5238 = vmatprep.mubr.f32.mxu0 0.0
  %5239 = vmatmul.mubr.f32.gmra.mrb[0].mxu0 %v5086
  %v5240 = vpop.f32.mrb[0].mxu0
  %v5241 = vadd.f32 %v5173, %v5240
  %v5242 = vpop.f32.mrb[0].mxu0
  %5243 = vmatprep.mubr.f32.mxu0 0.0
  %5244 = vmatmul.mubr.f32.gmra.mrb[0].mxu0 %v5089
  %v5245 = vpop.f32.mrb[0].mxu0
  %v5246 = vadd.f32 %v5173, %v5245
  %v5247 = vpop.f32.mrb[0].mxu0
  %5248 = vdwg.mxu0
  %v5249 = vtanh.pop %v5241
  %v5250 = vtanh.pop %v5246
  %s5251 = scalar_lea.vmem %s9, 64
  %v5252 = vld [vmem:[%s5251] sm:$0xff]
  %v5253 = vld [vmem:[%s5251 + $0x8] sm:$0xff]
  %v5254 = vld [vmem:[%s5251 + $0x10] sm:$0xff]
  %v5255 = vld [vmem:[%s5251 + $0x18] sm:$0xff]
  %v5256 = vlaneseq
  %v5257 = vshrl.u32 %v5256, 7
  %v5258 = vsub.s32 6, %v5257
  %v5259 = vrot.slane %v41, %v5258
  %v5261 = vsel %vm177, %v5249, 0
  %v5264 = vsel %vm177, %v5250, 0
  %5266 = vmatprep.subr.mxu0 0.0
  %5267 = vmatpush1.msra.mxu0 %v5252
  %5268 = vmatprep.subr.mxu0 0.0
  %5269 = vmatpush1.msra.mxu0 %v5253
  %5270 = vmatprep.subr.mxu0 0.0
  %5271 = vmatpush1.msra.mxu0 %v5254
  %5272 = vmatprep.subr.mxu0 0.0
  %5273 = vmatpush1.msra.mxu0 %v5255
  %5274 = vmatprep.subr.mxu0 0.0
  %5275 = vmatpush1.msra.mxu0 0.0
  %5276 = vmatprep.subr.mxu0 0.0
  %5277 = vmatpush1.msra.mxu0 0.0
  %5278 = vmatprep.subr.mxu0 0.0
  %5279 = vmatpush1.msra.mxu0 0.0
  %5280 = vmatprep.subr.mxu0 0.0
  %5281 = vmatpush1.msra.mxu0 0.0
  %5282 = vmatprep.subr.mxu0 0.0
  %5283 = vmatpush1.msra.mxu0 0.0
  %5284 = vmatprep.subr.mxu0 0.0
  %5285 = vmatpush1.msra.mxu0 0.0
  %5286 = vmatprep.subr.mxu0 0.0
  %5287 = vmatpush1.msra.mxu0 0.0
  %5288 = vmatprep.subr.mxu0 0.0
  %5289 = vmatpush1.msra.mxu0 0.0
  %5290 = vmatprep.subr.mxu0 0.0
  %5291 = vmatpush1.msra.mxu0 0.0
  %5292 = vmatprep.subr.mxu0 0.0
  %5293 = vmatpush1.msra.mxu0 0.0
  %5294 = vmatprep.subr.mxu0 0.0
  %5295 = vmatpush1.msra.mxu0 0.0
  %5296 = vmatprep.subr.mxu0 0.0
  %5297 = vmatpush1.msra.mxu0 0.0
  %5298 = vmatprep.subr.mxu0 0.0
  %5299 = vmatpush1.msra.mxu0 0.0
  %5300 = vmatprep.subr.mxu0 0.0
  %5301 = vmatpush1.msra.mxu0 0.0
  %5302 = vmatprep.subr.mxu0 0.0
  %5303 = vmatpush1.msra.mxu0 0.0
  %5304 = vmatprep.subr.mxu0 0.0
  %5305 = vmatpush1.msra.mxu0 0.0
  %5306 = vmatprep.subr.mxu0 0.0
  %5307 = vmatpush1.msra.mxu0 0.0
  %5308 = vmatprep.subr.mxu0 0.0
  %5309 = vmatpush1.msra.mxu0 0.0
  %5310 = vmatprep.subr.mxu0 0.0
  %5311 = vmatpush1.msra.mxu0 0.0
  %5312 = vmatprep.subr.mxu0 0.0
  %5313 = vmatpush1.msra.mxu0 0.0
  %5314 = vmatprep.subr.mxu0 0.0
  %5315 = vmatpush1.msra.mxu0 0.0
  %5316 = vmatprep.subr.mxu0 0.0
  %5317 = vmatpush1.msra.mxu0 0.0
  %5318 = vmatprep.subr.mxu0 0.0
  %5319 = vmatpush1.msra.mxu0 0.0
  %5320 = vmatprep.subr.mxu0 0.0
  %5321 = vmatpush1.msra.mxu0 0.0
  %5322 = vmatprep.subr.mxu0 0.0
  %5323 = vmatpush1.msra.mxu0 0.0
  %5324 = vmatprep.subr.mxu0 0.0
  %5325 = vmatpush1.msra.mxu0 0.0
  %5326 = vmatprep.subr.mxu0 0.0
  %5327 = vmatpush1.msra.mxu0 0.0
  %5328 = vmatprep.subr.mxu0 0.0
  %5329 = vmatpush1.msra.mxu0 0.0
  %5330 = vmatprep.mubr.f32.mxu0 0.0
  %5331 = vmatmul.mubr.f32.gmra.mrb[0].mxu0 %v5261
  %v5332 = vpop.f32.mrb[0].mxu0
  %v5333 = vadd.f32 %v5259, %v5332
  %v5334 = vpop.f32.mrb[0].mxu0
  %5335 = vmatprep.mubr.f32.mxu0 0.0
  %5336 = vmatmul.mubr.f32.gmra.mrb[0].mxu0 %v5264
  %v5337 = vpop.f32.mrb[0].mxu0
  %v5338 = vadd.f32 %v5259, %v5337
  %v5339 = vpop.f32.mrb[0].mxu0
  %5340 = vdwg.mxu0
  %5341 = vst [vmem:[%s10] sm:$0xff] %v5158
  %5342 = vst [vmem:[%s10 + $0x8] sm:$0xff] %v5163
  %5343 = vst [vmem:[%s10 + $0x10] sm:$0xff] %v5333
  %5344 = vst [vmem:[%s10 + $0x18] sm:$0xff] %v5338
  // Predicated region
  $region42: #{model_bert_forward.1} parent=0 // pred_check
    _
  $region43: #{model_bert_forward.1} parent=0 // pred_check_branch
    %5346 = sbr.rel (0) target = $region45
  $region44: #{model_bert_forward.1} parent=0 // pred_region
    _
  $region45: #{model_bert_forward.1} parent=0 // pred_fallthru
    _
  // Predicated region
  $region46: #{model_bert_forward.1} parent=0 // pred_check
    _
  $region47: #{model_bert_forward.1} parent=0 // pred_check_branch
    %5348 = sbr.rel (0) target = $region49
  $region48: #{model_bert_forward.1} parent=0 // pred_region
    _
  $region49: #{model_bert_forward.1} parent=0 // pred_fallthru
    _

</llo_original>
